<compile_context>
chip_gen: v7x
topology: tpu7x:2x2x1
jax: 0.10.0
libtpu: 0.0.40
codegen_flags: <defaults>
</compile_context>

<pallas_src>
import jax
import jax.numpy as jnp
from jax.experimental import pallas as pl
from jax.experimental.pallas import tpu as pltpu


def make_cab_kernel(C, N, H, W):
    HW = H * W

    def kernel(w_ref, b_ref, pos_ref, x_ref, o_ref):
        # w_ref : SMEM (3*9*C*C,) f32 -- three HWIO (3,3,C,C) weights, flat
        # b_ref : SMEM (3*C,)     f32 -- three (C,) biases, concatenated
        # pos_ref: VMEM (2, HW) int32 -- row 0 = h index, row 1 = w index
        # x_ref : VMEM (C, N, HW)     -- lane-dense input planes
        # o_ref : VMEM (C, N, HW)     -- lane-dense output planes

        # Hoisted position indices, broadcast to the full slab shape once.
        h_idx = jnp.broadcast_to(pos_ref[0:1, :], (N, HW))
        w_idx = jnp.broadcast_to(pos_ref[1:2, :], (N, HW))

        def conv3x3(planes, layer, d):
            # planes: list of C (N, HW) f32 slabs -> list of C (N, HW) slabs.
            accs = [jnp.zeros((N, HW), jnp.float32) for _ in range(C)]
            wbase = layer * 9 * C * C
            for kh in range(3):
                dh = (kh - 1) * d
                for kw in range(3):
                    dw = (kw - 1) * d
                    off = dh * W + dw            # flat lane offset of this tap
                    tap_base = wbase + (kh * 3 + kw) * C * C
                    if off != 0:
                        # Valid iff the source pixel is inside the image
                        # (zero padding elsewhere).  Computed once per tap,
                        # reused for every input channel.
                        mask = ((h_idx + dh >= 0) & (h_idx + dh < H) &
                                (w_idx + dw >= 0) & (w_idx + dw < W))
                    for ci in range(C):
                        p = planes[ci]
                        if off != 0:
                            # out[f] = in[f + off]  ->  roll by -off (XLU).
                            p = pltpu.roll(p, shift=(-off) % HW, axis=1)
                            p = jnp.where(mask, p, 0.0)
                        for co in range(C):
                            w = w_ref[tap_base + ci * C + co]  # SMEM scalar
                            accs[co] = accs[co] + w * p
            return [accs[co] + b_ref[layer * C + co] for co in range(C)]

        # AvgPool2d(1,1) == identity, then ReLU.
        relu_planes = [jnp.maximum(x_ref[ci].astype(jnp.float32), 0.0)
                       for ci in range(C)]

        y = conv3x3(relu_planes, 0, 1)   # Conv3x3, pad 1
        y = conv3x3(y, 1, 3)             # Conv3x3, pad 3, dilation 3
        y = conv3x3(y, 2, 1)             # Conv3x3, pad 1

        # out = x * sigmoid(y); x re-read late to keep vreg pressure low.
        for ci in range(C):
            xc = x_ref[ci].astype(jnp.float32)
            o_ref[ci] = (xc * jax.nn.sigmoid(y[ci])).astype(o_ref.dtype)

    return kernel


def cab_forward(x_nchw, params):
    N, C, H, W = x_nchw.shape
    w1, b1, w2, b2, w3, b3 = params

    # Flat f32 vectors for SMEM (HWIO weights, concatenated biases).
    w_flat = jnp.concatenate(
        [w1.reshape(-1), w2.reshape(-1), w3.reshape(-1)]).astype(jnp.float32)
    b_flat = jnp.concatenate(
        [b1.reshape(-1), b2.reshape(-1), b3.reshape(-1)]).astype(jnp.float32)

    # Position table for the border masks (computed once, outside the kernel).
    hw = jnp.arange(H * W, dtype=jnp.int32)
    pos = jnp.stack([hw // W, hw % W], axis=0)           # (2, H*W) int32

    # Lane-dense layout: (C, N, H*W).  Tiny one-time XLA transpose/reshape.
    x_packed = jnp.transpose(x_nchw, (1, 0, 2, 3)).reshape(C, N, H * W)

    out_packed = pl.pallas_call(
        make_cab_kernel(C, N, H, W),
        out_shape=jax.ShapeDtypeStruct((C, N, H * W), x_nchw.dtype),
        in_specs=[
            pl.BlockSpec(memory_space=pltpu.MemorySpace.SMEM),   # weights
            pl.BlockSpec(memory_space=pltpu.MemorySpace.SMEM),   # biases
            pl.BlockSpec(memory_space=pltpu.MemorySpace.VMEM),   # pos table
            pl.BlockSpec(memory_space=pltpu.MemorySpace.VMEM),   # x (C,N,HW)
        ],
        out_specs=pl.BlockSpec(memory_space=pltpu.MemorySpace.VMEM),
    )(w_flat, b_flat, pos, x_packed)

    # Back to NCHW (cheap XLA reshape/transpose on a tiny contiguous buffer).
    return jnp.transpose(out_packed.reshape(C, N, H, W), (1, 0, 2, 3))


def cab_reference(x_nchw, params):
    # Pure-JAX reference (NCHW / HWIO) for a sanity check.
    w1, b1, w2, b2, w3, b3 = params

    def conv(inp, w, b, d):
        out = jax.lax.conv_general_dilated(
            inp, w, (1, 1), ((d, d), (d, d)),
            rhs_dilation=(d, d),
            dimension_numbers=("NCHW", "HWIO", "NCHW"),
            precision=jax.lax.Precision.HIGHEST)
        return out + b.reshape(1, -1, 1, 1)

    t = jnp.maximum(x_nchw, 0.0)
    y = conv(t, w1, b1, 1)
    y = conv(y, w2, b2, 3)
    y = conv(y, w3, b3, 1)
    return x_nchw * jax.nn.sigmoid(y)


def init_params(key, channels):
    # Deterministic synthetic init (PyTorch-ish uniform fan-in scaling).
    ks = jax.random.split(key, 6)
    bound = 1.0 / jnp.sqrt(channels * 9.0)

    def w(k):  # HWIO
        return jax.random.uniform(k, (3, 3, channels, channels),
                                  jnp.float32, -bound, bound)

    def b(k):
        return jax.random.uniform(k, (channels,), jnp.float32, -bound, bound)

    return (w(ks[0]), b(ks[1]), w(ks[2]), b(ks[3]), w(ks[4]), b(ks[5]))


if __name__ == "__main__":
    key = jax.random.PRNGKey(0)
    kx, kp = jax.random.split(key)

    N, C, H, W = 2, 4, 16, 16                 # NCHW, as in the PyTorch module
    x_nchw = jax.random.normal(kx, (N, C, H, W), jnp.float32)
    params = init_params(kp, C)

    out = jax.block_until_ready(cab_forward(x_nchw, params))
    ref = jax.block_until_ready(cab_reference(x_nchw, params))

    assert out.shape == (N, C, H, W)
    assert jnp.allclose(out, ref, atol=1e-4, rtol=1e-4), "mismatch vs reference"

    print("KERNEL_OK")
</pallas_src>

<mosaic_0001>
module attributes {stable_mosaic.version = 11 : i64} {
  func.func @kernel(%arg0: memref<432xf32, #tpu.memory_space<smem>>, %arg1: memref<12xf32, #tpu.memory_space<smem>>, %arg2: memref<2x256xi32, #tpu.memory_space<vmem>>, %arg3: memref<4x2x256xf32, #tpu.memory_space<vmem>>, %arg4: memref<4x2x256xf32, #tpu.memory_space<vmem>>) attributes {dimension_semantics = [], scalar_prefetch = 0 : i64, scratch_operands = 0 : i64, tpu.core_type = #tpu.core_type<tc>} {
    %c0 = arith.constant 0 : index
    %c0_0 = arith.constant 0 : index
    %0 = vector.load %arg2[%c0, %c0_0] : memref<2x256xi32, #tpu.memory_space<vmem>>, vector<1x256xi32>
    %1 = vector.shape_cast %0 : vector<1x256xi32> to vector<1x256xi32>
    %2 = vector.broadcast %1 : vector<1x256xi32> to vector<2x256xi32>
    %c1 = arith.constant 1 : index
    %c0_1 = arith.constant 0 : index
    %3 = vector.load %arg2[%c1, %c0_1] : memref<2x256xi32, #tpu.memory_space<vmem>>, vector<1x256xi32>
    %4 = vector.shape_cast %3 : vector<1x256xi32> to vector<1x256xi32>
    %5 = vector.broadcast %4 : vector<1x256xi32> to vector<2x256xi32>
    %c0_2 = arith.constant 0 : index
    %c0_3 = arith.constant 0 : index
    %c0_4 = arith.constant 0 : index
    %6 = vector.load %arg3[%c0_2, %c0_3, %c0_4] : memref<4x2x256xf32, #tpu.memory_space<vmem>>, vector<1x2x256xf32>
    %7 = vector.shape_cast %6 : vector<1x2x256xf32> to vector<2x256xf32>
    %cst = arith.constant 0.000000e+00 : f32
    %8 = vector.broadcast %cst : f32 to vector<2x256xf32>
    %9 = arith.maximumf %7, %8 : vector<2x256xf32>
    %c1_5 = arith.constant 1 : index
    %c0_6 = arith.constant 0 : index
    %c0_7 = arith.constant 0 : index
    %10 = vector.load %arg3[%c1_5, %c0_6, %c0_7] : memref<4x2x256xf32, #tpu.memory_space<vmem>>, vector<1x2x256xf32>
    %11 = vector.shape_cast %10 : vector<1x2x256xf32> to vector<2x256xf32>
    %cst_8 = arith.constant 0.000000e+00 : f32
    %12 = vector.broadcast %cst_8 : f32 to vector<2x256xf32>
    %13 = arith.maximumf %11, %12 : vector<2x256xf32>
    %c2 = arith.constant 2 : index
    %c0_9 = arith.constant 0 : index
    %c0_10 = arith.constant 0 : index
    %14 = vector.load %arg3[%c2, %c0_9, %c0_10] : memref<4x2x256xf32, #tpu.memory_space<vmem>>, vector<1x2x256xf32>
    %15 = vector.shape_cast %14 : vector<1x2x256xf32> to vector<2x256xf32>
    %cst_11 = arith.constant 0.000000e+00 : f32
    %16 = vector.broadcast %cst_11 : f32 to vector<2x256xf32>
    %17 = arith.maximumf %15, %16 : vector<2x256xf32>
    %c3 = arith.constant 3 : index
    %c0_12 = arith.constant 0 : index
    %c0_13 = arith.constant 0 : index
    %18 = vector.load %arg3[%c3, %c0_12, %c0_13] : memref<4x2x256xf32, #tpu.memory_space<vmem>>, vector<1x2x256xf32>
    %19 = vector.shape_cast %18 : vector<1x2x256xf32> to vector<2x256xf32>
    %cst_14 = arith.constant 0.000000e+00 : f32
    %20 = vector.broadcast %cst_14 : f32 to vector<2x256xf32>
    %21 = arith.maximumf %19, %20 : vector<2x256xf32>
    %cst_15 = arith.constant 0.000000e+00 : f32
    %22 = vector.broadcast %cst_15 : f32 to vector<2x256xf32>
    %cst_16 = arith.constant 0.000000e+00 : f32
    %23 = vector.broadcast %cst_16 : f32 to vector<2x256xf32>
    %cst_17 = arith.constant 0.000000e+00 : f32
    %24 = vector.broadcast %cst_17 : f32 to vector<2x256xf32>
    %cst_18 = arith.constant 0.000000e+00 : f32
    %25 = vector.broadcast %cst_18 : f32 to vector<2x256xf32>
    %c-1_i32 = arith.constant -1 : i32
    %26 = vector.broadcast %c-1_i32 : i32 to vector<2x256xi32>
    %27 = arith.addi %2, %26 : vector<2x256xi32>
    %c0_i32 = arith.constant 0 : i32
    %28 = vector.broadcast %c0_i32 : i32 to vector<2x256xi32>
    %29 = arith.cmpi sge, %27, %28 : vector<2x256xi32>
    %c-1_i32_19 = arith.constant -1 : i32
    %30 = vector.broadcast %c-1_i32_19 : i32 to vector<2x256xi32>
    %31 = arith.addi %2, %30 : vector<2x256xi32>
    %c16_i32 = arith.constant 16 : i32
    %32 = vector.broadcast %c16_i32 : i32 to vector<2x256xi32>
    %33 = arith.cmpi slt, %31, %32 : vector<2x256xi32>
    %34 = arith.andi %29, %33 : vector<2x256xi1>
    %c-1_i32_20 = arith.constant -1 : i32
    %35 = vector.broadcast %c-1_i32_20 : i32 to vector<2x256xi32>
    %36 = arith.addi %5, %35 : vector<2x256xi32>
    %c0_i32_21 = arith.constant 0 : i32
    %37 = vector.broadcast %c0_i32_21 : i32 to vector<2x256xi32>
    %38 = arith.cmpi sge, %36, %37 : vector<2x256xi32>
    %39 = arith.andi %34, %38 : vector<2x256xi1>
    %c-1_i32_22 = arith.constant -1 : i32
    %40 = vector.broadcast %c-1_i32_22 : i32 to vector<2x256xi32>
    %41 = arith.addi %5, %40 : vector<2x256xi32>
    %c16_i32_23 = arith.constant 16 : i32
    %42 = vector.broadcast %c16_i32_23 : i32 to vector<2x256xi32>
    %43 = arith.cmpi slt, %41, %42 : vector<2x256xi32>
    %44 = arith.andi %39, %43 : vector<2x256xi1>
    %c17_i32 = arith.constant 17 : i32
    %45 = tpu.dynamic_rotate %9 by %c17_i32 dim 1 : vector<2x256xf32>, i32 -> vector<2x256xf32>
    %cst_24 = arith.constant 0.000000e+00 : f32
    %46 = vector.broadcast %cst_24 : f32 to vector<2x256xf32>
    %47 = arith.select %44, %45, %46 : vector<2x256xi1>, vector<2x256xf32>
    %c0_25 = arith.constant 0 : index
    %48 = memref.load %arg0[%c0_25] : memref<432xf32, #tpu.memory_space<smem>>
    %49 = vector.broadcast %48 : f32 to vector<2x256xf32>
    %50 = arith.mulf %49, %47 : vector<2x256xf32>
    %51 = arith.addf %22, %50 : vector<2x256xf32>
    %c1_26 = arith.constant 1 : index
    %52 = memref.load %arg0[%c1_26] : memref<432xf32, #tpu.memory_space<smem>>
    %53 = vector.broadcast %52 : f32 to vector<2x256xf32>
    %54 = arith.mulf %53, %47 : vector<2x256xf32>
    %55 = arith.addf %23, %54 : vector<2x256xf32>
    %c2_27 = arith.constant 2 : index
    %56 = memref.load %arg0[%c2_27] : memref<432xf32, #tpu.memory_space<smem>>
    %57 = vector.broadcast %56 : f32 to vector<2x256xf32>
    %58 = arith.mulf %57, %47 : vector<2x256xf32>
    %59 = arith.addf %24, %58 : vector<2x256xf32>
    %c3_28 = arith.constant 3 : index
    %60 = memref.load %arg0[%c3_28] : memref<432xf32, #tpu.memory_space<smem>>
    %61 = vector.broadcast %60 : f32 to vector<2x256xf32>
    %62 = arith.mulf %61, %47 : vector<2x256xf32>
    %63 = arith.addf %25, %62 : vector<2x256xf32>
    %c17_i32_29 = arith.constant 17 : i32
    %64 = tpu.dynamic_rotate %13 by %c17_i32_29 dim 1 : vector<2x256xf32>, i32 -> vector<2x256xf32>
    %cst_30 = arith.constant 0.000000e+00 : f32
    %65 = vector.broadcast %cst_30 : f32 to vector<2x256xf32>
    %66 = arith.select %44, %64, %65 : vector<2x256xi1>, vector<2x256xf32>
    %c4 = arith.constant 4 : index
    %67 = memref.load %arg0[%c4] : memref<432xf32, #tpu.memory_space<smem>>
    %68 = vector.broadcast %67 : f32 to vector<2x256xf32>
    %69 = arith.mulf %68, %66 : vector<2x256xf32>
    %70 = arith.addf %51, %69 : vector<2x256xf32>
    %c5 = arith.constant 5 : index
    %71 = memref.load %arg0[%c5] : memref<432xf32, #tpu.memory_space<smem>>
    %72 = vector.broadcast %71 : f32 to vector<2x256xf32>
    %73 = arith.mulf %72, %66 : vector<2x256xf32>
    %74 = arith.addf %55, %73 : vector<2x256xf32>
    %c6 = arith.constant 6 : index
    %75 = memref.load %arg0[%c6] : memref<432xf32, #tpu.memory_space<smem>>
    %76 = vector.broadcast %75 : f32 to vector<2x256xf32>
    %77 = arith.mulf %76, %66 : vector<2x256xf32>
    %78 = arith.addf %59, %77 : vector<2x256xf32>
    %c7 = arith.constant 7 : index
    %79 = memref.load %arg0[%c7] : memref<432xf32, #tpu.memory_space<smem>>
    %80 = vector.broadcast %79 : f32 to vector<2x256xf32>
    %81 = arith.mulf %80, %66 : vector<2x256xf32>
    %82 = arith.addf %63, %81 : vector<2x256xf32>
    %c17_i32_31 = arith.constant 17 : i32
    %83 = tpu.dynamic_rotate %17 by %c17_i32_31 dim 1 : vector<2x256xf32>, i32 -> vector<2x256xf32>
    %cst_32 = arith.constant 0.000000e+00 : f32
    %84 = vector.broadcast %cst_32 : f32 to vector<2x256xf32>
    %85 = arith.select %44, %83, %84 : vector<2x256xi1>, vector<2x256xf32>
    %c8 = arith.constant 8 : index
    %86 = memref.load %arg0[%c8] : memref<432xf32, #tpu.memory_space<smem>>
    %87 = vector.broadcast %86 : f32 to vector<2x256xf32>
    %88 = arith.mulf %87, %85 : vector<2x256xf32>
    %89 = arith.addf %70, %88 : vector<2x256xf32>
    %c9 = arith.constant 9 : index
    %90 = memref.load %arg0[%c9] : memref<432xf32, #tpu.memory_space<smem>>
    %91 = vector.broadcast %90 : f32 to vector<2x256xf32>
    %92 = arith.mulf %91, %85 : vector<2x256xf32>
    %93 = arith.addf %74, %92 : vector<2x256xf32>
    %c10 = arith.constant 10 : index
    %94 = memref.load %arg0[%c10] : memref<432xf32, #tpu.memory_space<smem>>
    %95 = vector.broadcast %94 : f32 to vector<2x256xf32>
    %96 = arith.mulf %95, %85 : vector<2x256xf32>
    %97 = arith.addf %78, %96 : vector<2x256xf32>
    %c11 = arith.constant 11 : index
    %98 = memref.load %arg0[%c11] : memref<432xf32, #tpu.memory_space<smem>>
    %99 = vector.broadcast %98 : f32 to vector<2x256xf32>
    %100 = arith.mulf %99, %85 : vector<2x256xf32>
    %101 = arith.addf %82, %100 : vector<2x256xf32>
    %c17_i32_33 = arith.constant 17 : i32
    %102 = tpu.dynamic_rotate %21 by %c17_i32_33 dim 1 : vector<2x256xf32>, i32 -> vector<2x256xf32>
    %cst_34 = arith.constant 0.000000e+00 : f32
    %103 = vector.broadcast %cst_34 : f32 to vector<2x256xf32>
    %104 = arith.select %44, %102, %103 : vector<2x256xi1>, vector<2x256xf32>
    %c12 = arith.constant 12 : index
    %105 = memref.load %arg0[%c12] : memref<432xf32, #tpu.memory_space<smem>>
    %106 = vector.broadcast %105 : f32 to vector<2x256xf32>
    %107 = arith.mulf %106, %104 : vector<2x256xf32>
    %108 = arith.addf %89, %107 : vector<2x256xf32>
    %c13 = arith.constant 13 : index
    %109 = memref.load %arg0[%c13] : memref<432xf32, #tpu.memory_space<smem>>
    %110 = vector.broadcast %109 : f32 to vector<2x256xf32>
    %111 = arith.mulf %110, %104 : vector<2x256xf32>
    %112 = arith.addf %93, %111 : vector<2x256xf32>
    %c14 = arith.constant 14 : index
    %113 = memref.load %arg0[%c14] : memref<432xf32, #tpu.memory_space<smem>>
    %114 = vector.broadcast %113 : f32 to vector<2x256xf32>
    %115 = arith.mulf %114, %104 : vector<2x256xf32>
    %116 = arith.addf %97, %115 : vector<2x256xf32>
    %c15 = arith.constant 15 : index
    %117 = memref.load %arg0[%c15] : memref<432xf32, #tpu.memory_space<smem>>
    %118 = vector.broadcast %117 : f32 to vector<2x256xf32>
    %119 = arith.mulf %118, %104 : vector<2x256xf32>
    %120 = arith.addf %101, %119 : vector<2x256xf32>
    %c-1_i32_35 = arith.constant -1 : i32
    %121 = vector.broadcast %c-1_i32_35 : i32 to vector<2x256xi32>
    %122 = arith.addi %2, %121 : vector<2x256xi32>
    %c0_i32_36 = arith.constant 0 : i32
    %123 = vector.broadcast %c0_i32_36 : i32 to vector<2x256xi32>
    %124 = arith.cmpi sge, %122, %123 : vector<2x256xi32>
    %c-1_i32_37 = arith.constant -1 : i32
    %125 = vector.broadcast %c-1_i32_37 : i32 to vector<2x256xi32>
    %126 = arith.addi %2, %125 : vector<2x256xi32>
    %c16_i32_38 = arith.constant 16 : i32
    %127 = vector.broadcast %c16_i32_38 : i32 to vector<2x256xi32>
    %128 = arith.cmpi slt, %126, %127 : vector<2x256xi32>
    %129 = arith.andi %124, %128 : vector<2x256xi1>
    %c0_i32_39 = arith.constant 0 : i32
    %130 = vector.broadcast %c0_i32_39 : i32 to vector<2x256xi32>
    %131 = arith.addi %5, %130 : vector<2x256xi32>
    %c0_i32_40 = arith.constant 0 : i32
    %132 = vector.broadcast %c0_i32_40 : i32 to vector<2x256xi32>
    %133 = arith.cmpi sge, %131, %132 : vector<2x256xi32>
    %134 = arith.andi %129, %133 : vector<2x256xi1>
    %c0_i32_41 = arith.constant 0 : i32
    %135 = vector.broadcast %c0_i32_41 : i32 to vector<2x256xi32>
    %136 = arith.addi %5, %135 : vector<2x256xi32>
    %c16_i32_42 = arith.constant 16 : i32
    %137 = vector.broadcast %c16_i32_42 : i32 to vector<2x256xi32>
    %138 = arith.cmpi slt, %136, %137 : vector<2x256xi32>
    %139 = arith.andi %134, %138 : vector<2x256xi1>
    %c16_i32_43 = arith.constant 16 : i32
    %140 = tpu.dynamic_rotate %9 by %c16_i32_43 dim 1 : vector<2x256xf32>, i32 -> vector<2x256xf32>
    %cst_44 = arith.constant 0.000000e+00 : f32
    %141 = vector.broadcast %cst_44 : f32 to vector<2x256xf32>
    %142 = arith.select %139, %140, %141 : vector<2x256xi1>, vector<2x256xf32>
    %c16 = arith.constant 16 : index
    %143 = memref.load %arg0[%c16] : memref<432xf32, #tpu.memory_space<smem>>
    %144 = vector.broadcast %143 : f32 to vector<2x256xf32>
    %145 = arith.mulf %144, %142 : vector<2x256xf32>
    %146 = arith.addf %108, %145 : vector<2x256xf32>
    %c17 = arith.constant 17 : index
    %147 = memref.load %arg0[%c17] : memref<432xf32, #tpu.memory_space<smem>>
    %148 = vector.broadcast %147 : f32 to vector<2x256xf32>
    %149 = arith.mulf %148, %142 : vector<2x256xf32>
    %150 = arith.addf %112, %149 : vector<2x256xf32>
    %c18 = arith.constant 18 : index
    %151 = memref.load %arg0[%c18] : memref<432xf32, #tpu.memory_space<smem>>
    %152 = vector.broadcast %151 : f32 to vector<2x256xf32>
    %153 = arith.mulf %152, %142 : vector<2x256xf32>
    %154 = arith.addf %116, %153 : vector<2x256xf32>
    %c19 = arith.constant 19 : index
    %155 = memref.load %arg0[%c19] : memref<432xf32, #tpu.memory_space<smem>>
    %156 = vector.broadcast %155 : f32 to vector<2x256xf32>
    %157 = arith.mulf %156, %142 : vector<2x256xf32>
    %158 = arith.addf %120, %157 : vector<2x256xf32>
    %c16_i32_45 = arith.constant 16 : i32
    %159 = tpu.dynamic_rotate %13 by %c16_i32_45 dim 1 : vector<2x256xf32>, i32 -> vector<2x256xf32>
    %cst_46 = arith.constant 0.000000e+00 : f32
    %160 = vector.broadcast %cst_46 : f32 to vector<2x256xf32>
    %161 = arith.select %139, %159, %160 : vector<2x256xi1>, vector<2x256xf32>
    %c20 = arith.constant 20 : index
    %162 = memref.load %arg0[%c20] : memref<432xf32, #tpu.memory_space<smem>>
    %163 = vector.broadcast %162 : f32 to vector<2x256xf32>
    %164 = arith.mulf %163, %161 : vector<2x256xf32>
    %165 = arith.addf %146, %164 : vector<2x256xf32>
    %c21 = arith.constant 21 : index
    %166 = memref.load %arg0[%c21] : memref<432xf32, #tpu.memory_space<smem>>
    %167 = vector.broadcast %166 : f32 to vector<2x256xf32>
    %168 = arith.mulf %167, %161 : vector<2x256xf32>
    %169 = arith.addf %150, %168 : vector<2x256xf32>
    %c22 = arith.constant 22 : index
    %170 = memref.load %arg0[%c22] : memref<432xf32, #tpu.memory_space<smem>>
    %171 = vector.broadcast %170 : f32 to vector<2x256xf32>
    %172 = arith.mulf %171, %161 : vector<2x256xf32>
    %173 = arith.addf %154, %172 : vector<2x256xf32>
    %c23 = arith.constant 23 : index
    %174 = memref.load %arg0[%c23] : memref<432xf32, #tpu.memory_space<smem>>
    %175 = vector.broadcast %174 : f32 to vector<2x256xf32>
    %176 = arith.mulf %175, %161 : vector<2x256xf32>
    %177 = arith.addf %158, %176 : vector<2x256xf32>
    %c16_i32_47 = arith.constant 16 : i32
    %178 = tpu.dynamic_rotate %17 by %c16_i32_47 dim 1 : vector<2x256xf32>, i32 -> vector<2x256xf32>
    %cst_48 = arith.constant 0.000000e+00 : f32
    %179 = vector.broadcast %cst_48 : f32 to vector<2x256xf32>
    %180 = arith.select %139, %178, %179 : vector<2x256xi1>, vector<2x256xf32>
    %c24 = arith.constant 24 : index
    %181 = memref.load %arg0[%c24] : memref<432xf32, #tpu.memory_space<smem>>
    %182 = vector.broadcast %181 : f32 to vector<2x256xf32>
    %183 = arith.mulf %182, %180 : vector<2x256xf32>
    %184 = arith.addf %165, %183 : vector<2x256xf32>
    %c25 = arith.constant 25 : index
    %185 = memref.load %arg0[%c25] : memref<432xf32, #tpu.memory_space<smem>>
    %186 = vector.broadcast %185 : f32 to vector<2x256xf32>
    %187 = arith.mulf %186, %180 : vector<2x256xf32>
    %188 = arith.addf %169, %187 : vector<2x256xf32>
    %c26 = arith.constant 26 : index
    %189 = memref.load %arg0[%c26] : memref<432xf32, #tpu.memory_space<smem>>
    %190 = vector.broadcast %189 : f32 to vector<2x256xf32>
    %191 = arith.mulf %190, %180 : vector<2x256xf32>
    %192 = arith.addf %173, %191 : vector<2x256xf32>
    %c27 = arith.constant 27 : index
    %193 = memref.load %arg0[%c27] : memref<432xf32, #tpu.memory_space<smem>>
    %194 = vector.broadcast %193 : f32 to vector<2x256xf32>
    %195 = arith.mulf %194, %180 : vector<2x256xf32>
    %196 = arith.addf %177, %195 : vector<2x256xf32>
    %c16_i32_49 = arith.constant 16 : i32
    %197 = tpu.dynamic_rotate %21 by %c16_i32_49 dim 1 : vector<2x256xf32>, i32 -> vector<2x256xf32>
    %cst_50 = arith.constant 0.000000e+00 : f32
    %198 = vector.broadcast %cst_50 : f32 to vector<2x256xf32>
    %199 = arith.select %139, %197, %198 : vector<2x256xi1>, vector<2x256xf32>
    %c28 = arith.constant 28 : index
    %200 = memref.load %arg0[%c28] : memref<432xf32, #tpu.memory_space<smem>>
    %201 = vector.broadcast %200 : f32 to vector<2x256xf32>
    %202 = arith.mulf %201, %199 : vector<2x256xf32>
    %203 = arith.addf %184, %202 : vector<2x256xf32>
    %c29 = arith.constant 29 : index
    %204 = memref.load %arg0[%c29] : memref<432xf32, #tpu.memory_space<smem>>
    %205 = vector.broadcast %204 : f32 to vector<2x256xf32>
    %206 = arith.mulf %205, %199 : vector<2x256xf32>
    %207 = arith.addf %188, %206 : vector<2x256xf32>
    %c30 = arith.constant 30 : index
    %208 = memref.load %arg0[%c30] : memref<432xf32, #tpu.memory_space<smem>>
    %209 = vector.broadcast %208 : f32 to vector<2x256xf32>
    %210 = arith.mulf %209, %199 : vector<2x256xf32>
    %211 = arith.addf %192, %210 : vector<2x256xf32>
    %c31 = arith.constant 31 : index
    %212 = memref.load %arg0[%c31] : memref<432xf32, #tpu.memory_space<smem>>
    %213 = vector.broadcast %212 : f32 to vector<2x256xf32>
    %214 = arith.mulf %213, %199 : vector<2x256xf32>
    %215 = arith.addf %196, %214 : vector<2x256xf32>
    %c-1_i32_51 = arith.constant -1 : i32
    %216 = vector.broadcast %c-1_i32_51 : i32 to vector<2x256xi32>
    %217 = arith.addi %2, %216 : vector<2x256xi32>
    %c0_i32_52 = arith.constant 0 : i32
    %218 = vector.broadcast %c0_i32_52 : i32 to vector<2x256xi32>
    %219 = arith.cmpi sge, %217, %218 : vector<2x256xi32>
    %c-1_i32_53 = arith.constant -1 : i32
    %220 = vector.broadcast %c-1_i32_53 : i32 to vector<2x256xi32>
    %221 = arith.addi %2, %220 : vector<2x256xi32>
    %c16_i32_54 = arith.constant 16 : i32
    %222 = vector.broadcast %c16_i32_54 : i32 to vector<2x256xi32>
    %223 = arith.cmpi slt, %221, %222 : vector<2x256xi32>
    %224 = arith.andi %219, %223 : vector<2x256xi1>
    %c1_i32 = arith.constant 1 : i32
    %225 = vector.broadcast %c1_i32 : i32 to vector<2x256xi32>
    %226 = arith.addi %5, %225 : vector<2x256xi32>
    %c0_i32_55 = arith.constant 0 : i32
    %227 = vector.broadcast %c0_i32_55 : i32 to vector<2x256xi32>
    %228 = arith.cmpi sge, %226, %227 : vector<2x256xi32>
    %229 = arith.andi %224, %228 : vector<2x256xi1>
    %c1_i32_56 = arith.constant 1 : i32
    %230 = vector.broadcast %c1_i32_56 : i32 to vector<2x256xi32>
    %231 = arith.addi %5, %230 : vector<2x256xi32>
    %c16_i32_57 = arith.constant 16 : i32
    %232 = vector.broadcast %c16_i32_57 : i32 to vector<2x256xi32>
    %233 = arith.cmpi slt, %231, %232 : vector<2x256xi32>
    %234 = arith.andi %229, %233 : vector<2x256xi1>
    %c15_i32 = arith.constant 15 : i32
    %235 = tpu.dynamic_rotate %9 by %c15_i32 dim 1 : vector<2x256xf32>, i32 -> vector<2x256xf32>
    %cst_58 = arith.constant 0.000000e+00 : f32
    %236 = vector.broadcast %cst_58 : f32 to vector<2x256xf32>
    %237 = arith.select %234, %235, %236 : vector<2x256xi1>, vector<2x256xf32>
    %c32 = arith.constant 32 : index
    %238 = memref.load %arg0[%c32] : memref<432xf32, #tpu.memory_space<smem>>
    %239 = vector.broadcast %238 : f32 to vector<2x256xf32>
    %240 = arith.mulf %239, %237 : vector<2x256xf32>
    %241 = arith.addf %203, %240 : vector<2x256xf32>
    %c33 = arith.constant 33 : index
    %242 = memref.load %arg0[%c33] : memref<432xf32, #tpu.memory_space<smem>>
    %243 = vector.broadcast %242 : f32 to vector<2x256xf32>
    %244 = arith.mulf %243, %237 : vector<2x256xf32>
    %245 = arith.addf %207, %244 : vector<2x256xf32>
    %c34 = arith.constant 34 : index
    %246 = memref.load %arg0[%c34] : memref<432xf32, #tpu.memory_space<smem>>
    %247 = vector.broadcast %246 : f32 to vector<2x256xf32>
    %248 = arith.mulf %247, %237 : vector<2x256xf32>
    %249 = arith.addf %211, %248 : vector<2x256xf32>
    %c35 = arith.constant 35 : index
    %250 = memref.load %arg0[%c35] : memref<432xf32, #tpu.memory_space<smem>>
    %251 = vector.broadcast %250 : f32 to vector<2x256xf32>
    %252 = arith.mulf %251, %237 : vector<2x256xf32>
    %253 = arith.addf %215, %252 : vector<2x256xf32>
    %c15_i32_59 = arith.constant 15 : i32
    %254 = tpu.dynamic_rotate %13 by %c15_i32_59 dim 1 : vector<2x256xf32>, i32 -> vector<2x256xf32>
    %cst_60 = arith.constant 0.000000e+00 : f32
    %255 = vector.broadcast %cst_60 : f32 to vector<2x256xf32>
    %256 = arith.select %234, %254, %255 : vector<2x256xi1>, vector<2x256xf32>
    %c36 = arith.constant 36 : index
    %257 = memref.load %arg0[%c36] : memref<432xf32, #tpu.memory_space<smem>>
    %258 = vector.broadcast %257 : f32 to vector<2x256xf32>
    %259 = arith.mulf %258, %256 : vector<2x256xf32>
    %260 = arith.addf %241, %259 : vector<2x256xf32>
    %c37 = arith.constant 37 : index
    %261 = memref.load %arg0[%c37] : memref<432xf32, #tpu.memory_space<smem>>
    %262 = vector.broadcast %261 : f32 to vector<2x256xf32>
    %263 = arith.mulf %262, %256 : vector<2x256xf32>
    %264 = arith.addf %245, %263 : vector<2x256xf32>
    %c38 = arith.constant 38 : index
    %265 = memref.load %arg0[%c38] : memref<432xf32, #tpu.memory_space<smem>>
    %266 = vector.broadcast %265 : f32 to vector<2x256xf32>
    %267 = arith.mulf %266, %256 : vector<2x256xf32>
    %268 = arith.addf %249, %267 : vector<2x256xf32>
    %c39 = arith.constant 39 : index
    %269 = memref.load %arg0[%c39] : memref<432xf32, #tpu.memory_space<smem>>
    %270 = vector.broadcast %269 : f32 to vector<2x256xf32>
    %271 = arith.mulf %270, %256 : vector<2x256xf32>
    %272 = arith.addf %253, %271 : vector<2x256xf32>
    %c15_i32_61 = arith.constant 15 : i32
    %273 = tpu.dynamic_rotate %17 by %c15_i32_61 dim 1 : vector<2x256xf32>, i32 -> vector<2x256xf32>
    %cst_62 = arith.constant 0.000000e+00 : f32
    %274 = vector.broadcast %cst_62 : f32 to vector<2x256xf32>
    %275 = arith.select %234, %273, %274 : vector<2x256xi1>, vector<2x256xf32>
    %c40 = arith.constant 40 : index
    %276 = memref.load %arg0[%c40] : memref<432xf32, #tpu.memory_space<smem>>
    %277 = vector.broadcast %276 : f32 to vector<2x256xf32>
    %278 = arith.mulf %277, %275 : vector<2x256xf32>
    %279 = arith.addf %260, %278 : vector<2x256xf32>
    %c41 = arith.constant 41 : index
    %280 = memref.load %arg0[%c41] : memref<432xf32, #tpu.memory_space<smem>>
    %281 = vector.broadcast %280 : f32 to vector<2x256xf32>
    %282 = arith.mulf %281, %275 : vector<2x256xf32>
    %283 = arith.addf %264, %282 : vector<2x256xf32>
    %c42 = arith.constant 42 : index
    %284 = memref.load %arg0[%c42] : memref<432xf32, #tpu.memory_space<smem>>
    %285 = vector.broadcast %284 : f32 to vector<2x256xf32>
    %286 = arith.mulf %285, %275 : vector<2x256xf32>
    %287 = arith.addf %268, %286 : vector<2x256xf32>
    %c43 = arith.constant 43 : index
    %288 = memref.load %arg0[%c43] : memref<432xf32, #tpu.memory_space<smem>>
    %289 = vector.broadcast %288 : f32 to vector<2x256xf32>
    %290 = arith.mulf %289, %275 : vector<2x256xf32>
    %291 = arith.addf %272, %290 : vector<2x256xf32>
    %c15_i32_63 = arith.constant 15 : i32
    %292 = tpu.dynamic_rotate %21 by %c15_i32_63 dim 1 : vector<2x256xf32>, i32 -> vector<2x256xf32>
    %cst_64 = arith.constant 0.000000e+00 : f32
    %293 = vector.broadcast %cst_64 : f32 to vector<2x256xf32>
    %294 = arith.select %234, %292, %293 : vector<2x256xi1>, vector<2x256xf32>
    %c44 = arith.constant 44 : index
    %295 = memref.load %arg0[%c44] : memref<432xf32, #tpu.memory_space<smem>>
    %296 = vector.broadcast %295 : f32 to vector<2x256xf32>
    %297 = arith.mulf %296, %294 : vector<2x256xf32>
    %298 = arith.addf %279, %297 : vector<2x256xf32>
    %c45 = arith.constant 45 : index
    %299 = memref.load %arg0[%c45] : memref<432xf32, #tpu.memory_space<smem>>
    %300 = vector.broadcast %299 : f32 to vector<2x256xf32>
    %301 = arith.mulf %300, %294 : vector<2x256xf32>
    %302 = arith.addf %283, %301 : vector<2x256xf32>
    %c46 = arith.constant 46 : index
    %303 = memref.load %arg0[%c46] : memref<432xf32, #tpu.memory_space<smem>>
    %304 = vector.broadcast %303 : f32 to vector<2x256xf32>
    %305 = arith.mulf %304, %294 : vector<2x256xf32>
    %306 = arith.addf %287, %305 : vector<2x256xf32>
    %c47 = arith.constant 47 : index
    %307 = memref.load %arg0[%c47] : memref<432xf32, #tpu.memory_space<smem>>
    %308 = vector.broadcast %307 : f32 to vector<2x256xf32>
    %309 = arith.mulf %308, %294 : vector<2x256xf32>
    %310 = arith.addf %291, %309 : vector<2x256xf32>
    %c0_i32_65 = arith.constant 0 : i32
    %311 = vector.broadcast %c0_i32_65 : i32 to vector<2x256xi32>
    %312 = arith.addi %2, %311 : vector<2x256xi32>
    %c0_i32_66 = arith.constant 0 : i32
    %313 = vector.broadcast %c0_i32_66 : i32 to vector<2x256xi32>
    %314 = arith.cmpi sge, %312, %313 : vector<2x256xi32>
    %c0_i32_67 = arith.constant 0 : i32
    %315 = vector.broadcast %c0_i32_67 : i32 to vector<2x256xi32>
    %316 = arith.addi %2, %315 : vector<2x256xi32>
    %c16_i32_68 = arith.constant 16 : i32
    %317 = vector.broadcast %c16_i32_68 : i32 to vector<2x256xi32>
    %318 = arith.cmpi slt, %316, %317 : vector<2x256xi32>
    %319 = arith.andi %314, %318 : vector<2x256xi1>
    %c-1_i32_69 = arith.constant -1 : i32
    %320 = vector.broadcast %c-1_i32_69 : i32 to vector<2x256xi32>
    %321 = arith.addi %5, %320 : vector<2x256xi32>
    %c0_i32_70 = arith.constant 0 : i32
    %322 = vector.broadcast %c0_i32_70 : i32 to vector<2x256xi32>
    %323 = arith.cmpi sge, %321, %322 : vector<2x256xi32>
    %324 = arith.andi %319, %323 : vector<2x256xi1>
    %c-1_i32_71 = arith.constant -1 : i32
    %325 = vector.broadcast %c-1_i32_71 : i32 to vector<2x256xi32>
    %326 = arith.addi %5, %325 : vector<2x256xi32>
    %c16_i32_72 = arith.constant 16 : i32
    %327 = vector.broadcast %c16_i32_72 : i32 to vector<2x256xi32>
    %328 = arith.cmpi slt, %326, %327 : vector<2x256xi32>
    %329 = arith.andi %324, %328 : vector<2x256xi1>
    %c1_i32_73 = arith.constant 1 : i32
    %330 = tpu.dynamic_rotate %9 by %c1_i32_73 dim 1 : vector<2x256xf32>, i32 -> vector<2x256xf32>
    %cst_74 = arith.constant 0.000000e+00 : f32
    %331 = vector.broadcast %cst_74 : f32 to vector<2x256xf32>
    %332 = arith.select %329, %330, %331 : vector<2x256xi1>, vector<2x256xf32>
    %c48 = arith.constant 48 : index
    %333 = memref.load %arg0[%c48] : memref<432xf32, #tpu.memory_space<smem>>
    %334 = vector.broadcast %333 : f32 to vector<2x256xf32>
    %335 = arith.mulf %334, %332 : vector<2x256xf32>
    %336 = arith.addf %298, %335 : vector<2x256xf32>
    %c49 = arith.constant 49 : index
    %337 = memref.load %arg0[%c49] : memref<432xf32, #tpu.memory_space<smem>>
    %338 = vector.broadcast %337 : f32 to vector<2x256xf32>
    %339 = arith.mulf %338, %332 : vector<2x256xf32>
    %340 = arith.addf %302, %339 : vector<2x256xf32>
    %c50 = arith.constant 50 : index
    %341 = memref.load %arg0[%c50] : memref<432xf32, #tpu.memory_space<smem>>
    %342 = vector.broadcast %341 : f32 to vector<2x256xf32>
    %343 = arith.mulf %342, %332 : vector<2x256xf32>
    %344 = arith.addf %306, %343 : vector<2x256xf32>
    %c51 = arith.constant 51 : index
    %345 = memref.load %arg0[%c51] : memref<432xf32, #tpu.memory_space<smem>>
    %346 = vector.broadcast %345 : f32 to vector<2x256xf32>
    %347 = arith.mulf %346, %332 : vector<2x256xf32>
    %348 = arith.addf %310, %347 : vector<2x256xf32>
    %c1_i32_75 = arith.constant 1 : i32
    %349 = tpu.dynamic_rotate %13 by %c1_i32_75 dim 1 : vector<2x256xf32>, i32 -> vector<2x256xf32>
    %cst_76 = arith.constant 0.000000e+00 : f32
    %350 = vector.broadcast %cst_76 : f32 to vector<2x256xf32>
    %351 = arith.select %329, %349, %350 : vector<2x256xi1>, vector<2x256xf32>
    %c52 = arith.constant 52 : index
    %352 = memref.load %arg0[%c52] : memref<432xf32, #tpu.memory_space<smem>>
    %353 = vector.broadcast %352 : f32 to vector<2x256xf32>
    %354 = arith.mulf %353, %351 : vector<2x256xf32>
    %355 = arith.addf %336, %354 : vector<2x256xf32>
    %c53 = arith.constant 53 : index
    %356 = memref.load %arg0[%c53] : memref<432xf32, #tpu.memory_space<smem>>
    %357 = vector.broadcast %356 : f32 to vector<2x256xf32>
    %358 = arith.mulf %357, %351 : vector<2x256xf32>
    %359 = arith.addf %340, %358 : vector<2x256xf32>
    %c54 = arith.constant 54 : index
    %360 = memref.load %arg0[%c54] : memref<432xf32, #tpu.memory_space<smem>>
    %361 = vector.broadcast %360 : f32 to vector<2x256xf32>
    %362 = arith.mulf %361, %351 : vector<2x256xf32>
    %363 = arith.addf %344, %362 : vector<2x256xf32>
    %c55 = arith.constant 55 : index
    %364 = memref.load %arg0[%c55] : memref<432xf32, #tpu.memory_space<smem>>
    %365 = vector.broadcast %364 : f32 to vector<2x256xf32>
    %366 = arith.mulf %365, %351 : vector<2x256xf32>
    %367 = arith.addf %348, %366 : vector<2x256xf32>
    %c1_i32_77 = arith.constant 1 : i32
    %368 = tpu.dynamic_rotate %17 by %c1_i32_77 dim 1 : vector<2x256xf32>, i32 -> vector<2x256xf32>
    %cst_78 = arith.constant 0.000000e+00 : f32
    %369 = vector.broadcast %cst_78 : f32 to vector<2x256xf32>
    %370 = arith.select %329, %368, %369 : vector<2x256xi1>, vector<2x256xf32>
    %c56 = arith.constant 56 : index
    %371 = memref.load %arg0[%c56] : memref<432xf32, #tpu.memory_space<smem>>
    %372 = vector.broadcast %371 : f32 to vector<2x256xf32>
    %373 = arith.mulf %372, %370 : vector<2x256xf32>
    %374 = arith.addf %355, %373 : vector<2x256xf32>
    %c57 = arith.constant 57 : index
    %375 = memref.load %arg0[%c57] : memref<432xf32, #tpu.memory_space<smem>>
    %376 = vector.broadcast %375 : f32 to vector<2x256xf32>
    %377 = arith.mulf %376, %370 : vector<2x256xf32>
    %378 = arith.addf %359, %377 : vector<2x256xf32>
    %c58 = arith.constant 58 : index
    %379 = memref.load %arg0[%c58] : memref<432xf32, #tpu.memory_space<smem>>
    %380 = vector.broadcast %379 : f32 to vector<2x256xf32>
    %381 = arith.mulf %380, %370 : vector<2x256xf32>
    %382 = arith.addf %363, %381 : vector<2x256xf32>
    %c59 = arith.constant 59 : index
    %383 = memref.load %arg0[%c59] : memref<432xf32, #tpu.memory_space<smem>>
    %384 = vector.broadcast %383 : f32 to vector<2x256xf32>
    %385 = arith.mulf %384, %370 : vector<2x256xf32>
    %386 = arith.addf %367, %385 : vector<2x256xf32>
    %c1_i32_79 = arith.constant 1 : i32
    %387 = tpu.dynamic_rotate %21 by %c1_i32_79 dim 1 : vector<2x256xf32>, i32 -> vector<2x256xf32>
    %cst_80 = arith.constant 0.000000e+00 : f32
    %388 = vector.broadcast %cst_80 : f32 to vector<2x256xf32>
    %389 = arith.select %329, %387, %388 : vector<2x256xi1>, vector<2x256xf32>
    %c60 = arith.constant 60 : index
    %390 = memref.load %arg0[%c60] : memref<432xf32, #tpu.memory_space<smem>>
    %391 = vector.broadcast %390 : f32 to vector<2x256xf32>
    %392 = arith.mulf %391, %389 : vector<2x256xf32>
    %393 = arith.addf %374, %392 : vector<2x256xf32>
    %c61 = arith.constant 61 : index
    %394 = memref.load %arg0[%c61] : memref<432xf32, #tpu.memory_space<smem>>
    %395 = vector.broadcast %394 : f32 to vector<2x256xf32>
    %396 = arith.mulf %395, %389 : vector<2x256xf32>
    %397 = arith.addf %378, %396 : vector<2x256xf32>
    %c62 = arith.constant 62 : index
    %398 = memref.load %arg0[%c62] : memref<432xf32, #tpu.memory_space<smem>>
    %399 = vector.broadcast %398 : f32 to vector<2x256xf32>
    %400 = arith.mulf %399, %389 : vector<2x256xf32>
    %401 = arith.addf %382, %400 : vector<2x256xf32>
    %c63 = arith.constant 63 : index
    %402 = memref.load %arg0[%c63] : memref<432xf32, #tpu.memory_space<smem>>
    %403 = vector.broadcast %402 : f32 to vector<2x256xf32>
    %404 = arith.mulf %403, %389 : vector<2x256xf32>
    %405 = arith.addf %386, %404 : vector<2x256xf32>
    %c64 = arith.constant 64 : index
    %406 = memref.load %arg0[%c64] : memref<432xf32, #tpu.memory_space<smem>>
    %407 = vector.broadcast %406 : f32 to vector<2x256xf32>
    %408 = arith.mulf %407, %9 : vector<2x256xf32>
    %409 = arith.addf %393, %408 : vector<2x256xf32>
    %c65 = arith.constant 65 : index
    %410 = memref.load %arg0[%c65] : memref<432xf32, #tpu.memory_space<smem>>
    %411 = vector.broadcast %410 : f32 to vector<2x256xf32>
    %412 = arith.mulf %411, %9 : vector<2x256xf32>
    %413 = arith.addf %397, %412 : vector<2x256xf32>
    %c66 = arith.constant 66 : index
    %414 = memref.load %arg0[%c66] : memref<432xf32, #tpu.memory_space<smem>>
    %415 = vector.broadcast %414 : f32 to vector<2x256xf32>
    %416 = arith.mulf %415, %9 : vector<2x256xf32>
    %417 = arith.addf %401, %416 : vector<2x256xf32>
    %c67 = arith.constant 67 : index
    %418 = memref.load %arg0[%c67] : memref<432xf32, #tpu.memory_space<smem>>
    %419 = vector.broadcast %418 : f32 to vector<2x256xf32>
    %420 = arith.mulf %419, %9 : vector<2x256xf32>
    %421 = arith.addf %405, %420 : vector<2x256xf32>
    %c68 = arith.constant 68 : index
    %422 = memref.load %arg0[%c68] : memref<432xf32, #tpu.memory_space<smem>>
    %423 = vector.broadcast %422 : f32 to vector<2x256xf32>
    %424 = arith.mulf %423, %13 : vector<2x256xf32>
    %425 = arith.addf %409, %424 : vector<2x256xf32>
    %c69 = arith.constant 69 : index
    %426 = memref.load %arg0[%c69] : memref<432xf32, #tpu.memory_space<smem>>
    %427 = vector.broadcast %426 : f32 to vector<2x256xf32>
    %428 = arith.mulf %427, %13 : vector<2x256xf32>
    %429 = arith.addf %413, %428 : vector<2x256xf32>
    %c70 = arith.constant 70 : index
    %430 = memref.load %arg0[%c70] : memref<432xf32, #tpu.memory_space<smem>>
    %431 = vector.broadcast %430 : f32 to vector<2x256xf32>
    %432 = arith.mulf %431, %13 : vector<2x256xf32>
    %433 = arith.addf %417, %432 : vector<2x256xf32>
    %c71 = arith.constant 71 : index
    %434 = memref.load %arg0[%c71] : memref<432xf32, #tpu.memory_space<smem>>
    %435 = vector.broadcast %434 : f32 to vector<2x256xf32>
    %436 = arith.mulf %435, %13 : vector<2x256xf32>
    %437 = arith.addf %421, %436 : vector<2x256xf32>
    %c72 = arith.constant 72 : index
    %438 = memref.load %arg0[%c72] : memref<432xf32, #tpu.memory_space<smem>>
    %439 = vector.broadcast %438 : f32 to vector<2x256xf32>
    %440 = arith.mulf %439, %17 : vector<2x256xf32>
    %441 = arith.addf %425, %440 : vector<2x256xf32>
    %c73 = arith.constant 73 : index
    %442 = memref.load %arg0[%c73] : memref<432xf32, #tpu.memory_space<smem>>
    %443 = vector.broadcast %442 : f32 to vector<2x256xf32>
    %444 = arith.mulf %443, %17 : vector<2x256xf32>
    %445 = arith.addf %429, %444 : vector<2x256xf32>
    %c74 = arith.constant 74 : index
    %446 = memref.load %arg0[%c74] : memref<432xf32, #tpu.memory_space<smem>>
    %447 = vector.broadcast %446 : f32 to vector<2x256xf32>
    %448 = arith.mulf %447, %17 : vector<2x256xf32>
    %449 = arith.addf %433, %448 : vector<2x256xf32>
    %c75 = arith.constant 75 : index
    %450 = memref.load %arg0[%c75] : memref<432xf32, #tpu.memory_space<smem>>
    %451 = vector.broadcast %450 : f32 to vector<2x256xf32>
    %452 = arith.mulf %451, %17 : vector<2x256xf32>
    %453 = arith.addf %437, %452 : vector<2x256xf32>
    %c76 = arith.constant 76 : index
    %454 = memref.load %arg0[%c76] : memref<432xf32, #tpu.memory_space<smem>>
    %455 = vector.broadcast %454 : f32 to vector<2x256xf32>
    %456 = arith.mulf %455, %21 : vector<2x256xf32>
    %457 = arith.addf %441, %456 : vector<2x256xf32>
    %c77 = arith.constant 77 : index
    %458 = memref.load %arg0[%c77] : memref<432xf32, #tpu.memory_space<smem>>
    %459 = vector.broadcast %458 : f32 to vector<2x256xf32>
    %460 = arith.mulf %459, %21 : vector<2x256xf32>
    %461 = arith.addf %445, %460 : vector<2x256xf32>
    %c78 = arith.constant 78 : index
    %462 = memref.load %arg0[%c78] : memref<432xf32, #tpu.memory_space<smem>>
    %463 = vector.broadcast %462 : f32 to vector<2x256xf32>
    %464 = arith.mulf %463, %21 : vector<2x256xf32>
    %465 = arith.addf %449, %464 : vector<2x256xf32>
    %c79 = arith.constant 79 : index
    %466 = memref.load %arg0[%c79] : memref<432xf32, #tpu.memory_space<smem>>
    %467 = vector.broadcast %466 : f32 to vector<2x256xf32>
    %468 = arith.mulf %467, %21 : vector<2x256xf32>
    %469 = arith.addf %453, %468 : vector<2x256xf32>
    %c0_i32_81 = arith.constant 0 : i32
    %470 = vector.broadcast %c0_i32_81 : i32 to vector<2x256xi32>
    %471 = arith.addi %2, %470 : vector<2x256xi32>
    %c0_i32_82 = arith.constant 0 : i32
    %472 = vector.broadcast %c0_i32_82 : i32 to vector<2x256xi32>
    %473 = arith.cmpi sge, %471, %472 : vector<2x256xi32>
    %c0_i32_83 = arith.constant 0 : i32
    %474 = vector.broadcast %c0_i32_83 : i32 to vector<2x256xi32>
    %475 = arith.addi %2, %474 : vector<2x256xi32>
    %c16_i32_84 = arith.constant 16 : i32
    %476 = vector.broadcast %c16_i32_84 : i32 to vector<2x256xi32>
    %477 = arith.cmpi slt, %475, %476 : vector<2x256xi32>
    %478 = arith.andi %473, %477 : vector<2x256xi1>
    %c1_i32_85 = arith.constant 1 : i32
    %479 = vector.broadcast %c1_i32_85 : i32 to vector<2x256xi32>
    %480 = arith.addi %5, %479 : vector<2x256xi32>
    %c0_i32_86 = arith.constant 0 : i32
    %481 = vector.broadcast %c0_i32_86 : i32 to vector<2x256xi32>
    %482 = arith.cmpi sge, %480, %481 : vector<2x256xi32>
    %483 = arith.andi %478, %482 : vector<2x256xi1>
    %c1_i32_87 = arith.constant 1 : i32
    %484 = vector.broadcast %c1_i32_87 : i32 to vector<2x256xi32>
    %485 = arith.addi %5, %484 : vector<2x256xi32>
    %c16_i32_88 = arith.constant 16 : i32
    %486 = vector.broadcast %c16_i32_88 : i32 to vector<2x256xi32>
    %487 = arith.cmpi slt, %485, %486 : vector<2x256xi32>
    %488 = arith.andi %483, %487 : vector<2x256xi1>
    %c255_i32 = arith.constant 255 : i32
    %489 = tpu.dynamic_rotate %9 by %c255_i32 dim 1 : vector<2x256xf32>, i32 -> vector<2x256xf32>
    %cst_89 = arith.constant 0.000000e+00 : f32
    %490 = vector.broadcast %cst_89 : f32 to vector<2x256xf32>
    %491 = arith.select %488, %489, %490 : vector<2x256xi1>, vector<2x256xf32>
    %c80 = arith.constant 80 : index
    %492 = memref.load %arg0[%c80] : memref<432xf32, #tpu.memory_space<smem>>
    %493 = vector.broadcast %492 : f32 to vector<2x256xf32>
    %494 = arith.mulf %493, %491 : vector<2x256xf32>
    %495 = arith.addf %457, %494 : vector<2x256xf32>
    %c81 = arith.constant 81 : index
    %496 = memref.load %arg0[%c81] : memref<432xf32, #tpu.memory_space<smem>>
    %497 = vector.broadcast %496 : f32 to vector<2x256xf32>
    %498 = arith.mulf %497, %491 : vector<2x256xf32>
    %499 = arith.addf %461, %498 : vector<2x256xf32>
    %c82 = arith.constant 82 : index
    %500 = memref.load %arg0[%c82] : memref<432xf32, #tpu.memory_space<smem>>
    %501 = vector.broadcast %500 : f32 to vector<2x256xf32>
    %502 = arith.mulf %501, %491 : vector<2x256xf32>
    %503 = arith.addf %465, %502 : vector<2x256xf32>
    %c83 = arith.constant 83 : index
    %504 = memref.load %arg0[%c83] : memref<432xf32, #tpu.memory_space<smem>>
    %505 = vector.broadcast %504 : f32 to vector<2x256xf32>
    %506 = arith.mulf %505, %491 : vector<2x256xf32>
    %507 = arith.addf %469, %506 : vector<2x256xf32>
    %c255_i32_90 = arith.constant 255 : i32
    %508 = tpu.dynamic_rotate %13 by %c255_i32_90 dim 1 : vector<2x256xf32>, i32 -> vector<2x256xf32>
    %cst_91 = arith.constant 0.000000e+00 : f32
    %509 = vector.broadcast %cst_91 : f32 to vector<2x256xf32>
    %510 = arith.select %488, %508, %509 : vector<2x256xi1>, vector<2x256xf32>
    %c84 = arith.constant 84 : index
    %511 = memref.load %arg0[%c84] : memref<432xf32, #tpu.memory_space<smem>>
    %512 = vector.broadcast %511 : f32 to vector<2x256xf32>
    %513 = arith.mulf %512, %510 : vector<2x256xf32>
    %514 = arith.addf %495, %513 : vector<2x256xf32>
    %c85 = arith.constant 85 : index
    %515 = memref.load %arg0[%c85] : memref<432xf32, #tpu.memory_space<smem>>
    %516 = vector.broadcast %515 : f32 to vector<2x256xf32>
    %517 = arith.mulf %516, %510 : vector<2x256xf32>
    %518 = arith.addf %499, %517 : vector<2x256xf32>
    %c86 = arith.constant 86 : index
    %519 = memref.load %arg0[%c86] : memref<432xf32, #tpu.memory_space<smem>>
    %520 = vector.broadcast %519 : f32 to vector<2x256xf32>
    %521 = arith.mulf %520, %510 : vector<2x256xf32>
    %522 = arith.addf %503, %521 : vector<2x256xf32>
    %c87 = arith.constant 87 : index
    %523 = memref.load %arg0[%c87] : memref<432xf32, #tpu.memory_space<smem>>
    %524 = vector.broadcast %523 : f32 to vector<2x256xf32>
    %525 = arith.mulf %524, %510 : vector<2x256xf32>
    %526 = arith.addf %507, %525 : vector<2x256xf32>
    %c255_i32_92 = arith.constant 255 : i32
    %527 = tpu.dynamic_rotate %17 by %c255_i32_92 dim 1 : vector<2x256xf32>, i32 -> vector<2x256xf32>
    %cst_93 = arith.constant 0.000000e+00 : f32
    %528 = vector.broadcast %cst_93 : f32 to vector<2x256xf32>
    %529 = arith.select %488, %527, %528 : vector<2x256xi1>, vector<2x256xf32>
    %c88 = arith.constant 88 : index
    %530 = memref.load %arg0[%c88] : memref<432xf32, #tpu.memory_space<smem>>
    %531 = vector.broadcast %530 : f32 to vector<2x256xf32>
    %532 = arith.mulf %531, %529 : vector<2x256xf32>
    %533 = arith.addf %514, %532 : vector<2x256xf32>
    %c89 = arith.constant 89 : index
    %534 = memref.load %arg0[%c89] : memref<432xf32, #tpu.memory_space<smem>>
    %535 = vector.broadcast %534 : f32 to vector<2x256xf32>
    %536 = arith.mulf %535, %529 : vector<2x256xf32>
    %537 = arith.addf %518, %536 : vector<2x256xf32>
    %c90 = arith.constant 90 : index
    %538 = memref.load %arg0[%c90] : memref<432xf32, #tpu.memory_space<smem>>
    %539 = vector.broadcast %538 : f32 to vector<2x256xf32>
    %540 = arith.mulf %539, %529 : vector<2x256xf32>
    %541 = arith.addf %522, %540 : vector<2x256xf32>
    %c91 = arith.constant 91 : index
    %542 = memref.load %arg0[%c91] : memref<432xf32, #tpu.memory_space<smem>>
    %543 = vector.broadcast %542 : f32 to vector<2x256xf32>
    %544 = arith.mulf %543, %529 : vector<2x256xf32>
    %545 = arith.addf %526, %544 : vector<2x256xf32>
    %c255_i32_94 = arith.constant 255 : i32
    %546 = tpu.dynamic_rotate %21 by %c255_i32_94 dim 1 : vector<2x256xf32>, i32 -> vector<2x256xf32>
    %cst_95 = arith.constant 0.000000e+00 : f32
    %547 = vector.broadcast %cst_95 : f32 to vector<2x256xf32>
    %548 = arith.select %488, %546, %547 : vector<2x256xi1>, vector<2x256xf32>
    %c92 = arith.constant 92 : index
    %549 = memref.load %arg0[%c92] : memref<432xf32, #tpu.memory_space<smem>>
    %550 = vector.broadcast %549 : f32 to vector<2x256xf32>
    %551 = arith.mulf %550, %548 : vector<2x256xf32>
    %552 = arith.addf %533, %551 : vector<2x256xf32>
    %c93 = arith.constant 93 : index
    %553 = memref.load %arg0[%c93] : memref<432xf32, #tpu.memory_space<smem>>
    %554 = vector.broadcast %553 : f32 to vector<2x256xf32>
    %555 = arith.mulf %554, %548 : vector<2x256xf32>
    %556 = arith.addf %537, %555 : vector<2x256xf32>
    %c94 = arith.constant 94 : index
    %557 = memref.load %arg0[%c94] : memref<432xf32, #tpu.memory_space<smem>>
    %558 = vector.broadcast %557 : f32 to vector<2x256xf32>
    %559 = arith.mulf %558, %548 : vector<2x256xf32>
    %560 = arith.addf %541, %559 : vector<2x256xf32>
    %c95 = arith.constant 95 : index
    %561 = memref.load %arg0[%c95] : memref<432xf32, #tpu.memory_space<smem>>
    %562 = vector.broadcast %561 : f32 to vector<2x256xf32>
    %563 = arith.mulf %562, %548 : vector<2x256xf32>
    %564 = arith.addf %545, %563 : vector<2x256xf32>
    %c1_i32_96 = arith.constant 1 : i32
    %565 = vector.broadcast %c1_i32_96 : i32 to vector<2x256xi32>
    %566 = arith.addi %2, %565 : vector<2x256xi32>
    %c0_i32_97 = arith.constant 0 : i32
    %567 = vector.broadcast %c0_i32_97 : i32 to vector<2x256xi32>
    %568 = arith.cmpi sge, %566, %567 : vector<2x256xi32>
    %c1_i32_98 = arith.constant 1 : i32
    %569 = vector.broadcast %c1_i32_98 : i32 to vector<2x256xi32>
    %570 = arith.addi %2, %569 : vector<2x256xi32>
    %c16_i32_99 = arith.constant 16 : i32
    %571 = vector.broadcast %c16_i32_99 : i32 to vector<2x256xi32>
    %572 = arith.cmpi slt, %570, %571 : vector<2x256xi32>
    %573 = arith.andi %568, %572 : vector<2x256xi1>
    %c-1_i32_100 = arith.constant -1 : i32
    %574 = vector.broadcast %c-1_i32_100 : i32 to vector<2x256xi32>
    %575 = arith.addi %5, %574 : vector<2x256xi32>
    %c0_i32_101 = arith.constant 0 : i32
    %576 = vector.broadcast %c0_i32_101 : i32 to vector<2x256xi32>
    %577 = arith.cmpi sge, %575, %576 : vector<2x256xi32>
    %578 = arith.andi %573, %577 : vector<2x256xi1>
    %c-1_i32_102 = arith.constant -1 : i32
    %579 = vector.broadcast %c-1_i32_102 : i32 to vector<2x256xi32>
    %580 = arith.addi %5, %579 : vector<2x256xi32>
    %c16_i32_103 = arith.constant 16 : i32
    %581 = vector.broadcast %c16_i32_103 : i32 to vector<2x256xi32>
    %582 = arith.cmpi slt, %580, %581 : vector<2x256xi32>
    %583 = arith.andi %578, %582 : vector<2x256xi1>
    %c241_i32 = arith.constant 241 : i32
    %584 = tpu.dynamic_rotate %9 by %c241_i32 dim 1 : vector<2x256xf32>, i32 -> vector<2x256xf32>
    %cst_104 = arith.constant 0.000000e+00 : f32
    %585 = vector.broadcast %cst_104 : f32 to vector<2x256xf32>
    %586 = arith.select %583, %584, %585 : vector<2x256xi1>, vector<2x256xf32>
    %c96 = arith.constant 96 : index
    %587 = memref.load %arg0[%c96] : memref<432xf32, #tpu.memory_space<smem>>
    %588 = vector.broadcast %587 : f32 to vector<2x256xf32>
    %589 = arith.mulf %588, %586 : vector<2x256xf32>
    %590 = arith.addf %552, %589 : vector<2x256xf32>
    %c97 = arith.constant 97 : index
    %591 = memref.load %arg0[%c97] : memref<432xf32, #tpu.memory_space<smem>>
    %592 = vector.broadcast %591 : f32 to vector<2x256xf32>
    %593 = arith.mulf %592, %586 : vector<2x256xf32>
    %594 = arith.addf %556, %593 : vector<2x256xf32>
    %c98 = arith.constant 98 : index
    %595 = memref.load %arg0[%c98] : memref<432xf32, #tpu.memory_space<smem>>
    %596 = vector.broadcast %595 : f32 to vector<2x256xf32>
    %597 = arith.mulf %596, %586 : vector<2x256xf32>
    %598 = arith.addf %560, %597 : vector<2x256xf32>
    %c99 = arith.constant 99 : index
    %599 = memref.load %arg0[%c99] : memref<432xf32, #tpu.memory_space<smem>>
    %600 = vector.broadcast %599 : f32 to vector<2x256xf32>
    %601 = arith.mulf %600, %586 : vector<2x256xf32>
    %602 = arith.addf %564, %601 : vector<2x256xf32>
    %c241_i32_105 = arith.constant 241 : i32
    %603 = tpu.dynamic_rotate %13 by %c241_i32_105 dim 1 : vector<2x256xf32>, i32 -> vector<2x256xf32>
    %cst_106 = arith.constant 0.000000e+00 : f32
    %604 = vector.broadcast %cst_106 : f32 to vector<2x256xf32>
    %605 = arith.select %583, %603, %604 : vector<2x256xi1>, vector<2x256xf32>
    %c100 = arith.constant 100 : index
    %606 = memref.load %arg0[%c100] : memref<432xf32, #tpu.memory_space<smem>>
    %607 = vector.broadcast %606 : f32 to vector<2x256xf32>
    %608 = arith.mulf %607, %605 : vector<2x256xf32>
    %609 = arith.addf %590, %608 : vector<2x256xf32>
    %c101 = arith.constant 101 : index
    %610 = memref.load %arg0[%c101] : memref<432xf32, #tpu.memory_space<smem>>
    %611 = vector.broadcast %610 : f32 to vector<2x256xf32>
    %612 = arith.mulf %611, %605 : vector<2x256xf32>
    %613 = arith.addf %594, %612 : vector<2x256xf32>
    %c102 = arith.constant 102 : index
    %614 = memref.load %arg0[%c102] : memref<432xf32, #tpu.memory_space<smem>>
    %615 = vector.broadcast %614 : f32 to vector<2x256xf32>
    %616 = arith.mulf %615, %605 : vector<2x256xf32>
    %617 = arith.addf %598, %616 : vector<2x256xf32>
    %c103 = arith.constant 103 : index
    %618 = memref.load %arg0[%c103] : memref<432xf32, #tpu.memory_space<smem>>
    %619 = vector.broadcast %618 : f32 to vector<2x256xf32>
    %620 = arith.mulf %619, %605 : vector<2x256xf32>
    %621 = arith.addf %602, %620 : vector<2x256xf32>
    %c241_i32_107 = arith.constant 241 : i32
    %622 = tpu.dynamic_rotate %17 by %c241_i32_107 dim 1 : vector<2x256xf32>, i32 -> vector<2x256xf32>
    %cst_108 = arith.constant 0.000000e+00 : f32
    %623 = vector.broadcast %cst_108 : f32 to vector<2x256xf32>
    %624 = arith.select %583, %622, %623 : vector<2x256xi1>, vector<2x256xf32>
    %c104 = arith.constant 104 : index
    %625 = memref.load %arg0[%c104] : memref<432xf32, #tpu.memory_space<smem>>
    %626 = vector.broadcast %625 : f32 to vector<2x256xf32>
    %627 = arith.mulf %626, %624 : vector<2x256xf32>
    %628 = arith.addf %609, %627 : vector<2x256xf32>
    %c105 = arith.constant 105 : index
    %629 = memref.load %arg0[%c105] : memref<432xf32, #tpu.memory_space<smem>>
    %630 = vector.broadcast %629 : f32 to vector<2x256xf32>
    %631 = arith.mulf %630, %624 : vector<2x256xf32>
    %632 = arith.addf %613, %631 : vector<2x256xf32>
    %c106 = arith.constant 106 : index
    %633 = memref.load %arg0[%c106] : memref<432xf32, #tpu.memory_space<smem>>
    %634 = vector.broadcast %633 : f32 to vector<2x256xf32>
    %635 = arith.mulf %634, %624 : vector<2x256xf32>
    %636 = arith.addf %617, %635 : vector<2x256xf32>
    %c107 = arith.constant 107 : index
    %637 = memref.load %arg0[%c107] : memref<432xf32, #tpu.memory_space<smem>>
    %638 = vector.broadcast %637 : f32 to vector<2x256xf32>
    %639 = arith.mulf %638, %624 : vector<2x256xf32>
    %640 = arith.addf %621, %639 : vector<2x256xf32>
    %c241_i32_109 = arith.constant 241 : i32
    %641 = tpu.dynamic_rotate %21 by %c241_i32_109 dim 1 : vector<2x256xf32>, i32 -> vector<2x256xf32>
    %cst_110 = arith.constant 0.000000e+00 : f32
    %642 = vector.broadcast %cst_110 : f32 to vector<2x256xf32>
    %643 = arith.select %583, %641, %642 : vector<2x256xi1>, vector<2x256xf32>
    %c108 = arith.constant 108 : index
    %644 = memref.load %arg0[%c108] : memref<432xf32, #tpu.memory_space<smem>>
    %645 = vector.broadcast %644 : f32 to vector<2x256xf32>
    %646 = arith.mulf %645, %643 : vector<2x256xf32>
    %647 = arith.addf %628, %646 : vector<2x256xf32>
    %c109 = arith.constant 109 : index
    %648 = memref.load %arg0[%c109] : memref<432xf32, #tpu.memory_space<smem>>
    %649 = vector.broadcast %648 : f32 to vector<2x256xf32>
    %650 = arith.mulf %649, %643 : vector<2x256xf32>
    %651 = arith.addf %632, %650 : vector<2x256xf32>
    %c110 = arith.constant 110 : index
    %652 = memref.load %arg0[%c110] : memref<432xf32, #tpu.memory_space<smem>>
    %653 = vector.broadcast %652 : f32 to vector<2x256xf32>
    %654 = arith.mulf %653, %643 : vector<2x256xf32>
    %655 = arith.addf %636, %654 : vector<2x256xf32>
    %c111 = arith.constant 111 : index
    %656 = memref.load %arg0[%c111] : memref<432xf32, #tpu.memory_space<smem>>
    %657 = vector.broadcast %656 : f32 to vector<2x256xf32>
    %658 = arith.mulf %657, %643 : vector<2x256xf32>
    %659 = arith.addf %640, %658 : vector<2x256xf32>
    %c1_i32_111 = arith.constant 1 : i32
    %660 = vector.broadcast %c1_i32_111 : i32 to vector<2x256xi32>
    %661 = arith.addi %2, %660 : vector<2x256xi32>
    %c0_i32_112 = arith.constant 0 : i32
    %662 = vector.broadcast %c0_i32_112 : i32 to vector<2x256xi32>
    %663 = arith.cmpi sge, %661, %662 : vector<2x256xi32>
    %c1_i32_113 = arith.constant 1 : i32
    %664 = vector.broadcast %c1_i32_113 : i32 to vector<2x256xi32>
    %665 = arith.addi %2, %664 : vector<2x256xi32>
    %c16_i32_114 = arith.constant 16 : i32
    %666 = vector.broadcast %c16_i32_114 : i32 to vector<2x256xi32>
    %667 = arith.cmpi slt, %665, %666 : vector<2x256xi32>
    %668 = arith.andi %663, %667 : vector<2x256xi1>
    %c0_i32_115 = arith.constant 0 : i32
    %669 = vector.broadcast %c0_i32_115 : i32 to vector<2x256xi32>
    %670 = arith.addi %5, %669 : vector<2x256xi32>
    %c0_i32_116 = arith.constant 0 : i32
    %671 = vector.broadcast %c0_i32_116 : i32 to vector<2x256xi32>
    %672 = arith.cmpi sge, %670, %671 : vector<2x256xi32>
    %673 = arith.andi %668, %672 : vector<2x256xi1>
    %c0_i32_117 = arith.constant 0 : i32
    %674 = vector.broadcast %c0_i32_117 : i32 to vector<2x256xi32>
    %675 = arith.addi %5, %674 : vector<2x256xi32>
    %c16_i32_118 = arith.constant 16 : i32
    %676 = vector.broadcast %c16_i32_118 : i32 to vector<2x256xi32>
    %677 = arith.cmpi slt, %675, %676 : vector<2x256xi32>
    %678 = arith.andi %673, %677 : vector<2x256xi1>
    %c240_i32 = arith.constant 240 : i32
    %679 = tpu.dynamic_rotate %9 by %c240_i32 dim 1 : vector<2x256xf32>, i32 -> vector<2x256xf32>
    %cst_119 = arith.constant 0.000000e+00 : f32
    %680 = vector.broadcast %cst_119 : f32 to vector<2x256xf32>
    %681 = arith.select %678, %679, %680 : vector<2x256xi1>, vector<2x256xf32>
    %c112 = arith.constant 112 : index
    %682 = memref.load %arg0[%c112] : memref<432xf32, #tpu.memory_space<smem>>
    %683 = vector.broadcast %682 : f32 to vector<2x256xf32>
    %684 = arith.mulf %683, %681 : vector<2x256xf32>
    %685 = arith.addf %647, %684 : vector<2x256xf32>
    %c113 = arith.constant 113 : index
    %686 = memref.load %arg0[%c113] : memref<432xf32, #tpu.memory_space<smem>>
    %687 = vector.broadcast %686 : f32 to vector<2x256xf32>
    %688 = arith.mulf %687, %681 : vector<2x256xf32>
    %689 = arith.addf %651, %688 : vector<2x256xf32>
    %c114 = arith.constant 114 : index
    %690 = memref.load %arg0[%c114] : memref<432xf32, #tpu.memory_space<smem>>
    %691 = vector.broadcast %690 : f32 to vector<2x256xf32>
    %692 = arith.mulf %691, %681 : vector<2x256xf32>
    %693 = arith.addf %655, %692 : vector<2x256xf32>
    %c115 = arith.constant 115 : index
    %694 = memref.load %arg0[%c115] : memref<432xf32, #tpu.memory_space<smem>>
    %695 = vector.broadcast %694 : f32 to vector<2x256xf32>
    %696 = arith.mulf %695, %681 : vector<2x256xf32>
    %697 = arith.addf %659, %696 : vector<2x256xf32>
    %c240_i32_120 = arith.constant 240 : i32
    %698 = tpu.dynamic_rotate %13 by %c240_i32_120 dim 1 : vector<2x256xf32>, i32 -> vector<2x256xf32>
    %cst_121 = arith.constant 0.000000e+00 : f32
    %699 = vector.broadcast %cst_121 : f32 to vector<2x256xf32>
    %700 = arith.select %678, %698, %699 : vector<2x256xi1>, vector<2x256xf32>
    %c116 = arith.constant 116 : index
    %701 = memref.load %arg0[%c116] : memref<432xf32, #tpu.memory_space<smem>>
    %702 = vector.broadcast %701 : f32 to vector<2x256xf32>
    %703 = arith.mulf %702, %700 : vector<2x256xf32>
    %704 = arith.addf %685, %703 : vector<2x256xf32>
    %c117 = arith.constant 117 : index
    %705 = memref.load %arg0[%c117] : memref<432xf32, #tpu.memory_space<smem>>
    %706 = vector.broadcast %705 : f32 to vector<2x256xf32>
    %707 = arith.mulf %706, %700 : vector<2x256xf32>
    %708 = arith.addf %689, %707 : vector<2x256xf32>
    %c118 = arith.constant 118 : index
    %709 = memref.load %arg0[%c118] : memref<432xf32, #tpu.memory_space<smem>>
    %710 = vector.broadcast %709 : f32 to vector<2x256xf32>
    %711 = arith.mulf %710, %700 : vector<2x256xf32>
    %712 = arith.addf %693, %711 : vector<2x256xf32>
    %c119 = arith.constant 119 : index
    %713 = memref.load %arg0[%c119] : memref<432xf32, #tpu.memory_space<smem>>
    %714 = vector.broadcast %713 : f32 to vector<2x256xf32>
    %715 = arith.mulf %714, %700 : vector<2x256xf32>
    %716 = arith.addf %697, %715 : vector<2x256xf32>
    %c240_i32_122 = arith.constant 240 : i32
    %717 = tpu.dynamic_rotate %17 by %c240_i32_122 dim 1 : vector<2x256xf32>, i32 -> vector<2x256xf32>
    %cst_123 = arith.constant 0.000000e+00 : f32
    %718 = vector.broadcast %cst_123 : f32 to vector<2x256xf32>
    %719 = arith.select %678, %717, %718 : vector<2x256xi1>, vector<2x256xf32>
    %c120 = arith.constant 120 : index
    %720 = memref.load %arg0[%c120] : memref<432xf32, #tpu.memory_space<smem>>
    %721 = vector.broadcast %720 : f32 to vector<2x256xf32>
    %722 = arith.mulf %721, %719 : vector<2x256xf32>
    %723 = arith.addf %704, %722 : vector<2x256xf32>
    %c121 = arith.constant 121 : index
    %724 = memref.load %arg0[%c121] : memref<432xf32, #tpu.memory_space<smem>>
    %725 = vector.broadcast %724 : f32 to vector<2x256xf32>
    %726 = arith.mulf %725, %719 : vector<2x256xf32>
    %727 = arith.addf %708, %726 : vector<2x256xf32>
    %c122 = arith.constant 122 : index
    %728 = memref.load %arg0[%c122] : memref<432xf32, #tpu.memory_space<smem>>
    %729 = vector.broadcast %728 : f32 to vector<2x256xf32>
    %730 = arith.mulf %729, %719 : vector<2x256xf32>
    %731 = arith.addf %712, %730 : vector<2x256xf32>
    %c123 = arith.constant 123 : index
    %732 = memref.load %arg0[%c123] : memref<432xf32, #tpu.memory_space<smem>>
    %733 = vector.broadcast %732 : f32 to vector<2x256xf32>
    %734 = arith.mulf %733, %719 : vector<2x256xf32>
    %735 = arith.addf %716, %734 : vector<2x256xf32>
    %c240_i32_124 = arith.constant 240 : i32
    %736 = tpu.dynamic_rotate %21 by %c240_i32_124 dim 1 : vector<2x256xf32>, i32 -> vector<2x256xf32>
    %cst_125 = arith.constant 0.000000e+00 : f32
    %737 = vector.broadcast %cst_125 : f32 to vector<2x256xf32>
    %738 = arith.select %678, %736, %737 : vector<2x256xi1>, vector<2x256xf32>
    %c124 = arith.constant 124 : index
    %739 = memref.load %arg0[%c124] : memref<432xf32, #tpu.memory_space<smem>>
    %740 = vector.broadcast %739 : f32 to vector<2x256xf32>
    %741 = arith.mulf %740, %738 : vector<2x256xf32>
    %742 = arith.addf %723, %741 : vector<2x256xf32>
    %c125 = arith.constant 125 : index
    %743 = memref.load %arg0[%c125] : memref<432xf32, #tpu.memory_space<smem>>
    %744 = vector.broadcast %743 : f32 to vector<2x256xf32>
    %745 = arith.mulf %744, %738 : vector<2x256xf32>
    %746 = arith.addf %727, %745 : vector<2x256xf32>
    %c126 = arith.constant 126 : index
    %747 = memref.load %arg0[%c126] : memref<432xf32, #tpu.memory_space<smem>>
    %748 = vector.broadcast %747 : f32 to vector<2x256xf32>
    %749 = arith.mulf %748, %738 : vector<2x256xf32>
    %750 = arith.addf %731, %749 : vector<2x256xf32>
    %c127 = arith.constant 127 : index
    %751 = memref.load %arg0[%c127] : memref<432xf32, #tpu.memory_space<smem>>
    %752 = vector.broadcast %751 : f32 to vector<2x256xf32>
    %753 = arith.mulf %752, %738 : vector<2x256xf32>
    %754 = arith.addf %735, %753 : vector<2x256xf32>
    %c1_i32_126 = arith.constant 1 : i32
    %755 = vector.broadcast %c1_i32_126 : i32 to vector<2x256xi32>
    %756 = arith.addi %2, %755 : vector<2x256xi32>
    %c0_i32_127 = arith.constant 0 : i32
    %757 = vector.broadcast %c0_i32_127 : i32 to vector<2x256xi32>
    %758 = arith.cmpi sge, %756, %757 : vector<2x256xi32>
    %c1_i32_128 = arith.constant 1 : i32
    %759 = vector.broadcast %c1_i32_128 : i32 to vector<2x256xi32>
    %760 = arith.addi %2, %759 : vector<2x256xi32>
    %c16_i32_129 = arith.constant 16 : i32
    %761 = vector.broadcast %c16_i32_129 : i32 to vector<2x256xi32>
    %762 = arith.cmpi slt, %760, %761 : vector<2x256xi32>
    %763 = arith.andi %758, %762 : vector<2x256xi1>
    %c1_i32_130 = arith.constant 1 : i32
    %764 = vector.broadcast %c1_i32_130 : i32 to vector<2x256xi32>
    %765 = arith.addi %5, %764 : vector<2x256xi32>
    %c0_i32_131 = arith.constant 0 : i32
    %766 = vector.broadcast %c0_i32_131 : i32 to vector<2x256xi32>
    %767 = arith.cmpi sge, %765, %766 : vector<2x256xi32>
    %768 = arith.andi %763, %767 : vector<2x256xi1>
    %c1_i32_132 = arith.constant 1 : i32
    %769 = vector.broadcast %c1_i32_132 : i32 to vector<2x256xi32>
    %770 = arith.addi %5, %769 : vector<2x256xi32>
    %c16_i32_133 = arith.constant 16 : i32
    %771 = vector.broadcast %c16_i32_133 : i32 to vector<2x256xi32>
    %772 = arith.cmpi slt, %770, %771 : vector<2x256xi32>
    %773 = arith.andi %768, %772 : vector<2x256xi1>
    %c239_i32 = arith.constant 239 : i32
    %774 = tpu.dynamic_rotate %9 by %c239_i32 dim 1 : vector<2x256xf32>, i32 -> vector<2x256xf32>
    %cst_134 = arith.constant 0.000000e+00 : f32
    %775 = vector.broadcast %cst_134 : f32 to vector<2x256xf32>
    %776 = arith.select %773, %774, %775 : vector<2x256xi1>, vector<2x256xf32>
    %c128 = arith.constant 128 : index
    %777 = memref.load %arg0[%c128] : memref<432xf32, #tpu.memory_space<smem>>
    %778 = vector.broadcast %777 : f32 to vector<2x256xf32>
    %779 = arith.mulf %778, %776 : vector<2x256xf32>
    %780 = arith.addf %742, %779 : vector<2x256xf32>
    %c129 = arith.constant 129 : index
    %781 = memref.load %arg0[%c129] : memref<432xf32, #tpu.memory_space<smem>>
    %782 = vector.broadcast %781 : f32 to vector<2x256xf32>
    %783 = arith.mulf %782, %776 : vector<2x256xf32>
    %784 = arith.addf %746, %783 : vector<2x256xf32>
    %c130 = arith.constant 130 : index
    %785 = memref.load %arg0[%c130] : memref<432xf32, #tpu.memory_space<smem>>
    %786 = vector.broadcast %785 : f32 to vector<2x256xf32>
    %787 = arith.mulf %786, %776 : vector<2x256xf32>
    %788 = arith.addf %750, %787 : vector<2x256xf32>
    %c131 = arith.constant 131 : index
    %789 = memref.load %arg0[%c131] : memref<432xf32, #tpu.memory_space<smem>>
    %790 = vector.broadcast %789 : f32 to vector<2x256xf32>
    %791 = arith.mulf %790, %776 : vector<2x256xf32>
    %792 = arith.addf %754, %791 : vector<2x256xf32>
    %c239_i32_135 = arith.constant 239 : i32
    %793 = tpu.dynamic_rotate %13 by %c239_i32_135 dim 1 : vector<2x256xf32>, i32 -> vector<2x256xf32>
    %cst_136 = arith.constant 0.000000e+00 : f32
    %794 = vector.broadcast %cst_136 : f32 to vector<2x256xf32>
    %795 = arith.select %773, %793, %794 : vector<2x256xi1>, vector<2x256xf32>
    %c132 = arith.constant 132 : index
    %796 = memref.load %arg0[%c132] : memref<432xf32, #tpu.memory_space<smem>>
    %797 = vector.broadcast %796 : f32 to vector<2x256xf32>
    %798 = arith.mulf %797, %795 : vector<2x256xf32>
    %799 = arith.addf %780, %798 : vector<2x256xf32>
    %c133 = arith.constant 133 : index
    %800 = memref.load %arg0[%c133] : memref<432xf32, #tpu.memory_space<smem>>
    %801 = vector.broadcast %800 : f32 to vector<2x256xf32>
    %802 = arith.mulf %801, %795 : vector<2x256xf32>
    %803 = arith.addf %784, %802 : vector<2x256xf32>
    %c134 = arith.constant 134 : index
    %804 = memref.load %arg0[%c134] : memref<432xf32, #tpu.memory_space<smem>>
    %805 = vector.broadcast %804 : f32 to vector<2x256xf32>
    %806 = arith.mulf %805, %795 : vector<2x256xf32>
    %807 = arith.addf %788, %806 : vector<2x256xf32>
    %c135 = arith.constant 135 : index
    %808 = memref.load %arg0[%c135] : memref<432xf32, #tpu.memory_space<smem>>
    %809 = vector.broadcast %808 : f32 to vector<2x256xf32>
    %810 = arith.mulf %809, %795 : vector<2x256xf32>
    %811 = arith.addf %792, %810 : vector<2x256xf32>
    %c239_i32_137 = arith.constant 239 : i32
    %812 = tpu.dynamic_rotate %17 by %c239_i32_137 dim 1 : vector<2x256xf32>, i32 -> vector<2x256xf32>
    %cst_138 = arith.constant 0.000000e+00 : f32
    %813 = vector.broadcast %cst_138 : f32 to vector<2x256xf32>
    %814 = arith.select %773, %812, %813 : vector<2x256xi1>, vector<2x256xf32>
    %c136 = arith.constant 136 : index
    %815 = memref.load %arg0[%c136] : memref<432xf32, #tpu.memory_space<smem>>
    %816 = vector.broadcast %815 : f32 to vector<2x256xf32>
    %817 = arith.mulf %816, %814 : vector<2x256xf32>
    %818 = arith.addf %799, %817 : vector<2x256xf32>
    %c137 = arith.constant 137 : index
    %819 = memref.load %arg0[%c137] : memref<432xf32, #tpu.memory_space<smem>>
    %820 = vector.broadcast %819 : f32 to vector<2x256xf32>
    %821 = arith.mulf %820, %814 : vector<2x256xf32>
    %822 = arith.addf %803, %821 : vector<2x256xf32>
    %c138 = arith.constant 138 : index
    %823 = memref.load %arg0[%c138] : memref<432xf32, #tpu.memory_space<smem>>
    %824 = vector.broadcast %823 : f32 to vector<2x256xf32>
    %825 = arith.mulf %824, %814 : vector<2x256xf32>
    %826 = arith.addf %807, %825 : vector<2x256xf32>
    %c139 = arith.constant 139 : index
    %827 = memref.load %arg0[%c139] : memref<432xf32, #tpu.memory_space<smem>>
    %828 = vector.broadcast %827 : f32 to vector<2x256xf32>
    %829 = arith.mulf %828, %814 : vector<2x256xf32>
    %830 = arith.addf %811, %829 : vector<2x256xf32>
    %c239_i32_139 = arith.constant 239 : i32
    %831 = tpu.dynamic_rotate %21 by %c239_i32_139 dim 1 : vector<2x256xf32>, i32 -> vector<2x256xf32>
    %cst_140 = arith.constant 0.000000e+00 : f32
    %832 = vector.broadcast %cst_140 : f32 to vector<2x256xf32>
    %833 = arith.select %773, %831, %832 : vector<2x256xi1>, vector<2x256xf32>
    %c140 = arith.constant 140 : index
    %834 = memref.load %arg0[%c140] : memref<432xf32, #tpu.memory_space<smem>>
    %835 = vector.broadcast %834 : f32 to vector<2x256xf32>
    %836 = arith.mulf %835, %833 : vector<2x256xf32>
    %837 = arith.addf %818, %836 : vector<2x256xf32>
    %c141 = arith.constant 141 : index
    %838 = memref.load %arg0[%c141] : memref<432xf32, #tpu.memory_space<smem>>
    %839 = vector.broadcast %838 : f32 to vector<2x256xf32>
    %840 = arith.mulf %839, %833 : vector<2x256xf32>
    %841 = arith.addf %822, %840 : vector<2x256xf32>
    %c142 = arith.constant 142 : index
    %842 = memref.load %arg0[%c142] : memref<432xf32, #tpu.memory_space<smem>>
    %843 = vector.broadcast %842 : f32 to vector<2x256xf32>
    %844 = arith.mulf %843, %833 : vector<2x256xf32>
    %845 = arith.addf %826, %844 : vector<2x256xf32>
    %c143 = arith.constant 143 : index
    %846 = memref.load %arg0[%c143] : memref<432xf32, #tpu.memory_space<smem>>
    %847 = vector.broadcast %846 : f32 to vector<2x256xf32>
    %848 = arith.mulf %847, %833 : vector<2x256xf32>
    %849 = arith.addf %830, %848 : vector<2x256xf32>
    %c0_141 = arith.constant 0 : index
    %850 = memref.load %arg1[%c0_141] : memref<12xf32, #tpu.memory_space<smem>>
    %851 = vector.broadcast %850 : f32 to vector<2x256xf32>
    %852 = arith.addf %837, %851 : vector<2x256xf32>
    %c1_142 = arith.constant 1 : index
    %853 = memref.load %arg1[%c1_142] : memref<12xf32, #tpu.memory_space<smem>>
    %854 = vector.broadcast %853 : f32 to vector<2x256xf32>
    %855 = arith.addf %841, %854 : vector<2x256xf32>
    %c2_143 = arith.constant 2 : index
    %856 = memref.load %arg1[%c2_143] : memref<12xf32, #tpu.memory_space<smem>>
    %857 = vector.broadcast %856 : f32 to vector<2x256xf32>
    %858 = arith.addf %845, %857 : vector<2x256xf32>
    %c3_144 = arith.constant 3 : index
    %859 = memref.load %arg1[%c3_144] : memref<12xf32, #tpu.memory_space<smem>>
    %860 = vector.broadcast %859 : f32 to vector<2x256xf32>
    %861 = arith.addf %849, %860 : vector<2x256xf32>
    %cst_145 = arith.constant 0.000000e+00 : f32
    %862 = vector.broadcast %cst_145 : f32 to vector<2x256xf32>
    %cst_146 = arith.constant 0.000000e+00 : f32
    %863 = vector.broadcast %cst_146 : f32 to vector<2x256xf32>
    %cst_147 = arith.constant 0.000000e+00 : f32
    %864 = vector.broadcast %cst_147 : f32 to vector<2x256xf32>
    %cst_148 = arith.constant 0.000000e+00 : f32
    %865 = vector.broadcast %cst_148 : f32 to vector<2x256xf32>
    %c-3_i32 = arith.constant -3 : i32
    %866 = vector.broadcast %c-3_i32 : i32 to vector<2x256xi32>
    %867 = arith.addi %2, %866 : vector<2x256xi32>
    %c0_i32_149 = arith.constant 0 : i32
    %868 = vector.broadcast %c0_i32_149 : i32 to vector<2x256xi32>
    %869 = arith.cmpi sge, %867, %868 : vector<2x256xi32>
    %c-3_i32_150 = arith.constant -3 : i32
    %870 = vector.broadcast %c-3_i32_150 : i32 to vector<2x256xi32>
    %871 = arith.addi %2, %870 : vector<2x256xi32>
    %c16_i32_151 = arith.constant 16 : i32
    %872 = vector.broadcast %c16_i32_151 : i32 to vector<2x256xi32>
    %873 = arith.cmpi slt, %871, %872 : vector<2x256xi32>
    %874 = arith.andi %869, %873 : vector<2x256xi1>
    %c-3_i32_152 = arith.constant -3 : i32
    %875 = vector.broadcast %c-3_i32_152 : i32 to vector<2x256xi32>
    %876 = arith.addi %5, %875 : vector<2x256xi32>
    %c0_i32_153 = arith.constant 0 : i32
    %877 = vector.broadcast %c0_i32_153 : i32 to vector<2x256xi32>
    %878 = arith.cmpi sge, %876, %877 : vector<2x256xi32>
    %879 = arith.andi %874, %878 : vector<2x256xi1>
    %c-3_i32_154 = arith.constant -3 : i32
    %880 = vector.broadcast %c-3_i32_154 : i32 to vector<2x256xi32>
    %881 = arith.addi %5, %880 : vector<2x256xi32>
    %c16_i32_155 = arith.constant 16 : i32
    %882 = vector.broadcast %c16_i32_155 : i32 to vector<2x256xi32>
    %883 = arith.cmpi slt, %881, %882 : vector<2x256xi32>
    %884 = arith.andi %879, %883 : vector<2x256xi1>
    %c51_i32 = arith.constant 51 : i32
    %885 = tpu.dynamic_rotate %852 by %c51_i32 dim 1 : vector<2x256xf32>, i32 -> vector<2x256xf32>
    %cst_156 = arith.constant 0.000000e+00 : f32
    %886 = vector.broadcast %cst_156 : f32 to vector<2x256xf32>
    %887 = arith.select %884, %885, %886 : vector<2x256xi1>, vector<2x256xf32>
    %c144 = arith.constant 144 : index
    %888 = memref.load %arg0[%c144] : memref<432xf32, #tpu.memory_space<smem>>
    %889 = vector.broadcast %888 : f32 to vector<2x256xf32>
    %890 = arith.mulf %889, %887 : vector<2x256xf32>
    %891 = arith.addf %862, %890 : vector<2x256xf32>
    %c145 = arith.constant 145 : index
    %892 = memref.load %arg0[%c145] : memref<432xf32, #tpu.memory_space<smem>>
    %893 = vector.broadcast %892 : f32 to vector<2x256xf32>
    %894 = arith.mulf %893, %887 : vector<2x256xf32>
    %895 = arith.addf %863, %894 : vector<2x256xf32>
    %c146 = arith.constant 146 : index
    %896 = memref.load %arg0[%c146] : memref<432xf32, #tpu.memory_space<smem>>
    %897 = vector.broadcast %896 : f32 to vector<2x256xf32>
    %898 = arith.mulf %897, %887 : vector<2x256xf32>
    %899 = arith.addf %864, %898 : vector<2x256xf32>
    %c147 = arith.constant 147 : index
    %900 = memref.load %arg0[%c147] : memref<432xf32, #tpu.memory_space<smem>>
    %901 = vector.broadcast %900 : f32 to vector<2x256xf32>
    %902 = arith.mulf %901, %887 : vector<2x256xf32>
    %903 = arith.addf %865, %902 : vector<2x256xf32>
    %c51_i32_157 = arith.constant 51 : i32
    %904 = tpu.dynamic_rotate %855 by %c51_i32_157 dim 1 : vector<2x256xf32>, i32 -> vector<2x256xf32>
    %cst_158 = arith.constant 0.000000e+00 : f32
    %905 = vector.broadcast %cst_158 : f32 to vector<2x256xf32>
    %906 = arith.select %884, %904, %905 : vector<2x256xi1>, vector<2x256xf32>
    %c148 = arith.constant 148 : index
    %907 = memref.load %arg0[%c148] : memref<432xf32, #tpu.memory_space<smem>>
    %908 = vector.broadcast %907 : f32 to vector<2x256xf32>
    %909 = arith.mulf %908, %906 : vector<2x256xf32>
    %910 = arith.addf %891, %909 : vector<2x256xf32>
    %c149 = arith.constant 149 : index
    %911 = memref.load %arg0[%c149] : memref<432xf32, #tpu.memory_space<smem>>
    %912 = vector.broadcast %911 : f32 to vector<2x256xf32>
    %913 = arith.mulf %912, %906 : vector<2x256xf32>
    %914 = arith.addf %895, %913 : vector<2x256xf32>
    %c150 = arith.constant 150 : index
    %915 = memref.load %arg0[%c150] : memref<432xf32, #tpu.memory_space<smem>>
    %916 = vector.broadcast %915 : f32 to vector<2x256xf32>
    %917 = arith.mulf %916, %906 : vector<2x256xf32>
    %918 = arith.addf %899, %917 : vector<2x256xf32>
    %c151 = arith.constant 151 : index
    %919 = memref.load %arg0[%c151] : memref<432xf32, #tpu.memory_space<smem>>
    %920 = vector.broadcast %919 : f32 to vector<2x256xf32>
    %921 = arith.mulf %920, %906 : vector<2x256xf32>
    %922 = arith.addf %903, %921 : vector<2x256xf32>
    %c51_i32_159 = arith.constant 51 : i32
    %923 = tpu.dynamic_rotate %858 by %c51_i32_159 dim 1 : vector<2x256xf32>, i32 -> vector<2x256xf32>
    %cst_160 = arith.constant 0.000000e+00 : f32
    %924 = vector.broadcast %cst_160 : f32 to vector<2x256xf32>
    %925 = arith.select %884, %923, %924 : vector<2x256xi1>, vector<2x256xf32>
    %c152 = arith.constant 152 : index
    %926 = memref.load %arg0[%c152] : memref<432xf32, #tpu.memory_space<smem>>
    %927 = vector.broadcast %926 : f32 to vector<2x256xf32>
    %928 = arith.mulf %927, %925 : vector<2x256xf32>
    %929 = arith.addf %910, %928 : vector<2x256xf32>
    %c153 = arith.constant 153 : index
    %930 = memref.load %arg0[%c153] : memref<432xf32, #tpu.memory_space<smem>>
    %931 = vector.broadcast %930 : f32 to vector<2x256xf32>
    %932 = arith.mulf %931, %925 : vector<2x256xf32>
    %933 = arith.addf %914, %932 : vector<2x256xf32>
    %c154 = arith.constant 154 : index
    %934 = memref.load %arg0[%c154] : memref<432xf32, #tpu.memory_space<smem>>
    %935 = vector.broadcast %934 : f32 to vector<2x256xf32>
    %936 = arith.mulf %935, %925 : vector<2x256xf32>
    %937 = arith.addf %918, %936 : vector<2x256xf32>
    %c155 = arith.constant 155 : index
    %938 = memref.load %arg0[%c155] : memref<432xf32, #tpu.memory_space<smem>>
    %939 = vector.broadcast %938 : f32 to vector<2x256xf32>
    %940 = arith.mulf %939, %925 : vector<2x256xf32>
    %941 = arith.addf %922, %940 : vector<2x256xf32>
    %c51_i32_161 = arith.constant 51 : i32
    %942 = tpu.dynamic_rotate %861 by %c51_i32_161 dim 1 : vector<2x256xf32>, i32 -> vector<2x256xf32>
    %cst_162 = arith.constant 0.000000e+00 : f32
    %943 = vector.broadcast %cst_162 : f32 to vector<2x256xf32>
    %944 = arith.select %884, %942, %943 : vector<2x256xi1>, vector<2x256xf32>
    %c156 = arith.constant 156 : index
    %945 = memref.load %arg0[%c156] : memref<432xf32, #tpu.memory_space<smem>>
    %946 = vector.broadcast %945 : f32 to vector<2x256xf32>
    %947 = arith.mulf %946, %944 : vector<2x256xf32>
    %948 = arith.addf %929, %947 : vector<2x256xf32>
    %c157 = arith.constant 157 : index
    %949 = memref.load %arg0[%c157] : memref<432xf32, #tpu.memory_space<smem>>
    %950 = vector.broadcast %949 : f32 to vector<2x256xf32>
    %951 = arith.mulf %950, %944 : vector<2x256xf32>
    %952 = arith.addf %933, %951 : vector<2x256xf32>
    %c158 = arith.constant 158 : index
    %953 = memref.load %arg0[%c158] : memref<432xf32, #tpu.memory_space<smem>>
    %954 = vector.broadcast %953 : f32 to vector<2x256xf32>
    %955 = arith.mulf %954, %944 : vector<2x256xf32>
    %956 = arith.addf %937, %955 : vector<2x256xf32>
    %c159 = arith.constant 159 : index
    %957 = memref.load %arg0[%c159] : memref<432xf32, #tpu.memory_space<smem>>
    %958 = vector.broadcast %957 : f32 to vector<2x256xf32>
    %959 = arith.mulf %958, %944 : vector<2x256xf32>
    %960 = arith.addf %941, %959 : vector<2x256xf32>
    %c-3_i32_163 = arith.constant -3 : i32
    %961 = vector.broadcast %c-3_i32_163 : i32 to vector<2x256xi32>
    %962 = arith.addi %2, %961 : vector<2x256xi32>
    %c0_i32_164 = arith.constant 0 : i32
    %963 = vector.broadcast %c0_i32_164 : i32 to vector<2x256xi32>
    %964 = arith.cmpi sge, %962, %963 : vector<2x256xi32>
    %c-3_i32_165 = arith.constant -3 : i32
    %965 = vector.broadcast %c-3_i32_165 : i32 to vector<2x256xi32>
    %966 = arith.addi %2, %965 : vector<2x256xi32>
    %c16_i32_166 = arith.constant 16 : i32
    %967 = vector.broadcast %c16_i32_166 : i32 to vector<2x256xi32>
    %968 = arith.cmpi slt, %966, %967 : vector<2x256xi32>
    %969 = arith.andi %964, %968 : vector<2x256xi1>
    %c0_i32_167 = arith.constant 0 : i32
    %970 = vector.broadcast %c0_i32_167 : i32 to vector<2x256xi32>
    %971 = arith.addi %5, %970 : vector<2x256xi32>
    %c0_i32_168 = arith.constant 0 : i32
    %972 = vector.broadcast %c0_i32_168 : i32 to vector<2x256xi32>
    %973 = arith.cmpi sge, %971, %972 : vector<2x256xi32>
    %974 = arith.andi %969, %973 : vector<2x256xi1>
    %c0_i32_169 = arith.constant 0 : i32
    %975 = vector.broadcast %c0_i32_169 : i32 to vector<2x256xi32>
    %976 = arith.addi %5, %975 : vector<2x256xi32>
    %c16_i32_170 = arith.constant 16 : i32
    %977 = vector.broadcast %c16_i32_170 : i32 to vector<2x256xi32>
    %978 = arith.cmpi slt, %976, %977 : vector<2x256xi32>
    %979 = arith.andi %974, %978 : vector<2x256xi1>
    %c48_i32 = arith.constant 48 : i32
    %980 = tpu.dynamic_rotate %852 by %c48_i32 dim 1 : vector<2x256xf32>, i32 -> vector<2x256xf32>
    %cst_171 = arith.constant 0.000000e+00 : f32
    %981 = vector.broadcast %cst_171 : f32 to vector<2x256xf32>
    %982 = arith.select %979, %980, %981 : vector<2x256xi1>, vector<2x256xf32>
    %c160 = arith.constant 160 : index
    %983 = memref.load %arg0[%c160] : memref<432xf32, #tpu.memory_space<smem>>
    %984 = vector.broadcast %983 : f32 to vector<2x256xf32>
    %985 = arith.mulf %984, %982 : vector<2x256xf32>
    %986 = arith.addf %948, %985 : vector<2x256xf32>
    %c161 = arith.constant 161 : index
    %987 = memref.load %arg0[%c161] : memref<432xf32, #tpu.memory_space<smem>>
    %988 = vector.broadcast %987 : f32 to vector<2x256xf32>
    %989 = arith.mulf %988, %982 : vector<2x256xf32>
    %990 = arith.addf %952, %989 : vector<2x256xf32>
    %c162 = arith.constant 162 : index
    %991 = memref.load %arg0[%c162] : memref<432xf32, #tpu.memory_space<smem>>
    %992 = vector.broadcast %991 : f32 to vector<2x256xf32>
    %993 = arith.mulf %992, %982 : vector<2x256xf32>
    %994 = arith.addf %956, %993 : vector<2x256xf32>
    %c163 = arith.constant 163 : index
    %995 = memref.load %arg0[%c163] : memref<432xf32, #tpu.memory_space<smem>>
    %996 = vector.broadcast %995 : f32 to vector<2x256xf32>
    %997 = arith.mulf %996, %982 : vector<2x256xf32>
    %998 = arith.addf %960, %997 : vector<2x256xf32>
    %c48_i32_172 = arith.constant 48 : i32
    %999 = tpu.dynamic_rotate %855 by %c48_i32_172 dim 1 : vector<2x256xf32>, i32 -> vector<2x256xf32>
    %cst_173 = arith.constant 0.000000e+00 : f32
    %1000 = vector.broadcast %cst_173 : f32 to vector<2x256xf32>
    %1001 = arith.select %979, %999, %1000 : vector<2x256xi1>, vector<2x256xf32>
    %c164 = arith.constant 164 : index
    %1002 = memref.load %arg0[%c164] : memref<432xf32, #tpu.memory_space<smem>>
    %1003 = vector.broadcast %1002 : f32 to vector<2x256xf32>
    %1004 = arith.mulf %1003, %1001 : vector<2x256xf32>
    %1005 = arith.addf %986, %1004 : vector<2x256xf32>
    %c165 = arith.constant 165 : index
    %1006 = memref.load %arg0[%c165] : memref<432xf32, #tpu.memory_space<smem>>
    %1007 = vector.broadcast %1006 : f32 to vector<2x256xf32>
    %1008 = arith.mulf %1007, %1001 : vector<2x256xf32>
    %1009 = arith.addf %990, %1008 : vector<2x256xf32>
    %c166 = arith.constant 166 : index
    %1010 = memref.load %arg0[%c166] : memref<432xf32, #tpu.memory_space<smem>>
    %1011 = vector.broadcast %1010 : f32 to vector<2x256xf32>
    %1012 = arith.mulf %1011, %1001 : vector<2x256xf32>
    %1013 = arith.addf %994, %1012 : vector<2x256xf32>
    %c167 = arith.constant 167 : index
    %1014 = memref.load %arg0[%c167] : memref<432xf32, #tpu.memory_space<smem>>
    %1015 = vector.broadcast %1014 : f32 to vector<2x256xf32>
    %1016 = arith.mulf %1015, %1001 : vector<2x256xf32>
    %1017 = arith.addf %998, %1016 : vector<2x256xf32>
    %c48_i32_174 = arith.constant 48 : i32
    %1018 = tpu.dynamic_rotate %858 by %c48_i32_174 dim 1 : vector<2x256xf32>, i32 -> vector<2x256xf32>
    %cst_175 = arith.constant 0.000000e+00 : f32
    %1019 = vector.broadcast %cst_175 : f32 to vector<2x256xf32>
    %1020 = arith.select %979, %1018, %1019 : vector<2x256xi1>, vector<2x256xf32>
    %c168 = arith.constant 168 : index
    %1021 = memref.load %arg0[%c168] : memref<432xf32, #tpu.memory_space<smem>>
    %1022 = vector.broadcast %1021 : f32 to vector<2x256xf32>
    %1023 = arith.mulf %1022, %1020 : vector<2x256xf32>
    %1024 = arith.addf %1005, %1023 : vector<2x256xf32>
    %c169 = arith.constant 169 : index
    %1025 = memref.load %arg0[%c169] : memref<432xf32, #tpu.memory_space<smem>>
    %1026 = vector.broadcast %1025 : f32 to vector<2x256xf32>
    %1027 = arith.mulf %1026, %1020 : vector<2x256xf32>
    %1028 = arith.addf %1009, %1027 : vector<2x256xf32>
    %c170 = arith.constant 170 : index
    %1029 = memref.load %arg0[%c170] : memref<432xf32, #tpu.memory_space<smem>>
    %1030 = vector.broadcast %1029 : f32 to vector<2x256xf32>
    %1031 = arith.mulf %1030, %1020 : vector<2x256xf32>
    %1032 = arith.addf %1013, %1031 : vector<2x256xf32>
    %c171 = arith.constant 171 : index
    %1033 = memref.load %arg0[%c171] : memref<432xf32, #tpu.memory_space<smem>>
    %1034 = vector.broadcast %1033 : f32 to vector<2x256xf32>
    %1035 = arith.mulf %1034, %1020 : vector<2x256xf32>
    %1036 = arith.addf %1017, %1035 : vector<2x256xf32>
    %c48_i32_176 = arith.constant 48 : i32
    %1037 = tpu.dynamic_rotate %861 by %c48_i32_176 dim 1 : vector<2x256xf32>, i32 -> vector<2x256xf32>
    %cst_177 = arith.constant 0.000000e+00 : f32
    %1038 = vector.broadcast %cst_177 : f32 to vector<2x256xf32>
    %1039 = arith.select %979, %1037, %1038 : vector<2x256xi1>, vector<2x256xf32>
    %c172 = arith.constant 172 : index
    %1040 = memref.load %arg0[%c172] : memref<432xf32, #tpu.memory_space<smem>>
    %1041 = vector.broadcast %1040 : f32 to vector<2x256xf32>
    %1042 = arith.mulf %1041, %1039 : vector<2x256xf32>
    %1043 = arith.addf %1024, %1042 : vector<2x256xf32>
    %c173 = arith.constant 173 : index
    %1044 = memref.load %arg0[%c173] : memref<432xf32, #tpu.memory_space<smem>>
    %1045 = vector.broadcast %1044 : f32 to vector<2x256xf32>
    %1046 = arith.mulf %1045, %1039 : vector<2x256xf32>
    %1047 = arith.addf %1028, %1046 : vector<2x256xf32>
    %c174 = arith.constant 174 : index
    %1048 = memref.load %arg0[%c174] : memref<432xf32, #tpu.memory_space<smem>>
    %1049 = vector.broadcast %1048 : f32 to vector<2x256xf32>
    %1050 = arith.mulf %1049, %1039 : vector<2x256xf32>
    %1051 = arith.addf %1032, %1050 : vector<2x256xf32>
    %c175 = arith.constant 175 : index
    %1052 = memref.load %arg0[%c175] : memref<432xf32, #tpu.memory_space<smem>>
    %1053 = vector.broadcast %1052 : f32 to vector<2x256xf32>
    %1054 = arith.mulf %1053, %1039 : vector<2x256xf32>
    %1055 = arith.addf %1036, %1054 : vector<2x256xf32>
    %c-3_i32_178 = arith.constant -3 : i32
    %1056 = vector.broadcast %c-3_i32_178 : i32 to vector<2x256xi32>
    %1057 = arith.addi %2, %1056 : vector<2x256xi32>
    %c0_i32_179 = arith.constant 0 : i32
    %1058 = vector.broadcast %c0_i32_179 : i32 to vector<2x256xi32>
    %1059 = arith.cmpi sge, %1057, %1058 : vector<2x256xi32>
    %c-3_i32_180 = arith.constant -3 : i32
    %1060 = vector.broadcast %c-3_i32_180 : i32 to vector<2x256xi32>
    %1061 = arith.addi %2, %1060 : vector<2x256xi32>
    %c16_i32_181 = arith.constant 16 : i32
    %1062 = vector.broadcast %c16_i32_181 : i32 to vector<2x256xi32>
    %1063 = arith.cmpi slt, %1061, %1062 : vector<2x256xi32>
    %1064 = arith.andi %1059, %1063 : vector<2x256xi1>
    %c3_i32 = arith.constant 3 : i32
    %1065 = vector.broadcast %c3_i32 : i32 to vector<2x256xi32>
    %1066 = arith.addi %5, %1065 : vector<2x256xi32>
    %c0_i32_182 = arith.constant 0 : i32
    %1067 = vector.broadcast %c0_i32_182 : i32 to vector<2x256xi32>
    %1068 = arith.cmpi sge, %1066, %1067 : vector<2x256xi32>
    %1069 = arith.andi %1064, %1068 : vector<2x256xi1>
    %c3_i32_183 = arith.constant 3 : i32
    %1070 = vector.broadcast %c3_i32_183 : i32 to vector<2x256xi32>
    %1071 = arith.addi %5, %1070 : vector<2x256xi32>
    %c16_i32_184 = arith.constant 16 : i32
    %1072 = vector.broadcast %c16_i32_184 : i32 to vector<2x256xi32>
    %1073 = arith.cmpi slt, %1071, %1072 : vector<2x256xi32>
    %1074 = arith.andi %1069, %1073 : vector<2x256xi1>
    %c45_i32 = arith.constant 45 : i32
    %1075 = tpu.dynamic_rotate %852 by %c45_i32 dim 1 : vector<2x256xf32>, i32 -> vector<2x256xf32>
    %cst_185 = arith.constant 0.000000e+00 : f32
    %1076 = vector.broadcast %cst_185 : f32 to vector<2x256xf32>
    %1077 = arith.select %1074, %1075, %1076 : vector<2x256xi1>, vector<2x256xf32>
    %c176 = arith.constant 176 : index
    %1078 = memref.load %arg0[%c176] : memref<432xf32, #tpu.memory_space<smem>>
    %1079 = vector.broadcast %1078 : f32 to vector<2x256xf32>
    %1080 = arith.mulf %1079, %1077 : vector<2x256xf32>
    %1081 = arith.addf %1043, %1080 : vector<2x256xf32>
    %c177 = arith.constant 177 : index
    %1082 = memref.load %arg0[%c177] : memref<432xf32, #tpu.memory_space<smem>>
    %1083 = vector.broadcast %1082 : f32 to vector<2x256xf32>
    %1084 = arith.mulf %1083, %1077 : vector<2x256xf32>
    %1085 = arith.addf %1047, %1084 : vector<2x256xf32>
    %c178 = arith.constant 178 : index
    %1086 = memref.load %arg0[%c178] : memref<432xf32, #tpu.memory_space<smem>>
    %1087 = vector.broadcast %1086 : f32 to vector<2x256xf32>
    %1088 = arith.mulf %1087, %1077 : vector<2x256xf32>
    %1089 = arith.addf %1051, %1088 : vector<2x256xf32>
    %c179 = arith.constant 179 : index
    %1090 = memref.load %arg0[%c179] : memref<432xf32, #tpu.memory_space<smem>>
    %1091 = vector.broadcast %1090 : f32 to vector<2x256xf32>
    %1092 = arith.mulf %1091, %1077 : vector<2x256xf32>
    %1093 = arith.addf %1055, %1092 : vector<2x256xf32>
    %c45_i32_186 = arith.constant 45 : i32
    %1094 = tpu.dynamic_rotate %855 by %c45_i32_186 dim 1 : vector<2x256xf32>, i32 -> vector<2x256xf32>
    %cst_187 = arith.constant 0.000000e+00 : f32
    %1095 = vector.broadcast %cst_187 : f32 to vector<2x256xf32>
    %1096 = arith.select %1074, %1094, %1095 : vector<2x256xi1>, vector<2x256xf32>
    %c180 = arith.constant 180 : index
    %1097 = memref.load %arg0[%c180] : memref<432xf32, #tpu.memory_space<smem>>
    %1098 = vector.broadcast %1097 : f32 to vector<2x256xf32>
    %1099 = arith.mulf %1098, %1096 : vector<2x256xf32>
    %1100 = arith.addf %1081, %1099 : vector<2x256xf32>
    %c181 = arith.constant 181 : index
    %1101 = memref.load %arg0[%c181] : memref<432xf32, #tpu.memory_space<smem>>
    %1102 = vector.broadcast %1101 : f32 to vector<2x256xf32>
    %1103 = arith.mulf %1102, %1096 : vector<2x256xf32>
    %1104 = arith.addf %1085, %1103 : vector<2x256xf32>
    %c182 = arith.constant 182 : index
    %1105 = memref.load %arg0[%c182] : memref<432xf32, #tpu.memory_space<smem>>
    %1106 = vector.broadcast %1105 : f32 to vector<2x256xf32>
    %1107 = arith.mulf %1106, %1096 : vector<2x256xf32>
    %1108 = arith.addf %1089, %1107 : vector<2x256xf32>
    %c183 = arith.constant 183 : index
    %1109 = memref.load %arg0[%c183] : memref<432xf32, #tpu.memory_space<smem>>
    %1110 = vector.broadcast %1109 : f32 to vector<2x256xf32>
    %1111 = arith.mulf %1110, %1096 : vector<2x256xf32>
    %1112 = arith.addf %1093, %1111 : vector<2x256xf32>
    %c45_i32_188 = arith.constant 45 : i32
    %1113 = tpu.dynamic_rotate %858 by %c45_i32_188 dim 1 : vector<2x256xf32>, i32 -> vector<2x256xf32>
    %cst_189 = arith.constant 0.000000e+00 : f32
    %1114 = vector.broadcast %cst_189 : f32 to vector<2x256xf32>
    %1115 = arith.select %1074, %1113, %1114 : vector<2x256xi1>, vector<2x256xf32>
    %c184 = arith.constant 184 : index
    %1116 = memref.load %arg0[%c184] : memref<432xf32, #tpu.memory_space<smem>>
    %1117 = vector.broadcast %1116 : f32 to vector<2x256xf32>
    %1118 = arith.mulf %1117, %1115 : vector<2x256xf32>
    %1119 = arith.addf %1100, %1118 : vector<2x256xf32>
    %c185 = arith.constant 185 : index
    %1120 = memref.load %arg0[%c185] : memref<432xf32, #tpu.memory_space<smem>>
    %1121 = vector.broadcast %1120 : f32 to vector<2x256xf32>
    %1122 = arith.mulf %1121, %1115 : vector<2x256xf32>
    %1123 = arith.addf %1104, %1122 : vector<2x256xf32>
    %c186 = arith.constant 186 : index
    %1124 = memref.load %arg0[%c186] : memref<432xf32, #tpu.memory_space<smem>>
    %1125 = vector.broadcast %1124 : f32 to vector<2x256xf32>
    %1126 = arith.mulf %1125, %1115 : vector<2x256xf32>
    %1127 = arith.addf %1108, %1126 : vector<2x256xf32>
    %c187 = arith.constant 187 : index
    %1128 = memref.load %arg0[%c187] : memref<432xf32, #tpu.memory_space<smem>>
    %1129 = vector.broadcast %1128 : f32 to vector<2x256xf32>
    %1130 = arith.mulf %1129, %1115 : vector<2x256xf32>
    %1131 = arith.addf %1112, %1130 : vector<2x256xf32>
    %c45_i32_190 = arith.constant 45 : i32
    %1132 = tpu.dynamic_rotate %861 by %c45_i32_190 dim 1 : vector<2x256xf32>, i32 -> vector<2x256xf32>
    %cst_191 = arith.constant 0.000000e+00 : f32
    %1133 = vector.broadcast %cst_191 : f32 to vector<2x256xf32>
    %1134 = arith.select %1074, %1132, %1133 : vector<2x256xi1>, vector<2x256xf32>
    %c188 = arith.constant 188 : index
    %1135 = memref.load %arg0[%c188] : memref<432xf32, #tpu.memory_space<smem>>
    %1136 = vector.broadcast %1135 : f32 to vector<2x256xf32>
    %1137 = arith.mulf %1136, %1134 : vector<2x256xf32>
    %1138 = arith.addf %1119, %1137 : vector<2x256xf32>
    %c189 = arith.constant 189 : index
    %1139 = memref.load %arg0[%c189] : memref<432xf32, #tpu.memory_space<smem>>
    %1140 = vector.broadcast %1139 : f32 to vector<2x256xf32>
    %1141 = arith.mulf %1140, %1134 : vector<2x256xf32>
    %1142 = arith.addf %1123, %1141 : vector<2x256xf32>
    %c190 = arith.constant 190 : index
    %1143 = memref.load %arg0[%c190] : memref<432xf32, #tpu.memory_space<smem>>
    %1144 = vector.broadcast %1143 : f32 to vector<2x256xf32>
    %1145 = arith.mulf %1144, %1134 : vector<2x256xf32>
    %1146 = arith.addf %1127, %1145 : vector<2x256xf32>
    %c191 = arith.constant 191 : index
    %1147 = memref.load %arg0[%c191] : memref<432xf32, #tpu.memory_space<smem>>
    %1148 = vector.broadcast %1147 : f32 to vector<2x256xf32>
    %1149 = arith.mulf %1148, %1134 : vector<2x256xf32>
    %1150 = arith.addf %1131, %1149 : vector<2x256xf32>
    %c0_i32_192 = arith.constant 0 : i32
    %1151 = vector.broadcast %c0_i32_192 : i32 to vector<2x256xi32>
    %1152 = arith.addi %2, %1151 : vector<2x256xi32>
    %c0_i32_193 = arith.constant 0 : i32
    %1153 = vector.broadcast %c0_i32_193 : i32 to vector<2x256xi32>
    %1154 = arith.cmpi sge, %1152, %1153 : vector<2x256xi32>
    %c0_i32_194 = arith.constant 0 : i32
    %1155 = vector.broadcast %c0_i32_194 : i32 to vector<2x256xi32>
    %1156 = arith.addi %2, %1155 : vector<2x256xi32>
    %c16_i32_195 = arith.constant 16 : i32
    %1157 = vector.broadcast %c16_i32_195 : i32 to vector<2x256xi32>
    %1158 = arith.cmpi slt, %1156, %1157 : vector<2x256xi32>
    %1159 = arith.andi %1154, %1158 : vector<2x256xi1>
    %c-3_i32_196 = arith.constant -3 : i32
    %1160 = vector.broadcast %c-3_i32_196 : i32 to vector<2x256xi32>
    %1161 = arith.addi %5, %1160 : vector<2x256xi32>
    %c0_i32_197 = arith.constant 0 : i32
    %1162 = vector.broadcast %c0_i32_197 : i32 to vector<2x256xi32>
    %1163 = arith.cmpi sge, %1161, %1162 : vector<2x256xi32>
    %1164 = arith.andi %1159, %1163 : vector<2x256xi1>
    %c-3_i32_198 = arith.constant -3 : i32
    %1165 = vector.broadcast %c-3_i32_198 : i32 to vector<2x256xi32>
    %1166 = arith.addi %5, %1165 : vector<2x256xi32>
    %c16_i32_199 = arith.constant 16 : i32
    %1167 = vector.broadcast %c16_i32_199 : i32 to vector<2x256xi32>
    %1168 = arith.cmpi slt, %1166, %1167 : vector<2x256xi32>
    %1169 = arith.andi %1164, %1168 : vector<2x256xi1>
    %c3_i32_200 = arith.constant 3 : i32
    %1170 = tpu.dynamic_rotate %852 by %c3_i32_200 dim 1 : vector<2x256xf32>, i32 -> vector<2x256xf32>
    %cst_201 = arith.constant 0.000000e+00 : f32
    %1171 = vector.broadcast %cst_201 : f32 to vector<2x256xf32>
    %1172 = arith.select %1169, %1170, %1171 : vector<2x256xi1>, vector<2x256xf32>
    %c192 = arith.constant 192 : index
    %1173 = memref.load %arg0[%c192] : memref<432xf32, #tpu.memory_space<smem>>
    %1174 = vector.broadcast %1173 : f32 to vector<2x256xf32>
    %1175 = arith.mulf %1174, %1172 : vector<2x256xf32>
    %1176 = arith.addf %1138, %1175 : vector<2x256xf32>
    %c193 = arith.constant 193 : index
    %1177 = memref.load %arg0[%c193] : memref<432xf32, #tpu.memory_space<smem>>
    %1178 = vector.broadcast %1177 : f32 to vector<2x256xf32>
    %1179 = arith.mulf %1178, %1172 : vector<2x256xf32>
    %1180 = arith.addf %1142, %1179 : vector<2x256xf32>
    %c194 = arith.constant 194 : index
    %1181 = memref.load %arg0[%c194] : memref<432xf32, #tpu.memory_space<smem>>
    %1182 = vector.broadcast %1181 : f32 to vector<2x256xf32>
    %1183 = arith.mulf %1182, %1172 : vector<2x256xf32>
    %1184 = arith.addf %1146, %1183 : vector<2x256xf32>
    %c195 = arith.constant 195 : index
    %1185 = memref.load %arg0[%c195] : memref<432xf32, #tpu.memory_space<smem>>
    %1186 = vector.broadcast %1185 : f32 to vector<2x256xf32>
    %1187 = arith.mulf %1186, %1172 : vector<2x256xf32>
    %1188 = arith.addf %1150, %1187 : vector<2x256xf32>
    %c3_i32_202 = arith.constant 3 : i32
    %1189 = tpu.dynamic_rotate %855 by %c3_i32_202 dim 1 : vector<2x256xf32>, i32 -> vector<2x256xf32>
    %cst_203 = arith.constant 0.000000e+00 : f32
    %1190 = vector.broadcast %cst_203 : f32 to vector<2x256xf32>
    %1191 = arith.select %1169, %1189, %1190 : vector<2x256xi1>, vector<2x256xf32>
    %c196 = arith.constant 196 : index
    %1192 = memref.load %arg0[%c196] : memref<432xf32, #tpu.memory_space<smem>>
    %1193 = vector.broadcast %1192 : f32 to vector<2x256xf32>
    %1194 = arith.mulf %1193, %1191 : vector<2x256xf32>
    %1195 = arith.addf %1176, %1194 : vector<2x256xf32>
    %c197 = arith.constant 197 : index
    %1196 = memref.load %arg0[%c197] : memref<432xf32, #tpu.memory_space<smem>>
    %1197 = vector.broadcast %1196 : f32 to vector<2x256xf32>
    %1198 = arith.mulf %1197, %1191 : vector<2x256xf32>
    %1199 = arith.addf %1180, %1198 : vector<2x256xf32>
    %c198 = arith.constant 198 : index
    %1200 = memref.load %arg0[%c198] : memref<432xf32, #tpu.memory_space<smem>>
    %1201 = vector.broadcast %1200 : f32 to vector<2x256xf32>
    %1202 = arith.mulf %1201, %1191 : vector<2x256xf32>
    %1203 = arith.addf %1184, %1202 : vector<2x256xf32>
    %c199 = arith.constant 199 : index
    %1204 = memref.load %arg0[%c199] : memref<432xf32, #tpu.memory_space<smem>>
    %1205 = vector.broadcast %1204 : f32 to vector<2x256xf32>
    %1206 = arith.mulf %1205, %1191 : vector<2x256xf32>
    %1207 = arith.addf %1188, %1206 : vector<2x256xf32>
    %c3_i32_204 = arith.constant 3 : i32
    %1208 = tpu.dynamic_rotate %858 by %c3_i32_204 dim 1 : vector<2x256xf32>, i32 -> vector<2x256xf32>
    %cst_205 = arith.constant 0.000000e+00 : f32
    %1209 = vector.broadcast %cst_205 : f32 to vector<2x256xf32>
    %1210 = arith.select %1169, %1208, %1209 : vector<2x256xi1>, vector<2x256xf32>
    %c200 = arith.constant 200 : index
    %1211 = memref.load %arg0[%c200] : memref<432xf32, #tpu.memory_space<smem>>
    %1212 = vector.broadcast %1211 : f32 to vector<2x256xf32>
    %1213 = arith.mulf %1212, %1210 : vector<2x256xf32>
    %1214 = arith.addf %1195, %1213 : vector<2x256xf32>
    %c201 = arith.constant 201 : index
    %1215 = memref.load %arg0[%c201] : memref<432xf32, #tpu.memory_space<smem>>
    %1216 = vector.broadcast %1215 : f32 to vector<2x256xf32>
    %1217 = arith.mulf %1216, %1210 : vector<2x256xf32>
    %1218 = arith.addf %1199, %1217 : vector<2x256xf32>
    %c202 = arith.constant 202 : index
    %1219 = memref.load %arg0[%c202] : memref<432xf32, #tpu.memory_space<smem>>
    %1220 = vector.broadcast %1219 : f32 to vector<2x256xf32>
    %1221 = arith.mulf %1220, %1210 : vector<2x256xf32>
    %1222 = arith.addf %1203, %1221 : vector<2x256xf32>
    %c203 = arith.constant 203 : index
    %1223 = memref.load %arg0[%c203] : memref<432xf32, #tpu.memory_space<smem>>
    %1224 = vector.broadcast %1223 : f32 to vector<2x256xf32>
    %1225 = arith.mulf %1224, %1210 : vector<2x256xf32>
    %1226 = arith.addf %1207, %1225 : vector<2x256xf32>
    %c3_i32_206 = arith.constant 3 : i32
    %1227 = tpu.dynamic_rotate %861 by %c3_i32_206 dim 1 : vector<2x256xf32>, i32 -> vector<2x256xf32>
    %cst_207 = arith.constant 0.000000e+00 : f32
    %1228 = vector.broadcast %cst_207 : f32 to vector<2x256xf32>
    %1229 = arith.select %1169, %1227, %1228 : vector<2x256xi1>, vector<2x256xf32>
    %c204 = arith.constant 204 : index
    %1230 = memref.load %arg0[%c204] : memref<432xf32, #tpu.memory_space<smem>>
    %1231 = vector.broadcast %1230 : f32 to vector<2x256xf32>
    %1232 = arith.mulf %1231, %1229 : vector<2x256xf32>
    %1233 = arith.addf %1214, %1232 : vector<2x256xf32>
    %c205 = arith.constant 205 : index
    %1234 = memref.load %arg0[%c205] : memref<432xf32, #tpu.memory_space<smem>>
    %1235 = vector.broadcast %1234 : f32 to vector<2x256xf32>
    %1236 = arith.mulf %1235, %1229 : vector<2x256xf32>
    %1237 = arith.addf %1218, %1236 : vector<2x256xf32>
    %c206 = arith.constant 206 : index
    %1238 = memref.load %arg0[%c206] : memref<432xf32, #tpu.memory_space<smem>>
    %1239 = vector.broadcast %1238 : f32 to vector<2x256xf32>
    %1240 = arith.mulf %1239, %1229 : vector<2x256xf32>
    %1241 = arith.addf %1222, %1240 : vector<2x256xf32>
    %c207 = arith.constant 207 : index
    %1242 = memref.load %arg0[%c207] : memref<432xf32, #tpu.memory_space<smem>>
    %1243 = vector.broadcast %1242 : f32 to vector<2x256xf32>
    %1244 = arith.mulf %1243, %1229 : vector<2x256xf32>
    %1245 = arith.addf %1226, %1244 : vector<2x256xf32>
    %c208 = arith.constant 208 : index
    %1246 = memref.load %arg0[%c208] : memref<432xf32, #tpu.memory_space<smem>>
    %1247 = vector.broadcast %1246 : f32 to vector<2x256xf32>
    %1248 = arith.mulf %1247, %852 : vector<2x256xf32>
    %1249 = arith.addf %1233, %1248 : vector<2x256xf32>
    %c209 = arith.constant 209 : index
    %1250 = memref.load %arg0[%c209] : memref<432xf32, #tpu.memory_space<smem>>
    %1251 = vector.broadcast %1250 : f32 to vector<2x256xf32>
    %1252 = arith.mulf %1251, %852 : vector<2x256xf32>
    %1253 = arith.addf %1237, %1252 : vector<2x256xf32>
    %c210 = arith.constant 210 : index
    %1254 = memref.load %arg0[%c210] : memref<432xf32, #tpu.memory_space<smem>>
    %1255 = vector.broadcast %1254 : f32 to vector<2x256xf32>
    %1256 = arith.mulf %1255, %852 : vector<2x256xf32>
    %1257 = arith.addf %1241, %1256 : vector<2x256xf32>
    %c211 = arith.constant 211 : index
    %1258 = memref.load %arg0[%c211] : memref<432xf32, #tpu.memory_space<smem>>
    %1259 = vector.broadcast %1258 : f32 to vector<2x256xf32>
    %1260 = arith.mulf %1259, %852 : vector<2x256xf32>
    %1261 = arith.addf %1245, %1260 : vector<2x256xf32>
    %c212 = arith.constant 212 : index
    %1262 = memref.load %arg0[%c212] : memref<432xf32, #tpu.memory_space<smem>>
    %1263 = vector.broadcast %1262 : f32 to vector<2x256xf32>
    %1264 = arith.mulf %1263, %855 : vector<2x256xf32>
    %1265 = arith.addf %1249, %1264 : vector<2x256xf32>
    %c213 = arith.constant 213 : index
    %1266 = memref.load %arg0[%c213] : memref<432xf32, #tpu.memory_space<smem>>
    %1267 = vector.broadcast %1266 : f32 to vector<2x256xf32>
    %1268 = arith.mulf %1267, %855 : vector<2x256xf32>
    %1269 = arith.addf %1253, %1268 : vector<2x256xf32>
    %c214 = arith.constant 214 : index
    %1270 = memref.load %arg0[%c214] : memref<432xf32, #tpu.memory_space<smem>>
    %1271 = vector.broadcast %1270 : f32 to vector<2x256xf32>
    %1272 = arith.mulf %1271, %855 : vector<2x256xf32>
    %1273 = arith.addf %1257, %1272 : vector<2x256xf32>
    %c215 = arith.constant 215 : index
    %1274 = memref.load %arg0[%c215] : memref<432xf32, #tpu.memory_space<smem>>
    %1275 = vector.broadcast %1274 : f32 to vector<2x256xf32>
    %1276 = arith.mulf %1275, %855 : vector<2x256xf32>
    %1277 = arith.addf %1261, %1276 : vector<2x256xf32>
    %c216 = arith.constant 216 : index
    %1278 = memref.load %arg0[%c216] : memref<432xf32, #tpu.memory_space<smem>>
    %1279 = vector.broadcast %1278 : f32 to vector<2x256xf32>
    %1280 = arith.mulf %1279, %858 : vector<2x256xf32>
    %1281 = arith.addf %1265, %1280 : vector<2x256xf32>
    %c217 = arith.constant 217 : index
    %1282 = memref.load %arg0[%c217] : memref<432xf32, #tpu.memory_space<smem>>
    %1283 = vector.broadcast %1282 : f32 to vector<2x256xf32>
    %1284 = arith.mulf %1283, %858 : vector<2x256xf32>
    %1285 = arith.addf %1269, %1284 : vector<2x256xf32>
    %c218 = arith.constant 218 : index
    %1286 = memref.load %arg0[%c218] : memref<432xf32, #tpu.memory_space<smem>>
    %1287 = vector.broadcast %1286 : f32 to vector<2x256xf32>
    %1288 = arith.mulf %1287, %858 : vector<2x256xf32>
    %1289 = arith.addf %1273, %1288 : vector<2x256xf32>
    %c219 = arith.constant 219 : index
    %1290 = memref.load %arg0[%c219] : memref<432xf32, #tpu.memory_space<smem>>
    %1291 = vector.broadcast %1290 : f32 to vector<2x256xf32>
    %1292 = arith.mulf %1291, %858 : vector<2x256xf32>
    %1293 = arith.addf %1277, %1292 : vector<2x256xf32>
    %c220 = arith.constant 220 : index
    %1294 = memref.load %arg0[%c220] : memref<432xf32, #tpu.memory_space<smem>>
    %1295 = vector.broadcast %1294 : f32 to vector<2x256xf32>
    %1296 = arith.mulf %1295, %861 : vector<2x256xf32>
    %1297 = arith.addf %1281, %1296 : vector<2x256xf32>
    %c221 = arith.constant 221 : index
    %1298 = memref.load %arg0[%c221] : memref<432xf32, #tpu.memory_space<smem>>
    %1299 = vector.broadcast %1298 : f32 to vector<2x256xf32>
    %1300 = arith.mulf %1299, %861 : vector<2x256xf32>
    %1301 = arith.addf %1285, %1300 : vector<2x256xf32>
    %c222 = arith.constant 222 : index
    %1302 = memref.load %arg0[%c222] : memref<432xf32, #tpu.memory_space<smem>>
    %1303 = vector.broadcast %1302 : f32 to vector<2x256xf32>
    %1304 = arith.mulf %1303, %861 : vector<2x256xf32>
    %1305 = arith.addf %1289, %1304 : vector<2x256xf32>
    %c223 = arith.constant 223 : index
    %1306 = memref.load %arg0[%c223] : memref<432xf32, #tpu.memory_space<smem>>
    %1307 = vector.broadcast %1306 : f32 to vector<2x256xf32>
    %1308 = arith.mulf %1307, %861 : vector<2x256xf32>
    %1309 = arith.addf %1293, %1308 : vector<2x256xf32>
    %c0_i32_208 = arith.constant 0 : i32
    %1310 = vector.broadcast %c0_i32_208 : i32 to vector<2x256xi32>
    %1311 = arith.addi %2, %1310 : vector<2x256xi32>
    %c0_i32_209 = arith.constant 0 : i32
    %1312 = vector.broadcast %c0_i32_209 : i32 to vector<2x256xi32>
    %1313 = arith.cmpi sge, %1311, %1312 : vector<2x256xi32>
    %c0_i32_210 = arith.constant 0 : i32
    %1314 = vector.broadcast %c0_i32_210 : i32 to vector<2x256xi32>
    %1315 = arith.addi %2, %1314 : vector<2x256xi32>
    %c16_i32_211 = arith.constant 16 : i32
    %1316 = vector.broadcast %c16_i32_211 : i32 to vector<2x256xi32>
    %1317 = arith.cmpi slt, %1315, %1316 : vector<2x256xi32>
    %1318 = arith.andi %1313, %1317 : vector<2x256xi1>
    %c3_i32_212 = arith.constant 3 : i32
    %1319 = vector.broadcast %c3_i32_212 : i32 to vector<2x256xi32>
    %1320 = arith.addi %5, %1319 : vector<2x256xi32>
    %c0_i32_213 = arith.constant 0 : i32
    %1321 = vector.broadcast %c0_i32_213 : i32 to vector<2x256xi32>
    %1322 = arith.cmpi sge, %1320, %1321 : vector<2x256xi32>
    %1323 = arith.andi %1318, %1322 : vector<2x256xi1>
    %c3_i32_214 = arith.constant 3 : i32
    %1324 = vector.broadcast %c3_i32_214 : i32 to vector<2x256xi32>
    %1325 = arith.addi %5, %1324 : vector<2x256xi32>
    %c16_i32_215 = arith.constant 16 : i32
    %1326 = vector.broadcast %c16_i32_215 : i32 to vector<2x256xi32>
    %1327 = arith.cmpi slt, %1325, %1326 : vector<2x256xi32>
    %1328 = arith.andi %1323, %1327 : vector<2x256xi1>
    %c253_i32 = arith.constant 253 : i32
    %1329 = tpu.dynamic_rotate %852 by %c253_i32 dim 1 : vector<2x256xf32>, i32 -> vector<2x256xf32>
    %cst_216 = arith.constant 0.000000e+00 : f32
    %1330 = vector.broadcast %cst_216 : f32 to vector<2x256xf32>
    %1331 = arith.select %1328, %1329, %1330 : vector<2x256xi1>, vector<2x256xf32>
    %c224 = arith.constant 224 : index
    %1332 = memref.load %arg0[%c224] : memref<432xf32, #tpu.memory_space<smem>>
    %1333 = vector.broadcast %1332 : f32 to vector<2x256xf32>
    %1334 = arith.mulf %1333, %1331 : vector<2x256xf32>
    %1335 = arith.addf %1297, %1334 : vector<2x256xf32>
    %c225 = arith.constant 225 : index
    %1336 = memref.load %arg0[%c225] : memref<432xf32, #tpu.memory_space<smem>>
    %1337 = vector.broadcast %1336 : f32 to vector<2x256xf32>
    %1338 = arith.mulf %1337, %1331 : vector<2x256xf32>
    %1339 = arith.addf %1301, %1338 : vector<2x256xf32>
    %c226 = arith.constant 226 : index
    %1340 = memref.load %arg0[%c226] : memref<432xf32, #tpu.memory_space<smem>>
    %1341 = vector.broadcast %1340 : f32 to vector<2x256xf32>
    %1342 = arith.mulf %1341, %1331 : vector<2x256xf32>
    %1343 = arith.addf %1305, %1342 : vector<2x256xf32>
    %c227 = arith.constant 227 : index
    %1344 = memref.load %arg0[%c227] : memref<432xf32, #tpu.memory_space<smem>>
    %1345 = vector.broadcast %1344 : f32 to vector<2x256xf32>
    %1346 = arith.mulf %1345, %1331 : vector<2x256xf32>
    %1347 = arith.addf %1309, %1346 : vector<2x256xf32>
    %c253_i32_217 = arith.constant 253 : i32
    %1348 = tpu.dynamic_rotate %855 by %c253_i32_217 dim 1 : vector<2x256xf32>, i32 -> vector<2x256xf32>
    %cst_218 = arith.constant 0.000000e+00 : f32
    %1349 = vector.broadcast %cst_218 : f32 to vector<2x256xf32>
    %1350 = arith.select %1328, %1348, %1349 : vector<2x256xi1>, vector<2x256xf32>
    %c228 = arith.constant 228 : index
    %1351 = memref.load %arg0[%c228] : memref<432xf32, #tpu.memory_space<smem>>
    %1352 = vector.broadcast %1351 : f32 to vector<2x256xf32>
    %1353 = arith.mulf %1352, %1350 : vector<2x256xf32>
    %1354 = arith.addf %1335, %1353 : vector<2x256xf32>
    %c229 = arith.constant 229 : index
    %1355 = memref.load %arg0[%c229] : memref<432xf32, #tpu.memory_space<smem>>
    %1356 = vector.broadcast %1355 : f32 to vector<2x256xf32>
    %1357 = arith.mulf %1356, %1350 : vector<2x256xf32>
    %1358 = arith.addf %1339, %1357 : vector<2x256xf32>
    %c230 = arith.constant 230 : index
    %1359 = memref.load %arg0[%c230] : memref<432xf32, #tpu.memory_space<smem>>
    %1360 = vector.broadcast %1359 : f32 to vector<2x256xf32>
    %1361 = arith.mulf %1360, %1350 : vector<2x256xf32>
    %1362 = arith.addf %1343, %1361 : vector<2x256xf32>
    %c231 = arith.constant 231 : index
    %1363 = memref.load %arg0[%c231] : memref<432xf32, #tpu.memory_space<smem>>
    %1364 = vector.broadcast %1363 : f32 to vector<2x256xf32>
    %1365 = arith.mulf %1364, %1350 : vector<2x256xf32>
    %1366 = arith.addf %1347, %1365 : vector<2x256xf32>
    %c253_i32_219 = arith.constant 253 : i32
    %1367 = tpu.dynamic_rotate %858 by %c253_i32_219 dim 1 : vector<2x256xf32>, i32 -> vector<2x256xf32>
    %cst_220 = arith.constant 0.000000e+00 : f32
    %1368 = vector.broadcast %cst_220 : f32 to vector<2x256xf32>
    %1369 = arith.select %1328, %1367, %1368 : vector<2x256xi1>, vector<2x256xf32>
    %c232 = arith.constant 232 : index
    %1370 = memref.load %arg0[%c232] : memref<432xf32, #tpu.memory_space<smem>>
    %1371 = vector.broadcast %1370 : f32 to vector<2x256xf32>
    %1372 = arith.mulf %1371, %1369 : vector<2x256xf32>
    %1373 = arith.addf %1354, %1372 : vector<2x256xf32>
    %c233 = arith.constant 233 : index
    %1374 = memref.load %arg0[%c233] : memref<432xf32, #tpu.memory_space<smem>>
    %1375 = vector.broadcast %1374 : f32 to vector<2x256xf32>
    %1376 = arith.mulf %1375, %1369 : vector<2x256xf32>
    %1377 = arith.addf %1358, %1376 : vector<2x256xf32>
    %c234 = arith.constant 234 : index
    %1378 = memref.load %arg0[%c234] : memref<432xf32, #tpu.memory_space<smem>>
    %1379 = vector.broadcast %1378 : f32 to vector<2x256xf32>
    %1380 = arith.mulf %1379, %1369 : vector<2x256xf32>
    %1381 = arith.addf %1362, %1380 : vector<2x256xf32>
    %c235 = arith.constant 235 : index
    %1382 = memref.load %arg0[%c235] : memref<432xf32, #tpu.memory_space<smem>>
    %1383 = vector.broadcast %1382 : f32 to vector<2x256xf32>
    %1384 = arith.mulf %1383, %1369 : vector<2x256xf32>
    %1385 = arith.addf %1366, %1384 : vector<2x256xf32>
    %c253_i32_221 = arith.constant 253 : i32
    %1386 = tpu.dynamic_rotate %861 by %c253_i32_221 dim 1 : vector<2x256xf32>, i32 -> vector<2x256xf32>
    %cst_222 = arith.constant 0.000000e+00 : f32
    %1387 = vector.broadcast %cst_222 : f32 to vector<2x256xf32>
    %1388 = arith.select %1328, %1386, %1387 : vector<2x256xi1>, vector<2x256xf32>
    %c236 = arith.constant 236 : index
    %1389 = memref.load %arg0[%c236] : memref<432xf32, #tpu.memory_space<smem>>
    %1390 = vector.broadcast %1389 : f32 to vector<2x256xf32>
    %1391 = arith.mulf %1390, %1388 : vector<2x256xf32>
    %1392 = arith.addf %1373, %1391 : vector<2x256xf32>
    %c237 = arith.constant 237 : index
    %1393 = memref.load %arg0[%c237] : memref<432xf32, #tpu.memory_space<smem>>
    %1394 = vector.broadcast %1393 : f32 to vector<2x256xf32>
    %1395 = arith.mulf %1394, %1388 : vector<2x256xf32>
    %1396 = arith.addf %1377, %1395 : vector<2x256xf32>
    %c238 = arith.constant 238 : index
    %1397 = memref.load %arg0[%c238] : memref<432xf32, #tpu.memory_space<smem>>
    %1398 = vector.broadcast %1397 : f32 to vector<2x256xf32>
    %1399 = arith.mulf %1398, %1388 : vector<2x256xf32>
    %1400 = arith.addf %1381, %1399 : vector<2x256xf32>
    %c239 = arith.constant 239 : index
    %1401 = memref.load %arg0[%c239] : memref<432xf32, #tpu.memory_space<smem>>
    %1402 = vector.broadcast %1401 : f32 to vector<2x256xf32>
    %1403 = arith.mulf %1402, %1388 : vector<2x256xf32>
    %1404 = arith.addf %1385, %1403 : vector<2x256xf32>
    %c3_i32_223 = arith.constant 3 : i32
    %1405 = vector.broadcast %c3_i32_223 : i32 to vector<2x256xi32>
    %1406 = arith.addi %2, %1405 : vector<2x256xi32>
    %c0_i32_224 = arith.constant 0 : i32
    %1407 = vector.broadcast %c0_i32_224 : i32 to vector<2x256xi32>
    %1408 = arith.cmpi sge, %1406, %1407 : vector<2x256xi32>
    %c3_i32_225 = arith.constant 3 : i32
    %1409 = vector.broadcast %c3_i32_225 : i32 to vector<2x256xi32>
    %1410 = arith.addi %2, %1409 : vector<2x256xi32>
    %c16_i32_226 = arith.constant 16 : i32
    %1411 = vector.broadcast %c16_i32_226 : i32 to vector<2x256xi32>
    %1412 = arith.cmpi slt, %1410, %1411 : vector<2x256xi32>
    %1413 = arith.andi %1408, %1412 : vector<2x256xi1>
    %c-3_i32_227 = arith.constant -3 : i32
    %1414 = vector.broadcast %c-3_i32_227 : i32 to vector<2x256xi32>
    %1415 = arith.addi %5, %1414 : vector<2x256xi32>
    %c0_i32_228 = arith.constant 0 : i32
    %1416 = vector.broadcast %c0_i32_228 : i32 to vector<2x256xi32>
    %1417 = arith.cmpi sge, %1415, %1416 : vector<2x256xi32>
    %1418 = arith.andi %1413, %1417 : vector<2x256xi1>
    %c-3_i32_229 = arith.constant -3 : i32
    %1419 = vector.broadcast %c-3_i32_229 : i32 to vector<2x256xi32>
    %1420 = arith.addi %5, %1419 : vector<2x256xi32>
    %c16_i32_230 = arith.constant 16 : i32
    %1421 = vector.broadcast %c16_i32_230 : i32 to vector<2x256xi32>
    %1422 = arith.cmpi slt, %1420, %1421 : vector<2x256xi32>
    %1423 = arith.andi %1418, %1422 : vector<2x256xi1>
    %c211_i32 = arith.constant 211 : i32
    %1424 = tpu.dynamic_rotate %852 by %c211_i32 dim 1 : vector<2x256xf32>, i32 -> vector<2x256xf32>
    %cst_231 = arith.constant 0.000000e+00 : f32
    %1425 = vector.broadcast %cst_231 : f32 to vector<2x256xf32>
    %1426 = arith.select %1423, %1424, %1425 : vector<2x256xi1>, vector<2x256xf32>
    %c240 = arith.constant 240 : index
    %1427 = memref.load %arg0[%c240] : memref<432xf32, #tpu.memory_space<smem>>
    %1428 = vector.broadcast %1427 : f32 to vector<2x256xf32>
    %1429 = arith.mulf %1428, %1426 : vector<2x256xf32>
    %1430 = arith.addf %1392, %1429 : vector<2x256xf32>
    %c241 = arith.constant 241 : index
    %1431 = memref.load %arg0[%c241] : memref<432xf32, #tpu.memory_space<smem>>
    %1432 = vector.broadcast %1431 : f32 to vector<2x256xf32>
    %1433 = arith.mulf %1432, %1426 : vector<2x256xf32>
    %1434 = arith.addf %1396, %1433 : vector<2x256xf32>
    %c242 = arith.constant 242 : index
    %1435 = memref.load %arg0[%c242] : memref<432xf32, #tpu.memory_space<smem>>
    %1436 = vector.broadcast %1435 : f32 to vector<2x256xf32>
    %1437 = arith.mulf %1436, %1426 : vector<2x256xf32>
    %1438 = arith.addf %1400, %1437 : vector<2x256xf32>
    %c243 = arith.constant 243 : index
    %1439 = memref.load %arg0[%c243] : memref<432xf32, #tpu.memory_space<smem>>
    %1440 = vector.broadcast %1439 : f32 to vector<2x256xf32>
    %1441 = arith.mulf %1440, %1426 : vector<2x256xf32>
    %1442 = arith.addf %1404, %1441 : vector<2x256xf32>
    %c211_i32_232 = arith.constant 211 : i32
    %1443 = tpu.dynamic_rotate %855 by %c211_i32_232 dim 1 : vector<2x256xf32>, i32 -> vector<2x256xf32>
    %cst_233 = arith.constant 0.000000e+00 : f32
    %1444 = vector.broadcast %cst_233 : f32 to vector<2x256xf32>
    %1445 = arith.select %1423, %1443, %1444 : vector<2x256xi1>, vector<2x256xf32>
    %c244 = arith.constant 244 : index
    %1446 = memref.load %arg0[%c244] : memref<432xf32, #tpu.memory_space<smem>>
    %1447 = vector.broadcast %1446 : f32 to vector<2x256xf32>
    %1448 = arith.mulf %1447, %1445 : vector<2x256xf32>
    %1449 = arith.addf %1430, %1448 : vector<2x256xf32>
    %c245 = arith.constant 245 : index
    %1450 = memref.load %arg0[%c245] : memref<432xf32, #tpu.memory_space<smem>>
    %1451 = vector.broadcast %1450 : f32 to vector<2x256xf32>
    %1452 = arith.mulf %1451, %1445 : vector<2x256xf32>
    %1453 = arith.addf %1434, %1452 : vector<2x256xf32>
    %c246 = arith.constant 246 : index
    %1454 = memref.load %arg0[%c246] : memref<432xf32, #tpu.memory_space<smem>>
    %1455 = vector.broadcast %1454 : f32 to vector<2x256xf32>
    %1456 = arith.mulf %1455, %1445 : vector<2x256xf32>
    %1457 = arith.addf %1438, %1456 : vector<2x256xf32>
    %c247 = arith.constant 247 : index
    %1458 = memref.load %arg0[%c247] : memref<432xf32, #tpu.memory_space<smem>>
    %1459 = vector.broadcast %1458 : f32 to vector<2x256xf32>
    %1460 = arith.mulf %1459, %1445 : vector<2x256xf32>
    %1461 = arith.addf %1442, %1460 : vector<2x256xf32>
    %c211_i32_234 = arith.constant 211 : i32
    %1462 = tpu.dynamic_rotate %858 by %c211_i32_234 dim 1 : vector<2x256xf32>, i32 -> vector<2x256xf32>
    %cst_235 = arith.constant 0.000000e+00 : f32
    %1463 = vector.broadcast %cst_235 : f32 to vector<2x256xf32>
    %1464 = arith.select %1423, %1462, %1463 : vector<2x256xi1>, vector<2x256xf32>
    %c248 = arith.constant 248 : index
    %1465 = memref.load %arg0[%c248] : memref<432xf32, #tpu.memory_space<smem>>
    %1466 = vector.broadcast %1465 : f32 to vector<2x256xf32>
    %1467 = arith.mulf %1466, %1464 : vector<2x256xf32>
    %1468 = arith.addf %1449, %1467 : vector<2x256xf32>
    %c249 = arith.constant 249 : index
    %1469 = memref.load %arg0[%c249] : memref<432xf32, #tpu.memory_space<smem>>
    %1470 = vector.broadcast %1469 : f32 to vector<2x256xf32>
    %1471 = arith.mulf %1470, %1464 : vector<2x256xf32>
    %1472 = arith.addf %1453, %1471 : vector<2x256xf32>
    %c250 = arith.constant 250 : index
    %1473 = memref.load %arg0[%c250] : memref<432xf32, #tpu.memory_space<smem>>
    %1474 = vector.broadcast %1473 : f32 to vector<2x256xf32>
    %1475 = arith.mulf %1474, %1464 : vector<2x256xf32>
    %1476 = arith.addf %1457, %1475 : vector<2x256xf32>
    %c251 = arith.constant 251 : index
    %1477 = memref.load %arg0[%c251] : memref<432xf32, #tpu.memory_space<smem>>
    %1478 = vector.broadcast %1477 : f32 to vector<2x256xf32>
    %1479 = arith.mulf %1478, %1464 : vector<2x256xf32>
    %1480 = arith.addf %1461, %1479 : vector<2x256xf32>
    %c211_i32_236 = arith.constant 211 : i32
    %1481 = tpu.dynamic_rotate %861 by %c211_i32_236 dim 1 : vector<2x256xf32>, i32 -> vector<2x256xf32>
    %cst_237 = arith.constant 0.000000e+00 : f32
    %1482 = vector.broadcast %cst_237 : f32 to vector<2x256xf32>
    %1483 = arith.select %1423, %1481, %1482 : vector<2x256xi1>, vector<2x256xf32>
    %c252 = arith.constant 252 : index
    %1484 = memref.load %arg0[%c252] : memref<432xf32, #tpu.memory_space<smem>>
    %1485 = vector.broadcast %1484 : f32 to vector<2x256xf32>
    %1486 = arith.mulf %1485, %1483 : vector<2x256xf32>
    %1487 = arith.addf %1468, %1486 : vector<2x256xf32>
    %c253 = arith.constant 253 : index
    %1488 = memref.load %arg0[%c253] : memref<432xf32, #tpu.memory_space<smem>>
    %1489 = vector.broadcast %1488 : f32 to vector<2x256xf32>
    %1490 = arith.mulf %1489, %1483 : vector<2x256xf32>
    %1491 = arith.addf %1472, %1490 : vector<2x256xf32>
    %c254 = arith.constant 254 : index
    %1492 = memref.load %arg0[%c254] : memref<432xf32, #tpu.memory_space<smem>>
    %1493 = vector.broadcast %1492 : f32 to vector<2x256xf32>
    %1494 = arith.mulf %1493, %1483 : vector<2x256xf32>
    %1495 = arith.addf %1476, %1494 : vector<2x256xf32>
    %c255 = arith.constant 255 : index
    %1496 = memref.load %arg0[%c255] : memref<432xf32, #tpu.memory_space<smem>>
    %1497 = vector.broadcast %1496 : f32 to vector<2x256xf32>
    %1498 = arith.mulf %1497, %1483 : vector<2x256xf32>
    %1499 = arith.addf %1480, %1498 : vector<2x256xf32>
    %c3_i32_238 = arith.constant 3 : i32
    %1500 = vector.broadcast %c3_i32_238 : i32 to vector<2x256xi32>
    %1501 = arith.addi %2, %1500 : vector<2x256xi32>
    %c0_i32_239 = arith.constant 0 : i32
    %1502 = vector.broadcast %c0_i32_239 : i32 to vector<2x256xi32>
    %1503 = arith.cmpi sge, %1501, %1502 : vector<2x256xi32>
    %c3_i32_240 = arith.constant 3 : i32
    %1504 = vector.broadcast %c3_i32_240 : i32 to vector<2x256xi32>
    %1505 = arith.addi %2, %1504 : vector<2x256xi32>
    %c16_i32_241 = arith.constant 16 : i32
    %1506 = vector.broadcast %c16_i32_241 : i32 to vector<2x256xi32>
    %1507 = arith.cmpi slt, %1505, %1506 : vector<2x256xi32>
    %1508 = arith.andi %1503, %1507 : vector<2x256xi1>
    %c0_i32_242 = arith.constant 0 : i32
    %1509 = vector.broadcast %c0_i32_242 : i32 to vector<2x256xi32>
    %1510 = arith.addi %5, %1509 : vector<2x256xi32>
    %c0_i32_243 = arith.constant 0 : i32
    %1511 = vector.broadcast %c0_i32_243 : i32 to vector<2x256xi32>
    %1512 = arith.cmpi sge, %1510, %1511 : vector<2x256xi32>
    %1513 = arith.andi %1508, %1512 : vector<2x256xi1>
    %c0_i32_244 = arith.constant 0 : i32
    %1514 = vector.broadcast %c0_i32_244 : i32 to vector<2x256xi32>
    %1515 = arith.addi %5, %1514 : vector<2x256xi32>
    %c16_i32_245 = arith.constant 16 : i32
    %1516 = vector.broadcast %c16_i32_245 : i32 to vector<2x256xi32>
    %1517 = arith.cmpi slt, %1515, %1516 : vector<2x256xi32>
    %1518 = arith.andi %1513, %1517 : vector<2x256xi1>
    %c208_i32 = arith.constant 208 : i32
    %1519 = tpu.dynamic_rotate %852 by %c208_i32 dim 1 : vector<2x256xf32>, i32 -> vector<2x256xf32>
    %cst_246 = arith.constant 0.000000e+00 : f32
    %1520 = vector.broadcast %cst_246 : f32 to vector<2x256xf32>
    %1521 = arith.select %1518, %1519, %1520 : vector<2x256xi1>, vector<2x256xf32>
    %c256 = arith.constant 256 : index
    %1522 = memref.load %arg0[%c256] : memref<432xf32, #tpu.memory_space<smem>>
    %1523 = vector.broadcast %1522 : f32 to vector<2x256xf32>
    %1524 = arith.mulf %1523, %1521 : vector<2x256xf32>
    %1525 = arith.addf %1487, %1524 : vector<2x256xf32>
    %c257 = arith.constant 257 : index
    %1526 = memref.load %arg0[%c257] : memref<432xf32, #tpu.memory_space<smem>>
    %1527 = vector.broadcast %1526 : f32 to vector<2x256xf32>
    %1528 = arith.mulf %1527, %1521 : vector<2x256xf32>
    %1529 = arith.addf %1491, %1528 : vector<2x256xf32>
    %c258 = arith.constant 258 : index
    %1530 = memref.load %arg0[%c258] : memref<432xf32, #tpu.memory_space<smem>>
    %1531 = vector.broadcast %1530 : f32 to vector<2x256xf32>
    %1532 = arith.mulf %1531, %1521 : vector<2x256xf32>
    %1533 = arith.addf %1495, %1532 : vector<2x256xf32>
    %c259 = arith.constant 259 : index
    %1534 = memref.load %arg0[%c259] : memref<432xf32, #tpu.memory_space<smem>>
    %1535 = vector.broadcast %1534 : f32 to vector<2x256xf32>
    %1536 = arith.mulf %1535, %1521 : vector<2x256xf32>
    %1537 = arith.addf %1499, %1536 : vector<2x256xf32>
    %c208_i32_247 = arith.constant 208 : i32
    %1538 = tpu.dynamic_rotate %855 by %c208_i32_247 dim 1 : vector<2x256xf32>, i32 -> vector<2x256xf32>
    %cst_248 = arith.constant 0.000000e+00 : f32
    %1539 = vector.broadcast %cst_248 : f32 to vector<2x256xf32>
    %1540 = arith.select %1518, %1538, %1539 : vector<2x256xi1>, vector<2x256xf32>
    %c260 = arith.constant 260 : index
    %1541 = memref.load %arg0[%c260] : memref<432xf32, #tpu.memory_space<smem>>
    %1542 = vector.broadcast %1541 : f32 to vector<2x256xf32>
    %1543 = arith.mulf %1542, %1540 : vector<2x256xf32>
    %1544 = arith.addf %1525, %1543 : vector<2x256xf32>
    %c261 = arith.constant 261 : index
    %1545 = memref.load %arg0[%c261] : memref<432xf32, #tpu.memory_space<smem>>
    %1546 = vector.broadcast %1545 : f32 to vector<2x256xf32>
    %1547 = arith.mulf %1546, %1540 : vector<2x256xf32>
    %1548 = arith.addf %1529, %1547 : vector<2x256xf32>
    %c262 = arith.constant 262 : index
    %1549 = memref.load %arg0[%c262] : memref<432xf32, #tpu.memory_space<smem>>
    %1550 = vector.broadcast %1549 : f32 to vector<2x256xf32>
    %1551 = arith.mulf %1550, %1540 : vector<2x256xf32>
    %1552 = arith.addf %1533, %1551 : vector<2x256xf32>
    %c263 = arith.constant 263 : index
    %1553 = memref.load %arg0[%c263] : memref<432xf32, #tpu.memory_space<smem>>
    %1554 = vector.broadcast %1553 : f32 to vector<2x256xf32>
    %1555 = arith.mulf %1554, %1540 : vector<2x256xf32>
    %1556 = arith.addf %1537, %1555 : vector<2x256xf32>
    %c208_i32_249 = arith.constant 208 : i32
    %1557 = tpu.dynamic_rotate %858 by %c208_i32_249 dim 1 : vector<2x256xf32>, i32 -> vector<2x256xf32>
    %cst_250 = arith.constant 0.000000e+00 : f32
    %1558 = vector.broadcast %cst_250 : f32 to vector<2x256xf32>
    %1559 = arith.select %1518, %1557, %1558 : vector<2x256xi1>, vector<2x256xf32>
    %c264 = arith.constant 264 : index
    %1560 = memref.load %arg0[%c264] : memref<432xf32, #tpu.memory_space<smem>>
    %1561 = vector.broadcast %1560 : f32 to vector<2x256xf32>
    %1562 = arith.mulf %1561, %1559 : vector<2x256xf32>
    %1563 = arith.addf %1544, %1562 : vector<2x256xf32>
    %c265 = arith.constant 265 : index
    %1564 = memref.load %arg0[%c265] : memref<432xf32, #tpu.memory_space<smem>>
    %1565 = vector.broadcast %1564 : f32 to vector<2x256xf32>
    %1566 = arith.mulf %1565, %1559 : vector<2x256xf32>
    %1567 = arith.addf %1548, %1566 : vector<2x256xf32>
    %c266 = arith.constant 266 : index
    %1568 = memref.load %arg0[%c266] : memref<432xf32, #tpu.memory_space<smem>>
    %1569 = vector.broadcast %1568 : f32 to vector<2x256xf32>
    %1570 = arith.mulf %1569, %1559 : vector<2x256xf32>
    %1571 = arith.addf %1552, %1570 : vector<2x256xf32>
    %c267 = arith.constant 267 : index
    %1572 = memref.load %arg0[%c267] : memref<432xf32, #tpu.memory_space<smem>>
    %1573 = vector.broadcast %1572 : f32 to vector<2x256xf32>
    %1574 = arith.mulf %1573, %1559 : vector<2x256xf32>
    %1575 = arith.addf %1556, %1574 : vector<2x256xf32>
    %c208_i32_251 = arith.constant 208 : i32
    %1576 = tpu.dynamic_rotate %861 by %c208_i32_251 dim 1 : vector<2x256xf32>, i32 -> vector<2x256xf32>
    %cst_252 = arith.constant 0.000000e+00 : f32
    %1577 = vector.broadcast %cst_252 : f32 to vector<2x256xf32>
    %1578 = arith.select %1518, %1576, %1577 : vector<2x256xi1>, vector<2x256xf32>
    %c268 = arith.constant 268 : index
    %1579 = memref.load %arg0[%c268] : memref<432xf32, #tpu.memory_space<smem>>
    %1580 = vector.broadcast %1579 : f32 to vector<2x256xf32>
    %1581 = arith.mulf %1580, %1578 : vector<2x256xf32>
    %1582 = arith.addf %1563, %1581 : vector<2x256xf32>
    %c269 = arith.constant 269 : index
    %1583 = memref.load %arg0[%c269] : memref<432xf32, #tpu.memory_space<smem>>
    %1584 = vector.broadcast %1583 : f32 to vector<2x256xf32>
    %1585 = arith.mulf %1584, %1578 : vector<2x256xf32>
    %1586 = arith.addf %1567, %1585 : vector<2x256xf32>
    %c270 = arith.constant 270 : index
    %1587 = memref.load %arg0[%c270] : memref<432xf32, #tpu.memory_space<smem>>
    %1588 = vector.broadcast %1587 : f32 to vector<2x256xf32>
    %1589 = arith.mulf %1588, %1578 : vector<2x256xf32>
    %1590 = arith.addf %1571, %1589 : vector<2x256xf32>
    %c271 = arith.constant 271 : index
    %1591 = memref.load %arg0[%c271] : memref<432xf32, #tpu.memory_space<smem>>
    %1592 = vector.broadcast %1591 : f32 to vector<2x256xf32>
    %1593 = arith.mulf %1592, %1578 : vector<2x256xf32>
    %1594 = arith.addf %1575, %1593 : vector<2x256xf32>
    %c3_i32_253 = arith.constant 3 : i32
    %1595 = vector.broadcast %c3_i32_253 : i32 to vector<2x256xi32>
    %1596 = arith.addi %2, %1595 : vector<2x256xi32>
    %c0_i32_254 = arith.constant 0 : i32
    %1597 = vector.broadcast %c0_i32_254 : i32 to vector<2x256xi32>
    %1598 = arith.cmpi sge, %1596, %1597 : vector<2x256xi32>
    %c3_i32_255 = arith.constant 3 : i32
    %1599 = vector.broadcast %c3_i32_255 : i32 to vector<2x256xi32>
    %1600 = arith.addi %2, %1599 : vector<2x256xi32>
    %c16_i32_256 = arith.constant 16 : i32
    %1601 = vector.broadcast %c16_i32_256 : i32 to vector<2x256xi32>
    %1602 = arith.cmpi slt, %1600, %1601 : vector<2x256xi32>
    %1603 = arith.andi %1598, %1602 : vector<2x256xi1>
    %c3_i32_257 = arith.constant 3 : i32
    %1604 = vector.broadcast %c3_i32_257 : i32 to vector<2x256xi32>
    %1605 = arith.addi %5, %1604 : vector<2x256xi32>
    %c0_i32_258 = arith.constant 0 : i32
    %1606 = vector.broadcast %c0_i32_258 : i32 to vector<2x256xi32>
    %1607 = arith.cmpi sge, %1605, %1606 : vector<2x256xi32>
    %1608 = arith.andi %1603, %1607 : vector<2x256xi1>
    %c3_i32_259 = arith.constant 3 : i32
    %1609 = vector.broadcast %c3_i32_259 : i32 to vector<2x256xi32>
    %1610 = arith.addi %5, %1609 : vector<2x256xi32>
    %c16_i32_260 = arith.constant 16 : i32
    %1611 = vector.broadcast %c16_i32_260 : i32 to vector<2x256xi32>
    %1612 = arith.cmpi slt, %1610, %1611 : vector<2x256xi32>
    %1613 = arith.andi %1608, %1612 : vector<2x256xi1>
    %c205_i32 = arith.constant 205 : i32
    %1614 = tpu.dynamic_rotate %852 by %c205_i32 dim 1 : vector<2x256xf32>, i32 -> vector<2x256xf32>
    %cst_261 = arith.constant 0.000000e+00 : f32
    %1615 = vector.broadcast %cst_261 : f32 to vector<2x256xf32>
    %1616 = arith.select %1613, %1614, %1615 : vector<2x256xi1>, vector<2x256xf32>
    %c272 = arith.constant 272 : index
    %1617 = memref.load %arg0[%c272] : memref<432xf32, #tpu.memory_space<smem>>
    %1618 = vector.broadcast %1617 : f32 to vector<2x256xf32>
    %1619 = arith.mulf %1618, %1616 : vector<2x256xf32>
    %1620 = arith.addf %1582, %1619 : vector<2x256xf32>
    %c273 = arith.constant 273 : index
    %1621 = memref.load %arg0[%c273] : memref<432xf32, #tpu.memory_space<smem>>
    %1622 = vector.broadcast %1621 : f32 to vector<2x256xf32>
    %1623 = arith.mulf %1622, %1616 : vector<2x256xf32>
    %1624 = arith.addf %1586, %1623 : vector<2x256xf32>
    %c274 = arith.constant 274 : index
    %1625 = memref.load %arg0[%c274] : memref<432xf32, #tpu.memory_space<smem>>
    %1626 = vector.broadcast %1625 : f32 to vector<2x256xf32>
    %1627 = arith.mulf %1626, %1616 : vector<2x256xf32>
    %1628 = arith.addf %1590, %1627 : vector<2x256xf32>
    %c275 = arith.constant 275 : index
    %1629 = memref.load %arg0[%c275] : memref<432xf32, #tpu.memory_space<smem>>
    %1630 = vector.broadcast %1629 : f32 to vector<2x256xf32>
    %1631 = arith.mulf %1630, %1616 : vector<2x256xf32>
    %1632 = arith.addf %1594, %1631 : vector<2x256xf32>
    %c205_i32_262 = arith.constant 205 : i32
    %1633 = tpu.dynamic_rotate %855 by %c205_i32_262 dim 1 : vector<2x256xf32>, i32 -> vector<2x256xf32>
    %cst_263 = arith.constant 0.000000e+00 : f32
    %1634 = vector.broadcast %cst_263 : f32 to vector<2x256xf32>
    %1635 = arith.select %1613, %1633, %1634 : vector<2x256xi1>, vector<2x256xf32>
    %c276 = arith.constant 276 : index
    %1636 = memref.load %arg0[%c276] : memref<432xf32, #tpu.memory_space<smem>>
    %1637 = vector.broadcast %1636 : f32 to vector<2x256xf32>
    %1638 = arith.mulf %1637, %1635 : vector<2x256xf32>
    %1639 = arith.addf %1620, %1638 : vector<2x256xf32>
    %c277 = arith.constant 277 : index
    %1640 = memref.load %arg0[%c277] : memref<432xf32, #tpu.memory_space<smem>>
    %1641 = vector.broadcast %1640 : f32 to vector<2x256xf32>
    %1642 = arith.mulf %1641, %1635 : vector<2x256xf32>
    %1643 = arith.addf %1624, %1642 : vector<2x256xf32>
    %c278 = arith.constant 278 : index
    %1644 = memref.load %arg0[%c278] : memref<432xf32, #tpu.memory_space<smem>>
    %1645 = vector.broadcast %1644 : f32 to vector<2x256xf32>
    %1646 = arith.mulf %1645, %1635 : vector<2x256xf32>
    %1647 = arith.addf %1628, %1646 : vector<2x256xf32>
    %c279 = arith.constant 279 : index
    %1648 = memref.load %arg0[%c279] : memref<432xf32, #tpu.memory_space<smem>>
    %1649 = vector.broadcast %1648 : f32 to vector<2x256xf32>
    %1650 = arith.mulf %1649, %1635 : vector<2x256xf32>
    %1651 = arith.addf %1632, %1650 : vector<2x256xf32>
    %c205_i32_264 = arith.constant 205 : i32
    %1652 = tpu.dynamic_rotate %858 by %c205_i32_264 dim 1 : vector<2x256xf32>, i32 -> vector<2x256xf32>
    %cst_265 = arith.constant 0.000000e+00 : f32
    %1653 = vector.broadcast %cst_265 : f32 to vector<2x256xf32>
    %1654 = arith.select %1613, %1652, %1653 : vector<2x256xi1>, vector<2x256xf32>
    %c280 = arith.constant 280 : index
    %1655 = memref.load %arg0[%c280] : memref<432xf32, #tpu.memory_space<smem>>
    %1656 = vector.broadcast %1655 : f32 to vector<2x256xf32>
    %1657 = arith.mulf %1656, %1654 : vector<2x256xf32>
    %1658 = arith.addf %1639, %1657 : vector<2x256xf32>
    %c281 = arith.constant 281 : index
    %1659 = memref.load %arg0[%c281] : memref<432xf32, #tpu.memory_space<smem>>
    %1660 = vector.broadcast %1659 : f32 to vector<2x256xf32>
    %1661 = arith.mulf %1660, %1654 : vector<2x256xf32>
    %1662 = arith.addf %1643, %1661 : vector<2x256xf32>
    %c282 = arith.constant 282 : index
    %1663 = memref.load %arg0[%c282] : memref<432xf32, #tpu.memory_space<smem>>
    %1664 = vector.broadcast %1663 : f32 to vector<2x256xf32>
    %1665 = arith.mulf %1664, %1654 : vector<2x256xf32>
    %1666 = arith.addf %1647, %1665 : vector<2x256xf32>
    %c283 = arith.constant 283 : index
    %1667 = memref.load %arg0[%c283] : memref<432xf32, #tpu.memory_space<smem>>
    %1668 = vector.broadcast %1667 : f32 to vector<2x256xf32>
    %1669 = arith.mulf %1668, %1654 : vector<2x256xf32>
    %1670 = arith.addf %1651, %1669 : vector<2x256xf32>
    %c205_i32_266 = arith.constant 205 : i32
    %1671 = tpu.dynamic_rotate %861 by %c205_i32_266 dim 1 : vector<2x256xf32>, i32 -> vector<2x256xf32>
    %cst_267 = arith.constant 0.000000e+00 : f32
    %1672 = vector.broadcast %cst_267 : f32 to vector<2x256xf32>
    %1673 = arith.select %1613, %1671, %1672 : vector<2x256xi1>, vector<2x256xf32>
    %c284 = arith.constant 284 : index
    %1674 = memref.load %arg0[%c284] : memref<432xf32, #tpu.memory_space<smem>>
    %1675 = vector.broadcast %1674 : f32 to vector<2x256xf32>
    %1676 = arith.mulf %1675, %1673 : vector<2x256xf32>
    %1677 = arith.addf %1658, %1676 : vector<2x256xf32>
    %c285 = arith.constant 285 : index
    %1678 = memref.load %arg0[%c285] : memref<432xf32, #tpu.memory_space<smem>>
    %1679 = vector.broadcast %1678 : f32 to vector<2x256xf32>
    %1680 = arith.mulf %1679, %1673 : vector<2x256xf32>
    %1681 = arith.addf %1662, %1680 : vector<2x256xf32>
    %c286 = arith.constant 286 : index
    %1682 = memref.load %arg0[%c286] : memref<432xf32, #tpu.memory_space<smem>>
    %1683 = vector.broadcast %1682 : f32 to vector<2x256xf32>
    %1684 = arith.mulf %1683, %1673 : vector<2x256xf32>
    %1685 = arith.addf %1666, %1684 : vector<2x256xf32>
    %c287 = arith.constant 287 : index
    %1686 = memref.load %arg0[%c287] : memref<432xf32, #tpu.memory_space<smem>>
    %1687 = vector.broadcast %1686 : f32 to vector<2x256xf32>
    %1688 = arith.mulf %1687, %1673 : vector<2x256xf32>
    %1689 = arith.addf %1670, %1688 : vector<2x256xf32>
    %c4_268 = arith.constant 4 : index
    %1690 = memref.load %arg1[%c4_268] : memref<12xf32, #tpu.memory_space<smem>>
    %1691 = vector.broadcast %1690 : f32 to vector<2x256xf32>
    %1692 = arith.addf %1677, %1691 : vector<2x256xf32>
    %c5_269 = arith.constant 5 : index
    %1693 = memref.load %arg1[%c5_269] : memref<12xf32, #tpu.memory_space<smem>>
    %1694 = vector.broadcast %1693 : f32 to vector<2x256xf32>
    %1695 = arith.addf %1681, %1694 : vector<2x256xf32>
    %c6_270 = arith.constant 6 : index
    %1696 = memref.load %arg1[%c6_270] : memref<12xf32, #tpu.memory_space<smem>>
    %1697 = vector.broadcast %1696 : f32 to vector<2x256xf32>
    %1698 = arith.addf %1685, %1697 : vector<2x256xf32>
    %c7_271 = arith.constant 7 : index
    %1699 = memref.load %arg1[%c7_271] : memref<12xf32, #tpu.memory_space<smem>>
    %1700 = vector.broadcast %1699 : f32 to vector<2x256xf32>
    %1701 = arith.addf %1689, %1700 : vector<2x256xf32>
    %cst_272 = arith.constant 0.000000e+00 : f32
    %1702 = vector.broadcast %cst_272 : f32 to vector<2x256xf32>
    %cst_273 = arith.constant 0.000000e+00 : f32
    %1703 = vector.broadcast %cst_273 : f32 to vector<2x256xf32>
    %cst_274 = arith.constant 0.000000e+00 : f32
    %1704 = vector.broadcast %cst_274 : f32 to vector<2x256xf32>
    %cst_275 = arith.constant 0.000000e+00 : f32
    %1705 = vector.broadcast %cst_275 : f32 to vector<2x256xf32>
    %c-1_i32_276 = arith.constant -1 : i32
    %1706 = vector.broadcast %c-1_i32_276 : i32 to vector<2x256xi32>
    %1707 = arith.addi %2, %1706 : vector<2x256xi32>
    %c0_i32_277 = arith.constant 0 : i32
    %1708 = vector.broadcast %c0_i32_277 : i32 to vector<2x256xi32>
    %1709 = arith.cmpi sge, %1707, %1708 : vector<2x256xi32>
    %c-1_i32_278 = arith.constant -1 : i32
    %1710 = vector.broadcast %c-1_i32_278 : i32 to vector<2x256xi32>
    %1711 = arith.addi %2, %1710 : vector<2x256xi32>
    %c16_i32_279 = arith.constant 16 : i32
    %1712 = vector.broadcast %c16_i32_279 : i32 to vector<2x256xi32>
    %1713 = arith.cmpi slt, %1711, %1712 : vector<2x256xi32>
    %1714 = arith.andi %1709, %1713 : vector<2x256xi1>
    %c-1_i32_280 = arith.constant -1 : i32
    %1715 = vector.broadcast %c-1_i32_280 : i32 to vector<2x256xi32>
    %1716 = arith.addi %5, %1715 : vector<2x256xi32>
    %c0_i32_281 = arith.constant 0 : i32
    %1717 = vector.broadcast %c0_i32_281 : i32 to vector<2x256xi32>
    %1718 = arith.cmpi sge, %1716, %1717 : vector<2x256xi32>
    %1719 = arith.andi %1714, %1718 : vector<2x256xi1>
    %c-1_i32_282 = arith.constant -1 : i32
    %1720 = vector.broadcast %c-1_i32_282 : i32 to vector<2x256xi32>
    %1721 = arith.addi %5, %1720 : vector<2x256xi32>
    %c16_i32_283 = arith.constant 16 : i32
    %1722 = vector.broadcast %c16_i32_283 : i32 to vector<2x256xi32>
    %1723 = arith.cmpi slt, %1721, %1722 : vector<2x256xi32>
    %1724 = arith.andi %1719, %1723 : vector<2x256xi1>
    %c17_i32_284 = arith.constant 17 : i32
    %1725 = tpu.dynamic_rotate %1692 by %c17_i32_284 dim 1 : vector<2x256xf32>, i32 -> vector<2x256xf32>
    %cst_285 = arith.constant 0.000000e+00 : f32
    %1726 = vector.broadcast %cst_285 : f32 to vector<2x256xf32>
    %1727 = arith.select %1724, %1725, %1726 : vector<2x256xi1>, vector<2x256xf32>
    %c288 = arith.constant 288 : index
    %1728 = memref.load %arg0[%c288] : memref<432xf32, #tpu.memory_space<smem>>
    %1729 = vector.broadcast %1728 : f32 to vector<2x256xf32>
    %1730 = arith.mulf %1729, %1727 : vector<2x256xf32>
    %1731 = arith.addf %1702, %1730 : vector<2x256xf32>
    %c289 = arith.constant 289 : index
    %1732 = memref.load %arg0[%c289] : memref<432xf32, #tpu.memory_space<smem>>
    %1733 = vector.broadcast %1732 : f32 to vector<2x256xf32>
    %1734 = arith.mulf %1733, %1727 : vector<2x256xf32>
    %1735 = arith.addf %1703, %1734 : vector<2x256xf32>
    %c290 = arith.constant 290 : index
    %1736 = memref.load %arg0[%c290] : memref<432xf32, #tpu.memory_space<smem>>
    %1737 = vector.broadcast %1736 : f32 to vector<2x256xf32>
    %1738 = arith.mulf %1737, %1727 : vector<2x256xf32>
    %1739 = arith.addf %1704, %1738 : vector<2x256xf32>
    %c291 = arith.constant 291 : index
    %1740 = memref.load %arg0[%c291] : memref<432xf32, #tpu.memory_space<smem>>
    %1741 = vector.broadcast %1740 : f32 to vector<2x256xf32>
    %1742 = arith.mulf %1741, %1727 : vector<2x256xf32>
    %1743 = arith.addf %1705, %1742 : vector<2x256xf32>
    %c17_i32_286 = arith.constant 17 : i32
    %1744 = tpu.dynamic_rotate %1695 by %c17_i32_286 dim 1 : vector<2x256xf32>, i32 -> vector<2x256xf32>
    %cst_287 = arith.constant 0.000000e+00 : f32
    %1745 = vector.broadcast %cst_287 : f32 to vector<2x256xf32>
    %1746 = arith.select %1724, %1744, %1745 : vector<2x256xi1>, vector<2x256xf32>
    %c292 = arith.constant 292 : index
    %1747 = memref.load %arg0[%c292] : memref<432xf32, #tpu.memory_space<smem>>
    %1748 = vector.broadcast %1747 : f32 to vector<2x256xf32>
    %1749 = arith.mulf %1748, %1746 : vector<2x256xf32>
    %1750 = arith.addf %1731, %1749 : vector<2x256xf32>
    %c293 = arith.constant 293 : index
    %1751 = memref.load %arg0[%c293] : memref<432xf32, #tpu.memory_space<smem>>
    %1752 = vector.broadcast %1751 : f32 to vector<2x256xf32>
    %1753 = arith.mulf %1752, %1746 : vector<2x256xf32>
    %1754 = arith.addf %1735, %1753 : vector<2x256xf32>
    %c294 = arith.constant 294 : index
    %1755 = memref.load %arg0[%c294] : memref<432xf32, #tpu.memory_space<smem>>
    %1756 = vector.broadcast %1755 : f32 to vector<2x256xf32>
    %1757 = arith.mulf %1756, %1746 : vector<2x256xf32>
    %1758 = arith.addf %1739, %1757 : vector<2x256xf32>
    %c295 = arith.constant 295 : index
    %1759 = memref.load %arg0[%c295] : memref<432xf32, #tpu.memory_space<smem>>
    %1760 = vector.broadcast %1759 : f32 to vector<2x256xf32>
    %1761 = arith.mulf %1760, %1746 : vector<2x256xf32>
    %1762 = arith.addf %1743, %1761 : vector<2x256xf32>
    %c17_i32_288 = arith.constant 17 : i32
    %1763 = tpu.dynamic_rotate %1698 by %c17_i32_288 dim 1 : vector<2x256xf32>, i32 -> vector<2x256xf32>
    %cst_289 = arith.constant 0.000000e+00 : f32
    %1764 = vector.broadcast %cst_289 : f32 to vector<2x256xf32>
    %1765 = arith.select %1724, %1763, %1764 : vector<2x256xi1>, vector<2x256xf32>
    %c296 = arith.constant 296 : index
    %1766 = memref.load %arg0[%c296] : memref<432xf32, #tpu.memory_space<smem>>
    %1767 = vector.broadcast %1766 : f32 to vector<2x256xf32>
    %1768 = arith.mulf %1767, %1765 : vector<2x256xf32>
    %1769 = arith.addf %1750, %1768 : vector<2x256xf32>
    %c297 = arith.constant 297 : index
    %1770 = memref.load %arg0[%c297] : memref<432xf32, #tpu.memory_space<smem>>
    %1771 = vector.broadcast %1770 : f32 to vector<2x256xf32>
    %1772 = arith.mulf %1771, %1765 : vector<2x256xf32>
    %1773 = arith.addf %1754, %1772 : vector<2x256xf32>
    %c298 = arith.constant 298 : index
    %1774 = memref.load %arg0[%c298] : memref<432xf32, #tpu.memory_space<smem>>
    %1775 = vector.broadcast %1774 : f32 to vector<2x256xf32>
    %1776 = arith.mulf %1775, %1765 : vector<2x256xf32>
    %1777 = arith.addf %1758, %1776 : vector<2x256xf32>
    %c299 = arith.constant 299 : index
    %1778 = memref.load %arg0[%c299] : memref<432xf32, #tpu.memory_space<smem>>
    %1779 = vector.broadcast %1778 : f32 to vector<2x256xf32>
    %1780 = arith.mulf %1779, %1765 : vector<2x256xf32>
    %1781 = arith.addf %1762, %1780 : vector<2x256xf32>
    %c17_i32_290 = arith.constant 17 : i32
    %1782 = tpu.dynamic_rotate %1701 by %c17_i32_290 dim 1 : vector<2x256xf32>, i32 -> vector<2x256xf32>
    %cst_291 = arith.constant 0.000000e+00 : f32
    %1783 = vector.broadcast %cst_291 : f32 to vector<2x256xf32>
    %1784 = arith.select %1724, %1782, %1783 : vector<2x256xi1>, vector<2x256xf32>
    %c300 = arith.constant 300 : index
    %1785 = memref.load %arg0[%c300] : memref<432xf32, #tpu.memory_space<smem>>
    %1786 = vector.broadcast %1785 : f32 to vector<2x256xf32>
    %1787 = arith.mulf %1786, %1784 : vector<2x256xf32>
    %1788 = arith.addf %1769, %1787 : vector<2x256xf32>
    %c301 = arith.constant 301 : index
    %1789 = memref.load %arg0[%c301] : memref<432xf32, #tpu.memory_space<smem>>
    %1790 = vector.broadcast %1789 : f32 to vector<2x256xf32>
    %1791 = arith.mulf %1790, %1784 : vector<2x256xf32>
    %1792 = arith.addf %1773, %1791 : vector<2x256xf32>
    %c302 = arith.constant 302 : index
    %1793 = memref.load %arg0[%c302] : memref<432xf32, #tpu.memory_space<smem>>
    %1794 = vector.broadcast %1793 : f32 to vector<2x256xf32>
    %1795 = arith.mulf %1794, %1784 : vector<2x256xf32>
    %1796 = arith.addf %1777, %1795 : vector<2x256xf32>
    %c303 = arith.constant 303 : index
    %1797 = memref.load %arg0[%c303] : memref<432xf32, #tpu.memory_space<smem>>
    %1798 = vector.broadcast %1797 : f32 to vector<2x256xf32>
    %1799 = arith.mulf %1798, %1784 : vector<2x256xf32>
    %1800 = arith.addf %1781, %1799 : vector<2x256xf32>
    %c-1_i32_292 = arith.constant -1 : i32
    %1801 = vector.broadcast %c-1_i32_292 : i32 to vector<2x256xi32>
    %1802 = arith.addi %2, %1801 : vector<2x256xi32>
    %c0_i32_293 = arith.constant 0 : i32
    %1803 = vector.broadcast %c0_i32_293 : i32 to vector<2x256xi32>
    %1804 = arith.cmpi sge, %1802, %1803 : vector<2x256xi32>
    %c-1_i32_294 = arith.constant -1 : i32
    %1805 = vector.broadcast %c-1_i32_294 : i32 to vector<2x256xi32>
    %1806 = arith.addi %2, %1805 : vector<2x256xi32>
    %c16_i32_295 = arith.constant 16 : i32
    %1807 = vector.broadcast %c16_i32_295 : i32 to vector<2x256xi32>
    %1808 = arith.cmpi slt, %1806, %1807 : vector<2x256xi32>
    %1809 = arith.andi %1804, %1808 : vector<2x256xi1>
    %c0_i32_296 = arith.constant 0 : i32
    %1810 = vector.broadcast %c0_i32_296 : i32 to vector<2x256xi32>
    %1811 = arith.addi %5, %1810 : vector<2x256xi32>
    %c0_i32_297 = arith.constant 0 : i32
    %1812 = vector.broadcast %c0_i32_297 : i32 to vector<2x256xi32>
    %1813 = arith.cmpi sge, %1811, %1812 : vector<2x256xi32>
    %1814 = arith.andi %1809, %1813 : vector<2x256xi1>
    %c0_i32_298 = arith.constant 0 : i32
    %1815 = vector.broadcast %c0_i32_298 : i32 to vector<2x256xi32>
    %1816 = arith.addi %5, %1815 : vector<2x256xi32>
    %c16_i32_299 = arith.constant 16 : i32
    %1817 = vector.broadcast %c16_i32_299 : i32 to vector<2x256xi32>
    %1818 = arith.cmpi slt, %1816, %1817 : vector<2x256xi32>
    %1819 = arith.andi %1814, %1818 : vector<2x256xi1>
    %c16_i32_300 = arith.constant 16 : i32
    %1820 = tpu.dynamic_rotate %1692 by %c16_i32_300 dim 1 : vector<2x256xf32>, i32 -> vector<2x256xf32>
    %cst_301 = arith.constant 0.000000e+00 : f32
    %1821 = vector.broadcast %cst_301 : f32 to vector<2x256xf32>
    %1822 = arith.select %1819, %1820, %1821 : vector<2x256xi1>, vector<2x256xf32>
    %c304 = arith.constant 304 : index
    %1823 = memref.load %arg0[%c304] : memref<432xf32, #tpu.memory_space<smem>>
    %1824 = vector.broadcast %1823 : f32 to vector<2x256xf32>
    %1825 = arith.mulf %1824, %1822 : vector<2x256xf32>
    %1826 = arith.addf %1788, %1825 : vector<2x256xf32>
    %c305 = arith.constant 305 : index
    %1827 = memref.load %arg0[%c305] : memref<432xf32, #tpu.memory_space<smem>>
    %1828 = vector.broadcast %1827 : f32 to vector<2x256xf32>
    %1829 = arith.mulf %1828, %1822 : vector<2x256xf32>
    %1830 = arith.addf %1792, %1829 : vector<2x256xf32>
    %c306 = arith.constant 306 : index
    %1831 = memref.load %arg0[%c306] : memref<432xf32, #tpu.memory_space<smem>>
    %1832 = vector.broadcast %1831 : f32 to vector<2x256xf32>
    %1833 = arith.mulf %1832, %1822 : vector<2x256xf32>
    %1834 = arith.addf %1796, %1833 : vector<2x256xf32>
    %c307 = arith.constant 307 : index
    %1835 = memref.load %arg0[%c307] : memref<432xf32, #tpu.memory_space<smem>>
    %1836 = vector.broadcast %1835 : f32 to vector<2x256xf32>
    %1837 = arith.mulf %1836, %1822 : vector<2x256xf32>
    %1838 = arith.addf %1800, %1837 : vector<2x256xf32>
    %c16_i32_302 = arith.constant 16 : i32
    %1839 = tpu.dynamic_rotate %1695 by %c16_i32_302 dim 1 : vector<2x256xf32>, i32 -> vector<2x256xf32>
    %cst_303 = arith.constant 0.000000e+00 : f32
    %1840 = vector.broadcast %cst_303 : f32 to vector<2x256xf32>
    %1841 = arith.select %1819, %1839, %1840 : vector<2x256xi1>, vector<2x256xf32>
    %c308 = arith.constant 308 : index
    %1842 = memref.load %arg0[%c308] : memref<432xf32, #tpu.memory_space<smem>>
    %1843 = vector.broadcast %1842 : f32 to vector<2x256xf32>
    %1844 = arith.mulf %1843, %1841 : vector<2x256xf32>
    %1845 = arith.addf %1826, %1844 : vector<2x256xf32>
    %c309 = arith.constant 309 : index
    %1846 = memref.load %arg0[%c309] : memref<432xf32, #tpu.memory_space<smem>>
    %1847 = vector.broadcast %1846 : f32 to vector<2x256xf32>
    %1848 = arith.mulf %1847, %1841 : vector<2x256xf32>
    %1849 = arith.addf %1830, %1848 : vector<2x256xf32>
    %c310 = arith.constant 310 : index
    %1850 = memref.load %arg0[%c310] : memref<432xf32, #tpu.memory_space<smem>>
    %1851 = vector.broadcast %1850 : f32 to vector<2x256xf32>
    %1852 = arith.mulf %1851, %1841 : vector<2x256xf32>
    %1853 = arith.addf %1834, %1852 : vector<2x256xf32>
    %c311 = arith.constant 311 : index
    %1854 = memref.load %arg0[%c311] : memref<432xf32, #tpu.memory_space<smem>>
    %1855 = vector.broadcast %1854 : f32 to vector<2x256xf32>
    %1856 = arith.mulf %1855, %1841 : vector<2x256xf32>
    %1857 = arith.addf %1838, %1856 : vector<2x256xf32>
    %c16_i32_304 = arith.constant 16 : i32
    %1858 = tpu.dynamic_rotate %1698 by %c16_i32_304 dim 1 : vector<2x256xf32>, i32 -> vector<2x256xf32>
    %cst_305 = arith.constant 0.000000e+00 : f32
    %1859 = vector.broadcast %cst_305 : f32 to vector<2x256xf32>
    %1860 = arith.select %1819, %1858, %1859 : vector<2x256xi1>, vector<2x256xf32>
    %c312 = arith.constant 312 : index
    %1861 = memref.load %arg0[%c312] : memref<432xf32, #tpu.memory_space<smem>>
    %1862 = vector.broadcast %1861 : f32 to vector<2x256xf32>
    %1863 = arith.mulf %1862, %1860 : vector<2x256xf32>
    %1864 = arith.addf %1845, %1863 : vector<2x256xf32>
    %c313 = arith.constant 313 : index
    %1865 = memref.load %arg0[%c313] : memref<432xf32, #tpu.memory_space<smem>>
    %1866 = vector.broadcast %1865 : f32 to vector<2x256xf32>
    %1867 = arith.mulf %1866, %1860 : vector<2x256xf32>
    %1868 = arith.addf %1849, %1867 : vector<2x256xf32>
    %c314 = arith.constant 314 : index
    %1869 = memref.load %arg0[%c314] : memref<432xf32, #tpu.memory_space<smem>>
    %1870 = vector.broadcast %1869 : f32 to vector<2x256xf32>
    %1871 = arith.mulf %1870, %1860 : vector<2x256xf32>
    %1872 = arith.addf %1853, %1871 : vector<2x256xf32>
    %c315 = arith.constant 315 : index
    %1873 = memref.load %arg0[%c315] : memref<432xf32, #tpu.memory_space<smem>>
    %1874 = vector.broadcast %1873 : f32 to vector<2x256xf32>
    %1875 = arith.mulf %1874, %1860 : vector<2x256xf32>
    %1876 = arith.addf %1857, %1875 : vector<2x256xf32>
    %c16_i32_306 = arith.constant 16 : i32
    %1877 = tpu.dynamic_rotate %1701 by %c16_i32_306 dim 1 : vector<2x256xf32>, i32 -> vector<2x256xf32>
    %cst_307 = arith.constant 0.000000e+00 : f32
    %1878 = vector.broadcast %cst_307 : f32 to vector<2x256xf32>
    %1879 = arith.select %1819, %1877, %1878 : vector<2x256xi1>, vector<2x256xf32>
    %c316 = arith.constant 316 : index
    %1880 = memref.load %arg0[%c316] : memref<432xf32, #tpu.memory_space<smem>>
    %1881 = vector.broadcast %1880 : f32 to vector<2x256xf32>
    %1882 = arith.mulf %1881, %1879 : vector<2x256xf32>
    %1883 = arith.addf %1864, %1882 : vector<2x256xf32>
    %c317 = arith.constant 317 : index
    %1884 = memref.load %arg0[%c317] : memref<432xf32, #tpu.memory_space<smem>>
    %1885 = vector.broadcast %1884 : f32 to vector<2x256xf32>
    %1886 = arith.mulf %1885, %1879 : vector<2x256xf32>
    %1887 = arith.addf %1868, %1886 : vector<2x256xf32>
    %c318 = arith.constant 318 : index
    %1888 = memref.load %arg0[%c318] : memref<432xf32, #tpu.memory_space<smem>>
    %1889 = vector.broadcast %1888 : f32 to vector<2x256xf32>
    %1890 = arith.mulf %1889, %1879 : vector<2x256xf32>
    %1891 = arith.addf %1872, %1890 : vector<2x256xf32>
    %c319 = arith.constant 319 : index
    %1892 = memref.load %arg0[%c319] : memref<432xf32, #tpu.memory_space<smem>>
    %1893 = vector.broadcast %1892 : f32 to vector<2x256xf32>
    %1894 = arith.mulf %1893, %1879 : vector<2x256xf32>
    %1895 = arith.addf %1876, %1894 : vector<2x256xf32>
    %c-1_i32_308 = arith.constant -1 : i32
    %1896 = vector.broadcast %c-1_i32_308 : i32 to vector<2x256xi32>
    %1897 = arith.addi %2, %1896 : vector<2x256xi32>
    %c0_i32_309 = arith.constant 0 : i32
    %1898 = vector.broadcast %c0_i32_309 : i32 to vector<2x256xi32>
    %1899 = arith.cmpi sge, %1897, %1898 : vector<2x256xi32>
    %c-1_i32_310 = arith.constant -1 : i32
    %1900 = vector.broadcast %c-1_i32_310 : i32 to vector<2x256xi32>
    %1901 = arith.addi %2, %1900 : vector<2x256xi32>
    %c16_i32_311 = arith.constant 16 : i32
    %1902 = vector.broadcast %c16_i32_311 : i32 to vector<2x256xi32>
    %1903 = arith.cmpi slt, %1901, %1902 : vector<2x256xi32>
    %1904 = arith.andi %1899, %1903 : vector<2x256xi1>
    %c1_i32_312 = arith.constant 1 : i32
    %1905 = vector.broadcast %c1_i32_312 : i32 to vector<2x256xi32>
    %1906 = arith.addi %5, %1905 : vector<2x256xi32>
    %c0_i32_313 = arith.constant 0 : i32
    %1907 = vector.broadcast %c0_i32_313 : i32 to vector<2x256xi32>
    %1908 = arith.cmpi sge, %1906, %1907 : vector<2x256xi32>
    %1909 = arith.andi %1904, %1908 : vector<2x256xi1>
    %c1_i32_314 = arith.constant 1 : i32
    %1910 = vector.broadcast %c1_i32_314 : i32 to vector<2x256xi32>
    %1911 = arith.addi %5, %1910 : vector<2x256xi32>
    %c16_i32_315 = arith.constant 16 : i32
    %1912 = vector.broadcast %c16_i32_315 : i32 to vector<2x256xi32>
    %1913 = arith.cmpi slt, %1911, %1912 : vector<2x256xi32>
    %1914 = arith.andi %1909, %1913 : vector<2x256xi1>
    %c15_i32_316 = arith.constant 15 : i32
    %1915 = tpu.dynamic_rotate %1692 by %c15_i32_316 dim 1 : vector<2x256xf32>, i32 -> vector<2x256xf32>
    %cst_317 = arith.constant 0.000000e+00 : f32
    %1916 = vector.broadcast %cst_317 : f32 to vector<2x256xf32>
    %1917 = arith.select %1914, %1915, %1916 : vector<2x256xi1>, vector<2x256xf32>
    %c320 = arith.constant 320 : index
    %1918 = memref.load %arg0[%c320] : memref<432xf32, #tpu.memory_space<smem>>
    %1919 = vector.broadcast %1918 : f32 to vector<2x256xf32>
    %1920 = arith.mulf %1919, %1917 : vector<2x256xf32>
    %1921 = arith.addf %1883, %1920 : vector<2x256xf32>
    %c321 = arith.constant 321 : index
    %1922 = memref.load %arg0[%c321] : memref<432xf32, #tpu.memory_space<smem>>
    %1923 = vector.broadcast %1922 : f32 to vector<2x256xf32>
    %1924 = arith.mulf %1923, %1917 : vector<2x256xf32>
    %1925 = arith.addf %1887, %1924 : vector<2x256xf32>
    %c322 = arith.constant 322 : index
    %1926 = memref.load %arg0[%c322] : memref<432xf32, #tpu.memory_space<smem>>
    %1927 = vector.broadcast %1926 : f32 to vector<2x256xf32>
    %1928 = arith.mulf %1927, %1917 : vector<2x256xf32>
    %1929 = arith.addf %1891, %1928 : vector<2x256xf32>
    %c323 = arith.constant 323 : index
    %1930 = memref.load %arg0[%c323] : memref<432xf32, #tpu.memory_space<smem>>
    %1931 = vector.broadcast %1930 : f32 to vector<2x256xf32>
    %1932 = arith.mulf %1931, %1917 : vector<2x256xf32>
    %1933 = arith.addf %1895, %1932 : vector<2x256xf32>
    %c15_i32_318 = arith.constant 15 : i32
    %1934 = tpu.dynamic_rotate %1695 by %c15_i32_318 dim 1 : vector<2x256xf32>, i32 -> vector<2x256xf32>
    %cst_319 = arith.constant 0.000000e+00 : f32
    %1935 = vector.broadcast %cst_319 : f32 to vector<2x256xf32>
    %1936 = arith.select %1914, %1934, %1935 : vector<2x256xi1>, vector<2x256xf32>
    %c324 = arith.constant 324 : index
    %1937 = memref.load %arg0[%c324] : memref<432xf32, #tpu.memory_space<smem>>
    %1938 = vector.broadcast %1937 : f32 to vector<2x256xf32>
    %1939 = arith.mulf %1938, %1936 : vector<2x256xf32>
    %1940 = arith.addf %1921, %1939 : vector<2x256xf32>
    %c325 = arith.constant 325 : index
    %1941 = memref.load %arg0[%c325] : memref<432xf32, #tpu.memory_space<smem>>
    %1942 = vector.broadcast %1941 : f32 to vector<2x256xf32>
    %1943 = arith.mulf %1942, %1936 : vector<2x256xf32>
    %1944 = arith.addf %1925, %1943 : vector<2x256xf32>
    %c326 = arith.constant 326 : index
    %1945 = memref.load %arg0[%c326] : memref<432xf32, #tpu.memory_space<smem>>
    %1946 = vector.broadcast %1945 : f32 to vector<2x256xf32>
    %1947 = arith.mulf %1946, %1936 : vector<2x256xf32>
    %1948 = arith.addf %1929, %1947 : vector<2x256xf32>
    %c327 = arith.constant 327 : index
    %1949 = memref.load %arg0[%c327] : memref<432xf32, #tpu.memory_space<smem>>
    %1950 = vector.broadcast %1949 : f32 to vector<2x256xf32>
    %1951 = arith.mulf %1950, %1936 : vector<2x256xf32>
    %1952 = arith.addf %1933, %1951 : vector<2x256xf32>
    %c15_i32_320 = arith.constant 15 : i32
    %1953 = tpu.dynamic_rotate %1698 by %c15_i32_320 dim 1 : vector<2x256xf32>, i32 -> vector<2x256xf32>
    %cst_321 = arith.constant 0.000000e+00 : f32
    %1954 = vector.broadcast %cst_321 : f32 to vector<2x256xf32>
    %1955 = arith.select %1914, %1953, %1954 : vector<2x256xi1>, vector<2x256xf32>
    %c328 = arith.constant 328 : index
    %1956 = memref.load %arg0[%c328] : memref<432xf32, #tpu.memory_space<smem>>
    %1957 = vector.broadcast %1956 : f32 to vector<2x256xf32>
    %1958 = arith.mulf %1957, %1955 : vector<2x256xf32>
    %1959 = arith.addf %1940, %1958 : vector<2x256xf32>
    %c329 = arith.constant 329 : index
    %1960 = memref.load %arg0[%c329] : memref<432xf32, #tpu.memory_space<smem>>
    %1961 = vector.broadcast %1960 : f32 to vector<2x256xf32>
    %1962 = arith.mulf %1961, %1955 : vector<2x256xf32>
    %1963 = arith.addf %1944, %1962 : vector<2x256xf32>
    %c330 = arith.constant 330 : index
    %1964 = memref.load %arg0[%c330] : memref<432xf32, #tpu.memory_space<smem>>
    %1965 = vector.broadcast %1964 : f32 to vector<2x256xf32>
    %1966 = arith.mulf %1965, %1955 : vector<2x256xf32>
    %1967 = arith.addf %1948, %1966 : vector<2x256xf32>
    %c331 = arith.constant 331 : index
    %1968 = memref.load %arg0[%c331] : memref<432xf32, #tpu.memory_space<smem>>
    %1969 = vector.broadcast %1968 : f32 to vector<2x256xf32>
    %1970 = arith.mulf %1969, %1955 : vector<2x256xf32>
    %1971 = arith.addf %1952, %1970 : vector<2x256xf32>
    %c15_i32_322 = arith.constant 15 : i32
    %1972 = tpu.dynamic_rotate %1701 by %c15_i32_322 dim 1 : vector<2x256xf32>, i32 -> vector<2x256xf32>
    %cst_323 = arith.constant 0.000000e+00 : f32
    %1973 = vector.broadcast %cst_323 : f32 to vector<2x256xf32>
    %1974 = arith.select %1914, %1972, %1973 : vector<2x256xi1>, vector<2x256xf32>
    %c332 = arith.constant 332 : index
    %1975 = memref.load %arg0[%c332] : memref<432xf32, #tpu.memory_space<smem>>
    %1976 = vector.broadcast %1975 : f32 to vector<2x256xf32>
    %1977 = arith.mulf %1976, %1974 : vector<2x256xf32>
    %1978 = arith.addf %1959, %1977 : vector<2x256xf32>
    %c333 = arith.constant 333 : index
    %1979 = memref.load %arg0[%c333] : memref<432xf32, #tpu.memory_space<smem>>
    %1980 = vector.broadcast %1979 : f32 to vector<2x256xf32>
    %1981 = arith.mulf %1980, %1974 : vector<2x256xf32>
    %1982 = arith.addf %1963, %1981 : vector<2x256xf32>
    %c334 = arith.constant 334 : index
    %1983 = memref.load %arg0[%c334] : memref<432xf32, #tpu.memory_space<smem>>
    %1984 = vector.broadcast %1983 : f32 to vector<2x256xf32>
    %1985 = arith.mulf %1984, %1974 : vector<2x256xf32>
    %1986 = arith.addf %1967, %1985 : vector<2x256xf32>
    %c335 = arith.constant 335 : index
    %1987 = memref.load %arg0[%c335] : memref<432xf32, #tpu.memory_space<smem>>
    %1988 = vector.broadcast %1987 : f32 to vector<2x256xf32>
    %1989 = arith.mulf %1988, %1974 : vector<2x256xf32>
    %1990 = arith.addf %1971, %1989 : vector<2x256xf32>
    %c0_i32_324 = arith.constant 0 : i32
    %1991 = vector.broadcast %c0_i32_324 : i32 to vector<2x256xi32>
    %1992 = arith.addi %2, %1991 : vector<2x256xi32>
    %c0_i32_325 = arith.constant 0 : i32
    %1993 = vector.broadcast %c0_i32_325 : i32 to vector<2x256xi32>
    %1994 = arith.cmpi sge, %1992, %1993 : vector<2x256xi32>
    %c0_i32_326 = arith.constant 0 : i32
    %1995 = vector.broadcast %c0_i32_326 : i32 to vector<2x256xi32>
    %1996 = arith.addi %2, %1995 : vector<2x256xi32>
    %c16_i32_327 = arith.constant 16 : i32
    %1997 = vector.broadcast %c16_i32_327 : i32 to vector<2x256xi32>
    %1998 = arith.cmpi slt, %1996, %1997 : vector<2x256xi32>
    %1999 = arith.andi %1994, %1998 : vector<2x256xi1>
    %c-1_i32_328 = arith.constant -1 : i32
    %2000 = vector.broadcast %c-1_i32_328 : i32 to vector<2x256xi32>
    %2001 = arith.addi %5, %2000 : vector<2x256xi32>
    %c0_i32_329 = arith.constant 0 : i32
    %2002 = vector.broadcast %c0_i32_329 : i32 to vector<2x256xi32>
    %2003 = arith.cmpi sge, %2001, %2002 : vector<2x256xi32>
    %2004 = arith.andi %1999, %2003 : vector<2x256xi1>
    %c-1_i32_330 = arith.constant -1 : i32
    %2005 = vector.broadcast %c-1_i32_330 : i32 to vector<2x256xi32>
    %2006 = arith.addi %5, %2005 : vector<2x256xi32>
    %c16_i32_331 = arith.constant 16 : i32
    %2007 = vector.broadcast %c16_i32_331 : i32 to vector<2x256xi32>
    %2008 = arith.cmpi slt, %2006, %2007 : vector<2x256xi32>
    %2009 = arith.andi %2004, %2008 : vector<2x256xi1>
    %c1_i32_332 = arith.constant 1 : i32
    %2010 = tpu.dynamic_rotate %1692 by %c1_i32_332 dim 1 : vector<2x256xf32>, i32 -> vector<2x256xf32>
    %cst_333 = arith.constant 0.000000e+00 : f32
    %2011 = vector.broadcast %cst_333 : f32 to vector<2x256xf32>
    %2012 = arith.select %2009, %2010, %2011 : vector<2x256xi1>, vector<2x256xf32>
    %c336 = arith.constant 336 : index
    %2013 = memref.load %arg0[%c336] : memref<432xf32, #tpu.memory_space<smem>>
    %2014 = vector.broadcast %2013 : f32 to vector<2x256xf32>
    %2015 = arith.mulf %2014, %2012 : vector<2x256xf32>
    %2016 = arith.addf %1978, %2015 : vector<2x256xf32>
    %c337 = arith.constant 337 : index
    %2017 = memref.load %arg0[%c337] : memref<432xf32, #tpu.memory_space<smem>>
    %2018 = vector.broadcast %2017 : f32 to vector<2x256xf32>
    %2019 = arith.mulf %2018, %2012 : vector<2x256xf32>
    %2020 = arith.addf %1982, %2019 : vector<2x256xf32>
    %c338 = arith.constant 338 : index
    %2021 = memref.load %arg0[%c338] : memref<432xf32, #tpu.memory_space<smem>>
    %2022 = vector.broadcast %2021 : f32 to vector<2x256xf32>
    %2023 = arith.mulf %2022, %2012 : vector<2x256xf32>
    %2024 = arith.addf %1986, %2023 : vector<2x256xf32>
    %c339 = arith.constant 339 : index
    %2025 = memref.load %arg0[%c339] : memref<432xf32, #tpu.memory_space<smem>>
    %2026 = vector.broadcast %2025 : f32 to vector<2x256xf32>
    %2027 = arith.mulf %2026, %2012 : vector<2x256xf32>
    %2028 = arith.addf %1990, %2027 : vector<2x256xf32>
    %c1_i32_334 = arith.constant 1 : i32
    %2029 = tpu.dynamic_rotate %1695 by %c1_i32_334 dim 1 : vector<2x256xf32>, i32 -> vector<2x256xf32>
    %cst_335 = arith.constant 0.000000e+00 : f32
    %2030 = vector.broadcast %cst_335 : f32 to vector<2x256xf32>
    %2031 = arith.select %2009, %2029, %2030 : vector<2x256xi1>, vector<2x256xf32>
    %c340 = arith.constant 340 : index
    %2032 = memref.load %arg0[%c340] : memref<432xf32, #tpu.memory_space<smem>>
    %2033 = vector.broadcast %2032 : f32 to vector<2x256xf32>
    %2034 = arith.mulf %2033, %2031 : vector<2x256xf32>
    %2035 = arith.addf %2016, %2034 : vector<2x256xf32>
    %c341 = arith.constant 341 : index
    %2036 = memref.load %arg0[%c341] : memref<432xf32, #tpu.memory_space<smem>>
    %2037 = vector.broadcast %2036 : f32 to vector<2x256xf32>
    %2038 = arith.mulf %2037, %2031 : vector<2x256xf32>
    %2039 = arith.addf %2020, %2038 : vector<2x256xf32>
    %c342 = arith.constant 342 : index
    %2040 = memref.load %arg0[%c342] : memref<432xf32, #tpu.memory_space<smem>>
    %2041 = vector.broadcast %2040 : f32 to vector<2x256xf32>
    %2042 = arith.mulf %2041, %2031 : vector<2x256xf32>
    %2043 = arith.addf %2024, %2042 : vector<2x256xf32>
    %c343 = arith.constant 343 : index
    %2044 = memref.load %arg0[%c343] : memref<432xf32, #tpu.memory_space<smem>>
    %2045 = vector.broadcast %2044 : f32 to vector<2x256xf32>
    %2046 = arith.mulf %2045, %2031 : vector<2x256xf32>
    %2047 = arith.addf %2028, %2046 : vector<2x256xf32>
    %c1_i32_336 = arith.constant 1 : i32
    %2048 = tpu.dynamic_rotate %1698 by %c1_i32_336 dim 1 : vector<2x256xf32>, i32 -> vector<2x256xf32>
    %cst_337 = arith.constant 0.000000e+00 : f32
    %2049 = vector.broadcast %cst_337 : f32 to vector<2x256xf32>
    %2050 = arith.select %2009, %2048, %2049 : vector<2x256xi1>, vector<2x256xf32>
    %c344 = arith.constant 344 : index
    %2051 = memref.load %arg0[%c344] : memref<432xf32, #tpu.memory_space<smem>>
    %2052 = vector.broadcast %2051 : f32 to vector<2x256xf32>
    %2053 = arith.mulf %2052, %2050 : vector<2x256xf32>
    %2054 = arith.addf %2035, %2053 : vector<2x256xf32>
    %c345 = arith.constant 345 : index
    %2055 = memref.load %arg0[%c345] : memref<432xf32, #tpu.memory_space<smem>>
    %2056 = vector.broadcast %2055 : f32 to vector<2x256xf32>
    %2057 = arith.mulf %2056, %2050 : vector<2x256xf32>
    %2058 = arith.addf %2039, %2057 : vector<2x256xf32>
    %c346 = arith.constant 346 : index
    %2059 = memref.load %arg0[%c346] : memref<432xf32, #tpu.memory_space<smem>>
    %2060 = vector.broadcast %2059 : f32 to vector<2x256xf32>
    %2061 = arith.mulf %2060, %2050 : vector<2x256xf32>
    %2062 = arith.addf %2043, %2061 : vector<2x256xf32>
    %c347 = arith.constant 347 : index
    %2063 = memref.load %arg0[%c347] : memref<432xf32, #tpu.memory_space<smem>>
    %2064 = vector.broadcast %2063 : f32 to vector<2x256xf32>
    %2065 = arith.mulf %2064, %2050 : vector<2x256xf32>
    %2066 = arith.addf %2047, %2065 : vector<2x256xf32>
    %c1_i32_338 = arith.constant 1 : i32
    %2067 = tpu.dynamic_rotate %1701 by %c1_i32_338 dim 1 : vector<2x256xf32>, i32 -> vector<2x256xf32>
    %cst_339 = arith.constant 0.000000e+00 : f32
    %2068 = vector.broadcast %cst_339 : f32 to vector<2x256xf32>
    %2069 = arith.select %2009, %2067, %2068 : vector<2x256xi1>, vector<2x256xf32>
    %c348 = arith.constant 348 : index
    %2070 = memref.load %arg0[%c348] : memref<432xf32, #tpu.memory_space<smem>>
    %2071 = vector.broadcast %2070 : f32 to vector<2x256xf32>
    %2072 = arith.mulf %2071, %2069 : vector<2x256xf32>
    %2073 = arith.addf %2054, %2072 : vector<2x256xf32>
    %c349 = arith.constant 349 : index
    %2074 = memref.load %arg0[%c349] : memref<432xf32, #tpu.memory_space<smem>>
    %2075 = vector.broadcast %2074 : f32 to vector<2x256xf32>
    %2076 = arith.mulf %2075, %2069 : vector<2x256xf32>
    %2077 = arith.addf %2058, %2076 : vector<2x256xf32>
    %c350 = arith.constant 350 : index
    %2078 = memref.load %arg0[%c350] : memref<432xf32, #tpu.memory_space<smem>>
    %2079 = vector.broadcast %2078 : f32 to vector<2x256xf32>
    %2080 = arith.mulf %2079, %2069 : vector<2x256xf32>
    %2081 = arith.addf %2062, %2080 : vector<2x256xf32>
    %c351 = arith.constant 351 : index
    %2082 = memref.load %arg0[%c351] : memref<432xf32, #tpu.memory_space<smem>>
    %2083 = vector.broadcast %2082 : f32 to vector<2x256xf32>
    %2084 = arith.mulf %2083, %2069 : vector<2x256xf32>
    %2085 = arith.addf %2066, %2084 : vector<2x256xf32>
    %c352 = arith.constant 352 : index
    %2086 = memref.load %arg0[%c352] : memref<432xf32, #tpu.memory_space<smem>>
    %2087 = vector.broadcast %2086 : f32 to vector<2x256xf32>
    %2088 = arith.mulf %2087, %1692 : vector<2x256xf32>
    %2089 = arith.addf %2073, %2088 : vector<2x256xf32>
    %c353 = arith.constant 353 : index
    %2090 = memref.load %arg0[%c353] : memref<432xf32, #tpu.memory_space<smem>>
    %2091 = vector.broadcast %2090 : f32 to vector<2x256xf32>
    %2092 = arith.mulf %2091, %1692 : vector<2x256xf32>
    %2093 = arith.addf %2077, %2092 : vector<2x256xf32>
    %c354 = arith.constant 354 : index
    %2094 = memref.load %arg0[%c354] : memref<432xf32, #tpu.memory_space<smem>>
    %2095 = vector.broadcast %2094 : f32 to vector<2x256xf32>
    %2096 = arith.mulf %2095, %1692 : vector<2x256xf32>
    %2097 = arith.addf %2081, %2096 : vector<2x256xf32>
    %c355 = arith.constant 355 : index
    %2098 = memref.load %arg0[%c355] : memref<432xf32, #tpu.memory_space<smem>>
    %2099 = vector.broadcast %2098 : f32 to vector<2x256xf32>
    %2100 = arith.mulf %2099, %1692 : vector<2x256xf32>
    %2101 = arith.addf %2085, %2100 : vector<2x256xf32>
    %c356 = arith.constant 356 : index
    %2102 = memref.load %arg0[%c356] : memref<432xf32, #tpu.memory_space<smem>>
    %2103 = vector.broadcast %2102 : f32 to vector<2x256xf32>
    %2104 = arith.mulf %2103, %1695 : vector<2x256xf32>
    %2105 = arith.addf %2089, %2104 : vector<2x256xf32>
    %c357 = arith.constant 357 : index
    %2106 = memref.load %arg0[%c357] : memref<432xf32, #tpu.memory_space<smem>>
    %2107 = vector.broadcast %2106 : f32 to vector<2x256xf32>
    %2108 = arith.mulf %2107, %1695 : vector<2x256xf32>
    %2109 = arith.addf %2093, %2108 : vector<2x256xf32>
    %c358 = arith.constant 358 : index
    %2110 = memref.load %arg0[%c358] : memref<432xf32, #tpu.memory_space<smem>>
    %2111 = vector.broadcast %2110 : f32 to vector<2x256xf32>
    %2112 = arith.mulf %2111, %1695 : vector<2x256xf32>
    %2113 = arith.addf %2097, %2112 : vector<2x256xf32>
    %c359 = arith.constant 359 : index
    %2114 = memref.load %arg0[%c359] : memref<432xf32, #tpu.memory_space<smem>>
    %2115 = vector.broadcast %2114 : f32 to vector<2x256xf32>
    %2116 = arith.mulf %2115, %1695 : vector<2x256xf32>
    %2117 = arith.addf %2101, %2116 : vector<2x256xf32>
    %c360 = arith.constant 360 : index
    %2118 = memref.load %arg0[%c360] : memref<432xf32, #tpu.memory_space<smem>>
    %2119 = vector.broadcast %2118 : f32 to vector<2x256xf32>
    %2120 = arith.mulf %2119, %1698 : vector<2x256xf32>
    %2121 = arith.addf %2105, %2120 : vector<2x256xf32>
    %c361 = arith.constant 361 : index
    %2122 = memref.load %arg0[%c361] : memref<432xf32, #tpu.memory_space<smem>>
    %2123 = vector.broadcast %2122 : f32 to vector<2x256xf32>
    %2124 = arith.mulf %2123, %1698 : vector<2x256xf32>
    %2125 = arith.addf %2109, %2124 : vector<2x256xf32>
    %c362 = arith.constant 362 : index
    %2126 = memref.load %arg0[%c362] : memref<432xf32, #tpu.memory_space<smem>>
    %2127 = vector.broadcast %2126 : f32 to vector<2x256xf32>
    %2128 = arith.mulf %2127, %1698 : vector<2x256xf32>
    %2129 = arith.addf %2113, %2128 : vector<2x256xf32>
    %c363 = arith.constant 363 : index
    %2130 = memref.load %arg0[%c363] : memref<432xf32, #tpu.memory_space<smem>>
    %2131 = vector.broadcast %2130 : f32 to vector<2x256xf32>
    %2132 = arith.mulf %2131, %1698 : vector<2x256xf32>
    %2133 = arith.addf %2117, %2132 : vector<2x256xf32>
    %c364 = arith.constant 364 : index
    %2134 = memref.load %arg0[%c364] : memref<432xf32, #tpu.memory_space<smem>>
    %2135 = vector.broadcast %2134 : f32 to vector<2x256xf32>
    %2136 = arith.mulf %2135, %1701 : vector<2x256xf32>
    %2137 = arith.addf %2121, %2136 : vector<2x256xf32>
    %c365 = arith.constant 365 : index
    %2138 = memref.load %arg0[%c365] : memref<432xf32, #tpu.memory_space<smem>>
    %2139 = vector.broadcast %2138 : f32 to vector<2x256xf32>
    %2140 = arith.mulf %2139, %1701 : vector<2x256xf32>
    %2141 = arith.addf %2125, %2140 : vector<2x256xf32>
    %c366 = arith.constant 366 : index
    %2142 = memref.load %arg0[%c366] : memref<432xf32, #tpu.memory_space<smem>>
    %2143 = vector.broadcast %2142 : f32 to vector<2x256xf32>
    %2144 = arith.mulf %2143, %1701 : vector<2x256xf32>
    %2145 = arith.addf %2129, %2144 : vector<2x256xf32>
    %c367 = arith.constant 367 : index
    %2146 = memref.load %arg0[%c367] : memref<432xf32, #tpu.memory_space<smem>>
    %2147 = vector.broadcast %2146 : f32 to vector<2x256xf32>
    %2148 = arith.mulf %2147, %1701 : vector<2x256xf32>
    %2149 = arith.addf %2133, %2148 : vector<2x256xf32>
    %c0_i32_340 = arith.constant 0 : i32
    %2150 = vector.broadcast %c0_i32_340 : i32 to vector<2x256xi32>
    %2151 = arith.addi %2, %2150 : vector<2x256xi32>
    %c0_i32_341 = arith.constant 0 : i32
    %2152 = vector.broadcast %c0_i32_341 : i32 to vector<2x256xi32>
    %2153 = arith.cmpi sge, %2151, %2152 : vector<2x256xi32>
    %c0_i32_342 = arith.constant 0 : i32
    %2154 = vector.broadcast %c0_i32_342 : i32 to vector<2x256xi32>
    %2155 = arith.addi %2, %2154 : vector<2x256xi32>
    %c16_i32_343 = arith.constant 16 : i32
    %2156 = vector.broadcast %c16_i32_343 : i32 to vector<2x256xi32>
    %2157 = arith.cmpi slt, %2155, %2156 : vector<2x256xi32>
    %2158 = arith.andi %2153, %2157 : vector<2x256xi1>
    %c1_i32_344 = arith.constant 1 : i32
    %2159 = vector.broadcast %c1_i32_344 : i32 to vector<2x256xi32>
    %2160 = arith.addi %5, %2159 : vector<2x256xi32>
    %c0_i32_345 = arith.constant 0 : i32
    %2161 = vector.broadcast %c0_i32_345 : i32 to vector<2x256xi32>
    %2162 = arith.cmpi sge, %2160, %2161 : vector<2x256xi32>
    %2163 = arith.andi %2158, %2162 : vector<2x256xi1>
    %c1_i32_346 = arith.constant 1 : i32
    %2164 = vector.broadcast %c1_i32_346 : i32 to vector<2x256xi32>
    %2165 = arith.addi %5, %2164 : vector<2x256xi32>
    %c16_i32_347 = arith.constant 16 : i32
    %2166 = vector.broadcast %c16_i32_347 : i32 to vector<2x256xi32>
    %2167 = arith.cmpi slt, %2165, %2166 : vector<2x256xi32>
    %2168 = arith.andi %2163, %2167 : vector<2x256xi1>
    %c255_i32_348 = arith.constant 255 : i32
    %2169 = tpu.dynamic_rotate %1692 by %c255_i32_348 dim 1 : vector<2x256xf32>, i32 -> vector<2x256xf32>
    %cst_349 = arith.constant 0.000000e+00 : f32
    %2170 = vector.broadcast %cst_349 : f32 to vector<2x256xf32>
    %2171 = arith.select %2168, %2169, %2170 : vector<2x256xi1>, vector<2x256xf32>
    %c368 = arith.constant 368 : index
    %2172 = memref.load %arg0[%c368] : memref<432xf32, #tpu.memory_space<smem>>
    %2173 = vector.broadcast %2172 : f32 to vector<2x256xf32>
    %2174 = arith.mulf %2173, %2171 : vector<2x256xf32>
    %2175 = arith.addf %2137, %2174 : vector<2x256xf32>
    %c369 = arith.constant 369 : index
    %2176 = memref.load %arg0[%c369] : memref<432xf32, #tpu.memory_space<smem>>
    %2177 = vector.broadcast %2176 : f32 to vector<2x256xf32>
    %2178 = arith.mulf %2177, %2171 : vector<2x256xf32>
    %2179 = arith.addf %2141, %2178 : vector<2x256xf32>
    %c370 = arith.constant 370 : index
    %2180 = memref.load %arg0[%c370] : memref<432xf32, #tpu.memory_space<smem>>
    %2181 = vector.broadcast %2180 : f32 to vector<2x256xf32>
    %2182 = arith.mulf %2181, %2171 : vector<2x256xf32>
    %2183 = arith.addf %2145, %2182 : vector<2x256xf32>
    %c371 = arith.constant 371 : index
    %2184 = memref.load %arg0[%c371] : memref<432xf32, #tpu.memory_space<smem>>
    %2185 = vector.broadcast %2184 : f32 to vector<2x256xf32>
    %2186 = arith.mulf %2185, %2171 : vector<2x256xf32>
    %2187 = arith.addf %2149, %2186 : vector<2x256xf32>
    %c255_i32_350 = arith.constant 255 : i32
    %2188 = tpu.dynamic_rotate %1695 by %c255_i32_350 dim 1 : vector<2x256xf32>, i32 -> vector<2x256xf32>
    %cst_351 = arith.constant 0.000000e+00 : f32
    %2189 = vector.broadcast %cst_351 : f32 to vector<2x256xf32>
    %2190 = arith.select %2168, %2188, %2189 : vector<2x256xi1>, vector<2x256xf32>
    %c372 = arith.constant 372 : index
    %2191 = memref.load %arg0[%c372] : memref<432xf32, #tpu.memory_space<smem>>
    %2192 = vector.broadcast %2191 : f32 to vector<2x256xf32>
    %2193 = arith.mulf %2192, %2190 : vector<2x256xf32>
    %2194 = arith.addf %2175, %2193 : vector<2x256xf32>
    %c373 = arith.constant 373 : index
    %2195 = memref.load %arg0[%c373] : memref<432xf32, #tpu.memory_space<smem>>
    %2196 = vector.broadcast %2195 : f32 to vector<2x256xf32>
    %2197 = arith.mulf %2196, %2190 : vector<2x256xf32>
    %2198 = arith.addf %2179, %2197 : vector<2x256xf32>
    %c374 = arith.constant 374 : index
    %2199 = memref.load %arg0[%c374] : memref<432xf32, #tpu.memory_space<smem>>
    %2200 = vector.broadcast %2199 : f32 to vector<2x256xf32>
    %2201 = arith.mulf %2200, %2190 : vector<2x256xf32>
    %2202 = arith.addf %2183, %2201 : vector<2x256xf32>
    %c375 = arith.constant 375 : index
    %2203 = memref.load %arg0[%c375] : memref<432xf32, #tpu.memory_space<smem>>
    %2204 = vector.broadcast %2203 : f32 to vector<2x256xf32>
    %2205 = arith.mulf %2204, %2190 : vector<2x256xf32>
    %2206 = arith.addf %2187, %2205 : vector<2x256xf32>
    %c255_i32_352 = arith.constant 255 : i32
    %2207 = tpu.dynamic_rotate %1698 by %c255_i32_352 dim 1 : vector<2x256xf32>, i32 -> vector<2x256xf32>
    %cst_353 = arith.constant 0.000000e+00 : f32
    %2208 = vector.broadcast %cst_353 : f32 to vector<2x256xf32>
    %2209 = arith.select %2168, %2207, %2208 : vector<2x256xi1>, vector<2x256xf32>
    %c376 = arith.constant 376 : index
    %2210 = memref.load %arg0[%c376] : memref<432xf32, #tpu.memory_space<smem>>
    %2211 = vector.broadcast %2210 : f32 to vector<2x256xf32>
    %2212 = arith.mulf %2211, %2209 : vector<2x256xf32>
    %2213 = arith.addf %2194, %2212 : vector<2x256xf32>
    %c377 = arith.constant 377 : index
    %2214 = memref.load %arg0[%c377] : memref<432xf32, #tpu.memory_space<smem>>
    %2215 = vector.broadcast %2214 : f32 to vector<2x256xf32>
    %2216 = arith.mulf %2215, %2209 : vector<2x256xf32>
    %2217 = arith.addf %2198, %2216 : vector<2x256xf32>
    %c378 = arith.constant 378 : index
    %2218 = memref.load %arg0[%c378] : memref<432xf32, #tpu.memory_space<smem>>
    %2219 = vector.broadcast %2218 : f32 to vector<2x256xf32>
    %2220 = arith.mulf %2219, %2209 : vector<2x256xf32>
    %2221 = arith.addf %2202, %2220 : vector<2x256xf32>
    %c379 = arith.constant 379 : index
    %2222 = memref.load %arg0[%c379] : memref<432xf32, #tpu.memory_space<smem>>
    %2223 = vector.broadcast %2222 : f32 to vector<2x256xf32>
    %2224 = arith.mulf %2223, %2209 : vector<2x256xf32>
    %2225 = arith.addf %2206, %2224 : vector<2x256xf32>
    %c255_i32_354 = arith.constant 255 : i32
    %2226 = tpu.dynamic_rotate %1701 by %c255_i32_354 dim 1 : vector<2x256xf32>, i32 -> vector<2x256xf32>
    %cst_355 = arith.constant 0.000000e+00 : f32
    %2227 = vector.broadcast %cst_355 : f32 to vector<2x256xf32>
    %2228 = arith.select %2168, %2226, %2227 : vector<2x256xi1>, vector<2x256xf32>
    %c380 = arith.constant 380 : index
    %2229 = memref.load %arg0[%c380] : memref<432xf32, #tpu.memory_space<smem>>
    %2230 = vector.broadcast %2229 : f32 to vector<2x256xf32>
    %2231 = arith.mulf %2230, %2228 : vector<2x256xf32>
    %2232 = arith.addf %2213, %2231 : vector<2x256xf32>
    %c381 = arith.constant 381 : index
    %2233 = memref.load %arg0[%c381] : memref<432xf32, #tpu.memory_space<smem>>
    %2234 = vector.broadcast %2233 : f32 to vector<2x256xf32>
    %2235 = arith.mulf %2234, %2228 : vector<2x256xf32>
    %2236 = arith.addf %2217, %2235 : vector<2x256xf32>
    %c382 = arith.constant 382 : index
    %2237 = memref.load %arg0[%c382] : memref<432xf32, #tpu.memory_space<smem>>
    %2238 = vector.broadcast %2237 : f32 to vector<2x256xf32>
    %2239 = arith.mulf %2238, %2228 : vector<2x256xf32>
    %2240 = arith.addf %2221, %2239 : vector<2x256xf32>
    %c383 = arith.constant 383 : index
    %2241 = memref.load %arg0[%c383] : memref<432xf32, #tpu.memory_space<smem>>
    %2242 = vector.broadcast %2241 : f32 to vector<2x256xf32>
    %2243 = arith.mulf %2242, %2228 : vector<2x256xf32>
    %2244 = arith.addf %2225, %2243 : vector<2x256xf32>
    %c1_i32_356 = arith.constant 1 : i32
    %2245 = vector.broadcast %c1_i32_356 : i32 to vector<2x256xi32>
    %2246 = arith.addi %2, %2245 : vector<2x256xi32>
    %c0_i32_357 = arith.constant 0 : i32
    %2247 = vector.broadcast %c0_i32_357 : i32 to vector<2x256xi32>
    %2248 = arith.cmpi sge, %2246, %2247 : vector<2x256xi32>
    %c1_i32_358 = arith.constant 1 : i32
    %2249 = vector.broadcast %c1_i32_358 : i32 to vector<2x256xi32>
    %2250 = arith.addi %2, %2249 : vector<2x256xi32>
    %c16_i32_359 = arith.constant 16 : i32
    %2251 = vector.broadcast %c16_i32_359 : i32 to vector<2x256xi32>
    %2252 = arith.cmpi slt, %2250, %2251 : vector<2x256xi32>
    %2253 = arith.andi %2248, %2252 : vector<2x256xi1>
    %c-1_i32_360 = arith.constant -1 : i32
    %2254 = vector.broadcast %c-1_i32_360 : i32 to vector<2x256xi32>
    %2255 = arith.addi %5, %2254 : vector<2x256xi32>
    %c0_i32_361 = arith.constant 0 : i32
    %2256 = vector.broadcast %c0_i32_361 : i32 to vector<2x256xi32>
    %2257 = arith.cmpi sge, %2255, %2256 : vector<2x256xi32>
    %2258 = arith.andi %2253, %2257 : vector<2x256xi1>
    %c-1_i32_362 = arith.constant -1 : i32
    %2259 = vector.broadcast %c-1_i32_362 : i32 to vector<2x256xi32>
    %2260 = arith.addi %5, %2259 : vector<2x256xi32>
    %c16_i32_363 = arith.constant 16 : i32
    %2261 = vector.broadcast %c16_i32_363 : i32 to vector<2x256xi32>
    %2262 = arith.cmpi slt, %2260, %2261 : vector<2x256xi32>
    %2263 = arith.andi %2258, %2262 : vector<2x256xi1>
    %c241_i32_364 = arith.constant 241 : i32
    %2264 = tpu.dynamic_rotate %1692 by %c241_i32_364 dim 1 : vector<2x256xf32>, i32 -> vector<2x256xf32>
    %cst_365 = arith.constant 0.000000e+00 : f32
    %2265 = vector.broadcast %cst_365 : f32 to vector<2x256xf32>
    %2266 = arith.select %2263, %2264, %2265 : vector<2x256xi1>, vector<2x256xf32>
    %c384 = arith.constant 384 : index
    %2267 = memref.load %arg0[%c384] : memref<432xf32, #tpu.memory_space<smem>>
    %2268 = vector.broadcast %2267 : f32 to vector<2x256xf32>
    %2269 = arith.mulf %2268, %2266 : vector<2x256xf32>
    %2270 = arith.addf %2232, %2269 : vector<2x256xf32>
    %c385 = arith.constant 385 : index
    %2271 = memref.load %arg0[%c385] : memref<432xf32, #tpu.memory_space<smem>>
    %2272 = vector.broadcast %2271 : f32 to vector<2x256xf32>
    %2273 = arith.mulf %2272, %2266 : vector<2x256xf32>
    %2274 = arith.addf %2236, %2273 : vector<2x256xf32>
    %c386 = arith.constant 386 : index
    %2275 = memref.load %arg0[%c386] : memref<432xf32, #tpu.memory_space<smem>>
    %2276 = vector.broadcast %2275 : f32 to vector<2x256xf32>
    %2277 = arith.mulf %2276, %2266 : vector<2x256xf32>
    %2278 = arith.addf %2240, %2277 : vector<2x256xf32>
    %c387 = arith.constant 387 : index
    %2279 = memref.load %arg0[%c387] : memref<432xf32, #tpu.memory_space<smem>>
    %2280 = vector.broadcast %2279 : f32 to vector<2x256xf32>
    %2281 = arith.mulf %2280, %2266 : vector<2x256xf32>
    %2282 = arith.addf %2244, %2281 : vector<2x256xf32>
    %c241_i32_366 = arith.constant 241 : i32
    %2283 = tpu.dynamic_rotate %1695 by %c241_i32_366 dim 1 : vector<2x256xf32>, i32 -> vector<2x256xf32>
    %cst_367 = arith.constant 0.000000e+00 : f32
    %2284 = vector.broadcast %cst_367 : f32 to vector<2x256xf32>
    %2285 = arith.select %2263, %2283, %2284 : vector<2x256xi1>, vector<2x256xf32>
    %c388 = arith.constant 388 : index
    %2286 = memref.load %arg0[%c388] : memref<432xf32, #tpu.memory_space<smem>>
    %2287 = vector.broadcast %2286 : f32 to vector<2x256xf32>
    %2288 = arith.mulf %2287, %2285 : vector<2x256xf32>
    %2289 = arith.addf %2270, %2288 : vector<2x256xf32>
    %c389 = arith.constant 389 : index
    %2290 = memref.load %arg0[%c389] : memref<432xf32, #tpu.memory_space<smem>>
    %2291 = vector.broadcast %2290 : f32 to vector<2x256xf32>
    %2292 = arith.mulf %2291, %2285 : vector<2x256xf32>
    %2293 = arith.addf %2274, %2292 : vector<2x256xf32>
    %c390 = arith.constant 390 : index
    %2294 = memref.load %arg0[%c390] : memref<432xf32, #tpu.memory_space<smem>>
    %2295 = vector.broadcast %2294 : f32 to vector<2x256xf32>
    %2296 = arith.mulf %2295, %2285 : vector<2x256xf32>
    %2297 = arith.addf %2278, %2296 : vector<2x256xf32>
    %c391 = arith.constant 391 : index
    %2298 = memref.load %arg0[%c391] : memref<432xf32, #tpu.memory_space<smem>>
    %2299 = vector.broadcast %2298 : f32 to vector<2x256xf32>
    %2300 = arith.mulf %2299, %2285 : vector<2x256xf32>
    %2301 = arith.addf %2282, %2300 : vector<2x256xf32>
    %c241_i32_368 = arith.constant 241 : i32
    %2302 = tpu.dynamic_rotate %1698 by %c241_i32_368 dim 1 : vector<2x256xf32>, i32 -> vector<2x256xf32>
    %cst_369 = arith.constant 0.000000e+00 : f32
    %2303 = vector.broadcast %cst_369 : f32 to vector<2x256xf32>
    %2304 = arith.select %2263, %2302, %2303 : vector<2x256xi1>, vector<2x256xf32>
    %c392 = arith.constant 392 : index
    %2305 = memref.load %arg0[%c392] : memref<432xf32, #tpu.memory_space<smem>>
    %2306 = vector.broadcast %2305 : f32 to vector<2x256xf32>
    %2307 = arith.mulf %2306, %2304 : vector<2x256xf32>
    %2308 = arith.addf %2289, %2307 : vector<2x256xf32>
    %c393 = arith.constant 393 : index
    %2309 = memref.load %arg0[%c393] : memref<432xf32, #tpu.memory_space<smem>>
    %2310 = vector.broadcast %2309 : f32 to vector<2x256xf32>
    %2311 = arith.mulf %2310, %2304 : vector<2x256xf32>
    %2312 = arith.addf %2293, %2311 : vector<2x256xf32>
    %c394 = arith.constant 394 : index
    %2313 = memref.load %arg0[%c394] : memref<432xf32, #tpu.memory_space<smem>>
    %2314 = vector.broadcast %2313 : f32 to vector<2x256xf32>
    %2315 = arith.mulf %2314, %2304 : vector<2x256xf32>
    %2316 = arith.addf %2297, %2315 : vector<2x256xf32>
    %c395 = arith.constant 395 : index
    %2317 = memref.load %arg0[%c395] : memref<432xf32, #tpu.memory_space<smem>>
    %2318 = vector.broadcast %2317 : f32 to vector<2x256xf32>
    %2319 = arith.mulf %2318, %2304 : vector<2x256xf32>
    %2320 = arith.addf %2301, %2319 : vector<2x256xf32>
    %c241_i32_370 = arith.constant 241 : i32
    %2321 = tpu.dynamic_rotate %1701 by %c241_i32_370 dim 1 : vector<2x256xf32>, i32 -> vector<2x256xf32>
    %cst_371 = arith.constant 0.000000e+00 : f32
    %2322 = vector.broadcast %cst_371 : f32 to vector<2x256xf32>
    %2323 = arith.select %2263, %2321, %2322 : vector<2x256xi1>, vector<2x256xf32>
    %c396 = arith.constant 396 : index
    %2324 = memref.load %arg0[%c396] : memref<432xf32, #tpu.memory_space<smem>>
    %2325 = vector.broadcast %2324 : f32 to vector<2x256xf32>
    %2326 = arith.mulf %2325, %2323 : vector<2x256xf32>
    %2327 = arith.addf %2308, %2326 : vector<2x256xf32>
    %c397 = arith.constant 397 : index
    %2328 = memref.load %arg0[%c397] : memref<432xf32, #tpu.memory_space<smem>>
    %2329 = vector.broadcast %2328 : f32 to vector<2x256xf32>
    %2330 = arith.mulf %2329, %2323 : vector<2x256xf32>
    %2331 = arith.addf %2312, %2330 : vector<2x256xf32>
    %c398 = arith.constant 398 : index
    %2332 = memref.load %arg0[%c398] : memref<432xf32, #tpu.memory_space<smem>>
    %2333 = vector.broadcast %2332 : f32 to vector<2x256xf32>
    %2334 = arith.mulf %2333, %2323 : vector<2x256xf32>
    %2335 = arith.addf %2316, %2334 : vector<2x256xf32>
    %c399 = arith.constant 399 : index
    %2336 = memref.load %arg0[%c399] : memref<432xf32, #tpu.memory_space<smem>>
    %2337 = vector.broadcast %2336 : f32 to vector<2x256xf32>
    %2338 = arith.mulf %2337, %2323 : vector<2x256xf32>
    %2339 = arith.addf %2320, %2338 : vector<2x256xf32>
    %c1_i32_372 = arith.constant 1 : i32
    %2340 = vector.broadcast %c1_i32_372 : i32 to vector<2x256xi32>
    %2341 = arith.addi %2, %2340 : vector<2x256xi32>
    %c0_i32_373 = arith.constant 0 : i32
    %2342 = vector.broadcast %c0_i32_373 : i32 to vector<2x256xi32>
    %2343 = arith.cmpi sge, %2341, %2342 : vector<2x256xi32>
    %c1_i32_374 = arith.constant 1 : i32
    %2344 = vector.broadcast %c1_i32_374 : i32 to vector<2x256xi32>
    %2345 = arith.addi %2, %2344 : vector<2x256xi32>
    %c16_i32_375 = arith.constant 16 : i32
    %2346 = vector.broadcast %c16_i32_375 : i32 to vector<2x256xi32>
    %2347 = arith.cmpi slt, %2345, %2346 : vector<2x256xi32>
    %2348 = arith.andi %2343, %2347 : vector<2x256xi1>
    %c0_i32_376 = arith.constant 0 : i32
    %2349 = vector.broadcast %c0_i32_376 : i32 to vector<2x256xi32>
    %2350 = arith.addi %5, %2349 : vector<2x256xi32>
    %c0_i32_377 = arith.constant 0 : i32
    %2351 = vector.broadcast %c0_i32_377 : i32 to vector<2x256xi32>
    %2352 = arith.cmpi sge, %2350, %2351 : vector<2x256xi32>
    %2353 = arith.andi %2348, %2352 : vector<2x256xi1>
    %c0_i32_378 = arith.constant 0 : i32
    %2354 = vector.broadcast %c0_i32_378 : i32 to vector<2x256xi32>
    %2355 = arith.addi %5, %2354 : vector<2x256xi32>
    %c16_i32_379 = arith.constant 16 : i32
    %2356 = vector.broadcast %c16_i32_379 : i32 to vector<2x256xi32>
    %2357 = arith.cmpi slt, %2355, %2356 : vector<2x256xi32>
    %2358 = arith.andi %2353, %2357 : vector<2x256xi1>
    %c240_i32_380 = arith.constant 240 : i32
    %2359 = tpu.dynamic_rotate %1692 by %c240_i32_380 dim 1 : vector<2x256xf32>, i32 -> vector<2x256xf32>
    %cst_381 = arith.constant 0.000000e+00 : f32
    %2360 = vector.broadcast %cst_381 : f32 to vector<2x256xf32>
    %2361 = arith.select %2358, %2359, %2360 : vector<2x256xi1>, vector<2x256xf32>
    %c400 = arith.constant 400 : index
    %2362 = memref.load %arg0[%c400] : memref<432xf32, #tpu.memory_space<smem>>
    %2363 = vector.broadcast %2362 : f32 to vector<2x256xf32>
    %2364 = arith.mulf %2363, %2361 : vector<2x256xf32>
    %2365 = arith.addf %2327, %2364 : vector<2x256xf32>
    %c401 = arith.constant 401 : index
    %2366 = memref.load %arg0[%c401] : memref<432xf32, #tpu.memory_space<smem>>
    %2367 = vector.broadcast %2366 : f32 to vector<2x256xf32>
    %2368 = arith.mulf %2367, %2361 : vector<2x256xf32>
    %2369 = arith.addf %2331, %2368 : vector<2x256xf32>
    %c402 = arith.constant 402 : index
    %2370 = memref.load %arg0[%c402] : memref<432xf32, #tpu.memory_space<smem>>
    %2371 = vector.broadcast %2370 : f32 to vector<2x256xf32>
    %2372 = arith.mulf %2371, %2361 : vector<2x256xf32>
    %2373 = arith.addf %2335, %2372 : vector<2x256xf32>
    %c403 = arith.constant 403 : index
    %2374 = memref.load %arg0[%c403] : memref<432xf32, #tpu.memory_space<smem>>
    %2375 = vector.broadcast %2374 : f32 to vector<2x256xf32>
    %2376 = arith.mulf %2375, %2361 : vector<2x256xf32>
    %2377 = arith.addf %2339, %2376 : vector<2x256xf32>
    %c240_i32_382 = arith.constant 240 : i32
    %2378 = tpu.dynamic_rotate %1695 by %c240_i32_382 dim 1 : vector<2x256xf32>, i32 -> vector<2x256xf32>
    %cst_383 = arith.constant 0.000000e+00 : f32
    %2379 = vector.broadcast %cst_383 : f32 to vector<2x256xf32>
    %2380 = arith.select %2358, %2378, %2379 : vector<2x256xi1>, vector<2x256xf32>
    %c404 = arith.constant 404 : index
    %2381 = memref.load %arg0[%c404] : memref<432xf32, #tpu.memory_space<smem>>
    %2382 = vector.broadcast %2381 : f32 to vector<2x256xf32>
    %2383 = arith.mulf %2382, %2380 : vector<2x256xf32>
    %2384 = arith.addf %2365, %2383 : vector<2x256xf32>
    %c405 = arith.constant 405 : index
    %2385 = memref.load %arg0[%c405] : memref<432xf32, #tpu.memory_space<smem>>
    %2386 = vector.broadcast %2385 : f32 to vector<2x256xf32>
    %2387 = arith.mulf %2386, %2380 : vector<2x256xf32>
    %2388 = arith.addf %2369, %2387 : vector<2x256xf32>
    %c406 = arith.constant 406 : index
    %2389 = memref.load %arg0[%c406] : memref<432xf32, #tpu.memory_space<smem>>
    %2390 = vector.broadcast %2389 : f32 to vector<2x256xf32>
    %2391 = arith.mulf %2390, %2380 : vector<2x256xf32>
    %2392 = arith.addf %2373, %2391 : vector<2x256xf32>
    %c407 = arith.constant 407 : index
    %2393 = memref.load %arg0[%c407] : memref<432xf32, #tpu.memory_space<smem>>
    %2394 = vector.broadcast %2393 : f32 to vector<2x256xf32>
    %2395 = arith.mulf %2394, %2380 : vector<2x256xf32>
    %2396 = arith.addf %2377, %2395 : vector<2x256xf32>
    %c240_i32_384 = arith.constant 240 : i32
    %2397 = tpu.dynamic_rotate %1698 by %c240_i32_384 dim 1 : vector<2x256xf32>, i32 -> vector<2x256xf32>
    %cst_385 = arith.constant 0.000000e+00 : f32
    %2398 = vector.broadcast %cst_385 : f32 to vector<2x256xf32>
    %2399 = arith.select %2358, %2397, %2398 : vector<2x256xi1>, vector<2x256xf32>
    %c408 = arith.constant 408 : index
    %2400 = memref.load %arg0[%c408] : memref<432xf32, #tpu.memory_space<smem>>
    %2401 = vector.broadcast %2400 : f32 to vector<2x256xf32>
    %2402 = arith.mulf %2401, %2399 : vector<2x256xf32>
    %2403 = arith.addf %2384, %2402 : vector<2x256xf32>
    %c409 = arith.constant 409 : index
    %2404 = memref.load %arg0[%c409] : memref<432xf32, #tpu.memory_space<smem>>
    %2405 = vector.broadcast %2404 : f32 to vector<2x256xf32>
    %2406 = arith.mulf %2405, %2399 : vector<2x256xf32>
    %2407 = arith.addf %2388, %2406 : vector<2x256xf32>
    %c410 = arith.constant 410 : index
    %2408 = memref.load %arg0[%c410] : memref<432xf32, #tpu.memory_space<smem>>
    %2409 = vector.broadcast %2408 : f32 to vector<2x256xf32>
    %2410 = arith.mulf %2409, %2399 : vector<2x256xf32>
    %2411 = arith.addf %2392, %2410 : vector<2x256xf32>
    %c411 = arith.constant 411 : index
    %2412 = memref.load %arg0[%c411] : memref<432xf32, #tpu.memory_space<smem>>
    %2413 = vector.broadcast %2412 : f32 to vector<2x256xf32>
    %2414 = arith.mulf %2413, %2399 : vector<2x256xf32>
    %2415 = arith.addf %2396, %2414 : vector<2x256xf32>
    %c240_i32_386 = arith.constant 240 : i32
    %2416 = tpu.dynamic_rotate %1701 by %c240_i32_386 dim 1 : vector<2x256xf32>, i32 -> vector<2x256xf32>
    %cst_387 = arith.constant 0.000000e+00 : f32
    %2417 = vector.broadcast %cst_387 : f32 to vector<2x256xf32>
    %2418 = arith.select %2358, %2416, %2417 : vector<2x256xi1>, vector<2x256xf32>
    %c412 = arith.constant 412 : index
    %2419 = memref.load %arg0[%c412] : memref<432xf32, #tpu.memory_space<smem>>
    %2420 = vector.broadcast %2419 : f32 to vector<2x256xf32>
    %2421 = arith.mulf %2420, %2418 : vector<2x256xf32>
    %2422 = arith.addf %2403, %2421 : vector<2x256xf32>
    %c413 = arith.constant 413 : index
    %2423 = memref.load %arg0[%c413] : memref<432xf32, #tpu.memory_space<smem>>
    %2424 = vector.broadcast %2423 : f32 to vector<2x256xf32>
    %2425 = arith.mulf %2424, %2418 : vector<2x256xf32>
    %2426 = arith.addf %2407, %2425 : vector<2x256xf32>
    %c414 = arith.constant 414 : index
    %2427 = memref.load %arg0[%c414] : memref<432xf32, #tpu.memory_space<smem>>
    %2428 = vector.broadcast %2427 : f32 to vector<2x256xf32>
    %2429 = arith.mulf %2428, %2418 : vector<2x256xf32>
    %2430 = arith.addf %2411, %2429 : vector<2x256xf32>
    %c415 = arith.constant 415 : index
    %2431 = memref.load %arg0[%c415] : memref<432xf32, #tpu.memory_space<smem>>
    %2432 = vector.broadcast %2431 : f32 to vector<2x256xf32>
    %2433 = arith.mulf %2432, %2418 : vector<2x256xf32>
    %2434 = arith.addf %2415, %2433 : vector<2x256xf32>
    %c1_i32_388 = arith.constant 1 : i32
    %2435 = vector.broadcast %c1_i32_388 : i32 to vector<2x256xi32>
    %2436 = arith.addi %2, %2435 : vector<2x256xi32>
    %c0_i32_389 = arith.constant 0 : i32
    %2437 = vector.broadcast %c0_i32_389 : i32 to vector<2x256xi32>
    %2438 = arith.cmpi sge, %2436, %2437 : vector<2x256xi32>
    %c1_i32_390 = arith.constant 1 : i32
    %2439 = vector.broadcast %c1_i32_390 : i32 to vector<2x256xi32>
    %2440 = arith.addi %2, %2439 : vector<2x256xi32>
    %c16_i32_391 = arith.constant 16 : i32
    %2441 = vector.broadcast %c16_i32_391 : i32 to vector<2x256xi32>
    %2442 = arith.cmpi slt, %2440, %2441 : vector<2x256xi32>
    %2443 = arith.andi %2438, %2442 : vector<2x256xi1>
    %c1_i32_392 = arith.constant 1 : i32
    %2444 = vector.broadcast %c1_i32_392 : i32 to vector<2x256xi32>
    %2445 = arith.addi %5, %2444 : vector<2x256xi32>
    %c0_i32_393 = arith.constant 0 : i32
    %2446 = vector.broadcast %c0_i32_393 : i32 to vector<2x256xi32>
    %2447 = arith.cmpi sge, %2445, %2446 : vector<2x256xi32>
    %2448 = arith.andi %2443, %2447 : vector<2x256xi1>
    %c1_i32_394 = arith.constant 1 : i32
    %2449 = vector.broadcast %c1_i32_394 : i32 to vector<2x256xi32>
    %2450 = arith.addi %5, %2449 : vector<2x256xi32>
    %c16_i32_395 = arith.constant 16 : i32
    %2451 = vector.broadcast %c16_i32_395 : i32 to vector<2x256xi32>
    %2452 = arith.cmpi slt, %2450, %2451 : vector<2x256xi32>
    %2453 = arith.andi %2448, %2452 : vector<2x256xi1>
    %c239_i32_396 = arith.constant 239 : i32
    %2454 = tpu.dynamic_rotate %1692 by %c239_i32_396 dim 1 : vector<2x256xf32>, i32 -> vector<2x256xf32>
    %cst_397 = arith.constant 0.000000e+00 : f32
    %2455 = vector.broadcast %cst_397 : f32 to vector<2x256xf32>
    %2456 = arith.select %2453, %2454, %2455 : vector<2x256xi1>, vector<2x256xf32>
    %c416 = arith.constant 416 : index
    %2457 = memref.load %arg0[%c416] : memref<432xf32, #tpu.memory_space<smem>>
    %2458 = vector.broadcast %2457 : f32 to vector<2x256xf32>
    %2459 = arith.mulf %2458, %2456 : vector<2x256xf32>
    %2460 = arith.addf %2422, %2459 : vector<2x256xf32>
    %c417 = arith.constant 417 : index
    %2461 = memref.load %arg0[%c417] : memref<432xf32, #tpu.memory_space<smem>>
    %2462 = vector.broadcast %2461 : f32 to vector<2x256xf32>
    %2463 = arith.mulf %2462, %2456 : vector<2x256xf32>
    %2464 = arith.addf %2426, %2463 : vector<2x256xf32>
    %c418 = arith.constant 418 : index
    %2465 = memref.load %arg0[%c418] : memref<432xf32, #tpu.memory_space<smem>>
    %2466 = vector.broadcast %2465 : f32 to vector<2x256xf32>
    %2467 = arith.mulf %2466, %2456 : vector<2x256xf32>
    %2468 = arith.addf %2430, %2467 : vector<2x256xf32>
    %c419 = arith.constant 419 : index
    %2469 = memref.load %arg0[%c419] : memref<432xf32, #tpu.memory_space<smem>>
    %2470 = vector.broadcast %2469 : f32 to vector<2x256xf32>
    %2471 = arith.mulf %2470, %2456 : vector<2x256xf32>
    %2472 = arith.addf %2434, %2471 : vector<2x256xf32>
    %c239_i32_398 = arith.constant 239 : i32
    %2473 = tpu.dynamic_rotate %1695 by %c239_i32_398 dim 1 : vector<2x256xf32>, i32 -> vector<2x256xf32>
    %cst_399 = arith.constant 0.000000e+00 : f32
    %2474 = vector.broadcast %cst_399 : f32 to vector<2x256xf32>
    %2475 = arith.select %2453, %2473, %2474 : vector<2x256xi1>, vector<2x256xf32>
    %c420 = arith.constant 420 : index
    %2476 = memref.load %arg0[%c420] : memref<432xf32, #tpu.memory_space<smem>>
    %2477 = vector.broadcast %2476 : f32 to vector<2x256xf32>
    %2478 = arith.mulf %2477, %2475 : vector<2x256xf32>
    %2479 = arith.addf %2460, %2478 : vector<2x256xf32>
    %c421 = arith.constant 421 : index
    %2480 = memref.load %arg0[%c421] : memref<432xf32, #tpu.memory_space<smem>>
    %2481 = vector.broadcast %2480 : f32 to vector<2x256xf32>
    %2482 = arith.mulf %2481, %2475 : vector<2x256xf32>
    %2483 = arith.addf %2464, %2482 : vector<2x256xf32>
    %c422 = arith.constant 422 : index
    %2484 = memref.load %arg0[%c422] : memref<432xf32, #tpu.memory_space<smem>>
    %2485 = vector.broadcast %2484 : f32 to vector<2x256xf32>
    %2486 = arith.mulf %2485, %2475 : vector<2x256xf32>
    %2487 = arith.addf %2468, %2486 : vector<2x256xf32>
    %c423 = arith.constant 423 : index
    %2488 = memref.load %arg0[%c423] : memref<432xf32, #tpu.memory_space<smem>>
    %2489 = vector.broadcast %2488 : f32 to vector<2x256xf32>
    %2490 = arith.mulf %2489, %2475 : vector<2x256xf32>
    %2491 = arith.addf %2472, %2490 : vector<2x256xf32>
    %c239_i32_400 = arith.constant 239 : i32
    %2492 = tpu.dynamic_rotate %1698 by %c239_i32_400 dim 1 : vector<2x256xf32>, i32 -> vector<2x256xf32>
    %cst_401 = arith.constant 0.000000e+00 : f32
    %2493 = vector.broadcast %cst_401 : f32 to vector<2x256xf32>
    %2494 = arith.select %2453, %2492, %2493 : vector<2x256xi1>, vector<2x256xf32>
    %c424 = arith.constant 424 : index
    %2495 = memref.load %arg0[%c424] : memref<432xf32, #tpu.memory_space<smem>>
    %2496 = vector.broadcast %2495 : f32 to vector<2x256xf32>
    %2497 = arith.mulf %2496, %2494 : vector<2x256xf32>
    %2498 = arith.addf %2479, %2497 : vector<2x256xf32>
    %c425 = arith.constant 425 : index
    %2499 = memref.load %arg0[%c425] : memref<432xf32, #tpu.memory_space<smem>>
    %2500 = vector.broadcast %2499 : f32 to vector<2x256xf32>
    %2501 = arith.mulf %2500, %2494 : vector<2x256xf32>
    %2502 = arith.addf %2483, %2501 : vector<2x256xf32>
    %c426 = arith.constant 426 : index
    %2503 = memref.load %arg0[%c426] : memref<432xf32, #tpu.memory_space<smem>>
    %2504 = vector.broadcast %2503 : f32 to vector<2x256xf32>
    %2505 = arith.mulf %2504, %2494 : vector<2x256xf32>
    %2506 = arith.addf %2487, %2505 : vector<2x256xf32>
    %c427 = arith.constant 427 : index
    %2507 = memref.load %arg0[%c427] : memref<432xf32, #tpu.memory_space<smem>>
    %2508 = vector.broadcast %2507 : f32 to vector<2x256xf32>
    %2509 = arith.mulf %2508, %2494 : vector<2x256xf32>
    %2510 = arith.addf %2491, %2509 : vector<2x256xf32>
    %c239_i32_402 = arith.constant 239 : i32
    %2511 = tpu.dynamic_rotate %1701 by %c239_i32_402 dim 1 : vector<2x256xf32>, i32 -> vector<2x256xf32>
    %cst_403 = arith.constant 0.000000e+00 : f32
    %2512 = vector.broadcast %cst_403 : f32 to vector<2x256xf32>
    %2513 = arith.select %2453, %2511, %2512 : vector<2x256xi1>, vector<2x256xf32>
    %c428 = arith.constant 428 : index
    %2514 = memref.load %arg0[%c428] : memref<432xf32, #tpu.memory_space<smem>>
    %2515 = vector.broadcast %2514 : f32 to vector<2x256xf32>
    %2516 = arith.mulf %2515, %2513 : vector<2x256xf32>
    %2517 = arith.addf %2498, %2516 : vector<2x256xf32>
    %c429 = arith.constant 429 : index
    %2518 = memref.load %arg0[%c429] : memref<432xf32, #tpu.memory_space<smem>>
    %2519 = vector.broadcast %2518 : f32 to vector<2x256xf32>
    %2520 = arith.mulf %2519, %2513 : vector<2x256xf32>
    %2521 = arith.addf %2502, %2520 : vector<2x256xf32>
    %c430 = arith.constant 430 : index
    %2522 = memref.load %arg0[%c430] : memref<432xf32, #tpu.memory_space<smem>>
    %2523 = vector.broadcast %2522 : f32 to vector<2x256xf32>
    %2524 = arith.mulf %2523, %2513 : vector<2x256xf32>
    %2525 = arith.addf %2506, %2524 : vector<2x256xf32>
    %c431 = arith.constant 431 : index
    %2526 = memref.load %arg0[%c431] : memref<432xf32, #tpu.memory_space<smem>>
    %2527 = vector.broadcast %2526 : f32 to vector<2x256xf32>
    %2528 = arith.mulf %2527, %2513 : vector<2x256xf32>
    %2529 = arith.addf %2510, %2528 : vector<2x256xf32>
    %c8_404 = arith.constant 8 : index
    %2530 = memref.load %arg1[%c8_404] : memref<12xf32, #tpu.memory_space<smem>>
    %2531 = vector.broadcast %2530 : f32 to vector<2x256xf32>
    %2532 = arith.addf %2517, %2531 : vector<2x256xf32>
    %c9_405 = arith.constant 9 : index
    %2533 = memref.load %arg1[%c9_405] : memref<12xf32, #tpu.memory_space<smem>>
    %2534 = vector.broadcast %2533 : f32 to vector<2x256xf32>
    %2535 = arith.addf %2521, %2534 : vector<2x256xf32>
    %c10_406 = arith.constant 10 : index
    %2536 = memref.load %arg1[%c10_406] : memref<12xf32, #tpu.memory_space<smem>>
    %2537 = vector.broadcast %2536 : f32 to vector<2x256xf32>
    %2538 = arith.addf %2525, %2537 : vector<2x256xf32>
    %c11_407 = arith.constant 11 : index
    %2539 = memref.load %arg1[%c11_407] : memref<12xf32, #tpu.memory_space<smem>>
    %2540 = vector.broadcast %2539 : f32 to vector<2x256xf32>
    %2541 = arith.addf %2529, %2540 : vector<2x256xf32>
    %c0_408 = arith.constant 0 : index
    %c0_409 = arith.constant 0 : index
    %c0_410 = arith.constant 0 : index
    %2542 = vector.load %arg3[%c0_408, %c0_409, %c0_410] : memref<4x2x256xf32, #tpu.memory_space<vmem>>, vector<1x2x256xf32>
    %2543 = vector.shape_cast %2542 : vector<1x2x256xf32> to vector<2x256xf32>
    %2544 = arith.negf %2532 : vector<2x256xf32>
    %2545 = math.exp %2544 : vector<2x256xf32>
    %cst_411 = arith.constant 1.000000e+00 : f32
    %2546 = vector.broadcast %cst_411 : f32 to vector<2x256xf32>
    %2547 = arith.addf %2546, %2545 : vector<2x256xf32>
    %2548 = arith.divf %2546, %2547 : vector<2x256xf32>
    %2549 = arith.mulf %2543, %2548 : vector<2x256xf32>
    %c0_412 = arith.constant 0 : index
    %c0_413 = arith.constant 0 : index
    %c0_414 = arith.constant 0 : index
    %2550 = vector.load %arg4[%c0_412, %c0_413, %c0_414] : memref<4x2x256xf32, #tpu.memory_space<vmem>>, vector<1x2x256xf32>
    %2551 = vector.shape_cast %2550 : vector<1x2x256xf32> to vector<2x256xf32>
    %2552 = vector.shape_cast %2549 : vector<2x256xf32> to vector<1x2x256xf32>
    tpu.vector_store %arg4[%c0_412, %c0_413, %c0_414], %2552 {strides = array<i32>} : memref<4x2x256xf32, #tpu.memory_space<vmem>>, vector<1x2x256xf32>,
    %c1_415 = arith.constant 1 : index
    %c0_416 = arith.constant 0 : index
    %c0_417 = arith.constant 0 : index
    %2553 = vector.load %arg3[%c1_415, %c0_416, %c0_417] : memref<4x2x256xf32, #tpu.memory_space<vmem>>, vector<1x2x256xf32>
    %2554 = vector.shape_cast %2553 : vector<1x2x256xf32> to vector<2x256xf32>
    %2555 = arith.negf %2535 : vector<2x256xf32>
    %2556 = math.exp %2555 : vector<2x256xf32>
    %cst_418 = arith.constant 1.000000e+00 : f32
    %2557 = vector.broadcast %cst_418 : f32 to vector<2x256xf32>
    %2558 = arith.addf %2557, %2556 : vector<2x256xf32>
    %2559 = arith.divf %2557, %2558 : vector<2x256xf32>
    %2560 = arith.mulf %2554, %2559 : vector<2x256xf32>
    %c1_419 = arith.constant 1 : index
    %c0_420 = arith.constant 0 : index
    %c0_421 = arith.constant 0 : index
    %2561 = vector.load %arg4[%c1_419, %c0_420, %c0_421] : memref<4x2x256xf32, #tpu.memory_space<vmem>>, vector<1x2x256xf32>
    %2562 = vector.shape_cast %2561 : vector<1x2x256xf32> to vector<2x256xf32>
    %2563 = vector.shape_cast %2560 : vector<2x256xf32> to vector<1x2x256xf32>
    tpu.vector_store %arg4[%c1_419, %c0_420, %c0_421], %2563 {strides = array<i32>} : memref<4x2x256xf32, #tpu.memory_space<vmem>>, vector<1x2x256xf32>,
    %c2_422 = arith.constant 2 : index
    %c0_423 = arith.constant 0 : index
    %c0_424 = arith.constant 0 : index
    %2564 = vector.load %arg3[%c2_422, %c0_423, %c0_424] : memref<4x2x256xf32, #tpu.memory_space<vmem>>, vector<1x2x256xf32>
    %2565 = vector.shape_cast %2564 : vector<1x2x256xf32> to vector<2x256xf32>
    %2566 = arith.negf %2538 : vector<2x256xf32>
    %2567 = math.exp %2566 : vector<2x256xf32>
    %cst_425 = arith.constant 1.000000e+00 : f32
    %2568 = vector.broadcast %cst_425 : f32 to vector<2x256xf32>
    %2569 = arith.addf %2568, %2567 : vector<2x256xf32>
    %2570 = arith.divf %2568, %2569 : vector<2x256xf32>
    %2571 = arith.mulf %2565, %2570 : vector<2x256xf32>
    %c2_426 = arith.constant 2 : index
    %c0_427 = arith.constant 0 : index
    %c0_428 = arith.constant 0 : index
    %2572 = vector.load %arg4[%c2_426, %c0_427, %c0_428] : memref<4x2x256xf32, #tpu.memory_space<vmem>>, vector<1x2x256xf32>
    %2573 = vector.shape_cast %2572 : vector<1x2x256xf32> to vector<2x256xf32>
    %2574 = vector.shape_cast %2571 : vector<2x256xf32> to vector<1x2x256xf32>
    tpu.vector_store %arg4[%c2_426, %c0_427, %c0_428], %2574 {strides = array<i32>} : memref<4x2x256xf32, #tpu.memory_space<vmem>>, vector<1x2x256xf32>,
    %c3_429 = arith.constant 3 : index
    %c0_430 = arith.constant 0 : index
    %c0_431 = arith.constant 0 : index
    %2575 = vector.load %arg3[%c3_429, %c0_430, %c0_431] : memref<4x2x256xf32, #tpu.memory_space<vmem>>, vector<1x2x256xf32>
    %2576 = vector.shape_cast %2575 : vector<1x2x256xf32> to vector<2x256xf32>
    %2577 = arith.negf %2541 : vector<2x256xf32>
    %2578 = math.exp %2577 : vector<2x256xf32>
    %cst_432 = arith.constant 1.000000e+00 : f32
    %2579 = vector.broadcast %cst_432 : f32 to vector<2x256xf32>
    %2580 = arith.addf %2579, %2578 : vector<2x256xf32>
    %2581 = arith.divf %2579, %2580 : vector<2x256xf32>
    %2582 = arith.mulf %2576, %2581 : vector<2x256xf32>
    %c3_433 = arith.constant 3 : index
    %c0_434 = arith.constant 0 : index
    %c0_435 = arith.constant 0 : index
    %2583 = vector.load %arg4[%c3_433, %c0_434, %c0_435] : memref<4x2x256xf32, #tpu.memory_space<vmem>>, vector<1x2x256xf32>
    %2584 = vector.shape_cast %2583 : vector<1x2x256xf32> to vector<2x256xf32>
    %2585 = vector.shape_cast %2582 : vector<2x256xf32> to vector<1x2x256xf32>
    tpu.vector_store %arg4[%c3_433, %c0_434, %c0_435], %2585 {strides = array<i32>} : memref<4x2x256xf32, #tpu.memory_space<vmem>>, vector<1x2x256xf32>,
    return
  }
}

</mosaic_0001>

<llo_original>
// kernel: tpu_custom_call.1
$region0: #{tpu_custom_call.1}
  #allocation0 [shape = 'u32[]', space=smem, size = 0x4, offset = 0x4, fixed_abs, tag = 'smem constant byte address 0x4 - core index']
  #allocation1 [shape = 'u32[144,128]{1,0:T(1,128)}', space=vmem, size = 0x12000, scoped, tag = 'internal scratch']
  %s0 = inlined_call_operand.hbm [shape: f32[432], index: 0, kind: input, shape index: {}]
  %s1 = inlined_call_operand.vmem [shape: f32[12], index: 1, kind: input, shape index: {}]
  %s2 = inlined_call_operand.vmem [shape: s32[2,256], index: 2, kind: input, shape index: {}]
  %s3 = inlined_call_operand.hbm [shape: f32[4,2,256], index: 3, kind: input, shape index: {}]
  %s4 = inlined_call_operand.hbm [shape: f32[4,2,256], index: 4, kind: output, shape index: {}]
  %s5 = sld [smem:[#allocation0]]
  $region38: #{tpu_custom_call.1} parent=0
    _
  %s7 = ssub.s32 1, %s5
  %s8 = scalar_select 0, %s7, %s5
  $region1: #{tpu_custom_call.1} parent=0
    #allocation2 [shape = 'u8[2048]{0}', space=smem, size = 0x800, scoped, tag = 'input window, operand 0, single buffered']
    #allocation3 [shape = 's32[1]{0}', space=sflag, size = 0x4, scoped, tag = 'scoped memory for tpu_custom_call.1']
    #allocation4 [shape = 's32[1]{0}', space=sflag, size = 0x4, scoped, tag = 'scoped memory for tpu_custom_call.1']
    #allocation5 [shape = 's32[1]{0}', space=sflag, size = 0x4, scoped, tag = 'scoped memory for tpu_custom_call.1']
    #allocation6 [shape = 's32[1]{0}', space=sflag, size = 0x4, scoped, tag = 'scoped memory for tpu_custom_call.1']
    #allocation7 [shape = 'u8[512]{0}', space=smem, size = 0x200, scoped, tag = 'input window, operand 1, single buffered']
    #allocation8 [shape = 'u8[8192]{0}', space=vmem, size = 0x2000, scoped, tag = 'input window, operand 3, single buffered']
    #allocation9 [shape = 'u8[8192]{0}', space=vmem, size = 0x2000, scoped, tag = 'output window, operand 0, single buffered']
    %9 = vsyncpa [#allocation5], 0
    %10 = vsyncpa [#allocation6], 0
    %11 = vsyncpa [#allocation3], 0
    %12 = vsyncpa [#allocation4], 0
    // Predicated region
    $region2: #{tpu_custom_call.1} parent=1 // pred_check
      _
    $region3: #{tpu_custom_call.1} parent=1 // pred_check_branch
      %14 = sbr.rel (0) target = $region5
    $region4: #{tpu_custom_call.1} parent=1 // pred_region
      %s16 = ssub.s32 64, 64
      %17 = vsyncadd [#allocation5], %s16
      %20 = dma.hbm_to_smem %s0, 64, [#allocation2], [#allocation5]
    $region5: #{tpu_custom_call.1} parent=1 // pred_fallthru
      _
    // Predicated region
    $region6: #{tpu_custom_call.1} parent=1 // pred_check
      _
    $region7: #{tpu_custom_call.1} parent=1 // pred_check_branch
      %22 = sbr.rel (0) target = $region9
    $region8: #{tpu_custom_call.1} parent=1 // pred_region
      %s24 = ssub.s32 16, 16
      %25 = vsyncadd [#allocation6], %s24
      %s27 = sshll.u32 %s1, 4
      %s28 = int_to_ptr.vmem [resolvable:$true] %s27
      %30 = dma.vmem_to_smem %s28, 16, [#allocation7], [#allocation6]
    $region9: #{tpu_custom_call.1} parent=1 // pred_fallthru
      _
    // Predicated region
    $region10: #{tpu_custom_call.1} parent=1 // pred_check
      _
    $region11: #{tpu_custom_call.1} parent=1 // pred_check_branch
      %32 = sbr.rel (0) target = $region13
    $region12: #{tpu_custom_call.1} parent=1 // pred_region
      _
    $region13: #{tpu_custom_call.1} parent=1 // pred_fallthru
      _
    // Predicated region
    $region14: #{tpu_custom_call.1} parent=1 // pred_check
      _
    $region15: #{tpu_custom_call.1} parent=1 // pred_check_branch
      %34 = sbr.rel (0) target = $region17
    $region16: #{tpu_custom_call.1} parent=1 // pred_region
      %s36 = ssub.s32 256, 256
      %37 = vsyncadd [#allocation3], %s36
      %s38 = sshll.u32 [#allocation8], 4
      %s39 = int_to_ptr.vmem [resolvable:$true] %s38
      %44 = dma.hbm_to_vmem [thread:$0]  %s3, 256, %s39, [#allocation3], 64, 64, 4
    $region17: #{tpu_custom_call.1} parent=1 // pred_fallthru
      _
    // Predicated region
    $region18: #{tpu_custom_call.1} parent=1 // pred_check
      _
    $region19: #{tpu_custom_call.1} parent=1 // pred_check_branch
      %46 = sbr.rel (0) target = $region21
    $region20: #{tpu_custom_call.1} parent=1 // pred_region
      %47 = dma.done [#allocation5], 64
    $region21: #{tpu_custom_call.1} parent=1 // pred_fallthru
      _
    // Predicated region
    $region22: #{tpu_custom_call.1} parent=1 // pred_check
      _
    $region23: #{tpu_custom_call.1} parent=1 // pred_check_branch
      %49 = sbr.rel (0) target = $region25
    $region24: #{tpu_custom_call.1} parent=1 // pred_region
      %50 = dma.done [#allocation6], 16
    $region25: #{tpu_custom_call.1} parent=1 // pred_fallthru
      _
    // Predicated region
    $region26: #{tpu_custom_call.1} parent=1 // pred_check
      _
    $region27: #{tpu_custom_call.1} parent=1 // pred_check_branch
      %52 = sbr.rel (0) target = $region29
    $region28: #{tpu_custom_call.1} parent=1 // pred_region
      %53 = dma.done [#allocation3], 256
    $region29: #{tpu_custom_call.1} parent=1 // pred_fallthru
      _
    %54 = sfence
    %v55 = vld [vmem:[%s2] ss:$2 sm:$0x3]
    %v56 = vlaneseq
    %v57 = vshrl.u32 %v56, 7
    %v58 = vsub.s32 0, %v57
    %v59 = vrot.slane %v55, %v58
    %v60 = vlaneseq
    %v61 = vshrl.u32 %v60, 7
    %v62 = vsub.s32 1, %v61
    %v63 = vrot.slane %v55, %v62
    %s64 = scalar_lea.vmem %s2, 1
    %v65 = vld [vmem:[%s64] ss:$2 sm:$0x3]
    %v66 = vlaneseq
    %v67 = vshrl.u32 %v66, 7
    %v68 = vsub.s32 0, %v67
    %v69 = vrot.slane %v65, %v68
    %v70 = vlaneseq
    %v71 = vshrl.u32 %v70, 7
    %v72 = vsub.s32 1, %v71
    %v73 = vrot.slane %v65, %v72
    %v74 = vld [vmem:[#allocation8] sm:$0xf]
    %v75 = vmax.f32 %v74, 0.0
    %s76 = scalar_lea.vmem [#allocation8], 4
    %v77 = vld [vmem:[%s76] sm:$0xf]
    %v78 = vmax.f32 %v77, 0.0
    %s79 = scalar_lea.vmem [#allocation8], 8
    %v80 = vld [vmem:[%s79] sm:$0xf]
    %v81 = vmax.f32 %v80, 0.0
    %s82 = scalar_lea.vmem [#allocation8], 12
    %v83 = vld [vmem:[%s82] sm:$0xf]
    %v84 = vmax.f32 %v83, 0.0
    %v85 = vadd.s32 %v59, 4294967295
    %v86 = vadd.s32 %v63, 4294967295
    %vm87 = vcmp.ge.s32.totalorder %v85, 0
    %vm88 = vcmp.ge.s32.totalorder %v86, 0
    %vm89 = vcmp.lt.s32.totalorder %v85, 16
    %vm90 = vcmp.lt.s32.totalorder %v86, 16
    %vm91 = vmand %vm87, %vm89
    %vm92 = vmand %vm88, %vm90
    %v93 = vadd.s32 %v69, 4294967295
    %v94 = vadd.s32 %v73, 4294967295
    %vm95 = vcmp.ge.s32.totalorder %v93, 0
    %vm96 = vcmp.ge.s32.totalorder %v94, 0
    %vm97 = vmand %vm91, %vm95
    %vm98 = vmand %vm92, %vm96
    %vm99 = vcmp.lt.s32.totalorder %v93, 16
    %vm100 = vcmp.lt.s32.totalorder %v94, 16
    %vm101 = vmand %vm97, %vm99
    %vm102 = vmand %vm98, %vm100
    %v105 = vunpack.c.l.s4 1983009808
    %v106 = vunpack.c.0.s8 %v105
    %v107 = vlaneseq
    %v108 = vshrl.u32 %v107, 7
    %v109 = vsub.s32 %v106, %v108
    %v110 = vrot.slane %v75, %v109
    %v111 = vcombine.high %v110, %v110
    %114 = vrot.lane.b32.xlu0 %v110, 17
    %v115 = vpop.permute.xlu0 %114
    %116 = vrot.lane.b32.xlu0 %v111, 17
    %v117 = vpop.permute.xlu0 %116
    %v118 = vlaneseq
    %v119 = vand.u32 %v118, 127
    %vm120 = vcmp.lt.s32.totalorder %v119, 17
    %v121 = vsel %vm120, %v115, %v117
    %v122 = vsel %vm120, %v117, %v115
    %v123 = vsel %vm101, %v122, 0.0
    %v124 = vsel %vm102, %v121, 0.0
    %s125 = sld [smem:[#allocation2]]
    %v126 = vstv %s125
    %v127 = vmul.f32 %v126, %v123
    %v128 = vmul.f32 %v126, %v124
    %v129 = vadd.f32 %v127, 0.0
    %v130 = vadd.f32 %v128, 0.0
    %s131 = sld [smem:[#allocation2 + $0x1]]
    %v132 = vstv %s131
    %v133 = vmul.f32 %v132, %v123
    %v134 = vmul.f32 %v132, %v124
    %v135 = vadd.f32 %v133, 0.0
    %v136 = vadd.f32 %v134, 0.0
    %s137 = sld [smem:[#allocation2 + $0x2]]
    %v138 = vstv %s137
    %v139 = vmul.f32 %v138, %v123
    %v140 = vmul.f32 %v138, %v124
    %v141 = vadd.f32 %v139, 0.0
    %v142 = vadd.f32 %v140, 0.0
    %s143 = sld [smem:[#allocation2 + $0x3]]
    %v144 = vstv %s143
    %v145 = vmul.f32 %v144, %v123
    %v146 = vmul.f32 %v144, %v124
    %v147 = vadd.f32 %v145, 0.0
    %v148 = vadd.f32 %v146, 0.0
    %v151 = vunpack.c.l.s4 1983009808
    %v152 = vunpack.c.0.s8 %v151
    %v153 = vlaneseq
    %v154 = vshrl.u32 %v153, 7
    %v155 = vsub.s32 %v152, %v154
    %v156 = vrot.slane %v78, %v155
    %v157 = vcombine.high %v156, %v156
    %160 = vrot.lane.b32.xlu0 %v156, 17
    %v161 = vpop.permute.xlu0 %160
    %162 = vrot.lane.b32.xlu0 %v157, 17
    %v163 = vpop.permute.xlu0 %162
    %v164 = vsel %vm120, %v161, %v163
    %v165 = vsel %vm120, %v163, %v161
    %v166 = vsel %vm101, %v165, 0.0
    %v167 = vsel %vm102, %v164, 0.0
    %s168 = sld [smem:[#allocation2 + $0x4]]
    %v169 = vstv %s168
    %v170 = vmul.f32 %v169, %v166
    %v171 = vmul.f32 %v169, %v167
    %v172 = vadd.f32 %v129, %v170
    %v173 = vadd.f32 %v130, %v171
    %s174 = sld [smem:[#allocation2 + $0x5]]
    %v175 = vstv %s174
    %v176 = vmul.f32 %v175, %v166
    %v177 = vmul.f32 %v175, %v167
    %v178 = vadd.f32 %v135, %v176
    %v179 = vadd.f32 %v136, %v177
    %s180 = sld [smem:[#allocation2 + $0x6]]
    %v181 = vstv %s180
    %v182 = vmul.f32 %v181, %v166
    %v183 = vmul.f32 %v181, %v167
    %v184 = vadd.f32 %v141, %v182
    %v185 = vadd.f32 %v142, %v183
    %s186 = sld [smem:[#allocation2 + $0x7]]
    %v187 = vstv %s186
    %v188 = vmul.f32 %v187, %v166
    %v189 = vmul.f32 %v187, %v167
    %v190 = vadd.f32 %v147, %v188
    %v191 = vadd.f32 %v148, %v189
    %v194 = vunpack.c.l.s4 1983009808
    %v195 = vunpack.c.0.s8 %v194
    %v196 = vlaneseq
    %v197 = vshrl.u32 %v196, 7
    %v198 = vsub.s32 %v195, %v197
    %v199 = vrot.slane %v81, %v198
    %v200 = vcombine.high %v199, %v199
    %203 = vrot.lane.b32.xlu0 %v199, 17
    %v204 = vpop.permute.xlu0 %203
    %205 = vrot.lane.b32.xlu0 %v200, 17
    %v206 = vpop.permute.xlu0 %205
    %v207 = vsel %vm120, %v204, %v206
    %v208 = vsel %vm120, %v206, %v204
    %v209 = vsel %vm101, %v208, 0.0
    %v210 = vsel %vm102, %v207, 0.0
    %s211 = sld [smem:[#allocation2 + $0x8]]
    %v212 = vstv %s211
    %v213 = vmul.f32 %v212, %v209
    %v214 = vmul.f32 %v212, %v210
    %v215 = vadd.f32 %v172, %v213
    %v216 = vadd.f32 %v173, %v214
    %s217 = sld [smem:[#allocation2 + $0x9]]
    %v218 = vstv %s217
    %v219 = vmul.f32 %v218, %v209
    %v220 = vmul.f32 %v218, %v210
    %v221 = vadd.f32 %v178, %v219
    %v222 = vadd.f32 %v179, %v220
    %s223 = sld [smem:[#allocation2 + $0xa]]
    %v224 = vstv %s223
    %v225 = vmul.f32 %v224, %v209
    %v226 = vmul.f32 %v224, %v210
    %v227 = vadd.f32 %v184, %v225
    %v228 = vadd.f32 %v185, %v226
    %s229 = sld [smem:[#allocation2 + $0xb]]
    %v230 = vstv %s229
    %v231 = vmul.f32 %v230, %v209
    %v232 = vmul.f32 %v230, %v210
    %v233 = vadd.f32 %v190, %v231
    %v234 = vadd.f32 %v191, %v232
    %v237 = vunpack.c.l.s4 1983009808
    %v238 = vunpack.c.0.s8 %v237
    %v239 = vlaneseq
    %v240 = vshrl.u32 %v239, 7
    %v241 = vsub.s32 %v238, %v240
    %v242 = vrot.slane %v84, %v241
    %v243 = vcombine.high %v242, %v242
    %246 = vrot.lane.b32.xlu0 %v242, 17
    %v247 = vpop.permute.xlu0 %246
    %248 = vrot.lane.b32.xlu0 %v243, 17
    %v249 = vpop.permute.xlu0 %248
    %v250 = vsel %vm120, %v247, %v249
    %v251 = vsel %vm120, %v249, %v247
    %v252 = vsel %vm101, %v251, 0.0
    %v253 = vsel %vm102, %v250, 0.0
    %s254 = sld [smem:[#allocation2 + $0xc]]
    %v255 = vstv %s254
    %v256 = vmul.f32 %v255, %v252
    %v257 = vmul.f32 %v255, %v253
    %v258 = vadd.f32 %v215, %v256
    %v259 = vadd.f32 %v216, %v257
    %s260 = sld [smem:[#allocation2 + $0xd]]
    %v261 = vstv %s260
    %v262 = vmul.f32 %v261, %v252
    %v263 = vmul.f32 %v261, %v253
    %v264 = vadd.f32 %v221, %v262
    %v265 = vadd.f32 %v222, %v263
    %s266 = sld [smem:[#allocation2 + $0xe]]
    %v267 = vstv %s266
    %v268 = vmul.f32 %v267, %v252
    %v269 = vmul.f32 %v267, %v253
    %v270 = vadd.f32 %v227, %v268
    %v271 = vadd.f32 %v228, %v269
    %s272 = sld [smem:[#allocation2 + $0xf]]
    %v273 = vstv %s272
    %v274 = vmul.f32 %v273, %v252
    %v275 = vmul.f32 %v273, %v253
    %v276 = vadd.f32 %v233, %v274
    %v277 = vadd.f32 %v234, %v275
    %vm278 = vcmp.ge.s32.totalorder %v69, 0
    %vm279 = vcmp.ge.s32.totalorder %v73, 0
    %vm280 = vmand %vm91, %vm278
    %vm281 = vmand %vm92, %vm279
    %vm282 = vcmp.lt.s32.totalorder %v69, 16
    %vm283 = vcmp.lt.s32.totalorder %v73, 16
    %vm284 = vmand %vm280, %vm282
    %vm285 = vmand %vm281, %vm283
    %286 = vrot.lane.b32.xlu0 %v110, 16
    %v287 = vpop.permute.xlu0 %286
    %288 = vrot.lane.b32.xlu0 %v111, 16
    %v289 = vpop.permute.xlu0 %288
    %vm290 = vcmp.lt.s32.totalorder %v119, 16
    %v291 = vsel %vm290, %v287, %v289
    %v292 = vsel %vm290, %v289, %v287
    %v293 = vsel %vm284, %v292, 0.0
    %v294 = vsel %vm285, %v291, 0.0
    %s295 = sld [smem:[#allocation2 + $0x10]]
    %v296 = vstv %s295
    %v297 = vmul.f32 %v296, %v293
    %v298 = vmul.f32 %v296, %v294
    %v299 = vadd.f32 %v258, %v297
    %v300 = vadd.f32 %v259, %v298
    %s301 = sld [smem:[#allocation2 + $0x11]]
    %v302 = vstv %s301
    %v303 = vmul.f32 %v302, %v293
    %v304 = vmul.f32 %v302, %v294
    %v305 = vadd.f32 %v264, %v303
    %v306 = vadd.f32 %v265, %v304
    %s307 = sld [smem:[#allocation2 + $0x12]]
    %v308 = vstv %s307
    %v309 = vmul.f32 %v308, %v293
    %v310 = vmul.f32 %v308, %v294
    %v311 = vadd.f32 %v270, %v309
    %v312 = vadd.f32 %v271, %v310
    %s313 = sld [smem:[#allocation2 + $0x13]]
    %v314 = vstv %s313
    %v315 = vmul.f32 %v314, %v293
    %v316 = vmul.f32 %v314, %v294
    %v317 = vadd.f32 %v276, %v315
    %v318 = vadd.f32 %v277, %v316
    %319 = vrot.lane.b32.xlu0 %v156, 16
    %v320 = vpop.permute.xlu0 %319
    %321 = vrot.lane.b32.xlu0 %v157, 16
    %v322 = vpop.permute.xlu0 %321
    %v323 = vsel %vm290, %v320, %v322
    %v324 = vsel %vm290, %v322, %v320
    %v325 = vsel %vm284, %v324, 0.0
    %v326 = vsel %vm285, %v323, 0.0
    %s327 = sld [smem:[#allocation2 + $0x14]]
    %v328 = vstv %s327
    %v329 = vmul.f32 %v328, %v325
    %v330 = vmul.f32 %v328, %v326
    %v331 = vadd.f32 %v299, %v329
    %v332 = vadd.f32 %v300, %v330
    %s333 = sld [smem:[#allocation2 + $0x15]]
    %v334 = vstv %s333
    %v335 = vmul.f32 %v334, %v325
    %v336 = vmul.f32 %v334, %v326
    %v337 = vadd.f32 %v305, %v335
    %v338 = vadd.f32 %v306, %v336
    %s339 = sld [smem:[#allocation2 + $0x16]]
    %v340 = vstv %s339
    %v341 = vmul.f32 %v340, %v325
    %v342 = vmul.f32 %v340, %v326
    %v343 = vadd.f32 %v311, %v341
    %v344 = vadd.f32 %v312, %v342
    %s345 = sld [smem:[#allocation2 + $0x17]]
    %v346 = vstv %s345
    %v347 = vmul.f32 %v346, %v325
    %v348 = vmul.f32 %v346, %v326
    %v349 = vadd.f32 %v317, %v347
    %v350 = vadd.f32 %v318, %v348
    %351 = vrot.lane.b32.xlu0 %v199, 16
    %v352 = vpop.permute.xlu0 %351
    %353 = vrot.lane.b32.xlu0 %v200, 16
    %v354 = vpop.permute.xlu0 %353
    %v355 = vsel %vm290, %v352, %v354
    %v356 = vsel %vm290, %v354, %v352
    %v357 = vsel %vm284, %v356, 0.0
    %v358 = vsel %vm285, %v355, 0.0
    %s359 = sld [smem:[#allocation2 + $0x18]]
    %v360 = vstv %s359
    %v361 = vmul.f32 %v360, %v357
    %v362 = vmul.f32 %v360, %v358
    %v363 = vadd.f32 %v331, %v361
    %v364 = vadd.f32 %v332, %v362
    %s365 = sld [smem:[#allocation2 + $0x19]]
    %v366 = vstv %s365
    %v367 = vmul.f32 %v366, %v357
    %v368 = vmul.f32 %v366, %v358
    %v369 = vadd.f32 %v337, %v367
    %v370 = vadd.f32 %v338, %v368
    %s371 = sld [smem:[#allocation2 + $0x1a]]
    %v372 = vstv %s371
    %v373 = vmul.f32 %v372, %v357
    %v374 = vmul.f32 %v372, %v358
    %v375 = vadd.f32 %v343, %v373
    %v376 = vadd.f32 %v344, %v374
    %s377 = sld [smem:[#allocation2 + $0x1b]]
    %v378 = vstv %s377
    %v379 = vmul.f32 %v378, %v357
    %v380 = vmul.f32 %v378, %v358
    %v381 = vadd.f32 %v349, %v379
    %v382 = vadd.f32 %v350, %v380
    %383 = vrot.lane.b32.xlu0 %v242, 16
    %v384 = vpop.permute.xlu0 %383
    %385 = vrot.lane.b32.xlu0 %v243, 16
    %v386 = vpop.permute.xlu0 %385
    %v387 = vsel %vm290, %v384, %v386
    %v388 = vsel %vm290, %v386, %v384
    %v389 = vsel %vm284, %v388, 0.0
    %v390 = vsel %vm285, %v387, 0.0
    %s391 = sld [smem:[#allocation2 + $0x1c]]
    %v392 = vstv %s391
    %v393 = vmul.f32 %v392, %v389
    %v394 = vmul.f32 %v392, %v390
    %v395 = vadd.f32 %v363, %v393
    %v396 = vadd.f32 %v364, %v394
    %s397 = sld [smem:[#allocation2 + $0x1d]]
    %v398 = vstv %s397
    %v399 = vmul.f32 %v398, %v389
    %v400 = vmul.f32 %v398, %v390
    %v401 = vadd.f32 %v369, %v399
    %v402 = vadd.f32 %v370, %v400
    %s403 = sld [smem:[#allocation2 + $0x1e]]
    %v404 = vstv %s403
    %v405 = vmul.f32 %v404, %v389
    %v406 = vmul.f32 %v404, %v390
    %v407 = vadd.f32 %v375, %v405
    %v408 = vadd.f32 %v376, %v406
    %s409 = sld [smem:[#allocation2 + $0x1f]]
    %v410 = vstv %s409
    %v411 = vmul.f32 %v410, %v389
    %v412 = vmul.f32 %v410, %v390
    %v413 = vadd.f32 %v381, %v411
    %v414 = vadd.f32 %v382, %v412
    %v415 = vadd.s32 %v69, 1
    %v416 = vadd.s32 %v73, 1
    %vm417 = vcmp.ge.s32.totalorder %v415, 0
    %vm418 = vcmp.ge.s32.totalorder %v416, 0
    %vm419 = vmand %vm91, %vm417
    %vm420 = vmand %vm92, %vm418
    %vm421 = vcmp.lt.s32.totalorder %v415, 16
    %vm422 = vcmp.lt.s32.totalorder %v416, 16
    %vm423 = vmand %vm419, %vm421
    %vm424 = vmand %vm420, %vm422
    %425 = vrot.lane.b32.xlu0 %v110, 15
    %v426 = vpop.permute.xlu0 %425
    %427 = vrot.lane.b32.xlu0 %v111, 15
    %v428 = vpop.permute.xlu0 %427
    %vm429 = vcmp.lt.s32.totalorder %v119, 15
    %v430 = vsel %vm429, %v426, %v428
    %v431 = vsel %vm429, %v428, %v426
    %v432 = vsel %vm423, %v431, 0.0
    %v433 = vsel %vm424, %v430, 0.0
    %s434 = sld [smem:[#allocation2 + $0x20]]
    %v435 = vstv %s434
    %v436 = vmul.f32 %v435, %v432
    %v437 = vmul.f32 %v435, %v433
    %v438 = vadd.f32 %v395, %v436
    %v439 = vadd.f32 %v396, %v437
    %s440 = sld [smem:[#allocation2 + $0x21]]
    %v441 = vstv %s440
    %v442 = vmul.f32 %v441, %v432
    %v443 = vmul.f32 %v441, %v433
    %v444 = vadd.f32 %v401, %v442
    %v445 = vadd.f32 %v402, %v443
    %s446 = sld [smem:[#allocation2 + $0x22]]
    %v447 = vstv %s446
    %v448 = vmul.f32 %v447, %v432
    %v449 = vmul.f32 %v447, %v433
    %v450 = vadd.f32 %v407, %v448
    %v451 = vadd.f32 %v408, %v449
    %s452 = sld [smem:[#allocation2 + $0x23]]
    %v453 = vstv %s452
    %v454 = vmul.f32 %v453, %v432
    %v455 = vmul.f32 %v453, %v433
    %v456 = vadd.f32 %v413, %v454
    %v457 = vadd.f32 %v414, %v455
    %458 = vrot.lane.b32.xlu0 %v156, 15
    %v459 = vpop.permute.xlu0 %458
    %460 = vrot.lane.b32.xlu0 %v157, 15
    %v461 = vpop.permute.xlu0 %460
    %v462 = vsel %vm429, %v459, %v461
    %v463 = vsel %vm429, %v461, %v459
    %v464 = vsel %vm423, %v463, 0.0
    %v465 = vsel %vm424, %v462, 0.0
    %s466 = sld [smem:[#allocation2 + $0x24]]
    %v467 = vstv %s466
    %v468 = vmul.f32 %v467, %v464
    %v469 = vmul.f32 %v467, %v465
    %v470 = vadd.f32 %v438, %v468
    %v471 = vadd.f32 %v439, %v469
    %s472 = sld [smem:[#allocation2 + $0x25]]
    %v473 = vstv %s472
    %v474 = vmul.f32 %v473, %v464
    %v475 = vmul.f32 %v473, %v465
    %v476 = vadd.f32 %v444, %v474
    %v477 = vadd.f32 %v445, %v475
    %s478 = sld [smem:[#allocation2 + $0x26]]
    %v479 = vstv %s478
    %v480 = vmul.f32 %v479, %v464
    %v481 = vmul.f32 %v479, %v465
    %v482 = vadd.f32 %v450, %v480
    %v483 = vadd.f32 %v451, %v481
    %s484 = sld [smem:[#allocation2 + $0x27]]
    %v485 = vstv %s484
    %v486 = vmul.f32 %v485, %v464
    %v487 = vmul.f32 %v485, %v465
    %v488 = vadd.f32 %v456, %v486
    %v489 = vadd.f32 %v457, %v487
    %490 = vrot.lane.b32.xlu0 %v199, 15
    %v491 = vpop.permute.xlu0 %490
    %492 = vrot.lane.b32.xlu0 %v200, 15
    %v493 = vpop.permute.xlu0 %492
    %v494 = vsel %vm429, %v491, %v493
    %v495 = vsel %vm429, %v493, %v491
    %v496 = vsel %vm423, %v495, 0.0
    %v497 = vsel %vm424, %v494, 0.0
    %s498 = sld [smem:[#allocation2 + $0x28]]
    %v499 = vstv %s498
    %v500 = vmul.f32 %v499, %v496
    %v501 = vmul.f32 %v499, %v497
    %v502 = vadd.f32 %v470, %v500
    %v503 = vadd.f32 %v471, %v501
    %s504 = sld [smem:[#allocation2 + $0x29]]
    %v505 = vstv %s504
    %v506 = vmul.f32 %v505, %v496
    %v507 = vmul.f32 %v505, %v497
    %v508 = vadd.f32 %v476, %v506
    %v509 = vadd.f32 %v477, %v507
    %s510 = sld [smem:[#allocation2 + $0x2a]]
    %v511 = vstv %s510
    %v512 = vmul.f32 %v511, %v496
    %v513 = vmul.f32 %v511, %v497
    %v514 = vadd.f32 %v482, %v512
    %v515 = vadd.f32 %v483, %v513
    %s516 = sld [smem:[#allocation2 + $0x2b]]
    %v517 = vstv %s516
    %v518 = vmul.f32 %v517, %v496
    %v519 = vmul.f32 %v517, %v497
    %v520 = vadd.f32 %v488, %v518
    %v521 = vadd.f32 %v489, %v519
    %522 = vrot.lane.b32.xlu0 %v242, 15
    %v523 = vpop.permute.xlu0 %522
    %524 = vrot.lane.b32.xlu0 %v243, 15
    %v525 = vpop.permute.xlu0 %524
    %v526 = vsel %vm429, %v523, %v525
    %v527 = vsel %vm429, %v525, %v523
    %v528 = vsel %vm423, %v527, 0.0
    %v529 = vsel %vm424, %v526, 0.0
    %s530 = sld [smem:[#allocation2 + $0x2c]]
    %v531 = vstv %s530
    %v532 = vmul.f32 %v531, %v528
    %v533 = vmul.f32 %v531, %v529
    %v534 = vadd.f32 %v502, %v532
    %v535 = vadd.f32 %v503, %v533
    %s536 = sld [smem:[#allocation2 + $0x2d]]
    %v537 = vstv %s536
    %v538 = vmul.f32 %v537, %v528
    %v539 = vmul.f32 %v537, %v529
    %v540 = vadd.f32 %v508, %v538
    %v541 = vadd.f32 %v509, %v539
    %s542 = sld [smem:[#allocation2 + $0x2e]]
    %v543 = vstv %s542
    %v544 = vmul.f32 %v543, %v528
    %v545 = vmul.f32 %v543, %v529
    %v546 = vadd.f32 %v514, %v544
    %v547 = vadd.f32 %v515, %v545
    %s548 = sld [smem:[#allocation2 + $0x2f]]
    %v549 = vstv %s548
    %v550 = vmul.f32 %v549, %v528
    %v551 = vmul.f32 %v549, %v529
    %v552 = vadd.f32 %v520, %v550
    %v553 = vadd.f32 %v521, %v551
    %vm554 = vcmp.ge.s32.totalorder %v59, 0
    %vm555 = vcmp.ge.s32.totalorder %v63, 0
    %vm556 = vcmp.lt.s32.totalorder %v59, 16
    %vm557 = vcmp.lt.s32.totalorder %v63, 16
    %vm558 = vmand %vm554, %vm556
    %vm559 = vmand %vm555, %vm557
    %vm560 = vmand %vm558, %vm95
    %vm561 = vmand %vm559, %vm96
    %vm562 = vmand %vm560, %vm99
    %vm563 = vmand %vm561, %vm100
    %564 = vrot.lane.b32.xlu0 %v110, 1
    %v565 = vpop.permute.xlu0 %564
    %566 = vrot.lane.b32.xlu0 %v111, 1
    %v567 = vpop.permute.xlu0 %566
    %vm568 = vcmp.lt.s32.totalorder %v119, 1
    %v569 = vsel %vm568, %v565, %v567
    %v570 = vsel %vm568, %v567, %v565
    %v571 = vsel %vm562, %v570, 0.0
    %v572 = vsel %vm563, %v569, 0.0
    %s573 = sld [smem:[#allocation2 + $0x30]]
    %v574 = vstv %s573
    %v575 = vmul.f32 %v574, %v571
    %v576 = vmul.f32 %v574, %v572
    %v577 = vadd.f32 %v534, %v575
    %v578 = vadd.f32 %v535, %v576
    %s579 = sld [smem:[#allocation2 + $0x31]]
    %v580 = vstv %s579
    %v581 = vmul.f32 %v580, %v571
    %v582 = vmul.f32 %v580, %v572
    %v583 = vadd.f32 %v540, %v581
    %v584 = vadd.f32 %v541, %v582
    %s585 = sld [smem:[#allocation2 + $0x32]]
    %v586 = vstv %s585
    %v587 = vmul.f32 %v586, %v571
    %v588 = vmul.f32 %v586, %v572
    %v589 = vadd.f32 %v546, %v587
    %v590 = vadd.f32 %v547, %v588
    %s591 = sld [smem:[#allocation2 + $0x33]]
    %v592 = vstv %s591
    %v593 = vmul.f32 %v592, %v571
    %v594 = vmul.f32 %v592, %v572
    %v595 = vadd.f32 %v552, %v593
    %v596 = vadd.f32 %v553, %v594
    %597 = vrot.lane.b32.xlu0 %v156, 1
    %v598 = vpop.permute.xlu0 %597
    %599 = vrot.lane.b32.xlu0 %v157, 1
    %v600 = vpop.permute.xlu0 %599
    %v601 = vsel %vm568, %v598, %v600
    %v602 = vsel %vm568, %v600, %v598
    %v603 = vsel %vm562, %v602, 0.0
    %v604 = vsel %vm563, %v601, 0.0
    %s605 = sld [smem:[#allocation2 + $0x34]]
    %v606 = vstv %s605
    %v607 = vmul.f32 %v606, %v603
    %v608 = vmul.f32 %v606, %v604
    %v609 = vadd.f32 %v577, %v607
    %v610 = vadd.f32 %v578, %v608
    %s611 = sld [smem:[#allocation2 + $0x35]]
    %v612 = vstv %s611
    %v613 = vmul.f32 %v612, %v603
    %v614 = vmul.f32 %v612, %v604
    %v615 = vadd.f32 %v583, %v613
    %v616 = vadd.f32 %v584, %v614
    %s617 = sld [smem:[#allocation2 + $0x36]]
    %v618 = vstv %s617
    %v619 = vmul.f32 %v618, %v603
    %v620 = vmul.f32 %v618, %v604
    %v621 = vadd.f32 %v589, %v619
    %v622 = vadd.f32 %v590, %v620
    %s623 = sld [smem:[#allocation2 + $0x37]]
    %v624 = vstv %s623
    %v625 = vmul.f32 %v624, %v603
    %v626 = vmul.f32 %v624, %v604
    %v627 = vadd.f32 %v595, %v625
    %v628 = vadd.f32 %v596, %v626
    %629 = vrot.lane.b32.xlu0 %v199, 1
    %v630 = vpop.permute.xlu0 %629
    %631 = vrot.lane.b32.xlu0 %v200, 1
    %v632 = vpop.permute.xlu0 %631
    %v633 = vsel %vm568, %v630, %v632
    %v634 = vsel %vm568, %v632, %v630
    %v635 = vsel %vm562, %v634, 0.0
    %v636 = vsel %vm563, %v633, 0.0
    %s637 = sld [smem:[#allocation2 + $0x38]]
    %v638 = vstv %s637
    %v639 = vmul.f32 %v638, %v635
    %v640 = vmul.f32 %v638, %v636
    %v641 = vadd.f32 %v609, %v639
    %v642 = vadd.f32 %v610, %v640
    %s643 = sld [smem:[#allocation2 + $0x39]]
    %v644 = vstv %s643
    %v645 = vmul.f32 %v644, %v635
    %v646 = vmul.f32 %v644, %v636
    %v647 = vadd.f32 %v615, %v645
    %v648 = vadd.f32 %v616, %v646
    %s649 = sld [smem:[#allocation2 + $0x3a]]
    %v650 = vstv %s649
    %v651 = vmul.f32 %v650, %v635
    %v652 = vmul.f32 %v650, %v636
    %v653 = vadd.f32 %v621, %v651
    %v654 = vadd.f32 %v622, %v652
    %s655 = sld [smem:[#allocation2 + $0x3b]]
    %v656 = vstv %s655
    %v657 = vmul.f32 %v656, %v635
    %v658 = vmul.f32 %v656, %v636
    %v659 = vadd.f32 %v627, %v657
    %v660 = vadd.f32 %v628, %v658
    %661 = vrot.lane.b32.xlu0 %v242, 1
    %v662 = vpop.permute.xlu0 %661
    %663 = vrot.lane.b32.xlu0 %v243, 1
    %v664 = vpop.permute.xlu0 %663
    %v665 = vsel %vm568, %v662, %v664
    %v666 = vsel %vm568, %v664, %v662
    %v667 = vsel %vm562, %v666, 0.0
    %v668 = vsel %vm563, %v665, 0.0
    %s669 = sld [smem:[#allocation2 + $0x3c]]
    %v670 = vstv %s669
    %v671 = vmul.f32 %v670, %v667
    %v672 = vmul.f32 %v670, %v668
    %v673 = vadd.f32 %v641, %v671
    %v674 = vadd.f32 %v642, %v672
    %s675 = sld [smem:[#allocation2 + $0x3d]]
    %v676 = vstv %s675
    %v677 = vmul.f32 %v676, %v667
    %v678 = vmul.f32 %v676, %v668
    %v679 = vadd.f32 %v647, %v677
    %v680 = vadd.f32 %v648, %v678
    %s681 = sld [smem:[#allocation2 + $0x3e]]
    %v682 = vstv %s681
    %v683 = vmul.f32 %v682, %v667
    %v684 = vmul.f32 %v682, %v668
    %v685 = vadd.f32 %v653, %v683
    %v686 = vadd.f32 %v654, %v684
    %s687 = sld [smem:[#allocation2 + $0x3f]]
    %v688 = vstv %s687
    %v689 = vmul.f32 %v688, %v667
    %v690 = vmul.f32 %v688, %v668
    %v691 = vadd.f32 %v659, %v689
    %v692 = vadd.f32 %v660, %v690
    %s693 = sld [smem:[#allocation2 + $0x40]]
    %v694 = vstv %s693
    %v695 = vmul.f32 %v694, %v75
    %v698 = vunpack.c.l.s4 1983009808
    %v699 = vunpack.c.0.s8 %v698
    %v700 = vlaneseq
    %v701 = vshrl.u32 %v700, 7
    %v702 = vsub.s32 %v699, %v701
    %v703 = vrot.slane %v695, %v702
    %v704 = vcombine.high %v703, %v703
    %v707 = vadd.f32 %v673, %v703
    %v708 = vadd.f32 %v674, %v704
    %s709 = sld [smem:[#allocation2 + $0x41]]
    %v710 = vstv %s709
    %v711 = vmul.f32 %v710, %v75
    %v714 = vunpack.c.l.s4 1983009808
    %v715 = vunpack.c.0.s8 %v714
    %v716 = vlaneseq
    %v717 = vshrl.u32 %v716, 7
    %v718 = vsub.s32 %v715, %v717
    %v719 = vrot.slane %v711, %v718
    %v720 = vcombine.high %v719, %v719
    %v723 = vadd.f32 %v679, %v719
    %v724 = vadd.f32 %v680, %v720
    %s725 = sld [smem:[#allocation2 + $0x42]]
    %v726 = vstv %s725
    %v727 = vmul.f32 %v726, %v75
    %v730 = vunpack.c.l.s4 1983009808
    %v731 = vunpack.c.0.s8 %v730
    %v732 = vlaneseq
    %v733 = vshrl.u32 %v732, 7
    %v734 = vsub.s32 %v731, %v733
    %v735 = vrot.slane %v727, %v734
    %v736 = vcombine.high %v735, %v735
    %v739 = vadd.f32 %v685, %v735
    %v740 = vadd.f32 %v686, %v736
    %s741 = sld [smem:[#allocation2 + $0x43]]
    %v742 = vstv %s741
    %v743 = vmul.f32 %v742, %v75
    %v746 = vunpack.c.l.s4 1983009808
    %v747 = vunpack.c.0.s8 %v746
    %v748 = vlaneseq
    %v749 = vshrl.u32 %v748, 7
    %v750 = vsub.s32 %v747, %v749
    %v751 = vrot.slane %v743, %v750
    %v752 = vcombine.high %v751, %v751
    %v755 = vadd.f32 %v691, %v751
    %v756 = vadd.f32 %v692, %v752
    %s757 = sld [smem:[#allocation2 + $0x44]]
    %v758 = vstv %s757
    %v759 = vmul.f32 %v758, %v78
    %v762 = vunpack.c.l.s4 1983009808
    %v763 = vunpack.c.0.s8 %v762
    %v764 = vlaneseq
    %v765 = vshrl.u32 %v764, 7
    %v766 = vsub.s32 %v763, %v765
    %v767 = vrot.slane %v759, %v766
    %v768 = vcombine.high %v767, %v767
    %v771 = vadd.f32 %v707, %v767
    %v772 = vadd.f32 %v708, %v768
    %s773 = sld [smem:[#allocation2 + $0x45]]
    %v774 = vstv %s773
    %v775 = vmul.f32 %v774, %v78
    %v778 = vunpack.c.l.s4 1983009808
    %v779 = vunpack.c.0.s8 %v778
    %v780 = vlaneseq
    %v781 = vshrl.u32 %v780, 7
    %v782 = vsub.s32 %v779, %v781
    %v783 = vrot.slane %v775, %v782
    %v784 = vcombine.high %v783, %v783
    %v787 = vadd.f32 %v723, %v783
    %v788 = vadd.f32 %v724, %v784
    %s789 = sld [smem:[#allocation2 + $0x46]]
    %v790 = vstv %s789
    %v791 = vmul.f32 %v790, %v78
    %v794 = vunpack.c.l.s4 1983009808
    %v795 = vunpack.c.0.s8 %v794
    %v796 = vlaneseq
    %v797 = vshrl.u32 %v796, 7
    %v798 = vsub.s32 %v795, %v797
    %v799 = vrot.slane %v791, %v798
    %v800 = vcombine.high %v799, %v799
    %v803 = vadd.f32 %v739, %v799
    %v804 = vadd.f32 %v740, %v800
    %s805 = sld [smem:[#allocation2 + $0x47]]
    %v806 = vstv %s805
    %v807 = vmul.f32 %v806, %v78
    %v810 = vunpack.c.l.s4 1983009808
    %v811 = vunpack.c.0.s8 %v810
    %v812 = vlaneseq
    %v813 = vshrl.u32 %v812, 7
    %v814 = vsub.s32 %v811, %v813
    %v815 = vrot.slane %v807, %v814
    %v816 = vcombine.high %v815, %v815
    %v819 = vadd.f32 %v755, %v815
    %v820 = vadd.f32 %v756, %v816
    %s821 = sld [smem:[#allocation2 + $0x48]]
    %v822 = vstv %s821
    %v823 = vmul.f32 %v822, %v81
    %v826 = vunpack.c.l.s4 1983009808
    %v827 = vunpack.c.0.s8 %v826
    %v828 = vlaneseq
    %v829 = vshrl.u32 %v828, 7
    %v830 = vsub.s32 %v827, %v829
    %v831 = vrot.slane %v823, %v830
    %v832 = vcombine.high %v831, %v831
    %v835 = vadd.f32 %v771, %v831
    %v836 = vadd.f32 %v772, %v832
    %s837 = sld [smem:[#allocation2 + $0x49]]
    %v838 = vstv %s837
    %v839 = vmul.f32 %v838, %v81
    %v842 = vunpack.c.l.s4 1983009808
    %v843 = vunpack.c.0.s8 %v842
    %v844 = vlaneseq
    %v845 = vshrl.u32 %v844, 7
    %v846 = vsub.s32 %v843, %v845
    %v847 = vrot.slane %v839, %v846
    %v848 = vcombine.high %v847, %v847
    %v851 = vadd.f32 %v787, %v847
    %v852 = vadd.f32 %v788, %v848
    %s853 = sld [smem:[#allocation2 + $0x4a]]
    %v854 = vstv %s853
    %v855 = vmul.f32 %v854, %v81
    %v858 = vunpack.c.l.s4 1983009808
    %v859 = vunpack.c.0.s8 %v858
    %v860 = vlaneseq
    %v861 = vshrl.u32 %v860, 7
    %v862 = vsub.s32 %v859, %v861
    %v863 = vrot.slane %v855, %v862
    %v864 = vcombine.high %v863, %v863
    %v867 = vadd.f32 %v803, %v863
    %v868 = vadd.f32 %v804, %v864
    %s869 = sld [smem:[#allocation2 + $0x4b]]
    %v870 = vstv %s869
    %v871 = vmul.f32 %v870, %v81
    %v874 = vunpack.c.l.s4 1983009808
    %v875 = vunpack.c.0.s8 %v874
    %v876 = vlaneseq
    %v877 = vshrl.u32 %v876, 7
    %v878 = vsub.s32 %v875, %v877
    %v879 = vrot.slane %v871, %v878
    %v880 = vcombine.high %v879, %v879
    %v883 = vadd.f32 %v819, %v879
    %v884 = vadd.f32 %v820, %v880
    %s885 = sld [smem:[#allocation2 + $0x4c]]
    %v886 = vstv %s885
    %v887 = vmul.f32 %v886, %v84
    %v890 = vunpack.c.l.s4 1983009808
    %v891 = vunpack.c.0.s8 %v890
    %v892 = vlaneseq
    %v893 = vshrl.u32 %v892, 7
    %v894 = vsub.s32 %v891, %v893
    %v895 = vrot.slane %v887, %v894
    %v896 = vcombine.high %v895, %v895
    %v899 = vadd.f32 %v835, %v895
    %v900 = vadd.f32 %v836, %v896
    %s901 = sld [smem:[#allocation2 + $0x4d]]
    %v902 = vstv %s901
    %v903 = vmul.f32 %v902, %v84
    %v906 = vunpack.c.l.s4 1983009808
    %v907 = vunpack.c.0.s8 %v906
    %v908 = vlaneseq
    %v909 = vshrl.u32 %v908, 7
    %v910 = vsub.s32 %v907, %v909
    %v911 = vrot.slane %v903, %v910
    %v912 = vcombine.high %v911, %v911
    %v915 = vadd.f32 %v851, %v911
    %v916 = vadd.f32 %v852, %v912
    %s917 = sld [smem:[#allocation2 + $0x4e]]
    %v918 = vstv %s917
    %v919 = vmul.f32 %v918, %v84
    %v922 = vunpack.c.l.s4 1983009808
    %v923 = vunpack.c.0.s8 %v922
    %v924 = vlaneseq
    %v925 = vshrl.u32 %v924, 7
    %v926 = vsub.s32 %v923, %v925
    %v927 = vrot.slane %v919, %v926
    %v928 = vcombine.high %v927, %v927
    %v931 = vadd.f32 %v867, %v927
    %v932 = vadd.f32 %v868, %v928
    %s933 = sld [smem:[#allocation2 + $0x4f]]
    %v934 = vstv %s933
    %v935 = vmul.f32 %v934, %v84
    %v938 = vunpack.c.l.s4 1983009808
    %v939 = vunpack.c.0.s8 %v938
    %v940 = vlaneseq
    %v941 = vshrl.u32 %v940, 7
    %v942 = vsub.s32 %v939, %v941
    %v943 = vrot.slane %v935, %v942
    %v944 = vcombine.high %v943, %v943
    %v947 = vadd.f32 %v883, %v943
    %v948 = vadd.f32 %v884, %v944
    %vm949 = vmand %vm558, %vm417
    %vm950 = vmand %vm559, %vm418
    %vm951 = vmand %vm949, %vm421
    %vm952 = vmand %vm950, %vm422
    %953 = vrot.lane.b32.xlu0 %v110, 127
    %v954 = vpop.permute.xlu0 %953
    %955 = vrot.lane.b32.xlu0 %v111, 127
    %v956 = vpop.permute.xlu0 %955
    %vm957 = vcmp.lt.s32.totalorder %v119, 127
    %v958 = vsel %vm957, %v954, %v956
    %v959 = vsel %vm957, %v956, %v954
    %v960 = vsel %vm951, %v958, 0.0
    %v961 = vsel %vm952, %v959, 0.0
    %s962 = sld [smem:[#allocation2 + $0x50]]
    %v963 = vstv %s962
    %v964 = vmul.f32 %v963, %v960
    %v965 = vmul.f32 %v963, %v961
    %v966 = vadd.f32 %v899, %v964
    %v967 = vadd.f32 %v900, %v965
    %s968 = sld [smem:[#allocation2 + $0x51]]
    %v969 = vstv %s968
    %v970 = vmul.f32 %v969, %v960
    %v971 = vmul.f32 %v969, %v961
    %v972 = vadd.f32 %v915, %v970
    %v973 = vadd.f32 %v916, %v971
    %s974 = sld [smem:[#allocation2 + $0x52]]
    %v975 = vstv %s974
    %v976 = vmul.f32 %v975, %v960
    %v977 = vmul.f32 %v975, %v961
    %v978 = vadd.f32 %v931, %v976
    %v979 = vadd.f32 %v932, %v977
    %s980 = sld [smem:[#allocation2 + $0x53]]
    %v981 = vstv %s980
    %v982 = vmul.f32 %v981, %v960
    %v983 = vmul.f32 %v981, %v961
    %v984 = vadd.f32 %v947, %v982
    %v985 = vadd.f32 %v948, %v983
    %986 = vrot.lane.b32.xlu0 %v156, 127
    %v987 = vpop.permute.xlu0 %986
    %988 = vrot.lane.b32.xlu0 %v157, 127
    %v989 = vpop.permute.xlu0 %988
    %v990 = vsel %vm957, %v987, %v989
    %v991 = vsel %vm957, %v989, %v987
    %v992 = vsel %vm951, %v990, 0.0
    %v993 = vsel %vm952, %v991, 0.0
    %s994 = sld [smem:[#allocation2 + $0x54]]
    %v995 = vstv %s994
    %v996 = vmul.f32 %v995, %v992
    %v997 = vmul.f32 %v995, %v993
    %v998 = vadd.f32 %v966, %v996
    %v999 = vadd.f32 %v967, %v997
    %s1000 = sld [smem:[#allocation2 + $0x55]]
    %v1001 = vstv %s1000
    %v1002 = vmul.f32 %v1001, %v992
    %v1003 = vmul.f32 %v1001, %v993
    %v1004 = vadd.f32 %v972, %v1002
    %v1005 = vadd.f32 %v973, %v1003
    %s1006 = sld [smem:[#allocation2 + $0x56]]
    %v1007 = vstv %s1006
    %v1008 = vmul.f32 %v1007, %v992
    %v1009 = vmul.f32 %v1007, %v993
    %v1010 = vadd.f32 %v978, %v1008
    %v1011 = vadd.f32 %v979, %v1009
    %s1012 = sld [smem:[#allocation2 + $0x57]]
    %v1013 = vstv %s1012
    %v1014 = vmul.f32 %v1013, %v992
    %v1015 = vmul.f32 %v1013, %v993
    %v1016 = vadd.f32 %v984, %v1014
    %v1017 = vadd.f32 %v985, %v1015
    %1018 = vrot.lane.b32.xlu0 %v199, 127
    %v1019 = vpop.permute.xlu0 %1018
    %1020 = vrot.lane.b32.xlu0 %v200, 127
    %v1021 = vpop.permute.xlu0 %1020
    %v1022 = vsel %vm957, %v1019, %v1021
    %v1023 = vsel %vm957, %v1021, %v1019
    %v1024 = vsel %vm951, %v1022, 0.0
    %v1025 = vsel %vm952, %v1023, 0.0
    %s1026 = sld [smem:[#allocation2 + $0x58]]
    %v1027 = vstv %s1026
    %v1028 = vmul.f32 %v1027, %v1024
    %v1029 = vmul.f32 %v1027, %v1025
    %v1030 = vadd.f32 %v998, %v1028
    %v1031 = vadd.f32 %v999, %v1029
    %s1032 = sld [smem:[#allocation2 + $0x59]]
    %v1033 = vstv %s1032
    %v1034 = vmul.f32 %v1033, %v1024
    %v1035 = vmul.f32 %v1033, %v1025
    %v1036 = vadd.f32 %v1004, %v1034
    %v1037 = vadd.f32 %v1005, %v1035
    %s1038 = sld [smem:[#allocation2 + $0x5a]]
    %v1039 = vstv %s1038
    %v1040 = vmul.f32 %v1039, %v1024
    %v1041 = vmul.f32 %v1039, %v1025
    %v1042 = vadd.f32 %v1010, %v1040
    %v1043 = vadd.f32 %v1011, %v1041
    %s1044 = sld [smem:[#allocation2 + $0x5b]]
    %v1045 = vstv %s1044
    %v1046 = vmul.f32 %v1045, %v1024
    %v1047 = vmul.f32 %v1045, %v1025
    %v1048 = vadd.f32 %v1016, %v1046
    %v1049 = vadd.f32 %v1017, %v1047
    %1050 = vrot.lane.b32.xlu0 %v242, 127
    %v1051 = vpop.permute.xlu0 %1050
    %1052 = vrot.lane.b32.xlu0 %v243, 127
    %v1053 = vpop.permute.xlu0 %1052
    %v1054 = vsel %vm957, %v1051, %v1053
    %v1055 = vsel %vm957, %v1053, %v1051
    %v1056 = vsel %vm951, %v1054, 0.0
    %v1057 = vsel %vm952, %v1055, 0.0
    %s1058 = sld [smem:[#allocation2 + $0x5c]]
    %v1059 = vstv %s1058
    %v1060 = vmul.f32 %v1059, %v1056
    %v1061 = vmul.f32 %v1059, %v1057
    %v1062 = vadd.f32 %v1030, %v1060
    %v1063 = vadd.f32 %v1031, %v1061
    %s1064 = sld [smem:[#allocation2 + $0x5d]]
    %v1065 = vstv %s1064
    %v1066 = vmul.f32 %v1065, %v1056
    %v1067 = vmul.f32 %v1065, %v1057
    %v1068 = vadd.f32 %v1036, %v1066
    %v1069 = vadd.f32 %v1037, %v1067
    %s1070 = sld [smem:[#allocation2 + $0x5e]]
    %v1071 = vstv %s1070
    %v1072 = vmul.f32 %v1071, %v1056
    %v1073 = vmul.f32 %v1071, %v1057
    %v1074 = vadd.f32 %v1042, %v1072
    %v1075 = vadd.f32 %v1043, %v1073
    %s1076 = sld [smem:[#allocation2 + $0x5f]]
    %v1077 = vstv %s1076
    %v1078 = vmul.f32 %v1077, %v1056
    %v1079 = vmul.f32 %v1077, %v1057
    %v1080 = vadd.f32 %v1048, %v1078
    %v1081 = vadd.f32 %v1049, %v1079
    %v1082 = vadd.s32 %v59, 1
    %v1083 = vadd.s32 %v63, 1
    %vm1084 = vcmp.ge.s32.totalorder %v1082, 0
    %vm1085 = vcmp.ge.s32.totalorder %v1083, 0
    %vm1086 = vcmp.lt.s32.totalorder %v1082, 16
    %vm1087 = vcmp.lt.s32.totalorder %v1083, 16
    %vm1088 = vmand %vm1084, %vm1086
    %vm1089 = vmand %vm1085, %vm1087
    %vm1090 = vmand %vm1088, %vm95
    %vm1091 = vmand %vm1089, %vm96
    %vm1092 = vmand %vm1090, %vm99
    %vm1093 = vmand %vm1091, %vm100
    %1094 = vrot.lane.b32.xlu0 %v110, 113
    %v1095 = vpop.permute.xlu0 %1094
    %1096 = vrot.lane.b32.xlu0 %v111, 113
    %v1097 = vpop.permute.xlu0 %1096
    %vm1098 = vcmp.lt.s32.totalorder %v119, 113
    %v1099 = vsel %vm1098, %v1095, %v1097
    %v1100 = vsel %vm1098, %v1097, %v1095
    %v1101 = vsel %vm1092, %v1099, 0.0
    %v1102 = vsel %vm1093, %v1100, 0.0
    %s1103 = sld [smem:[#allocation2 + $0x60]]
    %v1104 = vstv %s1103
    %v1105 = vmul.f32 %v1104, %v1101
    %v1106 = vmul.f32 %v1104, %v1102
    %v1107 = vadd.f32 %v1062, %v1105
    %v1108 = vadd.f32 %v1063, %v1106
    %s1109 = sld [smem:[#allocation2 + $0x61]]
    %v1110 = vstv %s1109
    %v1111 = vmul.f32 %v1110, %v1101
    %v1112 = vmul.f32 %v1110, %v1102
    %v1113 = vadd.f32 %v1068, %v1111
    %v1114 = vadd.f32 %v1069, %v1112
    %s1115 = sld [smem:[#allocation2 + $0x62]]
    %v1116 = vstv %s1115
    %v1117 = vmul.f32 %v1116, %v1101
    %v1118 = vmul.f32 %v1116, %v1102
    %v1119 = vadd.f32 %v1074, %v1117
    %v1120 = vadd.f32 %v1075, %v1118
    %s1121 = sld [smem:[#allocation2 + $0x63]]
    %v1122 = vstv %s1121
    %v1123 = vmul.f32 %v1122, %v1101
    %v1124 = vmul.f32 %v1122, %v1102
    %v1125 = vadd.f32 %v1080, %v1123
    %v1126 = vadd.f32 %v1081, %v1124
    %1127 = vrot.lane.b32.xlu0 %v156, 113
    %v1128 = vpop.permute.xlu0 %1127
    %1129 = vrot.lane.b32.xlu0 %v157, 113
    %v1130 = vpop.permute.xlu0 %1129
    %v1131 = vsel %vm1098, %v1128, %v1130
    %v1132 = vsel %vm1098, %v1130, %v1128
    %v1133 = vsel %vm1092, %v1131, 0.0
    %v1134 = vsel %vm1093, %v1132, 0.0
    %s1135 = sld [smem:[#allocation2 + $0x64]]
    %v1136 = vstv %s1135
    %v1137 = vmul.f32 %v1136, %v1133
    %v1138 = vmul.f32 %v1136, %v1134
    %v1139 = vadd.f32 %v1107, %v1137
    %v1140 = vadd.f32 %v1108, %v1138
    %s1141 = sld [smem:[#allocation2 + $0x65]]
    %v1142 = vstv %s1141
    %v1143 = vmul.f32 %v1142, %v1133
    %v1144 = vmul.f32 %v1142, %v1134
    %v1145 = vadd.f32 %v1113, %v1143
    %v1146 = vadd.f32 %v1114, %v1144
    %s1147 = sld [smem:[#allocation2 + $0x66]]
    %v1148 = vstv %s1147
    %v1149 = vmul.f32 %v1148, %v1133
    %v1150 = vmul.f32 %v1148, %v1134
    %v1151 = vadd.f32 %v1119, %v1149
    %v1152 = vadd.f32 %v1120, %v1150
    %s1153 = sld [smem:[#allocation2 + $0x67]]
    %v1154 = vstv %s1153
    %v1155 = vmul.f32 %v1154, %v1133
    %v1156 = vmul.f32 %v1154, %v1134
    %v1157 = vadd.f32 %v1125, %v1155
    %v1158 = vadd.f32 %v1126, %v1156
    %1159 = vrot.lane.b32.xlu0 %v199, 113
    %v1160 = vpop.permute.xlu0 %1159
    %1161 = vrot.lane.b32.xlu0 %v200, 113
    %v1162 = vpop.permute.xlu0 %1161
    %v1163 = vsel %vm1098, %v1160, %v1162
    %v1164 = vsel %vm1098, %v1162, %v1160
    %v1165 = vsel %vm1092, %v1163, 0.0
    %v1166 = vsel %vm1093, %v1164, 0.0
    %s1167 = sld [smem:[#allocation2 + $0x68]]
    %v1168 = vstv %s1167
    %v1169 = vmul.f32 %v1168, %v1165
    %v1170 = vmul.f32 %v1168, %v1166
    %v1171 = vadd.f32 %v1139, %v1169
    %v1172 = vadd.f32 %v1140, %v1170
    %s1173 = sld [smem:[#allocation2 + $0x69]]
    %v1174 = vstv %s1173
    %v1175 = vmul.f32 %v1174, %v1165
    %v1176 = vmul.f32 %v1174, %v1166
    %v1177 = vadd.f32 %v1145, %v1175
    %v1178 = vadd.f32 %v1146, %v1176
    %s1179 = sld [smem:[#allocation2 + $0x6a]]
    %v1180 = vstv %s1179
    %v1181 = vmul.f32 %v1180, %v1165
    %v1182 = vmul.f32 %v1180, %v1166
    %v1183 = vadd.f32 %v1151, %v1181
    %v1184 = vadd.f32 %v1152, %v1182
    %s1185 = sld [smem:[#allocation2 + $0x6b]]
    %v1186 = vstv %s1185
    %v1187 = vmul.f32 %v1186, %v1165
    %v1188 = vmul.f32 %v1186, %v1166
    %v1189 = vadd.f32 %v1157, %v1187
    %v1190 = vadd.f32 %v1158, %v1188
    %1191 = vrot.lane.b32.xlu0 %v242, 113
    %v1192 = vpop.permute.xlu0 %1191
    %1193 = vrot.lane.b32.xlu0 %v243, 113
    %v1194 = vpop.permute.xlu0 %1193
    %v1195 = vsel %vm1098, %v1192, %v1194
    %v1196 = vsel %vm1098, %v1194, %v1192
    %v1197 = vsel %vm1092, %v1195, 0.0
    %v1198 = vsel %vm1093, %v1196, 0.0
    %s1199 = sld [smem:[#allocation2 + $0x6c]]
    %v1200 = vstv %s1199
    %v1201 = vmul.f32 %v1200, %v1197
    %v1202 = vmul.f32 %v1200, %v1198
    %v1203 = vadd.f32 %v1171, %v1201
    %v1204 = vadd.f32 %v1172, %v1202
    %s1205 = sld [smem:[#allocation2 + $0x6d]]
    %v1206 = vstv %s1205
    %v1207 = vmul.f32 %v1206, %v1197
    %v1208 = vmul.f32 %v1206, %v1198
    %v1209 = vadd.f32 %v1177, %v1207
    %v1210 = vadd.f32 %v1178, %v1208
    %s1211 = sld [smem:[#allocation2 + $0x6e]]
    %v1212 = vstv %s1211
    %v1213 = vmul.f32 %v1212, %v1197
    %v1214 = vmul.f32 %v1212, %v1198
    %v1215 = vadd.f32 %v1183, %v1213
    %v1216 = vadd.f32 %v1184, %v1214
    %s1217 = sld [smem:[#allocation2 + $0x6f]]
    %v1218 = vstv %s1217
    %v1219 = vmul.f32 %v1218, %v1197
    %v1220 = vmul.f32 %v1218, %v1198
    %v1221 = vadd.f32 %v1189, %v1219
    %v1222 = vadd.f32 %v1190, %v1220
    %vm1223 = vmand %vm1088, %vm278
    %vm1224 = vmand %vm1089, %vm279
    %vm1225 = vmand %vm1223, %vm282
    %vm1226 = vmand %vm1224, %vm283
    %1227 = vrot.lane.b32.xlu0 %v110, 112
    %v1228 = vpop.permute.xlu0 %1227
    %1229 = vrot.lane.b32.xlu0 %v111, 112
    %v1230 = vpop.permute.xlu0 %1229
    %vm1231 = vcmp.lt.s32.totalorder %v119, 112
    %v1232 = vsel %vm1231, %v1228, %v1230
    %v1233 = vsel %vm1231, %v1230, %v1228
    %v1234 = vsel %vm1225, %v1232, 0.0
    %v1235 = vsel %vm1226, %v1233, 0.0
    %s1236 = sld [smem:[#allocation2 + $0x70]]
    %v1237 = vstv %s1236
    %v1238 = vmul.f32 %v1237, %v1234
    %v1239 = vmul.f32 %v1237, %v1235
    %v1240 = vadd.f32 %v1203, %v1238
    %v1241 = vadd.f32 %v1204, %v1239
    %s1242 = sld [smem:[#allocation2 + $0x71]]
    %v1243 = vstv %s1242
    %v1244 = vmul.f32 %v1243, %v1234
    %v1245 = vmul.f32 %v1243, %v1235
    %v1246 = vadd.f32 %v1209, %v1244
    %v1247 = vadd.f32 %v1210, %v1245
    %s1248 = sld [smem:[#allocation2 + $0x72]]
    %v1249 = vstv %s1248
    %v1250 = vmul.f32 %v1249, %v1234
    %v1251 = vmul.f32 %v1249, %v1235
    %v1252 = vadd.f32 %v1215, %v1250
    %v1253 = vadd.f32 %v1216, %v1251
    %s1254 = sld [smem:[#allocation2 + $0x73]]
    %v1255 = vstv %s1254
    %v1256 = vmul.f32 %v1255, %v1234
    %v1257 = vmul.f32 %v1255, %v1235
    %v1258 = vadd.f32 %v1221, %v1256
    %v1259 = vadd.f32 %v1222, %v1257
    %1260 = vrot.lane.b32.xlu0 %v156, 112
    %v1261 = vpop.permute.xlu0 %1260
    %1262 = vrot.lane.b32.xlu0 %v157, 112
    %v1263 = vpop.permute.xlu0 %1262
    %v1264 = vsel %vm1231, %v1261, %v1263
    %v1265 = vsel %vm1231, %v1263, %v1261
    %v1266 = vsel %vm1225, %v1264, 0.0
    %v1267 = vsel %vm1226, %v1265, 0.0
    %s1268 = sld [smem:[#allocation2 + $0x74]]
    %v1269 = vstv %s1268
    %v1270 = vmul.f32 %v1269, %v1266
    %v1271 = vmul.f32 %v1269, %v1267
    %v1272 = vadd.f32 %v1240, %v1270
    %v1273 = vadd.f32 %v1241, %v1271
    %s1274 = sld [smem:[#allocation2 + $0x75]]
    %v1275 = vstv %s1274
    %v1276 = vmul.f32 %v1275, %v1266
    %v1277 = vmul.f32 %v1275, %v1267
    %v1278 = vadd.f32 %v1246, %v1276
    %v1279 = vadd.f32 %v1247, %v1277
    %s1280 = sld [smem:[#allocation2 + $0x76]]
    %v1281 = vstv %s1280
    %v1282 = vmul.f32 %v1281, %v1266
    %v1283 = vmul.f32 %v1281, %v1267
    %v1284 = vadd.f32 %v1252, %v1282
    %v1285 = vadd.f32 %v1253, %v1283
    %s1286 = sld [smem:[#allocation2 + $0x77]]
    %v1287 = vstv %s1286
    %v1288 = vmul.f32 %v1287, %v1266
    %v1289 = vmul.f32 %v1287, %v1267
    %v1290 = vadd.f32 %v1258, %v1288
    %v1291 = vadd.f32 %v1259, %v1289
    %1292 = vrot.lane.b32.xlu0 %v199, 112
    %v1293 = vpop.permute.xlu0 %1292
    %1294 = vrot.lane.b32.xlu0 %v200, 112
    %v1295 = vpop.permute.xlu0 %1294
    %v1296 = vsel %vm1231, %v1293, %v1295
    %v1297 = vsel %vm1231, %v1295, %v1293
    %v1298 = vsel %vm1225, %v1296, 0.0
    %v1299 = vsel %vm1226, %v1297, 0.0
    %s1300 = sld [smem:[#allocation2 + $0x78]]
    %v1301 = vstv %s1300
    %v1302 = vmul.f32 %v1301, %v1298
    %v1303 = vmul.f32 %v1301, %v1299
    %v1304 = vadd.f32 %v1272, %v1302
    %v1305 = vadd.f32 %v1273, %v1303
    %s1306 = sld [smem:[#allocation2 + $0x79]]
    %v1307 = vstv %s1306
    %v1308 = vmul.f32 %v1307, %v1298
    %v1309 = vmul.f32 %v1307, %v1299
    %v1310 = vadd.f32 %v1278, %v1308
    %v1311 = vadd.f32 %v1279, %v1309
    %s1312 = sld [smem:[#allocation2 + $0x7a]]
    %v1313 = vstv %s1312
    %v1314 = vmul.f32 %v1313, %v1298
    %v1315 = vmul.f32 %v1313, %v1299
    %v1316 = vadd.f32 %v1284, %v1314
    %v1317 = vadd.f32 %v1285, %v1315
    %s1318 = sld [smem:[#allocation2 + $0x7b]]
    %v1319 = vstv %s1318
    %v1320 = vmul.f32 %v1319, %v1298
    %v1321 = vmul.f32 %v1319, %v1299
    %v1322 = vadd.f32 %v1290, %v1320
    %v1323 = vadd.f32 %v1291, %v1321
    %1324 = vrot.lane.b32.xlu0 %v242, 112
    %v1325 = vpop.permute.xlu0 %1324
    %1326 = vrot.lane.b32.xlu0 %v243, 112
    %v1327 = vpop.permute.xlu0 %1326
    %v1328 = vsel %vm1231, %v1325, %v1327
    %v1329 = vsel %vm1231, %v1327, %v1325
    %v1330 = vsel %vm1225, %v1328, 0.0
    %v1331 = vsel %vm1226, %v1329, 0.0
    %s1332 = sld [smem:[#allocation2 + $0x7c]]
    %v1333 = vstv %s1332
    %v1334 = vmul.f32 %v1333, %v1330
    %v1335 = vmul.f32 %v1333, %v1331
    %v1336 = vadd.f32 %v1304, %v1334
    %v1337 = vadd.f32 %v1305, %v1335
    %s1338 = sld [smem:[#allocation2 + $0x7d]]
    %v1339 = vstv %s1338
    %v1340 = vmul.f32 %v1339, %v1330
    %v1341 = vmul.f32 %v1339, %v1331
    %v1342 = vadd.f32 %v1310, %v1340
    %v1343 = vadd.f32 %v1311, %v1341
    %s1344 = sld [smem:[#allocation2 + $0x7e]]
    %v1345 = vstv %s1344
    %v1346 = vmul.f32 %v1345, %v1330
    %v1347 = vmul.f32 %v1345, %v1331
    %v1348 = vadd.f32 %v1316, %v1346
    %v1349 = vadd.f32 %v1317, %v1347
    %s1350 = sld [smem:[#allocation2 + $0x7f]]
    %v1351 = vstv %s1350
    %v1352 = vmul.f32 %v1351, %v1330
    %v1353 = vmul.f32 %v1351, %v1331
    %v1354 = vadd.f32 %v1322, %v1352
    %v1355 = vadd.f32 %v1323, %v1353
    %vm1356 = vmand %vm1088, %vm417
    %vm1357 = vmand %vm1089, %vm418
    %vm1358 = vmand %vm1356, %vm421
    %vm1359 = vmand %vm1357, %vm422
    %1360 = vrot.lane.b32.xlu0 %v110, 111
    %v1361 = vpop.permute.xlu0 %1360
    %1362 = vrot.lane.b32.xlu0 %v111, 111
    %v1363 = vpop.permute.xlu0 %1362
    %vm1364 = vcmp.lt.s32.totalorder %v119, 111
    %v1365 = vsel %vm1364, %v1361, %v1363
    %v1366 = vsel %vm1364, %v1363, %v1361
    %v1367 = vsel %vm1358, %v1365, 0.0
    %v1368 = vsel %vm1359, %v1366, 0.0
    %s1369 = sld [smem:[#allocation2 + $0x80]]
    %v1370 = vstv %s1369
    %v1371 = vmul.f32 %v1370, %v1367
    %v1372 = vmul.f32 %v1370, %v1368
    %v1373 = vadd.f32 %v1336, %v1371
    %v1374 = vadd.f32 %v1337, %v1372
    %s1375 = sld [smem:[#allocation2 + $0x81]]
    %v1376 = vstv %s1375
    %v1377 = vmul.f32 %v1376, %v1367
    %v1378 = vmul.f32 %v1376, %v1368
    %v1379 = vadd.f32 %v1342, %v1377
    %v1380 = vadd.f32 %v1343, %v1378
    %s1381 = sld [smem:[#allocation2 + $0x82]]
    %v1382 = vstv %s1381
    %v1383 = vmul.f32 %v1382, %v1367
    %v1384 = vmul.f32 %v1382, %v1368
    %v1385 = vadd.f32 %v1348, %v1383
    %v1386 = vadd.f32 %v1349, %v1384
    %s1387 = sld [smem:[#allocation2 + $0x83]]
    %v1388 = vstv %s1387
    %v1389 = vmul.f32 %v1388, %v1367
    %v1390 = vmul.f32 %v1388, %v1368
    %v1391 = vadd.f32 %v1354, %v1389
    %v1392 = vadd.f32 %v1355, %v1390
    %1393 = vrot.lane.b32.xlu0 %v156, 111
    %v1394 = vpop.permute.xlu0 %1393
    %1395 = vrot.lane.b32.xlu0 %v157, 111
    %v1396 = vpop.permute.xlu0 %1395
    %v1397 = vsel %vm1364, %v1394, %v1396
    %v1398 = vsel %vm1364, %v1396, %v1394
    %v1399 = vsel %vm1358, %v1397, 0.0
    %v1400 = vsel %vm1359, %v1398, 0.0
    %s1401 = sld [smem:[#allocation2 + $0x84]]
    %v1402 = vstv %s1401
    %v1403 = vmul.f32 %v1402, %v1399
    %v1404 = vmul.f32 %v1402, %v1400
    %v1405 = vadd.f32 %v1373, %v1403
    %v1406 = vadd.f32 %v1374, %v1404
    %s1407 = sld [smem:[#allocation2 + $0x85]]
    %v1408 = vstv %s1407
    %v1409 = vmul.f32 %v1408, %v1399
    %v1410 = vmul.f32 %v1408, %v1400
    %v1411 = vadd.f32 %v1379, %v1409
    %v1412 = vadd.f32 %v1380, %v1410
    %s1413 = sld [smem:[#allocation2 + $0x86]]
    %v1414 = vstv %s1413
    %v1415 = vmul.f32 %v1414, %v1399
    %v1416 = vmul.f32 %v1414, %v1400
    %v1417 = vadd.f32 %v1385, %v1415
    %v1418 = vadd.f32 %v1386, %v1416
    %s1419 = sld [smem:[#allocation2 + $0x87]]
    %v1420 = vstv %s1419
    %v1421 = vmul.f32 %v1420, %v1399
    %v1422 = vmul.f32 %v1420, %v1400
    %v1423 = vadd.f32 %v1391, %v1421
    %v1424 = vadd.f32 %v1392, %v1422
    %1425 = vrot.lane.b32.xlu0 %v199, 111
    %v1426 = vpop.permute.xlu0 %1425
    %1427 = vrot.lane.b32.xlu0 %v200, 111
    %v1428 = vpop.permute.xlu0 %1427
    %v1429 = vsel %vm1364, %v1426, %v1428
    %v1430 = vsel %vm1364, %v1428, %v1426
    %v1431 = vsel %vm1358, %v1429, 0.0
    %v1432 = vsel %vm1359, %v1430, 0.0
    %s1433 = sld [smem:[#allocation2 + $0x88]]
    %v1434 = vstv %s1433
    %v1435 = vmul.f32 %v1434, %v1431
    %v1436 = vmul.f32 %v1434, %v1432
    %v1437 = vadd.f32 %v1405, %v1435
    %v1438 = vadd.f32 %v1406, %v1436
    %s1439 = sld [smem:[#allocation2 + $0x89]]
    %v1440 = vstv %s1439
    %v1441 = vmul.f32 %v1440, %v1431
    %v1442 = vmul.f32 %v1440, %v1432
    %v1443 = vadd.f32 %v1411, %v1441
    %v1444 = vadd.f32 %v1412, %v1442
    %s1445 = sld [smem:[#allocation2 + $0x8a]]
    %v1446 = vstv %s1445
    %v1447 = vmul.f32 %v1446, %v1431
    %v1448 = vmul.f32 %v1446, %v1432
    %v1449 = vadd.f32 %v1417, %v1447
    %v1450 = vadd.f32 %v1418, %v1448
    %s1451 = sld [smem:[#allocation2 + $0x8b]]
    %v1452 = vstv %s1451
    %v1453 = vmul.f32 %v1452, %v1431
    %v1454 = vmul.f32 %v1452, %v1432
    %v1455 = vadd.f32 %v1423, %v1453
    %v1456 = vadd.f32 %v1424, %v1454
    %1457 = vrot.lane.b32.xlu0 %v242, 111
    %v1458 = vpop.permute.xlu0 %1457
    %1459 = vrot.lane.b32.xlu0 %v243, 111
    %v1460 = vpop.permute.xlu0 %1459
    %v1461 = vsel %vm1364, %v1458, %v1460
    %v1462 = vsel %vm1364, %v1460, %v1458
    %v1463 = vsel %vm1358, %v1461, 0.0
    %v1464 = vsel %vm1359, %v1462, 0.0
    %s1465 = sld [smem:[#allocation2 + $0x8c]]
    %v1466 = vstv %s1465
    %v1467 = vmul.f32 %v1466, %v1463
    %v1468 = vmul.f32 %v1466, %v1464
    %v1469 = vadd.f32 %v1437, %v1467
    %v1470 = vadd.f32 %v1438, %v1468
    %s1471 = sld [smem:[#allocation2 + $0x8d]]
    %v1472 = vstv %s1471
    %v1473 = vmul.f32 %v1472, %v1463
    %v1474 = vmul.f32 %v1472, %v1464
    %v1475 = vadd.f32 %v1443, %v1473
    %v1476 = vadd.f32 %v1444, %v1474
    %s1477 = sld [smem:[#allocation2 + $0x8e]]
    %v1478 = vstv %s1477
    %v1479 = vmul.f32 %v1478, %v1463
    %v1480 = vmul.f32 %v1478, %v1464
    %v1481 = vadd.f32 %v1449, %v1479
    %v1482 = vadd.f32 %v1450, %v1480
    %s1483 = sld [smem:[#allocation2 + $0x8f]]
    %v1484 = vstv %s1483
    %v1485 = vmul.f32 %v1484, %v1463
    %v1486 = vmul.f32 %v1484, %v1464
    %v1487 = vadd.f32 %v1455, %v1485
    %v1488 = vadd.f32 %v1456, %v1486
    %s1489 = sld [smem:[#allocation7]]
    %v1490 = vstv %s1489
    %v1491 = vadd.f32 %v1469, %v1490
    %v1492 = vadd.f32 %v1470, %v1490
    %s1493 = sld [smem:[#allocation7 + $0x1]]
    %v1494 = vstv %s1493
    %v1495 = vadd.f32 %v1475, %v1494
    %v1496 = vadd.f32 %v1476, %v1494
    %s1497 = sld [smem:[#allocation7 + $0x2]]
    %v1498 = vstv %s1497
    %v1499 = vadd.f32 %v1481, %v1498
    %v1500 = vadd.f32 %v1482, %v1498
    %s1501 = sld [smem:[#allocation7 + $0x3]]
    %v1502 = vstv %s1501
    %v1503 = vadd.f32 %v1487, %v1502
    %v1504 = vadd.f32 %v1488, %v1502
    %v1505 = vadd.s32 %v59, 4294967293
    %v1506 = vadd.s32 %v63, 4294967293
    %vm1507 = vcmp.ge.s32.totalorder %v1505, 0
    %vm1508 = vcmp.ge.s32.totalorder %v1506, 0
    %vm1509 = vcmp.lt.s32.totalorder %v1505, 16
    %vm1510 = vcmp.lt.s32.totalorder %v1506, 16
    %vm1511 = vmand %vm1507, %vm1509
    %vm1512 = vmand %vm1508, %vm1510
    %v1513 = vadd.s32 %v69, 4294967293
    %v1514 = vadd.s32 %v73, 4294967293
    %vm1515 = vcmp.ge.s32.totalorder %v1513, 0
    %vm1516 = vcmp.ge.s32.totalorder %v1514, 0
    %vm1517 = vmand %vm1511, %vm1515
    %vm1518 = vmand %vm1512, %vm1516
    %vm1519 = vcmp.lt.s32.totalorder %v1513, 16
    %vm1520 = vcmp.lt.s32.totalorder %v1514, 16
    %vm1521 = vmand %vm1517, %vm1519
    %vm1522 = vmand %vm1518, %vm1520
    %1523 = vrot.lane.b32.xlu0 %v1491, 51
    %v1524 = vpop.permute.xlu0 %1523
    %1525 = vrot.lane.b32.xlu0 %v1492, 51
    %v1526 = vpop.permute.xlu0 %1525
    %vm1527 = vcmp.lt.s32.totalorder %v119, 51
    %v1528 = vsel %vm1527, %v1524, %v1526
    %v1529 = vsel %vm1527, %v1526, %v1524
    %v1530 = vsel %vm1521, %v1529, 0.0
    %v1531 = vsel %vm1522, %v1528, 0.0
    %s1532 = sld [smem:[#allocation2 + $0x90]]
    %v1533 = vstv %s1532
    %v1534 = vmul.f32 %v1533, %v1530
    %v1535 = vmul.f32 %v1533, %v1531
    %v1536 = vadd.f32 %v1534, 0.0
    %v1537 = vadd.f32 %v1535, 0.0
    %s1538 = sld [smem:[#allocation2 + $0x91]]
    %v1539 = vstv %s1538
    %v1540 = vmul.f32 %v1539, %v1530
    %v1541 = vmul.f32 %v1539, %v1531
    %v1542 = vadd.f32 %v1540, 0.0
    %v1543 = vadd.f32 %v1541, 0.0
    %s1544 = sld [smem:[#allocation2 + $0x92]]
    %v1545 = vstv %s1544
    %v1546 = vmul.f32 %v1545, %v1530
    %v1547 = vmul.f32 %v1545, %v1531
    %v1548 = vadd.f32 %v1546, 0.0
    %v1549 = vadd.f32 %v1547, 0.0
    %s1550 = sld [smem:[#allocation2 + $0x93]]
    %v1551 = vstv %s1550
    %v1552 = vmul.f32 %v1551, %v1530
    %v1553 = vmul.f32 %v1551, %v1531
    %v1554 = vadd.f32 %v1552, 0.0
    %v1555 = vadd.f32 %v1553, 0.0
    %1556 = vrot.lane.b32.xlu0 %v1495, 51
    %v1557 = vpop.permute.xlu0 %1556
    %1558 = vrot.lane.b32.xlu0 %v1496, 51
    %v1559 = vpop.permute.xlu0 %1558
    %v1560 = vsel %vm1527, %v1557, %v1559
    %v1561 = vsel %vm1527, %v1559, %v1557
    %v1562 = vsel %vm1521, %v1561, 0.0
    %v1563 = vsel %vm1522, %v1560, 0.0
    %s1564 = sld [smem:[#allocation2 + $0x94]]
    %v1565 = vstv %s1564
    %v1566 = vmul.f32 %v1565, %v1562
    %v1567 = vmul.f32 %v1565, %v1563
    %v1568 = vadd.f32 %v1536, %v1566
    %v1569 = vadd.f32 %v1537, %v1567
    %s1570 = sld [smem:[#allocation2 + $0x95]]
    %v1571 = vstv %s1570
    %v1572 = vmul.f32 %v1571, %v1562
    %v1573 = vmul.f32 %v1571, %v1563
    %v1574 = vadd.f32 %v1542, %v1572
    %v1575 = vadd.f32 %v1543, %v1573
    %s1576 = sld [smem:[#allocation2 + $0x96]]
    %v1577 = vstv %s1576
    %v1578 = vmul.f32 %v1577, %v1562
    %v1579 = vmul.f32 %v1577, %v1563
    %v1580 = vadd.f32 %v1548, %v1578
    %v1581 = vadd.f32 %v1549, %v1579
    %s1582 = sld [smem:[#allocation2 + $0x97]]
    %v1583 = vstv %s1582
    %v1584 = vmul.f32 %v1583, %v1562
    %v1585 = vmul.f32 %v1583, %v1563
    %v1586 = vadd.f32 %v1554, %v1584
    %v1587 = vadd.f32 %v1555, %v1585
    %1588 = vrot.lane.b32.xlu0 %v1499, 51
    %v1589 = vpop.permute.xlu0 %1588
    %1590 = vrot.lane.b32.xlu0 %v1500, 51
    %v1591 = vpop.permute.xlu0 %1590
    %v1592 = vsel %vm1527, %v1589, %v1591
    %v1593 = vsel %vm1527, %v1591, %v1589
    %v1594 = vsel %vm1521, %v1593, 0.0
    %v1595 = vsel %vm1522, %v1592, 0.0
    %s1596 = sld [smem:[#allocation2 + $0x98]]
    %v1597 = vstv %s1596
    %v1598 = vmul.f32 %v1597, %v1594
    %v1599 = vmul.f32 %v1597, %v1595
    %v1600 = vadd.f32 %v1568, %v1598
    %v1601 = vadd.f32 %v1569, %v1599
    %s1602 = sld [smem:[#allocation2 + $0x99]]
    %v1603 = vstv %s1602
    %v1604 = vmul.f32 %v1603, %v1594
    %v1605 = vmul.f32 %v1603, %v1595
    %v1606 = vadd.f32 %v1574, %v1604
    %v1607 = vadd.f32 %v1575, %v1605
    %s1608 = sld [smem:[#allocation2 + $0x9a]]
    %v1609 = vstv %s1608
    %v1610 = vmul.f32 %v1609, %v1594
    %v1611 = vmul.f32 %v1609, %v1595
    %v1612 = vadd.f32 %v1580, %v1610
    %v1613 = vadd.f32 %v1581, %v1611
    %s1614 = sld [smem:[#allocation2 + $0x9b]]
    %v1615 = vstv %s1614
    %v1616 = vmul.f32 %v1615, %v1594
    %v1617 = vmul.f32 %v1615, %v1595
    %v1618 = vadd.f32 %v1586, %v1616
    %v1619 = vadd.f32 %v1587, %v1617
    %1620 = vrot.lane.b32.xlu0 %v1503, 51
    %v1621 = vpop.permute.xlu0 %1620
    %1622 = vrot.lane.b32.xlu0 %v1504, 51
    %v1623 = vpop.permute.xlu0 %1622
    %v1624 = vsel %vm1527, %v1621, %v1623
    %v1625 = vsel %vm1527, %v1623, %v1621
    %v1626 = vsel %vm1521, %v1625, 0.0
    %v1627 = vsel %vm1522, %v1624, 0.0
    %s1628 = sld [smem:[#allocation2 + $0x9c]]
    %v1629 = vstv %s1628
    %v1630 = vmul.f32 %v1629, %v1626
    %v1631 = vmul.f32 %v1629, %v1627
    %v1632 = vadd.f32 %v1600, %v1630
    %v1633 = vadd.f32 %v1601, %v1631
    %s1634 = sld [smem:[#allocation2 + $0x9d]]
    %v1635 = vstv %s1634
    %v1636 = vmul.f32 %v1635, %v1626
    %v1637 = vmul.f32 %v1635, %v1627
    %v1638 = vadd.f32 %v1606, %v1636
    %v1639 = vadd.f32 %v1607, %v1637
    %s1640 = sld [smem:[#allocation2 + $0x9e]]
    %v1641 = vstv %s1640
    %v1642 = vmul.f32 %v1641, %v1626
    %v1643 = vmul.f32 %v1641, %v1627
    %v1644 = vadd.f32 %v1612, %v1642
    %v1645 = vadd.f32 %v1613, %v1643
    %s1646 = sld [smem:[#allocation2 + $0x9f]]
    %v1647 = vstv %s1646
    %v1648 = vmul.f32 %v1647, %v1626
    %v1649 = vmul.f32 %v1647, %v1627
    %v1650 = vadd.f32 %v1618, %v1648
    %v1651 = vadd.f32 %v1619, %v1649
    %vm1652 = vmand %vm1511, %vm278
    %vm1653 = vmand %vm1512, %vm279
    %vm1654 = vmand %vm1652, %vm282
    %vm1655 = vmand %vm1653, %vm283
    %1656 = vrot.lane.b32.xlu0 %v1491, 48
    %v1657 = vpop.permute.xlu0 %1656
    %1658 = vrot.lane.b32.xlu0 %v1492, 48
    %v1659 = vpop.permute.xlu0 %1658
    %vm1660 = vcmp.lt.s32.totalorder %v119, 48
    %v1661 = vsel %vm1660, %v1657, %v1659
    %v1662 = vsel %vm1660, %v1659, %v1657
    %v1663 = vsel %vm1654, %v1662, 0.0
    %v1664 = vsel %vm1655, %v1661, 0.0
    %s1665 = sld [smem:[#allocation2 + $0xa0]]
    %v1666 = vstv %s1665
    %v1667 = vmul.f32 %v1666, %v1663
    %v1668 = vmul.f32 %v1666, %v1664
    %v1669 = vadd.f32 %v1632, %v1667
    %v1670 = vadd.f32 %v1633, %v1668
    %s1671 = sld [smem:[#allocation2 + $0xa1]]
    %v1672 = vstv %s1671
    %v1673 = vmul.f32 %v1672, %v1663
    %v1674 = vmul.f32 %v1672, %v1664
    %v1675 = vadd.f32 %v1638, %v1673
    %v1676 = vadd.f32 %v1639, %v1674
    %s1677 = sld [smem:[#allocation2 + $0xa2]]
    %v1678 = vstv %s1677
    %v1679 = vmul.f32 %v1678, %v1663
    %v1680 = vmul.f32 %v1678, %v1664
    %v1681 = vadd.f32 %v1644, %v1679
    %v1682 = vadd.f32 %v1645, %v1680
    %s1683 = sld [smem:[#allocation2 + $0xa3]]
    %v1684 = vstv %s1683
    %v1685 = vmul.f32 %v1684, %v1663
    %v1686 = vmul.f32 %v1684, %v1664
    %v1687 = vadd.f32 %v1650, %v1685
    %v1688 = vadd.f32 %v1651, %v1686
    %1689 = vrot.lane.b32.xlu0 %v1495, 48
    %v1690 = vpop.permute.xlu0 %1689
    %1691 = vrot.lane.b32.xlu0 %v1496, 48
    %v1692 = vpop.permute.xlu0 %1691
    %v1693 = vsel %vm1660, %v1690, %v1692
    %v1694 = vsel %vm1660, %v1692, %v1690
    %v1695 = vsel %vm1654, %v1694, 0.0
    %v1696 = vsel %vm1655, %v1693, 0.0
    %s1697 = sld [smem:[#allocation2 + $0xa4]]
    %v1698 = vstv %s1697
    %v1699 = vmul.f32 %v1698, %v1695
    %v1700 = vmul.f32 %v1698, %v1696
    %v1701 = vadd.f32 %v1669, %v1699
    %v1702 = vadd.f32 %v1670, %v1700
    %s1703 = sld [smem:[#allocation2 + $0xa5]]
    %v1704 = vstv %s1703
    %v1705 = vmul.f32 %v1704, %v1695
    %v1706 = vmul.f32 %v1704, %v1696
    %v1707 = vadd.f32 %v1675, %v1705
    %v1708 = vadd.f32 %v1676, %v1706
    %s1709 = sld [smem:[#allocation2 + $0xa6]]
    %v1710 = vstv %s1709
    %v1711 = vmul.f32 %v1710, %v1695
    %v1712 = vmul.f32 %v1710, %v1696
    %v1713 = vadd.f32 %v1681, %v1711
    %v1714 = vadd.f32 %v1682, %v1712
    %s1715 = sld [smem:[#allocation2 + $0xa7]]
    %v1716 = vstv %s1715
    %v1717 = vmul.f32 %v1716, %v1695
    %v1718 = vmul.f32 %v1716, %v1696
    %v1719 = vadd.f32 %v1687, %v1717
    %v1720 = vadd.f32 %v1688, %v1718
    %1721 = vrot.lane.b32.xlu0 %v1499, 48
    %v1722 = vpop.permute.xlu0 %1721
    %1723 = vrot.lane.b32.xlu0 %v1500, 48
    %v1724 = vpop.permute.xlu0 %1723
    %v1725 = vsel %vm1660, %v1722, %v1724
    %v1726 = vsel %vm1660, %v1724, %v1722
    %v1727 = vsel %vm1654, %v1726, 0.0
    %v1728 = vsel %vm1655, %v1725, 0.0
    %s1729 = sld [smem:[#allocation2 + $0xa8]]
    %v1730 = vstv %s1729
    %v1731 = vmul.f32 %v1730, %v1727
    %v1732 = vmul.f32 %v1730, %v1728
    %v1733 = vadd.f32 %v1701, %v1731
    %v1734 = vadd.f32 %v1702, %v1732
    %s1735 = sld [smem:[#allocation2 + $0xa9]]
    %v1736 = vstv %s1735
    %v1737 = vmul.f32 %v1736, %v1727
    %v1738 = vmul.f32 %v1736, %v1728
    %v1739 = vadd.f32 %v1707, %v1737
    %v1740 = vadd.f32 %v1708, %v1738
    %s1741 = sld [smem:[#allocation2 + $0xaa]]
    %v1742 = vstv %s1741
    %v1743 = vmul.f32 %v1742, %v1727
    %v1744 = vmul.f32 %v1742, %v1728
    %v1745 = vadd.f32 %v1713, %v1743
    %v1746 = vadd.f32 %v1714, %v1744
    %s1747 = sld [smem:[#allocation2 + $0xab]]
    %v1748 = vstv %s1747
    %v1749 = vmul.f32 %v1748, %v1727
    %v1750 = vmul.f32 %v1748, %v1728
    %v1751 = vadd.f32 %v1719, %v1749
    %v1752 = vadd.f32 %v1720, %v1750
    %1753 = vrot.lane.b32.xlu0 %v1503, 48
    %v1754 = vpop.permute.xlu0 %1753
    %1755 = vrot.lane.b32.xlu0 %v1504, 48
    %v1756 = vpop.permute.xlu0 %1755
    %v1757 = vsel %vm1660, %v1754, %v1756
    %v1758 = vsel %vm1660, %v1756, %v1754
    %v1759 = vsel %vm1654, %v1758, 0.0
    %v1760 = vsel %vm1655, %v1757, 0.0
    %s1761 = sld [smem:[#allocation2 + $0xac]]
    %v1762 = vstv %s1761
    %v1763 = vmul.f32 %v1762, %v1759
    %v1764 = vmul.f32 %v1762, %v1760
    %v1765 = vadd.f32 %v1733, %v1763
    %v1766 = vadd.f32 %v1734, %v1764
    %s1767 = sld [smem:[#allocation2 + $0xad]]
    %v1768 = vstv %s1767
    %v1769 = vmul.f32 %v1768, %v1759
    %v1770 = vmul.f32 %v1768, %v1760
    %v1771 = vadd.f32 %v1739, %v1769
    %v1772 = vadd.f32 %v1740, %v1770
    %s1773 = sld [smem:[#allocation2 + $0xae]]
    %v1774 = vstv %s1773
    %v1775 = vmul.f32 %v1774, %v1759
    %v1776 = vmul.f32 %v1774, %v1760
    %v1777 = vadd.f32 %v1745, %v1775
    %v1778 = vadd.f32 %v1746, %v1776
    %s1779 = sld [smem:[#allocation2 + $0xaf]]
    %v1780 = vstv %s1779
    %v1781 = vmul.f32 %v1780, %v1759
    %v1782 = vmul.f32 %v1780, %v1760
    %v1783 = vadd.f32 %v1751, %v1781
    %v1784 = vadd.f32 %v1752, %v1782
    %v1785 = vadd.s32 %v69, 3
    %v1786 = vadd.s32 %v73, 3
    %vm1787 = vcmp.ge.s32.totalorder %v1785, 0
    %vm1788 = vcmp.ge.s32.totalorder %v1786, 0
    %vm1789 = vmand %vm1511, %vm1787
    %vm1790 = vmand %vm1512, %vm1788
    %vm1791 = vcmp.lt.s32.totalorder %v1785, 16
    %vm1792 = vcmp.lt.s32.totalorder %v1786, 16
    %vm1793 = vmand %vm1789, %vm1791
    %vm1794 = vmand %vm1790, %vm1792
    %1795 = vrot.lane.b32.xlu0 %v1491, 45
    %v1796 = vpop.permute.xlu0 %1795
    %1797 = vrot.lane.b32.xlu0 %v1492, 45
    %v1798 = vpop.permute.xlu0 %1797
    %vm1799 = vcmp.lt.s32.totalorder %v119, 45
    %v1800 = vsel %vm1799, %v1796, %v1798
    %v1801 = vsel %vm1799, %v1798, %v1796
    %v1802 = vsel %vm1793, %v1801, 0.0
    %v1803 = vsel %vm1794, %v1800, 0.0
    %s1804 = sld [smem:[#allocation2 + $0xb0]]
    %v1805 = vstv %s1804
    %v1806 = vmul.f32 %v1805, %v1802
    %v1807 = vmul.f32 %v1805, %v1803
    %v1808 = vadd.f32 %v1765, %v1806
    %v1809 = vadd.f32 %v1766, %v1807
    %s1810 = sld [smem:[#allocation2 + $0xb1]]
    %v1811 = vstv %s1810
    %v1812 = vmul.f32 %v1811, %v1802
    %v1813 = vmul.f32 %v1811, %v1803
    %v1814 = vadd.f32 %v1771, %v1812
    %v1815 = vadd.f32 %v1772, %v1813
    %s1816 = sld [smem:[#allocation2 + $0xb2]]
    %v1817 = vstv %s1816
    %v1818 = vmul.f32 %v1817, %v1802
    %v1819 = vmul.f32 %v1817, %v1803
    %v1820 = vadd.f32 %v1777, %v1818
    %v1821 = vadd.f32 %v1778, %v1819
    %s1822 = sld [smem:[#allocation2 + $0xb3]]
    %v1823 = vstv %s1822
    %v1824 = vmul.f32 %v1823, %v1802
    %v1825 = vmul.f32 %v1823, %v1803
    %v1826 = vadd.f32 %v1783, %v1824
    %v1827 = vadd.f32 %v1784, %v1825
    %1828 = vrot.lane.b32.xlu0 %v1495, 45
    %v1829 = vpop.permute.xlu0 %1828
    %1830 = vrot.lane.b32.xlu0 %v1496, 45
    %v1831 = vpop.permute.xlu0 %1830
    %v1832 = vsel %vm1799, %v1829, %v1831
    %v1833 = vsel %vm1799, %v1831, %v1829
    %v1834 = vsel %vm1793, %v1833, 0.0
    %v1835 = vsel %vm1794, %v1832, 0.0
    %s1836 = sld [smem:[#allocation2 + $0xb4]]
    %v1837 = vstv %s1836
    %v1838 = vmul.f32 %v1837, %v1834
    %v1839 = vmul.f32 %v1837, %v1835
    %v1840 = vadd.f32 %v1808, %v1838
    %v1841 = vadd.f32 %v1809, %v1839
    %s1842 = sld [smem:[#allocation2 + $0xb5]]
    %v1843 = vstv %s1842
    %v1844 = vmul.f32 %v1843, %v1834
    %v1845 = vmul.f32 %v1843, %v1835
    %v1846 = vadd.f32 %v1814, %v1844
    %v1847 = vadd.f32 %v1815, %v1845
    %s1848 = sld [smem:[#allocation2 + $0xb6]]
    %v1849 = vstv %s1848
    %v1850 = vmul.f32 %v1849, %v1834
    %v1851 = vmul.f32 %v1849, %v1835
    %v1852 = vadd.f32 %v1820, %v1850
    %v1853 = vadd.f32 %v1821, %v1851
    %s1854 = sld [smem:[#allocation2 + $0xb7]]
    %v1855 = vstv %s1854
    %v1856 = vmul.f32 %v1855, %v1834
    %v1857 = vmul.f32 %v1855, %v1835
    %v1858 = vadd.f32 %v1826, %v1856
    %v1859 = vadd.f32 %v1827, %v1857
    %1860 = vrot.lane.b32.xlu0 %v1499, 45
    %v1861 = vpop.permute.xlu0 %1860
    %1862 = vrot.lane.b32.xlu0 %v1500, 45
    %v1863 = vpop.permute.xlu0 %1862
    %v1864 = vsel %vm1799, %v1861, %v1863
    %v1865 = vsel %vm1799, %v1863, %v1861
    %v1866 = vsel %vm1793, %v1865, 0.0
    %v1867 = vsel %vm1794, %v1864, 0.0
    %s1868 = sld [smem:[#allocation2 + $0xb8]]
    %v1869 = vstv %s1868
    %v1870 = vmul.f32 %v1869, %v1866
    %v1871 = vmul.f32 %v1869, %v1867
    %v1872 = vadd.f32 %v1840, %v1870
    %v1873 = vadd.f32 %v1841, %v1871
    %s1874 = sld [smem:[#allocation2 + $0xb9]]
    %v1875 = vstv %s1874
    %v1876 = vmul.f32 %v1875, %v1866
    %v1877 = vmul.f32 %v1875, %v1867
    %v1878 = vadd.f32 %v1846, %v1876
    %v1879 = vadd.f32 %v1847, %v1877
    %s1880 = sld [smem:[#allocation2 + $0xba]]
    %v1881 = vstv %s1880
    %v1882 = vmul.f32 %v1881, %v1866
    %v1883 = vmul.f32 %v1881, %v1867
    %v1884 = vadd.f32 %v1852, %v1882
    %v1885 = vadd.f32 %v1853, %v1883
    %s1886 = sld [smem:[#allocation2 + $0xbb]]
    %v1887 = vstv %s1886
    %v1888 = vmul.f32 %v1887, %v1866
    %v1889 = vmul.f32 %v1887, %v1867
    %v1890 = vadd.f32 %v1858, %v1888
    %v1891 = vadd.f32 %v1859, %v1889
    %1892 = vrot.lane.b32.xlu0 %v1503, 45
    %v1893 = vpop.permute.xlu0 %1892
    %1894 = vrot.lane.b32.xlu0 %v1504, 45
    %v1895 = vpop.permute.xlu0 %1894
    %v1896 = vsel %vm1799, %v1893, %v1895
    %v1897 = vsel %vm1799, %v1895, %v1893
    %v1898 = vsel %vm1793, %v1897, 0.0
    %v1899 = vsel %vm1794, %v1896, 0.0
    %s1900 = sld [smem:[#allocation2 + $0xbc]]
    %v1901 = vstv %s1900
    %v1902 = vmul.f32 %v1901, %v1898
    %v1903 = vmul.f32 %v1901, %v1899
    %v1904 = vadd.f32 %v1872, %v1902
    %v1905 = vadd.f32 %v1873, %v1903
    %s1906 = sld [smem:[#allocation2 + $0xbd]]
    %v1907 = vstv %s1906
    %v1908 = vmul.f32 %v1907, %v1898
    %v1909 = vmul.f32 %v1907, %v1899
    %v1910 = vadd.f32 %v1878, %v1908
    %v1911 = vadd.f32 %v1879, %v1909
    %s1912 = sld [smem:[#allocation2 + $0xbe]]
    %v1913 = vstv %s1912
    %v1914 = vmul.f32 %v1913, %v1898
    %v1915 = vmul.f32 %v1913, %v1899
    %v1916 = vadd.f32 %v1884, %v1914
    %v1917 = vadd.f32 %v1885, %v1915
    %s1918 = sld [smem:[#allocation2 + $0xbf]]
    %v1919 = vstv %s1918
    %v1920 = vmul.f32 %v1919, %v1898
    %v1921 = vmul.f32 %v1919, %v1899
    %v1922 = vadd.f32 %v1890, %v1920
    %v1923 = vadd.f32 %v1891, %v1921
    %vm1924 = vmand %vm558, %vm1515
    %vm1925 = vmand %vm559, %vm1516
    %vm1926 = vmand %vm1924, %vm1519
    %vm1927 = vmand %vm1925, %vm1520
    %1928 = vrot.lane.b32.xlu0 %v1491, 3
    %v1929 = vpop.permute.xlu0 %1928
    %1930 = vrot.lane.b32.xlu0 %v1492, 3
    %v1931 = vpop.permute.xlu0 %1930
    %vm1932 = vcmp.lt.s32.totalorder %v119, 3
    %v1933 = vsel %vm1932, %v1929, %v1931
    %v1934 = vsel %vm1932, %v1931, %v1929
    %v1935 = vsel %vm1926, %v1934, 0.0
    %v1936 = vsel %vm1927, %v1933, 0.0
    %s1937 = sld [smem:[#allocation2 + $0xc0]]
    %v1938 = vstv %s1937
    %v1939 = vmul.f32 %v1938, %v1935
    %v1940 = vmul.f32 %v1938, %v1936
    %v1941 = vadd.f32 %v1904, %v1939
    %v1942 = vadd.f32 %v1905, %v1940
    %s1943 = sld [smem:[#allocation2 + $0xc1]]
    %v1944 = vstv %s1943
    %v1945 = vmul.f32 %v1944, %v1935
    %v1946 = vmul.f32 %v1944, %v1936
    %v1947 = vadd.f32 %v1910, %v1945
    %v1948 = vadd.f32 %v1911, %v1946
    %s1949 = sld [smem:[#allocation2 + $0xc2]]
    %v1950 = vstv %s1949
    %v1951 = vmul.f32 %v1950, %v1935
    %v1952 = vmul.f32 %v1950, %v1936
    %v1953 = vadd.f32 %v1916, %v1951
    %v1954 = vadd.f32 %v1917, %v1952
    %s1955 = sld [smem:[#allocation2 + $0xc3]]
    %v1956 = vstv %s1955
    %v1957 = vmul.f32 %v1956, %v1935
    %v1958 = vmul.f32 %v1956, %v1936
    %v1959 = vadd.f32 %v1922, %v1957
    %v1960 = vadd.f32 %v1923, %v1958
    %1961 = vrot.lane.b32.xlu0 %v1495, 3
    %v1962 = vpop.permute.xlu0 %1961
    %1963 = vrot.lane.b32.xlu0 %v1496, 3
    %v1964 = vpop.permute.xlu0 %1963
    %v1965 = vsel %vm1932, %v1962, %v1964
    %v1966 = vsel %vm1932, %v1964, %v1962
    %v1967 = vsel %vm1926, %v1966, 0.0
    %v1968 = vsel %vm1927, %v1965, 0.0
    %s1969 = sld [smem:[#allocation2 + $0xc4]]
    %v1970 = vstv %s1969
    %v1971 = vmul.f32 %v1970, %v1967
    %v1972 = vmul.f32 %v1970, %v1968
    %v1973 = vadd.f32 %v1941, %v1971
    %v1974 = vadd.f32 %v1942, %v1972
    %s1975 = sld [smem:[#allocation2 + $0xc5]]
    %v1976 = vstv %s1975
    %v1977 = vmul.f32 %v1976, %v1967
    %v1978 = vmul.f32 %v1976, %v1968
    %v1979 = vadd.f32 %v1947, %v1977
    %v1980 = vadd.f32 %v1948, %v1978
    %s1981 = sld [smem:[#allocation2 + $0xc6]]
    %v1982 = vstv %s1981
    %v1983 = vmul.f32 %v1982, %v1967
    %v1984 = vmul.f32 %v1982, %v1968
    %v1985 = vadd.f32 %v1953, %v1983
    %v1986 = vadd.f32 %v1954, %v1984
    %s1987 = sld [smem:[#allocation2 + $0xc7]]
    %v1988 = vstv %s1987
    %v1989 = vmul.f32 %v1988, %v1967
    %v1990 = vmul.f32 %v1988, %v1968
    %v1991 = vadd.f32 %v1959, %v1989
    %v1992 = vadd.f32 %v1960, %v1990
    %1993 = vrot.lane.b32.xlu0 %v1499, 3
    %v1994 = vpop.permute.xlu0 %1993
    %1995 = vrot.lane.b32.xlu0 %v1500, 3
    %v1996 = vpop.permute.xlu0 %1995
    %v1997 = vsel %vm1932, %v1994, %v1996
    %v1998 = vsel %vm1932, %v1996, %v1994
    %v1999 = vsel %vm1926, %v1998, 0.0
    %v2000 = vsel %vm1927, %v1997, 0.0
    %s2001 = sld [smem:[#allocation2 + $0xc8]]
    %v2002 = vstv %s2001
    %v2003 = vmul.f32 %v2002, %v1999
    %v2004 = vmul.f32 %v2002, %v2000
    %v2005 = vadd.f32 %v1973, %v2003
    %v2006 = vadd.f32 %v1974, %v2004
    %s2007 = sld [smem:[#allocation2 + $0xc9]]
    %v2008 = vstv %s2007
    %v2009 = vmul.f32 %v2008, %v1999
    %v2010 = vmul.f32 %v2008, %v2000
    %v2011 = vadd.f32 %v1979, %v2009
    %v2012 = vadd.f32 %v1980, %v2010
    %s2013 = sld [smem:[#allocation2 + $0xca]]
    %v2014 = vstv %s2013
    %v2015 = vmul.f32 %v2014, %v1999
    %v2016 = vmul.f32 %v2014, %v2000
    %v2017 = vadd.f32 %v1985, %v2015
    %v2018 = vadd.f32 %v1986, %v2016
    %s2019 = sld [smem:[#allocation2 + $0xcb]]
    %v2020 = vstv %s2019
    %v2021 = vmul.f32 %v2020, %v1999
    %v2022 = vmul.f32 %v2020, %v2000
    %v2023 = vadd.f32 %v1991, %v2021
    %v2024 = vadd.f32 %v1992, %v2022
    %2025 = vrot.lane.b32.xlu0 %v1503, 3
    %v2026 = vpop.permute.xlu0 %2025
    %2027 = vrot.lane.b32.xlu0 %v1504, 3
    %v2028 = vpop.permute.xlu0 %2027
    %v2029 = vsel %vm1932, %v2026, %v2028
    %v2030 = vsel %vm1932, %v2028, %v2026
    %v2031 = vsel %vm1926, %v2030, 0.0
    %v2032 = vsel %vm1927, %v2029, 0.0
    %s2033 = sld [smem:[#allocation2 + $0xcc]]
    %v2034 = vstv %s2033
    %v2035 = vmul.f32 %v2034, %v2031
    %v2036 = vmul.f32 %v2034, %v2032
    %v2037 = vadd.f32 %v2005, %v2035
    %v2038 = vadd.f32 %v2006, %v2036
    %s2039 = sld [smem:[#allocation2 + $0xcd]]
    %v2040 = vstv %s2039
    %v2041 = vmul.f32 %v2040, %v2031
    %v2042 = vmul.f32 %v2040, %v2032
    %v2043 = vadd.f32 %v2011, %v2041
    %v2044 = vadd.f32 %v2012, %v2042
    %s2045 = sld [smem:[#allocation2 + $0xce]]
    %v2046 = vstv %s2045
    %v2047 = vmul.f32 %v2046, %v2031
    %v2048 = vmul.f32 %v2046, %v2032
    %v2049 = vadd.f32 %v2017, %v2047
    %v2050 = vadd.f32 %v2018, %v2048
    %s2051 = sld [smem:[#allocation2 + $0xcf]]
    %v2052 = vstv %s2051
    %v2053 = vmul.f32 %v2052, %v2031
    %v2054 = vmul.f32 %v2052, %v2032
    %v2055 = vadd.f32 %v2023, %v2053
    %v2056 = vadd.f32 %v2024, %v2054
    %s2057 = sld [smem:[#allocation2 + $0xd0]]
    %v2058 = vstv %s2057
    %v2059 = vmul.f32 %v2058, %v1491
    %v2060 = vmul.f32 %v2058, %v1492
    %v2061 = vadd.f32 %v2037, %v2059
    %v2062 = vadd.f32 %v2038, %v2060
    %s2063 = sld [smem:[#allocation2 + $0xd1]]
    %v2064 = vstv %s2063
    %v2065 = vmul.f32 %v2064, %v1491
    %v2066 = vmul.f32 %v2064, %v1492
    %v2067 = vadd.f32 %v2043, %v2065
    %v2068 = vadd.f32 %v2044, %v2066
    %s2069 = sld [smem:[#allocation2 + $0xd2]]
    %v2070 = vstv %s2069
    %v2071 = vmul.f32 %v2070, %v1491
    %v2072 = vmul.f32 %v2070, %v1492
    %v2073 = vadd.f32 %v2049, %v2071
    %v2074 = vadd.f32 %v2050, %v2072
    %s2075 = sld [smem:[#allocation2 + $0xd3]]
    %v2076 = vstv %s2075
    %v2077 = vmul.f32 %v2076, %v1491
    %v2078 = vmul.f32 %v2076, %v1492
    %v2079 = vadd.f32 %v2055, %v2077
    %v2080 = vadd.f32 %v2056, %v2078
    %s2081 = sld [smem:[#allocation2 + $0xd4]]
    %v2082 = vstv %s2081
    %v2083 = vmul.f32 %v2082, %v1495
    %v2084 = vmul.f32 %v2082, %v1496
    %v2085 = vadd.f32 %v2061, %v2083
    %v2086 = vadd.f32 %v2062, %v2084
    %s2087 = sld [smem:[#allocation2 + $0xd5]]
    %v2088 = vstv %s2087
    %v2089 = vmul.f32 %v2088, %v1495
    %v2090 = vmul.f32 %v2088, %v1496
    %v2091 = vadd.f32 %v2067, %v2089
    %v2092 = vadd.f32 %v2068, %v2090
    %s2093 = sld [smem:[#allocation2 + $0xd6]]
    %v2094 = vstv %s2093
    %v2095 = vmul.f32 %v2094, %v1495
    %v2096 = vmul.f32 %v2094, %v1496
    %v2097 = vadd.f32 %v2073, %v2095
    %v2098 = vadd.f32 %v2074, %v2096
    %s2099 = sld [smem:[#allocation2 + $0xd7]]
    %v2100 = vstv %s2099
    %v2101 = vmul.f32 %v2100, %v1495
    %v2102 = vmul.f32 %v2100, %v1496
    %v2103 = vadd.f32 %v2079, %v2101
    %v2104 = vadd.f32 %v2080, %v2102
    %s2105 = sld [smem:[#allocation2 + $0xd8]]
    %v2106 = vstv %s2105
    %v2107 = vmul.f32 %v2106, %v1499
    %v2108 = vmul.f32 %v2106, %v1500
    %v2109 = vadd.f32 %v2085, %v2107
    %v2110 = vadd.f32 %v2086, %v2108
    %s2111 = sld [smem:[#allocation2 + $0xd9]]
    %v2112 = vstv %s2111
    %v2113 = vmul.f32 %v2112, %v1499
    %v2114 = vmul.f32 %v2112, %v1500
    %v2115 = vadd.f32 %v2091, %v2113
    %v2116 = vadd.f32 %v2092, %v2114
    %s2117 = sld [smem:[#allocation2 + $0xda]]
    %v2118 = vstv %s2117
    %v2119 = vmul.f32 %v2118, %v1499
    %v2120 = vmul.f32 %v2118, %v1500
    %v2121 = vadd.f32 %v2097, %v2119
    %v2122 = vadd.f32 %v2098, %v2120
    %s2123 = sld [smem:[#allocation2 + $0xdb]]
    %v2124 = vstv %s2123
    %v2125 = vmul.f32 %v2124, %v1499
    %v2126 = vmul.f32 %v2124, %v1500
    %v2127 = vadd.f32 %v2103, %v2125
    %v2128 = vadd.f32 %v2104, %v2126
    %s2129 = sld [smem:[#allocation2 + $0xdc]]
    %v2130 = vstv %s2129
    %v2131 = vmul.f32 %v2130, %v1503
    %v2132 = vmul.f32 %v2130, %v1504
    %v2133 = vadd.f32 %v2109, %v2131
    %v2134 = vadd.f32 %v2110, %v2132
    %s2135 = sld [smem:[#allocation2 + $0xdd]]
    %v2136 = vstv %s2135
    %v2137 = vmul.f32 %v2136, %v1503
    %v2138 = vmul.f32 %v2136, %v1504
    %v2139 = vadd.f32 %v2115, %v2137
    %v2140 = vadd.f32 %v2116, %v2138
    %s2141 = sld [smem:[#allocation2 + $0xde]]
    %v2142 = vstv %s2141
    %v2143 = vmul.f32 %v2142, %v1503
    %v2144 = vmul.f32 %v2142, %v1504
    %v2145 = vadd.f32 %v2121, %v2143
    %v2146 = vadd.f32 %v2122, %v2144
    %s2147 = sld [smem:[#allocation2 + $0xdf]]
    %v2148 = vstv %s2147
    %v2149 = vmul.f32 %v2148, %v1503
    %v2150 = vmul.f32 %v2148, %v1504
    %v2151 = vadd.f32 %v2127, %v2149
    %v2152 = vadd.f32 %v2128, %v2150
    %vm2153 = vmand %vm558, %vm1787
    %vm2154 = vmand %vm559, %vm1788
    %vm2155 = vmand %vm2153, %vm1791
    %vm2156 = vmand %vm2154, %vm1792
    %2157 = vrot.lane.b32.xlu0 %v1491, 125
    %v2158 = vpop.permute.xlu0 %2157
    %2159 = vrot.lane.b32.xlu0 %v1492, 125
    %v2160 = vpop.permute.xlu0 %2159
    %vm2161 = vcmp.lt.s32.totalorder %v119, 125
    %v2162 = vsel %vm2161, %v2158, %v2160
    %v2163 = vsel %vm2161, %v2160, %v2158
    %v2164 = vsel %vm2155, %v2162, 0.0
    %v2165 = vsel %vm2156, %v2163, 0.0
    %s2166 = sld [smem:[#allocation2 + $0xe0]]
    %v2167 = vstv %s2166
    %v2168 = vmul.f32 %v2167, %v2164
    %v2169 = vmul.f32 %v2167, %v2165
    %v2170 = vadd.f32 %v2133, %v2168
    %v2171 = vadd.f32 %v2134, %v2169
    %s2172 = sld [smem:[#allocation2 + $0xe1]]
    %v2173 = vstv %s2172
    %v2174 = vmul.f32 %v2173, %v2164
    %v2175 = vmul.f32 %v2173, %v2165
    %v2176 = vadd.f32 %v2139, %v2174
    %v2177 = vadd.f32 %v2140, %v2175
    %s2178 = sld [smem:[#allocation2 + $0xe2]]
    %v2179 = vstv %s2178
    %v2180 = vmul.f32 %v2179, %v2164
    %v2181 = vmul.f32 %v2179, %v2165
    %v2182 = vadd.f32 %v2145, %v2180
    %v2183 = vadd.f32 %v2146, %v2181
    %s2184 = sld [smem:[#allocation2 + $0xe3]]
    %v2185 = vstv %s2184
    %v2186 = vmul.f32 %v2185, %v2164
    %v2187 = vmul.f32 %v2185, %v2165
    %v2188 = vadd.f32 %v2151, %v2186
    %v2189 = vadd.f32 %v2152, %v2187
    %2190 = vrot.lane.b32.xlu0 %v1495, 125
    %v2191 = vpop.permute.xlu0 %2190
    %2192 = vrot.lane.b32.xlu0 %v1496, 125
    %v2193 = vpop.permute.xlu0 %2192
    %v2194 = vsel %vm2161, %v2191, %v2193
    %v2195 = vsel %vm2161, %v2193, %v2191
    %v2196 = vsel %vm2155, %v2194, 0.0
    %v2197 = vsel %vm2156, %v2195, 0.0
    %s2198 = sld [smem:[#allocation2 + $0xe4]]
    %v2199 = vstv %s2198
    %v2200 = vmul.f32 %v2199, %v2196
    %v2201 = vmul.f32 %v2199, %v2197
    %v2202 = vadd.f32 %v2170, %v2200
    %v2203 = vadd.f32 %v2171, %v2201
    %s2204 = sld [smem:[#allocation2 + $0xe5]]
    %v2205 = vstv %s2204
    %v2206 = vmul.f32 %v2205, %v2196
    %v2207 = vmul.f32 %v2205, %v2197
    %v2208 = vadd.f32 %v2176, %v2206
    %v2209 = vadd.f32 %v2177, %v2207
    %s2210 = sld [smem:[#allocation2 + $0xe6]]
    %v2211 = vstv %s2210
    %v2212 = vmul.f32 %v2211, %v2196
    %v2213 = vmul.f32 %v2211, %v2197
    %v2214 = vadd.f32 %v2182, %v2212
    %v2215 = vadd.f32 %v2183, %v2213
    %s2216 = sld [smem:[#allocation2 + $0xe7]]
    %v2217 = vstv %s2216
    %v2218 = vmul.f32 %v2217, %v2196
    %v2219 = vmul.f32 %v2217, %v2197
    %v2220 = vadd.f32 %v2188, %v2218
    %v2221 = vadd.f32 %v2189, %v2219
    %2222 = vrot.lane.b32.xlu0 %v1499, 125
    %v2223 = vpop.permute.xlu0 %2222
    %2224 = vrot.lane.b32.xlu0 %v1500, 125
    %v2225 = vpop.permute.xlu0 %2224
    %v2226 = vsel %vm2161, %v2223, %v2225
    %v2227 = vsel %vm2161, %v2225, %v2223
    %v2228 = vsel %vm2155, %v2226, 0.0
    %v2229 = vsel %vm2156, %v2227, 0.0
    %s2230 = sld [smem:[#allocation2 + $0xe8]]
    %v2231 = vstv %s2230
    %v2232 = vmul.f32 %v2231, %v2228
    %v2233 = vmul.f32 %v2231, %v2229
    %v2234 = vadd.f32 %v2202, %v2232
    %v2235 = vadd.f32 %v2203, %v2233
    %s2236 = sld [smem:[#allocation2 + $0xe9]]
    %v2237 = vstv %s2236
    %v2238 = vmul.f32 %v2237, %v2228
    %v2239 = vmul.f32 %v2237, %v2229
    %v2240 = vadd.f32 %v2208, %v2238
    %v2241 = vadd.f32 %v2209, %v2239
    %s2242 = sld [smem:[#allocation2 + $0xea]]
    %v2243 = vstv %s2242
    %v2244 = vmul.f32 %v2243, %v2228
    %v2245 = vmul.f32 %v2243, %v2229
    %v2246 = vadd.f32 %v2214, %v2244
    %v2247 = vadd.f32 %v2215, %v2245
    %s2248 = sld [smem:[#allocation2 + $0xeb]]
    %v2249 = vstv %s2248
    %v2250 = vmul.f32 %v2249, %v2228
    %v2251 = vmul.f32 %v2249, %v2229
    %v2252 = vadd.f32 %v2220, %v2250
    %v2253 = vadd.f32 %v2221, %v2251
    %2254 = vrot.lane.b32.xlu0 %v1503, 125
    %v2255 = vpop.permute.xlu0 %2254
    %2256 = vrot.lane.b32.xlu0 %v1504, 125
    %v2257 = vpop.permute.xlu0 %2256
    %v2258 = vsel %vm2161, %v2255, %v2257
    %v2259 = vsel %vm2161, %v2257, %v2255
    %v2260 = vsel %vm2155, %v2258, 0.0
    %v2261 = vsel %vm2156, %v2259, 0.0
    %s2262 = sld [smem:[#allocation2 + $0xec]]
    %v2263 = vstv %s2262
    %v2264 = vmul.f32 %v2263, %v2260
    %v2265 = vmul.f32 %v2263, %v2261
    %v2266 = vadd.f32 %v2234, %v2264
    %v2267 = vadd.f32 %v2235, %v2265
    %s2268 = sld [smem:[#allocation2 + $0xed]]
    %v2269 = vstv %s2268
    %v2270 = vmul.f32 %v2269, %v2260
    %v2271 = vmul.f32 %v2269, %v2261
    %v2272 = vadd.f32 %v2240, %v2270
    %v2273 = vadd.f32 %v2241, %v2271
    %s2274 = sld [smem:[#allocation2 + $0xee]]
    %v2275 = vstv %s2274
    %v2276 = vmul.f32 %v2275, %v2260
    %v2277 = vmul.f32 %v2275, %v2261
    %v2278 = vadd.f32 %v2246, %v2276
    %v2279 = vadd.f32 %v2247, %v2277
    %s2280 = sld [smem:[#allocation2 + $0xef]]
    %v2281 = vstv %s2280
    %v2282 = vmul.f32 %v2281, %v2260
    %v2283 = vmul.f32 %v2281, %v2261
    %v2284 = vadd.f32 %v2252, %v2282
    %v2285 = vadd.f32 %v2253, %v2283
    %v2286 = vadd.s32 %v59, 3
    %v2287 = vadd.s32 %v63, 3
    %vm2288 = vcmp.ge.s32.totalorder %v2286, 0
    %vm2289 = vcmp.ge.s32.totalorder %v2287, 0
    %vm2290 = vcmp.lt.s32.totalorder %v2286, 16
    %vm2291 = vcmp.lt.s32.totalorder %v2287, 16
    %vm2292 = vmand %vm2288, %vm2290
    %vm2293 = vmand %vm2289, %vm2291
    %vm2294 = vmand %vm2292, %vm1515
    %vm2295 = vmand %vm2293, %vm1516
    %vm2296 = vmand %vm2294, %vm1519
    %vm2297 = vmand %vm2295, %vm1520
    %2298 = vrot.lane.b32.xlu0 %v1491, 83
    %v2299 = vpop.permute.xlu0 %2298
    %2300 = vrot.lane.b32.xlu0 %v1492, 83
    %v2301 = vpop.permute.xlu0 %2300
    %vm2302 = vcmp.lt.s32.totalorder %v119, 83
    %v2303 = vsel %vm2302, %v2299, %v2301
    %v2304 = vsel %vm2302, %v2301, %v2299
    %v2305 = vsel %vm2296, %v2303, 0.0
    %v2306 = vsel %vm2297, %v2304, 0.0
    %s2307 = sld [smem:[#allocation2 + $0xf0]]
    %v2308 = vstv %s2307
    %v2309 = vmul.f32 %v2308, %v2305
    %v2310 = vmul.f32 %v2308, %v2306
    %v2311 = vadd.f32 %v2266, %v2309
    %v2312 = vadd.f32 %v2267, %v2310
    %s2313 = sld [smem:[#allocation2 + $0xf1]]
    %v2314 = vstv %s2313
    %v2315 = vmul.f32 %v2314, %v2305
    %v2316 = vmul.f32 %v2314, %v2306
    %v2317 = vadd.f32 %v2272, %v2315
    %v2318 = vadd.f32 %v2273, %v2316
    %s2319 = sld [smem:[#allocation2 + $0xf2]]
    %v2320 = vstv %s2319
    %v2321 = vmul.f32 %v2320, %v2305
    %v2322 = vmul.f32 %v2320, %v2306
    %v2323 = vadd.f32 %v2278, %v2321
    %v2324 = vadd.f32 %v2279, %v2322
    %s2325 = sld [smem:[#allocation2 + $0xf3]]
    %v2326 = vstv %s2325
    %v2327 = vmul.f32 %v2326, %v2305
    %v2328 = vmul.f32 %v2326, %v2306
    %v2329 = vadd.f32 %v2284, %v2327
    %v2330 = vadd.f32 %v2285, %v2328
    %2331 = vrot.lane.b32.xlu0 %v1495, 83
    %v2332 = vpop.permute.xlu0 %2331
    %2333 = vrot.lane.b32.xlu0 %v1496, 83
    %v2334 = vpop.permute.xlu0 %2333
    %v2335 = vsel %vm2302, %v2332, %v2334
    %v2336 = vsel %vm2302, %v2334, %v2332
    %v2337 = vsel %vm2296, %v2335, 0.0
    %v2338 = vsel %vm2297, %v2336, 0.0
    %s2339 = sld [smem:[#allocation2 + $0xf4]]
    %v2340 = vstv %s2339
    %v2341 = vmul.f32 %v2340, %v2337
    %v2342 = vmul.f32 %v2340, %v2338
    %v2343 = vadd.f32 %v2311, %v2341
    %v2344 = vadd.f32 %v2312, %v2342
    %s2345 = sld [smem:[#allocation2 + $0xf5]]
    %v2346 = vstv %s2345
    %v2347 = vmul.f32 %v2346, %v2337
    %v2348 = vmul.f32 %v2346, %v2338
    %v2349 = vadd.f32 %v2317, %v2347
    %v2350 = vadd.f32 %v2318, %v2348
    %s2351 = sld [smem:[#allocation2 + $0xf6]]
    %v2352 = vstv %s2351
    %v2353 = vmul.f32 %v2352, %v2337
    %v2354 = vmul.f32 %v2352, %v2338
    %v2355 = vadd.f32 %v2323, %v2353
    %v2356 = vadd.f32 %v2324, %v2354
    %s2357 = sld [smem:[#allocation2 + $0xf7]]
    %v2358 = vstv %s2357
    %v2359 = vmul.f32 %v2358, %v2337
    %v2360 = vmul.f32 %v2358, %v2338
    %v2361 = vadd.f32 %v2329, %v2359
    %v2362 = vadd.f32 %v2330, %v2360
    %2363 = vrot.lane.b32.xlu0 %v1499, 83
    %v2364 = vpop.permute.xlu0 %2363
    %2365 = vrot.lane.b32.xlu0 %v1500, 83
    %v2366 = vpop.permute.xlu0 %2365
    %v2367 = vsel %vm2302, %v2364, %v2366
    %v2368 = vsel %vm2302, %v2366, %v2364
    %v2369 = vsel %vm2296, %v2367, 0.0
    %v2370 = vsel %vm2297, %v2368, 0.0
    %s2371 = sld [smem:[#allocation2 + $0xf8]]
    %v2372 = vstv %s2371
    %v2373 = vmul.f32 %v2372, %v2369
    %v2374 = vmul.f32 %v2372, %v2370
    %v2375 = vadd.f32 %v2343, %v2373
    %v2376 = vadd.f32 %v2344, %v2374
    %s2377 = sld [smem:[#allocation2 + $0xf9]]
    %v2378 = vstv %s2377
    %v2379 = vmul.f32 %v2378, %v2369
    %v2380 = vmul.f32 %v2378, %v2370
    %v2381 = vadd.f32 %v2349, %v2379
    %v2382 = vadd.f32 %v2350, %v2380
    %s2383 = sld [smem:[#allocation2 + $0xfa]]
    %v2384 = vstv %s2383
    %v2385 = vmul.f32 %v2384, %v2369
    %v2386 = vmul.f32 %v2384, %v2370
    %v2387 = vadd.f32 %v2355, %v2385
    %v2388 = vadd.f32 %v2356, %v2386
    %s2389 = sld [smem:[#allocation2 + $0xfb]]
    %v2390 = vstv %s2389
    %v2391 = vmul.f32 %v2390, %v2369
    %v2392 = vmul.f32 %v2390, %v2370
    %v2393 = vadd.f32 %v2361, %v2391
    %v2394 = vadd.f32 %v2362, %v2392
    %2395 = vrot.lane.b32.xlu0 %v1503, 83
    %v2396 = vpop.permute.xlu0 %2395
    %2397 = vrot.lane.b32.xlu0 %v1504, 83
    %v2398 = vpop.permute.xlu0 %2397
    %v2399 = vsel %vm2302, %v2396, %v2398
    %v2400 = vsel %vm2302, %v2398, %v2396
    %v2401 = vsel %vm2296, %v2399, 0.0
    %v2402 = vsel %vm2297, %v2400, 0.0
    %s2403 = sld [smem:[#allocation2 + $0xfc]]
    %v2404 = vstv %s2403
    %v2405 = vmul.f32 %v2404, %v2401
    %v2406 = vmul.f32 %v2404, %v2402
    %v2407 = vadd.f32 %v2375, %v2405
    %v2408 = vadd.f32 %v2376, %v2406
    %s2409 = sld [smem:[#allocation2 + $0xfd]]
    %v2410 = vstv %s2409
    %v2411 = vmul.f32 %v2410, %v2401
    %v2412 = vmul.f32 %v2410, %v2402
    %v2413 = vadd.f32 %v2381, %v2411
    %v2414 = vadd.f32 %v2382, %v2412
    %s2415 = sld [smem:[#allocation2 + $0xfe]]
    %v2416 = vstv %s2415
    %v2417 = vmul.f32 %v2416, %v2401
    %v2418 = vmul.f32 %v2416, %v2402
    %v2419 = vadd.f32 %v2387, %v2417
    %v2420 = vadd.f32 %v2388, %v2418
    %s2421 = sld [smem:[#allocation2 + $0xff]]
    %v2422 = vstv %s2421
    %v2423 = vmul.f32 %v2422, %v2401
    %v2424 = vmul.f32 %v2422, %v2402
    %v2425 = vadd.f32 %v2393, %v2423
    %v2426 = vadd.f32 %v2394, %v2424
    %vm2427 = vmand %vm2292, %vm278
    %vm2428 = vmand %vm2293, %vm279
    %vm2429 = vmand %vm2427, %vm282
    %vm2430 = vmand %vm2428, %vm283
    %2431 = vrot.lane.b32.xlu0 %v1491, 80
    %v2432 = vpop.permute.xlu0 %2431
    %2433 = vrot.lane.b32.xlu0 %v1492, 80
    %v2434 = vpop.permute.xlu0 %2433
    %vm2435 = vcmp.lt.s32.totalorder %v119, 80
    %v2436 = vsel %vm2435, %v2432, %v2434
    %v2437 = vsel %vm2435, %v2434, %v2432
    %v2438 = vsel %vm2429, %v2436, 0.0
    %v2439 = vsel %vm2430, %v2437, 0.0
    %s2440 = sld [smem:[#allocation2 + $0x100]]
    %v2441 = vstv %s2440
    %v2442 = vmul.f32 %v2441, %v2438
    %v2443 = vmul.f32 %v2441, %v2439
    %v2444 = vadd.f32 %v2407, %v2442
    %v2445 = vadd.f32 %v2408, %v2443
    %s2446 = sld [smem:[#allocation2 + $0x101]]
    %v2447 = vstv %s2446
    %v2448 = vmul.f32 %v2447, %v2438
    %v2449 = vmul.f32 %v2447, %v2439
    %v2450 = vadd.f32 %v2413, %v2448
    %v2451 = vadd.f32 %v2414, %v2449
    %s2452 = sld [smem:[#allocation2 + $0x102]]
    %v2453 = vstv %s2452
    %v2454 = vmul.f32 %v2453, %v2438
    %v2455 = vmul.f32 %v2453, %v2439
    %v2456 = vadd.f32 %v2419, %v2454
    %v2457 = vadd.f32 %v2420, %v2455
    %s2458 = sld [smem:[#allocation2 + $0x103]]
    %v2459 = vstv %s2458
    %v2460 = vmul.f32 %v2459, %v2438
    %v2461 = vmul.f32 %v2459, %v2439
    %v2462 = vadd.f32 %v2425, %v2460
    %v2463 = vadd.f32 %v2426, %v2461
    %2464 = vrot.lane.b32.xlu0 %v1495, 80
    %v2465 = vpop.permute.xlu0 %2464
    %2466 = vrot.lane.b32.xlu0 %v1496, 80
    %v2467 = vpop.permute.xlu0 %2466
    %v2468 = vsel %vm2435, %v2465, %v2467
    %v2469 = vsel %vm2435, %v2467, %v2465
    %v2470 = vsel %vm2429, %v2468, 0.0
    %v2471 = vsel %vm2430, %v2469, 0.0
    %s2472 = sld [smem:[#allocation2 + $0x104]]
    %v2473 = vstv %s2472
    %v2474 = vmul.f32 %v2473, %v2470
    %v2475 = vmul.f32 %v2473, %v2471
    %v2476 = vadd.f32 %v2444, %v2474
    %v2477 = vadd.f32 %v2445, %v2475
    %s2478 = sld [smem:[#allocation2 + $0x105]]
    %v2479 = vstv %s2478
    %v2480 = vmul.f32 %v2479, %v2470
    %v2481 = vmul.f32 %v2479, %v2471
    %v2482 = vadd.f32 %v2450, %v2480
    %v2483 = vadd.f32 %v2451, %v2481
    %s2484 = sld [smem:[#allocation2 + $0x106]]
    %v2485 = vstv %s2484
    %v2486 = vmul.f32 %v2485, %v2470
    %v2487 = vmul.f32 %v2485, %v2471
    %v2488 = vadd.f32 %v2456, %v2486
    %v2489 = vadd.f32 %v2457, %v2487
    %s2490 = sld [smem:[#allocation2 + $0x107]]
    %v2491 = vstv %s2490
    %v2492 = vmul.f32 %v2491, %v2470
    %v2493 = vmul.f32 %v2491, %v2471
    %v2494 = vadd.f32 %v2462, %v2492
    %v2495 = vadd.f32 %v2463, %v2493
    %2496 = vrot.lane.b32.xlu0 %v1499, 80
    %v2497 = vpop.permute.xlu0 %2496
    %2498 = vrot.lane.b32.xlu0 %v1500, 80
    %v2499 = vpop.permute.xlu0 %2498
    %v2500 = vsel %vm2435, %v2497, %v2499
    %v2501 = vsel %vm2435, %v2499, %v2497
    %v2502 = vsel %vm2429, %v2500, 0.0
    %v2503 = vsel %vm2430, %v2501, 0.0
    %s2504 = sld [smem:[#allocation2 + $0x108]]
    %v2505 = vstv %s2504
    %v2506 = vmul.f32 %v2505, %v2502
    %v2507 = vmul.f32 %v2505, %v2503
    %v2508 = vadd.f32 %v2476, %v2506
    %v2509 = vadd.f32 %v2477, %v2507
    %s2510 = sld [smem:[#allocation2 + $0x109]]
    %v2511 = vstv %s2510
    %v2512 = vmul.f32 %v2511, %v2502
    %v2513 = vmul.f32 %v2511, %v2503
    %v2514 = vadd.f32 %v2482, %v2512
    %v2515 = vadd.f32 %v2483, %v2513
    %s2516 = sld [smem:[#allocation2 + $0x10a]]
    %v2517 = vstv %s2516
    %v2518 = vmul.f32 %v2517, %v2502
    %v2519 = vmul.f32 %v2517, %v2503
    %v2520 = vadd.f32 %v2488, %v2518
    %v2521 = vadd.f32 %v2489, %v2519
    %s2522 = sld [smem:[#allocation2 + $0x10b]]
    %v2523 = vstv %s2522
    %v2524 = vmul.f32 %v2523, %v2502
    %v2525 = vmul.f32 %v2523, %v2503
    %v2526 = vadd.f32 %v2494, %v2524
    %v2527 = vadd.f32 %v2495, %v2525
    %2528 = vrot.lane.b32.xlu0 %v1503, 80
    %v2529 = vpop.permute.xlu0 %2528
    %2530 = vrot.lane.b32.xlu0 %v1504, 80
    %v2531 = vpop.permute.xlu0 %2530
    %v2532 = vsel %vm2435, %v2529, %v2531
    %v2533 = vsel %vm2435, %v2531, %v2529
    %v2534 = vsel %vm2429, %v2532, 0.0
    %v2535 = vsel %vm2430, %v2533, 0.0
    %s2536 = sld [smem:[#allocation2 + $0x10c]]
    %v2537 = vstv %s2536
    %v2538 = vmul.f32 %v2537, %v2534
    %v2539 = vmul.f32 %v2537, %v2535
    %v2540 = vadd.f32 %v2508, %v2538
    %v2541 = vadd.f32 %v2509, %v2539
    %s2542 = sld [smem:[#allocation2 + $0x10d]]
    %v2543 = vstv %s2542
    %v2544 = vmul.f32 %v2543, %v2534
    %v2545 = vmul.f32 %v2543, %v2535
    %v2546 = vadd.f32 %v2514, %v2544
    %v2547 = vadd.f32 %v2515, %v2545
    %s2548 = sld [smem:[#allocation2 + $0x10e]]
    %v2549 = vstv %s2548
    %v2550 = vmul.f32 %v2549, %v2534
    %v2551 = vmul.f32 %v2549, %v2535
    %v2552 = vadd.f32 %v2520, %v2550
    %v2553 = vadd.f32 %v2521, %v2551
    %s2554 = sld [smem:[#allocation2 + $0x10f]]
    %v2555 = vstv %s2554
    %v2556 = vmul.f32 %v2555, %v2534
    %v2557 = vmul.f32 %v2555, %v2535
    %v2558 = vadd.f32 %v2526, %v2556
    %v2559 = vadd.f32 %v2527, %v2557
    %vm2560 = vmand %vm2292, %vm1787
    %vm2561 = vmand %vm2293, %vm1788
    %vm2562 = vmand %vm2560, %vm1791
    %vm2563 = vmand %vm2561, %vm1792
    %2564 = vrot.lane.b32.xlu0 %v1491, 77
    %v2565 = vpop.permute.xlu0 %2564
    %2566 = vrot.lane.b32.xlu0 %v1492, 77
    %v2567 = vpop.permute.xlu0 %2566
    %vm2568 = vcmp.lt.s32.totalorder %v119, 77
    %v2569 = vsel %vm2568, %v2565, %v2567
    %v2570 = vsel %vm2568, %v2567, %v2565
    %v2571 = vsel %vm2562, %v2569, 0.0
    %v2572 = vsel %vm2563, %v2570, 0.0
    %s2573 = sld [smem:[#allocation2 + $0x110]]
    %v2574 = vstv %s2573
    %v2575 = vmul.f32 %v2574, %v2571
    %v2576 = vmul.f32 %v2574, %v2572
    %v2577 = vadd.f32 %v2540, %v2575
    %v2578 = vadd.f32 %v2541, %v2576
    %s2579 = sld [smem:[#allocation2 + $0x111]]
    %v2580 = vstv %s2579
    %v2581 = vmul.f32 %v2580, %v2571
    %v2582 = vmul.f32 %v2580, %v2572
    %v2583 = vadd.f32 %v2546, %v2581
    %v2584 = vadd.f32 %v2547, %v2582
    %s2585 = sld [smem:[#allocation2 + $0x112]]
    %v2586 = vstv %s2585
    %v2587 = vmul.f32 %v2586, %v2571
    %v2588 = vmul.f32 %v2586, %v2572
    %v2589 = vadd.f32 %v2552, %v2587
    %v2590 = vadd.f32 %v2553, %v2588
    %s2591 = sld [smem:[#allocation2 + $0x113]]
    %v2592 = vstv %s2591
    %v2593 = vmul.f32 %v2592, %v2571
    %v2594 = vmul.f32 %v2592, %v2572
    %v2595 = vadd.f32 %v2558, %v2593
    %v2596 = vadd.f32 %v2559, %v2594
    %2597 = vrot.lane.b32.xlu0 %v1495, 77
    %v2598 = vpop.permute.xlu0 %2597
    %2599 = vrot.lane.b32.xlu0 %v1496, 77
    %v2600 = vpop.permute.xlu0 %2599
    %v2601 = vsel %vm2568, %v2598, %v2600
    %v2602 = vsel %vm2568, %v2600, %v2598
    %v2603 = vsel %vm2562, %v2601, 0.0
    %v2604 = vsel %vm2563, %v2602, 0.0
    %s2605 = sld [smem:[#allocation2 + $0x114]]
    %v2606 = vstv %s2605
    %v2607 = vmul.f32 %v2606, %v2603
    %v2608 = vmul.f32 %v2606, %v2604
    %v2609 = vadd.f32 %v2577, %v2607
    %v2610 = vadd.f32 %v2578, %v2608
    %s2611 = sld [smem:[#allocation2 + $0x115]]
    %v2612 = vstv %s2611
    %v2613 = vmul.f32 %v2612, %v2603
    %v2614 = vmul.f32 %v2612, %v2604
    %v2615 = vadd.f32 %v2583, %v2613
    %v2616 = vadd.f32 %v2584, %v2614
    %s2617 = sld [smem:[#allocation2 + $0x116]]
    %v2618 = vstv %s2617
    %v2619 = vmul.f32 %v2618, %v2603
    %v2620 = vmul.f32 %v2618, %v2604
    %v2621 = vadd.f32 %v2589, %v2619
    %v2622 = vadd.f32 %v2590, %v2620
    %s2623 = sld [smem:[#allocation2 + $0x117]]
    %v2624 = vstv %s2623
    %v2625 = vmul.f32 %v2624, %v2603
    %v2626 = vmul.f32 %v2624, %v2604
    %v2627 = vadd.f32 %v2595, %v2625
    %v2628 = vadd.f32 %v2596, %v2626
    %2629 = vrot.lane.b32.xlu0 %v1499, 77
    %v2630 = vpop.permute.xlu0 %2629
    %2631 = vrot.lane.b32.xlu0 %v1500, 77
    %v2632 = vpop.permute.xlu0 %2631
    %v2633 = vsel %vm2568, %v2630, %v2632
    %v2634 = vsel %vm2568, %v2632, %v2630
    %v2635 = vsel %vm2562, %v2633, 0.0
    %v2636 = vsel %vm2563, %v2634, 0.0
    %s2637 = sld [smem:[#allocation2 + $0x118]]
    %v2638 = vstv %s2637
    %v2639 = vmul.f32 %v2638, %v2635
    %v2640 = vmul.f32 %v2638, %v2636
    %v2641 = vadd.f32 %v2609, %v2639
    %v2642 = vadd.f32 %v2610, %v2640
    %s2643 = sld [smem:[#allocation2 + $0x119]]
    %v2644 = vstv %s2643
    %v2645 = vmul.f32 %v2644, %v2635
    %v2646 = vmul.f32 %v2644, %v2636
    %v2647 = vadd.f32 %v2615, %v2645
    %v2648 = vadd.f32 %v2616, %v2646
    %s2649 = sld [smem:[#allocation2 + $0x11a]]
    %v2650 = vstv %s2649
    %v2651 = vmul.f32 %v2650, %v2635
    %v2652 = vmul.f32 %v2650, %v2636
    %v2653 = vadd.f32 %v2621, %v2651
    %v2654 = vadd.f32 %v2622, %v2652
    %s2655 = sld [smem:[#allocation2 + $0x11b]]
    %v2656 = vstv %s2655
    %v2657 = vmul.f32 %v2656, %v2635
    %v2658 = vmul.f32 %v2656, %v2636
    %v2659 = vadd.f32 %v2627, %v2657
    %v2660 = vadd.f32 %v2628, %v2658
    %2661 = vrot.lane.b32.xlu0 %v1503, 77
    %v2662 = vpop.permute.xlu0 %2661
    %2663 = vrot.lane.b32.xlu0 %v1504, 77
    %v2664 = vpop.permute.xlu0 %2663
    %v2665 = vsel %vm2568, %v2662, %v2664
    %v2666 = vsel %vm2568, %v2664, %v2662
    %v2667 = vsel %vm2562, %v2665, 0.0
    %v2668 = vsel %vm2563, %v2666, 0.0
    %s2669 = sld [smem:[#allocation2 + $0x11c]]
    %v2670 = vstv %s2669
    %v2671 = vmul.f32 %v2670, %v2667
    %v2672 = vmul.f32 %v2670, %v2668
    %v2673 = vadd.f32 %v2641, %v2671
    %v2674 = vadd.f32 %v2642, %v2672
    %s2675 = sld [smem:[#allocation2 + $0x11d]]
    %v2676 = vstv %s2675
    %v2677 = vmul.f32 %v2676, %v2667
    %v2678 = vmul.f32 %v2676, %v2668
    %v2679 = vadd.f32 %v2647, %v2677
    %v2680 = vadd.f32 %v2648, %v2678
    %s2681 = sld [smem:[#allocation2 + $0x11e]]
    %v2682 = vstv %s2681
    %v2683 = vmul.f32 %v2682, %v2667
    %v2684 = vmul.f32 %v2682, %v2668
    %v2685 = vadd.f32 %v2653, %v2683
    %v2686 = vadd.f32 %v2654, %v2684
    %s2687 = sld [smem:[#allocation2 + $0x11f]]
    %v2688 = vstv %s2687
    %v2689 = vmul.f32 %v2688, %v2667
    %v2690 = vmul.f32 %v2688, %v2668
    %v2691 = vadd.f32 %v2659, %v2689
    %v2692 = vadd.f32 %v2660, %v2690
    %s2693 = sld [smem:[#allocation7 + $0x4]]
    %v2694 = vstv %s2693
    %v2695 = vadd.f32 %v2673, %v2694
    %v2696 = vadd.f32 %v2674, %v2694
    %s2697 = sld [smem:[#allocation7 + $0x5]]
    %v2698 = vstv %s2697
    %v2699 = vadd.f32 %v2679, %v2698
    %v2700 = vadd.f32 %v2680, %v2698
    %s2701 = sld [smem:[#allocation7 + $0x6]]
    %v2702 = vstv %s2701
    %v2703 = vadd.f32 %v2685, %v2702
    %v2704 = vadd.f32 %v2686, %v2702
    %s2705 = sld [smem:[#allocation7 + $0x7]]
    %v2706 = vstv %s2705
    %v2707 = vadd.f32 %v2691, %v2706
    %v2708 = vadd.f32 %v2692, %v2706
    %2709 = vrot.lane.b32.xlu0 %v2695, 17
    %v2710 = vpop.permute.xlu0 %2709
    %2711 = vrot.lane.b32.xlu0 %v2696, 17
    %v2712 = vpop.permute.xlu0 %2711
    %v2713 = vsel %vm120, %v2710, %v2712
    %v2714 = vsel %vm120, %v2712, %v2710
    %v2715 = vsel %vm101, %v2714, 0.0
    %v2716 = vsel %vm102, %v2713, 0.0
    %s2717 = sld [smem:[#allocation2 + $0x120]]
    %v2718 = vstv %s2717
    %v2719 = vmul.f32 %v2718, %v2715
    %v2720 = vmul.f32 %v2718, %v2716
    %v2721 = vadd.f32 %v2719, 0.0
    %v2722 = vadd.f32 %v2720, 0.0
    %s2723 = sld [smem:[#allocation2 + $0x121]]
    %v2724 = vstv %s2723
    %v2725 = vmul.f32 %v2724, %v2715
    %v2726 = vmul.f32 %v2724, %v2716
    %v2727 = vadd.f32 %v2725, 0.0
    %v2728 = vadd.f32 %v2726, 0.0
    %s2729 = sld [smem:[#allocation2 + $0x122]]
    %v2730 = vstv %s2729
    %v2731 = vmul.f32 %v2730, %v2715
    %v2732 = vmul.f32 %v2730, %v2716
    %v2733 = vadd.f32 %v2731, 0.0
    %v2734 = vadd.f32 %v2732, 0.0
    %s2735 = sld [smem:[#allocation2 + $0x123]]
    %v2736 = vstv %s2735
    %v2737 = vmul.f32 %v2736, %v2715
    %v2738 = vmul.f32 %v2736, %v2716
    %v2739 = vadd.f32 %v2737, 0.0
    %v2740 = vadd.f32 %v2738, 0.0
    %2741 = vrot.lane.b32.xlu0 %v2699, 17
    %v2742 = vpop.permute.xlu0 %2741
    %2743 = vrot.lane.b32.xlu0 %v2700, 17
    %v2744 = vpop.permute.xlu0 %2743
    %v2745 = vsel %vm120, %v2742, %v2744
    %v2746 = vsel %vm120, %v2744, %v2742
    %v2747 = vsel %vm101, %v2746, 0.0
    %v2748 = vsel %vm102, %v2745, 0.0
    %s2749 = sld [smem:[#allocation2 + $0x124]]
    %v2750 = vstv %s2749
    %v2751 = vmul.f32 %v2750, %v2747
    %v2752 = vmul.f32 %v2750, %v2748
    %v2753 = vadd.f32 %v2721, %v2751
    %v2754 = vadd.f32 %v2722, %v2752
    %s2755 = sld [smem:[#allocation2 + $0x125]]
    %v2756 = vstv %s2755
    %v2757 = vmul.f32 %v2756, %v2747
    %v2758 = vmul.f32 %v2756, %v2748
    %v2759 = vadd.f32 %v2727, %v2757
    %v2760 = vadd.f32 %v2728, %v2758
    %s2761 = sld [smem:[#allocation2 + $0x126]]
    %v2762 = vstv %s2761
    %v2763 = vmul.f32 %v2762, %v2747
    %v2764 = vmul.f32 %v2762, %v2748
    %v2765 = vadd.f32 %v2733, %v2763
    %v2766 = vadd.f32 %v2734, %v2764
    %s2767 = sld [smem:[#allocation2 + $0x127]]
    %v2768 = vstv %s2767
    %v2769 = vmul.f32 %v2768, %v2747
    %v2770 = vmul.f32 %v2768, %v2748
    %v2771 = vadd.f32 %v2739, %v2769
    %v2772 = vadd.f32 %v2740, %v2770
    %2773 = vrot.lane.b32.xlu0 %v2703, 17
    %v2774 = vpop.permute.xlu0 %2773
    %2775 = vrot.lane.b32.xlu0 %v2704, 17
    %v2776 = vpop.permute.xlu0 %2775
    %v2777 = vsel %vm120, %v2774, %v2776
    %v2778 = vsel %vm120, %v2776, %v2774
    %v2779 = vsel %vm101, %v2778, 0.0
    %v2780 = vsel %vm102, %v2777, 0.0
    %s2781 = sld [smem:[#allocation2 + $0x128]]
    %v2782 = vstv %s2781
    %v2783 = vmul.f32 %v2782, %v2779
    %v2784 = vmul.f32 %v2782, %v2780
    %v2785 = vadd.f32 %v2753, %v2783
    %v2786 = vadd.f32 %v2754, %v2784
    %s2787 = sld [smem:[#allocation2 + $0x129]]
    %v2788 = vstv %s2787
    %v2789 = vmul.f32 %v2788, %v2779
    %v2790 = vmul.f32 %v2788, %v2780
    %v2791 = vadd.f32 %v2759, %v2789
    %v2792 = vadd.f32 %v2760, %v2790
    %s2793 = sld [smem:[#allocation2 + $0x12a]]
    %v2794 = vstv %s2793
    %v2795 = vmul.f32 %v2794, %v2779
    %v2796 = vmul.f32 %v2794, %v2780
    %v2797 = vadd.f32 %v2765, %v2795
    %v2798 = vadd.f32 %v2766, %v2796
    %s2799 = sld [smem:[#allocation2 + $0x12b]]
    %v2800 = vstv %s2799
    %v2801 = vmul.f32 %v2800, %v2779
    %v2802 = vmul.f32 %v2800, %v2780
    %v2803 = vadd.f32 %v2771, %v2801
    %v2804 = vadd.f32 %v2772, %v2802
    %2805 = vrot.lane.b32.xlu0 %v2707, 17
    %v2806 = vpop.permute.xlu0 %2805
    %2807 = vrot.lane.b32.xlu0 %v2708, 17
    %v2808 = vpop.permute.xlu0 %2807
    %v2809 = vsel %vm120, %v2806, %v2808
    %v2810 = vsel %vm120, %v2808, %v2806
    %v2811 = vsel %vm101, %v2810, 0.0
    %v2812 = vsel %vm102, %v2809, 0.0
    %s2813 = sld [smem:[#allocation2 + $0x12c]]
    %v2814 = vstv %s2813
    %v2815 = vmul.f32 %v2814, %v2811
    %v2816 = vmul.f32 %v2814, %v2812
    %v2817 = vadd.f32 %v2785, %v2815
    %v2818 = vadd.f32 %v2786, %v2816
    %s2819 = sld [smem:[#allocation2 + $0x12d]]
    %v2820 = vstv %s2819
    %v2821 = vmul.f32 %v2820, %v2811
    %v2822 = vmul.f32 %v2820, %v2812
    %v2823 = vadd.f32 %v2791, %v2821
    %v2824 = vadd.f32 %v2792, %v2822
    %s2825 = sld [smem:[#allocation2 + $0x12e]]
    %v2826 = vstv %s2825
    %v2827 = vmul.f32 %v2826, %v2811
    %v2828 = vmul.f32 %v2826, %v2812
    %v2829 = vadd.f32 %v2797, %v2827
    %v2830 = vadd.f32 %v2798, %v2828
    %s2831 = sld [smem:[#allocation2 + $0x12f]]
    %v2832 = vstv %s2831
    %v2833 = vmul.f32 %v2832, %v2811
    %v2834 = vmul.f32 %v2832, %v2812
    %v2835 = vadd.f32 %v2803, %v2833
    %v2836 = vadd.f32 %v2804, %v2834
    %2837 = vrot.lane.b32.xlu0 %v2695, 16
    %v2838 = vpop.permute.xlu0 %2837
    %2839 = vrot.lane.b32.xlu0 %v2696, 16
    %v2840 = vpop.permute.xlu0 %2839
    %v2841 = vsel %vm290, %v2838, %v2840
    %v2842 = vsel %vm290, %v2840, %v2838
    %v2843 = vsel %vm284, %v2842, 0.0
    %v2844 = vsel %vm285, %v2841, 0.0
    %s2845 = sld [smem:[#allocation2 + $0x130]]
    %v2846 = vstv %s2845
    %v2847 = vmul.f32 %v2846, %v2843
    %v2848 = vmul.f32 %v2846, %v2844
    %v2849 = vadd.f32 %v2817, %v2847
    %v2850 = vadd.f32 %v2818, %v2848
    %s2851 = sld [smem:[#allocation2 + $0x131]]
    %v2852 = vstv %s2851
    %v2853 = vmul.f32 %v2852, %v2843
    %v2854 = vmul.f32 %v2852, %v2844
    %v2855 = vadd.f32 %v2823, %v2853
    %v2856 = vadd.f32 %v2824, %v2854
    %s2857 = sld [smem:[#allocation2 + $0x132]]
    %v2858 = vstv %s2857
    %v2859 = vmul.f32 %v2858, %v2843
    %v2860 = vmul.f32 %v2858, %v2844
    %v2861 = vadd.f32 %v2829, %v2859
    %v2862 = vadd.f32 %v2830, %v2860
    %s2863 = sld [smem:[#allocation2 + $0x133]]
    %v2864 = vstv %s2863
    %v2865 = vmul.f32 %v2864, %v2843
    %v2866 = vmul.f32 %v2864, %v2844
    %v2867 = vadd.f32 %v2835, %v2865
    %v2868 = vadd.f32 %v2836, %v2866
    %2869 = vrot.lane.b32.xlu0 %v2699, 16
    %v2870 = vpop.permute.xlu0 %2869
    %2871 = vrot.lane.b32.xlu0 %v2700, 16
    %v2872 = vpop.permute.xlu0 %2871
    %v2873 = vsel %vm290, %v2870, %v2872
    %v2874 = vsel %vm290, %v2872, %v2870
    %v2875 = vsel %vm284, %v2874, 0.0
    %v2876 = vsel %vm285, %v2873, 0.0
    %s2877 = sld [smem:[#allocation2 + $0x134]]
    %v2878 = vstv %s2877
    %v2879 = vmul.f32 %v2878, %v2875
    %v2880 = vmul.f32 %v2878, %v2876
    %v2881 = vadd.f32 %v2849, %v2879
    %v2882 = vadd.f32 %v2850, %v2880
    %s2883 = sld [smem:[#allocation2 + $0x135]]
    %v2884 = vstv %s2883
    %v2885 = vmul.f32 %v2884, %v2875
    %v2886 = vmul.f32 %v2884, %v2876
    %v2887 = vadd.f32 %v2855, %v2885
    %v2888 = vadd.f32 %v2856, %v2886
    %s2889 = sld [smem:[#allocation2 + $0x136]]
    %v2890 = vstv %s2889
    %v2891 = vmul.f32 %v2890, %v2875
    %v2892 = vmul.f32 %v2890, %v2876
    %v2893 = vadd.f32 %v2861, %v2891
    %v2894 = vadd.f32 %v2862, %v2892
    %s2895 = sld [smem:[#allocation2 + $0x137]]
    %v2896 = vstv %s2895
    %v2897 = vmul.f32 %v2896, %v2875
    %v2898 = vmul.f32 %v2896, %v2876
    %v2899 = vadd.f32 %v2867, %v2897
    %v2900 = vadd.f32 %v2868, %v2898
    %2901 = vrot.lane.b32.xlu0 %v2703, 16
    %v2902 = vpop.permute.xlu0 %2901
    %2903 = vrot.lane.b32.xlu0 %v2704, 16
    %v2904 = vpop.permute.xlu0 %2903
    %v2905 = vsel %vm290, %v2902, %v2904
    %v2906 = vsel %vm290, %v2904, %v2902
    %v2907 = vsel %vm284, %v2906, 0.0
    %v2908 = vsel %vm285, %v2905, 0.0
    %s2909 = sld [smem:[#allocation2 + $0x138]]
    %v2910 = vstv %s2909
    %v2911 = vmul.f32 %v2910, %v2907
    %v2912 = vmul.f32 %v2910, %v2908
    %v2913 = vadd.f32 %v2881, %v2911
    %v2914 = vadd.f32 %v2882, %v2912
    %s2915 = sld [smem:[#allocation2 + $0x139]]
    %v2916 = vstv %s2915
    %v2917 = vmul.f32 %v2916, %v2907
    %v2918 = vmul.f32 %v2916, %v2908
    %v2919 = vadd.f32 %v2887, %v2917
    %v2920 = vadd.f32 %v2888, %v2918
    %s2921 = sld [smem:[#allocation2 + $0x13a]]
    %v2922 = vstv %s2921
    %v2923 = vmul.f32 %v2922, %v2907
    %v2924 = vmul.f32 %v2922, %v2908
    %v2925 = vadd.f32 %v2893, %v2923
    %v2926 = vadd.f32 %v2894, %v2924
    %s2927 = sld [smem:[#allocation2 + $0x13b]]
    %v2928 = vstv %s2927
    %v2929 = vmul.f32 %v2928, %v2907
    %v2930 = vmul.f32 %v2928, %v2908
    %v2931 = vadd.f32 %v2899, %v2929
    %v2932 = vadd.f32 %v2900, %v2930
    %2933 = vrot.lane.b32.xlu0 %v2707, 16
    %v2934 = vpop.permute.xlu0 %2933
    %2935 = vrot.lane.b32.xlu0 %v2708, 16
    %v2936 = vpop.permute.xlu0 %2935
    %v2937 = vsel %vm290, %v2934, %v2936
    %v2938 = vsel %vm290, %v2936, %v2934
    %v2939 = vsel %vm284, %v2938, 0.0
    %v2940 = vsel %vm285, %v2937, 0.0
    %s2941 = sld [smem:[#allocation2 + $0x13c]]
    %v2942 = vstv %s2941
    %v2943 = vmul.f32 %v2942, %v2939
    %v2944 = vmul.f32 %v2942, %v2940
    %v2945 = vadd.f32 %v2913, %v2943
    %v2946 = vadd.f32 %v2914, %v2944
    %s2947 = sld [smem:[#allocation2 + $0x13d]]
    %v2948 = vstv %s2947
    %v2949 = vmul.f32 %v2948, %v2939
    %v2950 = vmul.f32 %v2948, %v2940
    %v2951 = vadd.f32 %v2919, %v2949
    %v2952 = vadd.f32 %v2920, %v2950
    %s2953 = sld [smem:[#allocation2 + $0x13e]]
    %v2954 = vstv %s2953
    %v2955 = vmul.f32 %v2954, %v2939
    %v2956 = vmul.f32 %v2954, %v2940
    %v2957 = vadd.f32 %v2925, %v2955
    %v2958 = vadd.f32 %v2926, %v2956
    %s2959 = sld [smem:[#allocation2 + $0x13f]]
    %v2960 = vstv %s2959
    %v2961 = vmul.f32 %v2960, %v2939
    %v2962 = vmul.f32 %v2960, %v2940
    %v2963 = vadd.f32 %v2931, %v2961
    %v2964 = vadd.f32 %v2932, %v2962
    %2965 = vrot.lane.b32.xlu0 %v2695, 15
    %v2966 = vpop.permute.xlu0 %2965
    %2967 = vrot.lane.b32.xlu0 %v2696, 15
    %v2968 = vpop.permute.xlu0 %2967
    %v2969 = vsel %vm429, %v2966, %v2968
    %v2970 = vsel %vm429, %v2968, %v2966
    %v2971 = vsel %vm423, %v2970, 0.0
    %v2972 = vsel %vm424, %v2969, 0.0
    %s2973 = sld [smem:[#allocation2 + $0x140]]
    %v2974 = vstv %s2973
    %v2975 = vmul.f32 %v2974, %v2971
    %v2976 = vmul.f32 %v2974, %v2972
    %v2977 = vadd.f32 %v2945, %v2975
    %v2978 = vadd.f32 %v2946, %v2976
    %s2979 = sld [smem:[#allocation2 + $0x141]]
    %v2980 = vstv %s2979
    %v2981 = vmul.f32 %v2980, %v2971
    %v2982 = vmul.f32 %v2980, %v2972
    %v2983 = vadd.f32 %v2951, %v2981
    %v2984 = vadd.f32 %v2952, %v2982
    %s2985 = sld [smem:[#allocation2 + $0x142]]
    %v2986 = vstv %s2985
    %v2987 = vmul.f32 %v2986, %v2971
    %v2988 = vmul.f32 %v2986, %v2972
    %v2989 = vadd.f32 %v2957, %v2987
    %v2990 = vadd.f32 %v2958, %v2988
    %s2991 = sld [smem:[#allocation2 + $0x143]]
    %v2992 = vstv %s2991
    %v2993 = vmul.f32 %v2992, %v2971
    %v2994 = vmul.f32 %v2992, %v2972
    %v2995 = vadd.f32 %v2963, %v2993
    %v2996 = vadd.f32 %v2964, %v2994
    %2997 = vrot.lane.b32.xlu0 %v2699, 15
    %v2998 = vpop.permute.xlu0 %2997
    %2999 = vrot.lane.b32.xlu0 %v2700, 15
    %v3000 = vpop.permute.xlu0 %2999
    %v3001 = vsel %vm429, %v2998, %v3000
    %v3002 = vsel %vm429, %v3000, %v2998
    %v3003 = vsel %vm423, %v3002, 0.0
    %v3004 = vsel %vm424, %v3001, 0.0
    %s3005 = sld [smem:[#allocation2 + $0x144]]
    %v3006 = vstv %s3005
    %v3007 = vmul.f32 %v3006, %v3003
    %v3008 = vmul.f32 %v3006, %v3004
    %v3009 = vadd.f32 %v2977, %v3007
    %v3010 = vadd.f32 %v2978, %v3008
    %s3011 = sld [smem:[#allocation2 + $0x145]]
    %v3012 = vstv %s3011
    %v3013 = vmul.f32 %v3012, %v3003
    %v3014 = vmul.f32 %v3012, %v3004
    %v3015 = vadd.f32 %v2983, %v3013
    %v3016 = vadd.f32 %v2984, %v3014
    %s3017 = sld [smem:[#allocation2 + $0x146]]
    %v3018 = vstv %s3017
    %v3019 = vmul.f32 %v3018, %v3003
    %v3020 = vmul.f32 %v3018, %v3004
    %v3021 = vadd.f32 %v2989, %v3019
    %v3022 = vadd.f32 %v2990, %v3020
    %s3023 = sld [smem:[#allocation2 + $0x147]]
    %v3024 = vstv %s3023
    %v3025 = vmul.f32 %v3024, %v3003
    %v3026 = vmul.f32 %v3024, %v3004
    %v3027 = vadd.f32 %v2995, %v3025
    %v3028 = vadd.f32 %v2996, %v3026
    %3029 = vrot.lane.b32.xlu0 %v2703, 15
    %v3030 = vpop.permute.xlu0 %3029
    %3031 = vrot.lane.b32.xlu0 %v2704, 15
    %v3032 = vpop.permute.xlu0 %3031
    %v3033 = vsel %vm429, %v3030, %v3032
    %v3034 = vsel %vm429, %v3032, %v3030
    %v3035 = vsel %vm423, %v3034, 0.0
    %v3036 = vsel %vm424, %v3033, 0.0
    %s3037 = sld [smem:[#allocation2 + $0x148]]
    %v3038 = vstv %s3037
    %v3039 = vmul.f32 %v3038, %v3035
    %v3040 = vmul.f32 %v3038, %v3036
    %v3041 = vadd.f32 %v3009, %v3039
    %v3042 = vadd.f32 %v3010, %v3040
    %s3043 = sld [smem:[#allocation2 + $0x149]]
    %v3044 = vstv %s3043
    %v3045 = vmul.f32 %v3044, %v3035
    %v3046 = vmul.f32 %v3044, %v3036
    %v3047 = vadd.f32 %v3015, %v3045
    %v3048 = vadd.f32 %v3016, %v3046
    %s3049 = sld [smem:[#allocation2 + $0x14a]]
    %v3050 = vstv %s3049
    %v3051 = vmul.f32 %v3050, %v3035
    %v3052 = vmul.f32 %v3050, %v3036
    %v3053 = vadd.f32 %v3021, %v3051
    %v3054 = vadd.f32 %v3022, %v3052
    %s3055 = sld [smem:[#allocation2 + $0x14b]]
    %v3056 = vstv %s3055
    %v3057 = vmul.f32 %v3056, %v3035
    %v3058 = vmul.f32 %v3056, %v3036
    %v3059 = vadd.f32 %v3027, %v3057
    %v3060 = vadd.f32 %v3028, %v3058
    %3061 = vrot.lane.b32.xlu0 %v2707, 15
    %v3062 = vpop.permute.xlu0 %3061
    %3063 = vrot.lane.b32.xlu0 %v2708, 15
    %v3064 = vpop.permute.xlu0 %3063
    %v3065 = vsel %vm429, %v3062, %v3064
    %v3066 = vsel %vm429, %v3064, %v3062
    %v3067 = vsel %vm423, %v3066, 0.0
    %v3068 = vsel %vm424, %v3065, 0.0
    %s3069 = sld [smem:[#allocation2 + $0x14c]]
    %v3070 = vstv %s3069
    %v3071 = vmul.f32 %v3070, %v3067
    %v3072 = vmul.f32 %v3070, %v3068
    %v3073 = vadd.f32 %v3041, %v3071
    %v3074 = vadd.f32 %v3042, %v3072
    %s3075 = sld [smem:[#allocation2 + $0x14d]]
    %v3076 = vstv %s3075
    %v3077 = vmul.f32 %v3076, %v3067
    %v3078 = vmul.f32 %v3076, %v3068
    %v3079 = vadd.f32 %v3047, %v3077
    %v3080 = vadd.f32 %v3048, %v3078
    %s3081 = sld [smem:[#allocation2 + $0x14e]]
    %v3082 = vstv %s3081
    %v3083 = vmul.f32 %v3082, %v3067
    %v3084 = vmul.f32 %v3082, %v3068
    %v3085 = vadd.f32 %v3053, %v3083
    %v3086 = vadd.f32 %v3054, %v3084
    %s3087 = sld [smem:[#allocation2 + $0x14f]]
    %v3088 = vstv %s3087
    %v3089 = vmul.f32 %v3088, %v3067
    %v3090 = vmul.f32 %v3088, %v3068
    %v3091 = vadd.f32 %v3059, %v3089
    %v3092 = vadd.f32 %v3060, %v3090
    %3093 = vrot.lane.b32.xlu0 %v2695, 1
    %v3094 = vpop.permute.xlu0 %3093
    %3095 = vrot.lane.b32.xlu0 %v2696, 1
    %v3096 = vpop.permute.xlu0 %3095
    %v3097 = vsel %vm568, %v3094, %v3096
    %v3098 = vsel %vm568, %v3096, %v3094
    %v3099 = vsel %vm562, %v3098, 0.0
    %v3100 = vsel %vm563, %v3097, 0.0
    %s3101 = sld [smem:[#allocation2 + $0x150]]
    %v3102 = vstv %s3101
    %v3103 = vmul.f32 %v3102, %v3099
    %v3104 = vmul.f32 %v3102, %v3100
    %v3105 = vadd.f32 %v3073, %v3103
    %v3106 = vadd.f32 %v3074, %v3104
    %s3107 = sld [smem:[#allocation2 + $0x151]]
    %v3108 = vstv %s3107
    %v3109 = vmul.f32 %v3108, %v3099
    %v3110 = vmul.f32 %v3108, %v3100
    %v3111 = vadd.f32 %v3079, %v3109
    %v3112 = vadd.f32 %v3080, %v3110
    %s3113 = sld [smem:[#allocation2 + $0x152]]
    %v3114 = vstv %s3113
    %v3115 = vmul.f32 %v3114, %v3099
    %v3116 = vmul.f32 %v3114, %v3100
    %v3117 = vadd.f32 %v3085, %v3115
    %v3118 = vadd.f32 %v3086, %v3116
    %s3119 = sld [smem:[#allocation2 + $0x153]]
    %v3120 = vstv %s3119
    %v3121 = vmul.f32 %v3120, %v3099
    %v3122 = vmul.f32 %v3120, %v3100
    %v3123 = vadd.f32 %v3091, %v3121
    %v3124 = vadd.f32 %v3092, %v3122
    %3125 = vrot.lane.b32.xlu0 %v2699, 1
    %v3126 = vpop.permute.xlu0 %3125
    %3127 = vrot.lane.b32.xlu0 %v2700, 1
    %v3128 = vpop.permute.xlu0 %3127
    %v3129 = vsel %vm568, %v3126, %v3128
    %v3130 = vsel %vm568, %v3128, %v3126
    %v3131 = vsel %vm562, %v3130, 0.0
    %v3132 = vsel %vm563, %v3129, 0.0
    %s3133 = sld [smem:[#allocation2 + $0x154]]
    %v3134 = vstv %s3133
    %v3135 = vmul.f32 %v3134, %v3131
    %v3136 = vmul.f32 %v3134, %v3132
    %v3137 = vadd.f32 %v3105, %v3135
    %v3138 = vadd.f32 %v3106, %v3136
    %s3139 = sld [smem:[#allocation2 + $0x155]]
    %v3140 = vstv %s3139
    %v3141 = vmul.f32 %v3140, %v3131
    %v3142 = vmul.f32 %v3140, %v3132
    %v3143 = vadd.f32 %v3111, %v3141
    %v3144 = vadd.f32 %v3112, %v3142
    %s3145 = sld [smem:[#allocation2 + $0x156]]
    %v3146 = vstv %s3145
    %v3147 = vmul.f32 %v3146, %v3131
    %v3148 = vmul.f32 %v3146, %v3132
    %v3149 = vadd.f32 %v3117, %v3147
    %v3150 = vadd.f32 %v3118, %v3148
    %s3151 = sld [smem:[#allocation2 + $0x157]]
    %v3152 = vstv %s3151
    %v3153 = vmul.f32 %v3152, %v3131
    %v3154 = vmul.f32 %v3152, %v3132
    %v3155 = vadd.f32 %v3123, %v3153
    %v3156 = vadd.f32 %v3124, %v3154
    %3157 = vrot.lane.b32.xlu0 %v2703, 1
    %v3158 = vpop.permute.xlu0 %3157
    %3159 = vrot.lane.b32.xlu0 %v2704, 1
    %v3160 = vpop.permute.xlu0 %3159
    %v3161 = vsel %vm568, %v3158, %v3160
    %v3162 = vsel %vm568, %v3160, %v3158
    %v3163 = vsel %vm562, %v3162, 0.0
    %v3164 = vsel %vm563, %v3161, 0.0
    %s3165 = sld [smem:[#allocation2 + $0x158]]
    %v3166 = vstv %s3165
    %v3167 = vmul.f32 %v3166, %v3163
    %v3168 = vmul.f32 %v3166, %v3164
    %v3169 = vadd.f32 %v3137, %v3167
    %v3170 = vadd.f32 %v3138, %v3168
    %s3171 = sld [smem:[#allocation2 + $0x159]]
    %v3172 = vstv %s3171
    %v3173 = vmul.f32 %v3172, %v3163
    %v3174 = vmul.f32 %v3172, %v3164
    %v3175 = vadd.f32 %v3143, %v3173
    %v3176 = vadd.f32 %v3144, %v3174
    %s3177 = sld [smem:[#allocation2 + $0x15a]]
    %v3178 = vstv %s3177
    %v3179 = vmul.f32 %v3178, %v3163
    %v3180 = vmul.f32 %v3178, %v3164
    %v3181 = vadd.f32 %v3149, %v3179
    %v3182 = vadd.f32 %v3150, %v3180
    %s3183 = sld [smem:[#allocation2 + $0x15b]]
    %v3184 = vstv %s3183
    %v3185 = vmul.f32 %v3184, %v3163
    %v3186 = vmul.f32 %v3184, %v3164
    %v3187 = vadd.f32 %v3155, %v3185
    %v3188 = vadd.f32 %v3156, %v3186
    %3189 = vrot.lane.b32.xlu0 %v2707, 1
    %v3190 = vpop.permute.xlu0 %3189
    %3191 = vrot.lane.b32.xlu0 %v2708, 1
    %v3192 = vpop.permute.xlu0 %3191
    %v3193 = vsel %vm568, %v3190, %v3192
    %v3194 = vsel %vm568, %v3192, %v3190
    %v3195 = vsel %vm562, %v3194, 0.0
    %v3196 = vsel %vm563, %v3193, 0.0
    %s3197 = sld [smem:[#allocation2 + $0x15c]]
    %v3198 = vstv %s3197
    %v3199 = vmul.f32 %v3198, %v3195
    %v3200 = vmul.f32 %v3198, %v3196
    %v3201 = vadd.f32 %v3169, %v3199
    %v3202 = vadd.f32 %v3170, %v3200
    %s3203 = sld [smem:[#allocation2 + $0x15d]]
    %v3204 = vstv %s3203
    %v3205 = vmul.f32 %v3204, %v3195
    %v3206 = vmul.f32 %v3204, %v3196
    %v3207 = vadd.f32 %v3175, %v3205
    %v3208 = vadd.f32 %v3176, %v3206
    %s3209 = sld [smem:[#allocation2 + $0x15e]]
    %v3210 = vstv %s3209
    %v3211 = vmul.f32 %v3210, %v3195
    %v3212 = vmul.f32 %v3210, %v3196
    %v3213 = vadd.f32 %v3181, %v3211
    %v3214 = vadd.f32 %v3182, %v3212
    %s3215 = sld [smem:[#allocation2 + $0x15f]]
    %v3216 = vstv %s3215
    %v3217 = vmul.f32 %v3216, %v3195
    %v3218 = vmul.f32 %v3216, %v3196
    %v3219 = vadd.f32 %v3187, %v3217
    %v3220 = vadd.f32 %v3188, %v3218
    %s3221 = sld [smem:[#allocation2 + $0x160]]
    %v3222 = vstv %s3221
    %v3223 = vmul.f32 %v3222, %v2695
    %v3224 = vmul.f32 %v3222, %v2696
    %v3225 = vadd.f32 %v3201, %v3223
    %v3226 = vadd.f32 %v3202, %v3224
    %s3227 = sld [smem:[#allocation2 + $0x161]]
    %v3228 = vstv %s3227
    %v3229 = vmul.f32 %v3228, %v2695
    %v3230 = vmul.f32 %v3228, %v2696
    %v3231 = vadd.f32 %v3207, %v3229
    %v3232 = vadd.f32 %v3208, %v3230
    %s3233 = sld [smem:[#allocation2 + $0x162]]
    %v3234 = vstv %s3233
    %v3235 = vmul.f32 %v3234, %v2695
    %v3236 = vmul.f32 %v3234, %v2696
    %v3237 = vadd.f32 %v3213, %v3235
    %v3238 = vadd.f32 %v3214, %v3236
    %s3239 = sld [smem:[#allocation2 + $0x163]]
    %v3240 = vstv %s3239
    %v3241 = vmul.f32 %v3240, %v2695
    %v3242 = vmul.f32 %v3240, %v2696
    %v3243 = vadd.f32 %v3219, %v3241
    %v3244 = vadd.f32 %v3220, %v3242
    %s3245 = sld [smem:[#allocation2 + $0x164]]
    %v3246 = vstv %s3245
    %v3247 = vmul.f32 %v3246, %v2699
    %v3248 = vmul.f32 %v3246, %v2700
    %v3249 = vadd.f32 %v3225, %v3247
    %v3250 = vadd.f32 %v3226, %v3248
    %s3251 = sld [smem:[#allocation2 + $0x165]]
    %v3252 = vstv %s3251
    %v3253 = vmul.f32 %v3252, %v2699
    %v3254 = vmul.f32 %v3252, %v2700
    %v3255 = vadd.f32 %v3231, %v3253
    %v3256 = vadd.f32 %v3232, %v3254
    %s3257 = sld [smem:[#allocation2 + $0x166]]
    %v3258 = vstv %s3257
    %v3259 = vmul.f32 %v3258, %v2699
    %v3260 = vmul.f32 %v3258, %v2700
    %v3261 = vadd.f32 %v3237, %v3259
    %v3262 = vadd.f32 %v3238, %v3260
    %s3263 = sld [smem:[#allocation2 + $0x167]]
    %v3264 = vstv %s3263
    %v3265 = vmul.f32 %v3264, %v2699
    %v3266 = vmul.f32 %v3264, %v2700
    %v3267 = vadd.f32 %v3243, %v3265
    %v3268 = vadd.f32 %v3244, %v3266
    %s3269 = sld [smem:[#allocation2 + $0x168]]
    %v3270 = vstv %s3269
    %v3271 = vmul.f32 %v3270, %v2703
    %v3272 = vmul.f32 %v3270, %v2704
    %v3273 = vadd.f32 %v3249, %v3271
    %v3274 = vadd.f32 %v3250, %v3272
    %s3275 = sld [smem:[#allocation2 + $0x169]]
    %v3276 = vstv %s3275
    %v3277 = vmul.f32 %v3276, %v2703
    %v3278 = vmul.f32 %v3276, %v2704
    %v3279 = vadd.f32 %v3255, %v3277
    %v3280 = vadd.f32 %v3256, %v3278
    %s3281 = sld [smem:[#allocation2 + $0x16a]]
    %v3282 = vstv %s3281
    %v3283 = vmul.f32 %v3282, %v2703
    %v3284 = vmul.f32 %v3282, %v2704
    %v3285 = vadd.f32 %v3261, %v3283
    %v3286 = vadd.f32 %v3262, %v3284
    %s3287 = sld [smem:[#allocation2 + $0x16b]]
    %v3288 = vstv %s3287
    %v3289 = vmul.f32 %v3288, %v2703
    %v3290 = vmul.f32 %v3288, %v2704
    %v3291 = vadd.f32 %v3267, %v3289
    %v3292 = vadd.f32 %v3268, %v3290
    %s3293 = sld [smem:[#allocation2 + $0x16c]]
    %v3294 = vstv %s3293
    %v3295 = vmul.f32 %v3294, %v2707
    %v3296 = vmul.f32 %v3294, %v2708
    %v3297 = vadd.f32 %v3273, %v3295
    %v3298 = vadd.f32 %v3274, %v3296
    %s3299 = sld [smem:[#allocation2 + $0x16d]]
    %v3300 = vstv %s3299
    %v3301 = vmul.f32 %v3300, %v2707
    %v3302 = vmul.f32 %v3300, %v2708
    %v3303 = vadd.f32 %v3279, %v3301
    %v3304 = vadd.f32 %v3280, %v3302
    %s3305 = sld [smem:[#allocation2 + $0x16e]]
    %v3306 = vstv %s3305
    %v3307 = vmul.f32 %v3306, %v2707
    %v3308 = vmul.f32 %v3306, %v2708
    %v3309 = vadd.f32 %v3285, %v3307
    %v3310 = vadd.f32 %v3286, %v3308
    %s3311 = sld [smem:[#allocation2 + $0x16f]]
    %v3312 = vstv %s3311
    %v3313 = vmul.f32 %v3312, %v2707
    %v3314 = vmul.f32 %v3312, %v2708
    %v3315 = vadd.f32 %v3291, %v3313
    %v3316 = vadd.f32 %v3292, %v3314
    %3317 = vrot.lane.b32.xlu0 %v2695, 127
    %v3318 = vpop.permute.xlu0 %3317
    %3319 = vrot.lane.b32.xlu0 %v2696, 127
    %v3320 = vpop.permute.xlu0 %3319
    %v3321 = vsel %vm957, %v3318, %v3320
    %v3322 = vsel %vm957, %v3320, %v3318
    %v3323 = vsel %vm951, %v3321, 0.0
    %v3324 = vsel %vm952, %v3322, 0.0
    %s3325 = sld [smem:[#allocation2 + $0x170]]
    %v3326 = vstv %s3325
    %v3327 = vmul.f32 %v3326, %v3323
    %v3328 = vmul.f32 %v3326, %v3324
    %v3329 = vadd.f32 %v3297, %v3327
    %v3330 = vadd.f32 %v3298, %v3328
    %s3331 = sld [smem:[#allocation2 + $0x171]]
    %v3332 = vstv %s3331
    %v3333 = vmul.f32 %v3332, %v3323
    %v3334 = vmul.f32 %v3332, %v3324
    %v3335 = vadd.f32 %v3303, %v3333
    %v3336 = vadd.f32 %v3304, %v3334
    %s3337 = sld [smem:[#allocation2 + $0x172]]
    %v3338 = vstv %s3337
    %v3339 = vmul.f32 %v3338, %v3323
    %v3340 = vmul.f32 %v3338, %v3324
    %v3341 = vadd.f32 %v3309, %v3339
    %v3342 = vadd.f32 %v3310, %v3340
    %s3343 = sld [smem:[#allocation2 + $0x173]]
    %v3344 = vstv %s3343
    %v3345 = vmul.f32 %v3344, %v3323
    %v3346 = vmul.f32 %v3344, %v3324
    %v3347 = vadd.f32 %v3315, %v3345
    %v3348 = vadd.f32 %v3316, %v3346
    %3349 = vrot.lane.b32.xlu0 %v2699, 127
    %v3350 = vpop.permute.xlu0 %3349
    %3351 = vrot.lane.b32.xlu0 %v2700, 127
    %v3352 = vpop.permute.xlu0 %3351
    %v3353 = vsel %vm957, %v3350, %v3352
    %v3354 = vsel %vm957, %v3352, %v3350
    %v3355 = vsel %vm951, %v3353, 0.0
    %v3356 = vsel %vm952, %v3354, 0.0
    %s3357 = sld [smem:[#allocation2 + $0x174]]
    %v3358 = vstv %s3357
    %v3359 = vmul.f32 %v3358, %v3355
    %v3360 = vmul.f32 %v3358, %v3356
    %v3361 = vadd.f32 %v3329, %v3359
    %v3362 = vadd.f32 %v3330, %v3360
    %s3363 = sld [smem:[#allocation2 + $0x175]]
    %v3364 = vstv %s3363
    %v3365 = vmul.f32 %v3364, %v3355
    %v3366 = vmul.f32 %v3364, %v3356
    %v3367 = vadd.f32 %v3335, %v3365
    %v3368 = vadd.f32 %v3336, %v3366
    %s3369 = sld [smem:[#allocation2 + $0x176]]
    %v3370 = vstv %s3369
    %v3371 = vmul.f32 %v3370, %v3355
    %v3372 = vmul.f32 %v3370, %v3356
    %v3373 = vadd.f32 %v3341, %v3371
    %v3374 = vadd.f32 %v3342, %v3372
    %s3375 = sld [smem:[#allocation2 + $0x177]]
    %v3376 = vstv %s3375
    %v3377 = vmul.f32 %v3376, %v3355
    %v3378 = vmul.f32 %v3376, %v3356
    %v3379 = vadd.f32 %v3347, %v3377
    %v3380 = vadd.f32 %v3348, %v3378
    %3381 = vrot.lane.b32.xlu0 %v2703, 127
    %v3382 = vpop.permute.xlu0 %3381
    %3383 = vrot.lane.b32.xlu0 %v2704, 127
    %v3384 = vpop.permute.xlu0 %3383
    %v3385 = vsel %vm957, %v3382, %v3384
    %v3386 = vsel %vm957, %v3384, %v3382
    %v3387 = vsel %vm951, %v3385, 0.0
    %v3388 = vsel %vm952, %v3386, 0.0
    %s3389 = sld [smem:[#allocation2 + $0x178]]
    %v3390 = vstv %s3389
    %v3391 = vmul.f32 %v3390, %v3387
    %v3392 = vmul.f32 %v3390, %v3388
    %v3393 = vadd.f32 %v3361, %v3391
    %v3394 = vadd.f32 %v3362, %v3392
    %s3395 = sld [smem:[#allocation2 + $0x179]]
    %v3396 = vstv %s3395
    %v3397 = vmul.f32 %v3396, %v3387
    %v3398 = vmul.f32 %v3396, %v3388
    %v3399 = vadd.f32 %v3367, %v3397
    %v3400 = vadd.f32 %v3368, %v3398
    %s3401 = sld [smem:[#allocation2 + $0x17a]]
    %v3402 = vstv %s3401
    %v3403 = vmul.f32 %v3402, %v3387
    %v3404 = vmul.f32 %v3402, %v3388
    %v3405 = vadd.f32 %v3373, %v3403
    %v3406 = vadd.f32 %v3374, %v3404
    %s3407 = sld [smem:[#allocation2 + $0x17b]]
    %v3408 = vstv %s3407
    %v3409 = vmul.f32 %v3408, %v3387
    %v3410 = vmul.f32 %v3408, %v3388
    %v3411 = vadd.f32 %v3379, %v3409
    %v3412 = vadd.f32 %v3380, %v3410
    %3413 = vrot.lane.b32.xlu0 %v2707, 127
    %v3414 = vpop.permute.xlu0 %3413
    %3415 = vrot.lane.b32.xlu0 %v2708, 127
    %v3416 = vpop.permute.xlu0 %3415
    %v3417 = vsel %vm957, %v3414, %v3416
    %v3418 = vsel %vm957, %v3416, %v3414
    %v3419 = vsel %vm951, %v3417, 0.0
    %v3420 = vsel %vm952, %v3418, 0.0
    %s3421 = sld [smem:[#allocation2 + $0x17c]]
    %v3422 = vstv %s3421
    %v3423 = vmul.f32 %v3422, %v3419
    %v3424 = vmul.f32 %v3422, %v3420
    %v3425 = vadd.f32 %v3393, %v3423
    %v3426 = vadd.f32 %v3394, %v3424
    %s3427 = sld [smem:[#allocation2 + $0x17d]]
    %v3428 = vstv %s3427
    %v3429 = vmul.f32 %v3428, %v3419
    %v3430 = vmul.f32 %v3428, %v3420
    %v3431 = vadd.f32 %v3399, %v3429
    %v3432 = vadd.f32 %v3400, %v3430
    %s3433 = sld [smem:[#allocation2 + $0x17e]]
    %v3434 = vstv %s3433
    %v3435 = vmul.f32 %v3434, %v3419
    %v3436 = vmul.f32 %v3434, %v3420
    %v3437 = vadd.f32 %v3405, %v3435
    %v3438 = vadd.f32 %v3406, %v3436
    %s3439 = sld [smem:[#allocation2 + $0x17f]]
    %v3440 = vstv %s3439
    %v3441 = vmul.f32 %v3440, %v3419
    %v3442 = vmul.f32 %v3440, %v3420
    %v3443 = vadd.f32 %v3411, %v3441
    %v3444 = vadd.f32 %v3412, %v3442
    %3445 = vrot.lane.b32.xlu0 %v2695, 113
    %v3446 = vpop.permute.xlu0 %3445
    %3447 = vrot.lane.b32.xlu0 %v2696, 113
    %v3448 = vpop.permute.xlu0 %3447
    %v3449 = vsel %vm1098, %v3446, %v3448
    %v3450 = vsel %vm1098, %v3448, %v3446
    %v3451 = vsel %vm1092, %v3449, 0.0
    %v3452 = vsel %vm1093, %v3450, 0.0
    %s3453 = sld [smem:[#allocation2 + $0x180]]
    %v3454 = vstv %s3453
    %v3455 = vmul.f32 %v3454, %v3451
    %v3456 = vmul.f32 %v3454, %v3452
    %v3457 = vadd.f32 %v3425, %v3455
    %v3458 = vadd.f32 %v3426, %v3456
    %s3459 = sld [smem:[#allocation2 + $0x181]]
    %v3460 = vstv %s3459
    %v3461 = vmul.f32 %v3460, %v3451
    %v3462 = vmul.f32 %v3460, %v3452
    %v3463 = vadd.f32 %v3431, %v3461
    %v3464 = vadd.f32 %v3432, %v3462
    %s3465 = sld [smem:[#allocation2 + $0x182]]
    %v3466 = vstv %s3465
    %v3467 = vmul.f32 %v3466, %v3451
    %v3468 = vmul.f32 %v3466, %v3452
    %v3469 = vadd.f32 %v3437, %v3467
    %v3470 = vadd.f32 %v3438, %v3468
    %s3471 = sld [smem:[#allocation2 + $0x183]]
    %v3472 = vstv %s3471
    %v3473 = vmul.f32 %v3472, %v3451
    %v3474 = vmul.f32 %v3472, %v3452
    %v3475 = vadd.f32 %v3443, %v3473
    %v3476 = vadd.f32 %v3444, %v3474
    %3477 = vrot.lane.b32.xlu0 %v2699, 113
    %v3478 = vpop.permute.xlu0 %3477
    %3479 = vrot.lane.b32.xlu0 %v2700, 113
    %v3480 = vpop.permute.xlu0 %3479
    %v3481 = vsel %vm1098, %v3478, %v3480
    %v3482 = vsel %vm1098, %v3480, %v3478
    %v3483 = vsel %vm1092, %v3481, 0.0
    %v3484 = vsel %vm1093, %v3482, 0.0
    %s3485 = sld [smem:[#allocation2 + $0x184]]
    %v3486 = vstv %s3485
    %v3487 = vmul.f32 %v3486, %v3483
    %v3488 = vmul.f32 %v3486, %v3484
    %v3489 = vadd.f32 %v3457, %v3487
    %v3490 = vadd.f32 %v3458, %v3488
    %s3491 = sld [smem:[#allocation2 + $0x185]]
    %v3492 = vstv %s3491
    %v3493 = vmul.f32 %v3492, %v3483
    %v3494 = vmul.f32 %v3492, %v3484
    %v3495 = vadd.f32 %v3463, %v3493
    %v3496 = vadd.f32 %v3464, %v3494
    %s3497 = sld [smem:[#allocation2 + $0x186]]
    %v3498 = vstv %s3497
    %v3499 = vmul.f32 %v3498, %v3483
    %v3500 = vmul.f32 %v3498, %v3484
    %v3501 = vadd.f32 %v3469, %v3499
    %v3502 = vadd.f32 %v3470, %v3500
    %s3503 = sld [smem:[#allocation2 + $0x187]]
    %v3504 = vstv %s3503
    %v3505 = vmul.f32 %v3504, %v3483
    %v3506 = vmul.f32 %v3504, %v3484
    %v3507 = vadd.f32 %v3475, %v3505
    %v3508 = vadd.f32 %v3476, %v3506
    %3509 = vrot.lane.b32.xlu0 %v2703, 113
    %v3510 = vpop.permute.xlu0 %3509
    %3511 = vrot.lane.b32.xlu0 %v2704, 113
    %v3512 = vpop.permute.xlu0 %3511
    %v3513 = vsel %vm1098, %v3510, %v3512
    %v3514 = vsel %vm1098, %v3512, %v3510
    %v3515 = vsel %vm1092, %v3513, 0.0
    %v3516 = vsel %vm1093, %v3514, 0.0
    %s3517 = sld [smem:[#allocation2 + $0x188]]
    %v3518 = vstv %s3517
    %v3519 = vmul.f32 %v3518, %v3515
    %v3520 = vmul.f32 %v3518, %v3516
    %v3521 = vadd.f32 %v3489, %v3519
    %v3522 = vadd.f32 %v3490, %v3520
    %s3523 = sld [smem:[#allocation2 + $0x189]]
    %v3524 = vstv %s3523
    %v3525 = vmul.f32 %v3524, %v3515
    %v3526 = vmul.f32 %v3524, %v3516
    %v3527 = vadd.f32 %v3495, %v3525
    %v3528 = vadd.f32 %v3496, %v3526
    %s3529 = sld [smem:[#allocation2 + $0x18a]]
    %v3530 = vstv %s3529
    %v3531 = vmul.f32 %v3530, %v3515
    %v3532 = vmul.f32 %v3530, %v3516
    %v3533 = vadd.f32 %v3501, %v3531
    %v3534 = vadd.f32 %v3502, %v3532
    %s3535 = sld [smem:[#allocation2 + $0x18b]]
    %v3536 = vstv %s3535
    %v3537 = vmul.f32 %v3536, %v3515
    %v3538 = vmul.f32 %v3536, %v3516
    %v3539 = vadd.f32 %v3507, %v3537
    %v3540 = vadd.f32 %v3508, %v3538
    %3541 = vrot.lane.b32.xlu0 %v2707, 113
    %v3542 = vpop.permute.xlu0 %3541
    %3543 = vrot.lane.b32.xlu0 %v2708, 113
    %v3544 = vpop.permute.xlu0 %3543
    %v3545 = vsel %vm1098, %v3542, %v3544
    %v3546 = vsel %vm1098, %v3544, %v3542
    %v3547 = vsel %vm1092, %v3545, 0.0
    %v3548 = vsel %vm1093, %v3546, 0.0
    %s3549 = sld [smem:[#allocation2 + $0x18c]]
    %v3550 = vstv %s3549
    %v3551 = vmul.f32 %v3550, %v3547
    %v3552 = vmul.f32 %v3550, %v3548
    %v3553 = vadd.f32 %v3521, %v3551
    %v3554 = vadd.f32 %v3522, %v3552
    %s3555 = sld [smem:[#allocation2 + $0x18d]]
    %v3556 = vstv %s3555
    %v3557 = vmul.f32 %v3556, %v3547
    %v3558 = vmul.f32 %v3556, %v3548
    %v3559 = vadd.f32 %v3527, %v3557
    %v3560 = vadd.f32 %v3528, %v3558
    %s3561 = sld [smem:[#allocation2 + $0x18e]]
    %v3562 = vstv %s3561
    %v3563 = vmul.f32 %v3562, %v3547
    %v3564 = vmul.f32 %v3562, %v3548
    %v3565 = vadd.f32 %v3533, %v3563
    %v3566 = vadd.f32 %v3534, %v3564
    %s3567 = sld [smem:[#allocation2 + $0x18f]]
    %v3568 = vstv %s3567
    %v3569 = vmul.f32 %v3568, %v3547
    %v3570 = vmul.f32 %v3568, %v3548
    %v3571 = vadd.f32 %v3539, %v3569
    %v3572 = vadd.f32 %v3540, %v3570
    %3573 = vrot.lane.b32.xlu0 %v2695, 112
    %v3574 = vpop.permute.xlu0 %3573
    %3575 = vrot.lane.b32.xlu0 %v2696, 112
    %v3576 = vpop.permute.xlu0 %3575
    %v3577 = vsel %vm1231, %v3574, %v3576
    %v3578 = vsel %vm1231, %v3576, %v3574
    %v3579 = vsel %vm1225, %v3577, 0.0
    %v3580 = vsel %vm1226, %v3578, 0.0
    %s3581 = sld [smem:[#allocation2 + $0x190]]
    %v3582 = vstv %s3581
    %v3583 = vmul.f32 %v3582, %v3579
    %v3584 = vmul.f32 %v3582, %v3580
    %v3585 = vadd.f32 %v3553, %v3583
    %v3586 = vadd.f32 %v3554, %v3584
    %s3587 = sld [smem:[#allocation2 + $0x191]]
    %v3588 = vstv %s3587
    %v3589 = vmul.f32 %v3588, %v3579
    %v3590 = vmul.f32 %v3588, %v3580
    %v3591 = vadd.f32 %v3559, %v3589
    %v3592 = vadd.f32 %v3560, %v3590
    %s3593 = sld [smem:[#allocation2 + $0x192]]
    %v3594 = vstv %s3593
    %v3595 = vmul.f32 %v3594, %v3579
    %v3596 = vmul.f32 %v3594, %v3580
    %v3597 = vadd.f32 %v3565, %v3595
    %v3598 = vadd.f32 %v3566, %v3596
    %s3599 = sld [smem:[#allocation2 + $0x193]]
    %v3600 = vstv %s3599
    %v3601 = vmul.f32 %v3600, %v3579
    %v3602 = vmul.f32 %v3600, %v3580
    %v3603 = vadd.f32 %v3571, %v3601
    %v3604 = vadd.f32 %v3572, %v3602
    %3605 = vrot.lane.b32.xlu0 %v2699, 112
    %v3606 = vpop.permute.xlu0 %3605
    %3607 = vrot.lane.b32.xlu0 %v2700, 112
    %v3608 = vpop.permute.xlu0 %3607
    %v3609 = vsel %vm1231, %v3606, %v3608
    %v3610 = vsel %vm1231, %v3608, %v3606
    %v3611 = vsel %vm1225, %v3609, 0.0
    %v3612 = vsel %vm1226, %v3610, 0.0
    %s3613 = sld [smem:[#allocation2 + $0x194]]
    %v3614 = vstv %s3613
    %v3615 = vmul.f32 %v3614, %v3611
    %v3616 = vmul.f32 %v3614, %v3612
    %v3617 = vadd.f32 %v3585, %v3615
    %v3618 = vadd.f32 %v3586, %v3616
    %s3619 = sld [smem:[#allocation2 + $0x195]]
    %v3620 = vstv %s3619
    %v3621 = vmul.f32 %v3620, %v3611
    %v3622 = vmul.f32 %v3620, %v3612
    %v3623 = vadd.f32 %v3591, %v3621
    %v3624 = vadd.f32 %v3592, %v3622
    %s3625 = sld [smem:[#allocation2 + $0x196]]
    %v3626 = vstv %s3625
    %v3627 = vmul.f32 %v3626, %v3611
    %v3628 = vmul.f32 %v3626, %v3612
    %v3629 = vadd.f32 %v3597, %v3627
    %v3630 = vadd.f32 %v3598, %v3628
    %s3631 = sld [smem:[#allocation2 + $0x197]]
    %v3632 = vstv %s3631
    %v3633 = vmul.f32 %v3632, %v3611
    %v3634 = vmul.f32 %v3632, %v3612
    %v3635 = vadd.f32 %v3603, %v3633
    %v3636 = vadd.f32 %v3604, %v3634
    %3637 = vrot.lane.b32.xlu0 %v2703, 112
    %v3638 = vpop.permute.xlu0 %3637
    %3639 = vrot.lane.b32.xlu0 %v2704, 112
    %v3640 = vpop.permute.xlu0 %3639
    %v3641 = vsel %vm1231, %v3638, %v3640
    %v3642 = vsel %vm1231, %v3640, %v3638
    %v3643 = vsel %vm1225, %v3641, 0.0
    %v3644 = vsel %vm1226, %v3642, 0.0
    %s3645 = sld [smem:[#allocation2 + $0x198]]
    %v3646 = vstv %s3645
    %v3647 = vmul.f32 %v3646, %v3643
    %v3648 = vmul.f32 %v3646, %v3644
    %v3649 = vadd.f32 %v3617, %v3647
    %v3650 = vadd.f32 %v3618, %v3648
    %s3651 = sld [smem:[#allocation2 + $0x199]]
    %v3652 = vstv %s3651
    %v3653 = vmul.f32 %v3652, %v3643
    %v3654 = vmul.f32 %v3652, %v3644
    %v3655 = vadd.f32 %v3623, %v3653
    %v3656 = vadd.f32 %v3624, %v3654
    %s3657 = sld [smem:[#allocation2 + $0x19a]]
    %v3658 = vstv %s3657
    %v3659 = vmul.f32 %v3658, %v3643
    %v3660 = vmul.f32 %v3658, %v3644
    %v3661 = vadd.f32 %v3629, %v3659
    %v3662 = vadd.f32 %v3630, %v3660
    %s3663 = sld [smem:[#allocation2 + $0x19b]]
    %v3664 = vstv %s3663
    %v3665 = vmul.f32 %v3664, %v3643
    %v3666 = vmul.f32 %v3664, %v3644
    %v3667 = vadd.f32 %v3635, %v3665
    %v3668 = vadd.f32 %v3636, %v3666
    %3669 = vrot.lane.b32.xlu0 %v2707, 112
    %v3670 = vpop.permute.xlu0 %3669
    %3671 = vrot.lane.b32.xlu0 %v2708, 112
    %v3672 = vpop.permute.xlu0 %3671
    %v3673 = vsel %vm1231, %v3670, %v3672
    %v3674 = vsel %vm1231, %v3672, %v3670
    %v3675 = vsel %vm1225, %v3673, 0.0
    %v3676 = vsel %vm1226, %v3674, 0.0
    %s3677 = sld [smem:[#allocation2 + $0x19c]]
    %v3678 = vstv %s3677
    %v3679 = vmul.f32 %v3678, %v3675
    %v3680 = vmul.f32 %v3678, %v3676
    %v3681 = vadd.f32 %v3649, %v3679
    %v3682 = vadd.f32 %v3650, %v3680
    %s3683 = sld [smem:[#allocation2 + $0x19d]]
    %v3684 = vstv %s3683
    %v3685 = vmul.f32 %v3684, %v3675
    %v3686 = vmul.f32 %v3684, %v3676
    %v3687 = vadd.f32 %v3655, %v3685
    %v3688 = vadd.f32 %v3656, %v3686
    %s3689 = sld [smem:[#allocation2 + $0x19e]]
    %v3690 = vstv %s3689
    %v3691 = vmul.f32 %v3690, %v3675
    %v3692 = vmul.f32 %v3690, %v3676
    %v3693 = vadd.f32 %v3661, %v3691
    %v3694 = vadd.f32 %v3662, %v3692
    %s3695 = sld [smem:[#allocation2 + $0x19f]]
    %v3696 = vstv %s3695
    %v3697 = vmul.f32 %v3696, %v3675
    %v3698 = vmul.f32 %v3696, %v3676
    %v3699 = vadd.f32 %v3667, %v3697
    %v3700 = vadd.f32 %v3668, %v3698
    %3701 = vrot.lane.b32.xlu0 %v2695, 111
    %v3702 = vpop.permute.xlu0 %3701
    %3703 = vrot.lane.b32.xlu0 %v2696, 111
    %v3704 = vpop.permute.xlu0 %3703
    %v3705 = vsel %vm1364, %v3702, %v3704
    %v3706 = vsel %vm1364, %v3704, %v3702
    %v3707 = vsel %vm1358, %v3705, 0.0
    %v3708 = vsel %vm1359, %v3706, 0.0
    %s3709 = sld [smem:[#allocation2 + $0x1a0]]
    %v3710 = vstv %s3709
    %v3711 = vmul.f32 %v3710, %v3707
    %v3712 = vmul.f32 %v3710, %v3708
    %v3713 = vadd.f32 %v3681, %v3711
    %v3714 = vadd.f32 %v3682, %v3712
    %s3715 = sld [smem:[#allocation2 + $0x1a1]]
    %v3716 = vstv %s3715
    %v3717 = vmul.f32 %v3716, %v3707
    %v3718 = vmul.f32 %v3716, %v3708
    %v3719 = vadd.f32 %v3687, %v3717
    %v3720 = vadd.f32 %v3688, %v3718
    %s3721 = sld [smem:[#allocation2 + $0x1a2]]
    %v3722 = vstv %s3721
    %v3723 = vmul.f32 %v3722, %v3707
    %v3724 = vmul.f32 %v3722, %v3708
    %v3725 = vadd.f32 %v3693, %v3723
    %v3726 = vadd.f32 %v3694, %v3724
    %s3727 = sld [smem:[#allocation2 + $0x1a3]]
    %v3728 = vstv %s3727
    %v3729 = vmul.f32 %v3728, %v3707
    %v3730 = vmul.f32 %v3728, %v3708
    %v3731 = vadd.f32 %v3699, %v3729
    %v3732 = vadd.f32 %v3700, %v3730
    %3733 = vrot.lane.b32.xlu0 %v2699, 111
    %v3734 = vpop.permute.xlu0 %3733
    %3735 = vrot.lane.b32.xlu0 %v2700, 111
    %v3736 = vpop.permute.xlu0 %3735
    %v3737 = vsel %vm1364, %v3734, %v3736
    %v3738 = vsel %vm1364, %v3736, %v3734
    %v3739 = vsel %vm1358, %v3737, 0.0
    %v3740 = vsel %vm1359, %v3738, 0.0
    %s3741 = sld [smem:[#allocation2 + $0x1a4]]
    %v3742 = vstv %s3741
    %v3743 = vmul.f32 %v3742, %v3739
    %v3744 = vmul.f32 %v3742, %v3740
    %v3745 = vadd.f32 %v3713, %v3743
    %v3746 = vadd.f32 %v3714, %v3744
    %s3747 = sld [smem:[#allocation2 + $0x1a5]]
    %v3748 = vstv %s3747
    %v3749 = vmul.f32 %v3748, %v3739
    %v3750 = vmul.f32 %v3748, %v3740
    %v3751 = vadd.f32 %v3719, %v3749
    %v3752 = vadd.f32 %v3720, %v3750
    %s3753 = sld [smem:[#allocation2 + $0x1a6]]
    %v3754 = vstv %s3753
    %v3755 = vmul.f32 %v3754, %v3739
    %v3756 = vmul.f32 %v3754, %v3740
    %v3757 = vadd.f32 %v3725, %v3755
    %v3758 = vadd.f32 %v3726, %v3756
    %s3759 = sld [smem:[#allocation2 + $0x1a7]]
    %v3760 = vstv %s3759
    %v3761 = vmul.f32 %v3760, %v3739
    %v3762 = vmul.f32 %v3760, %v3740
    %v3763 = vadd.f32 %v3731, %v3761
    %v3764 = vadd.f32 %v3732, %v3762
    %3765 = vrot.lane.b32.xlu0 %v2703, 111
    %v3766 = vpop.permute.xlu0 %3765
    %3767 = vrot.lane.b32.xlu0 %v2704, 111
    %v3768 = vpop.permute.xlu0 %3767
    %v3769 = vsel %vm1364, %v3766, %v3768
    %v3770 = vsel %vm1364, %v3768, %v3766
    %v3771 = vsel %vm1358, %v3769, 0.0
    %v3772 = vsel %vm1359, %v3770, 0.0
    %s3773 = sld [smem:[#allocation2 + $0x1a8]]
    %v3774 = vstv %s3773
    %v3775 = vmul.f32 %v3774, %v3771
    %v3776 = vmul.f32 %v3774, %v3772
    %v3777 = vadd.f32 %v3745, %v3775
    %v3778 = vadd.f32 %v3746, %v3776
    %s3779 = sld [smem:[#allocation2 + $0x1a9]]
    %v3780 = vstv %s3779
    %v3781 = vmul.f32 %v3780, %v3771
    %v3782 = vmul.f32 %v3780, %v3772
    %v3783 = vadd.f32 %v3751, %v3781
    %v3784 = vadd.f32 %v3752, %v3782
    %s3785 = sld [smem:[#allocation2 + $0x1aa]]
    %v3786 = vstv %s3785
    %v3787 = vmul.f32 %v3786, %v3771
    %v3788 = vmul.f32 %v3786, %v3772
    %v3789 = vadd.f32 %v3757, %v3787
    %v3790 = vadd.f32 %v3758, %v3788
    %s3791 = sld [smem:[#allocation2 + $0x1ab]]
    %v3792 = vstv %s3791
    %v3793 = vmul.f32 %v3792, %v3771
    %v3794 = vmul.f32 %v3792, %v3772
    %v3795 = vadd.f32 %v3763, %v3793
    %v3796 = vadd.f32 %v3764, %v3794
    %3797 = vrot.lane.b32.xlu0 %v2707, 111
    %v3798 = vpop.permute.xlu0 %3797
    %3799 = vrot.lane.b32.xlu0 %v2708, 111
    %v3800 = vpop.permute.xlu0 %3799
    %v3801 = vsel %vm1364, %v3798, %v3800
    %v3802 = vsel %vm1364, %v3800, %v3798
    %v3803 = vsel %vm1358, %v3801, 0.0
    %v3804 = vsel %vm1359, %v3802, 0.0
    %s3805 = sld [smem:[#allocation2 + $0x1ac]]
    %v3806 = vstv %s3805
    %v3807 = vmul.f32 %v3806, %v3803
    %v3808 = vmul.f32 %v3806, %v3804
    %v3809 = vadd.f32 %v3777, %v3807
    %v3810 = vadd.f32 %v3778, %v3808
    %s3811 = sld [smem:[#allocation2 + $0x1ad]]
    %v3812 = vstv %s3811
    %v3813 = vmul.f32 %v3812, %v3803
    %v3814 = vmul.f32 %v3812, %v3804
    %v3815 = vadd.f32 %v3783, %v3813
    %v3816 = vadd.f32 %v3784, %v3814
    %s3817 = sld [smem:[#allocation2 + $0x1ae]]
    %v3818 = vstv %s3817
    %v3819 = vmul.f32 %v3818, %v3803
    %v3820 = vmul.f32 %v3818, %v3804
    %v3821 = vadd.f32 %v3789, %v3819
    %v3822 = vadd.f32 %v3790, %v3820
    %s3823 = sld [smem:[#allocation2 + $0x1af]]
    %v3824 = vstv %s3823
    %v3825 = vmul.f32 %v3824, %v3803
    %v3826 = vmul.f32 %v3824, %v3804
    %v3827 = vadd.f32 %v3795, %v3825
    %v3828 = vadd.f32 %v3796, %v3826
    %s3829 = sld [smem:[#allocation7 + $0x8]]
    %v3830 = vstv %s3829
    %v3831 = vadd.f32 %v3809, %v3830
    %v3832 = vadd.f32 %v3810, %v3830
    %s3833 = sld [smem:[#allocation7 + $0x9]]
    %v3834 = vstv %s3833
    %v3835 = vadd.f32 %v3815, %v3834
    %v3836 = vadd.f32 %v3816, %v3834
    %s3837 = sld [smem:[#allocation7 + $0xa]]
    %v3838 = vstv %s3837
    %v3839 = vadd.f32 %v3821, %v3838
    %v3840 = vadd.f32 %v3822, %v3838
    %s3841 = sld [smem:[#allocation7 + $0xb]]
    %v3842 = vstv %s3841
    %v3843 = vadd.f32 %v3827, %v3842
    %v3844 = vadd.f32 %v3828, %v3842
    %v3845 = vxor.u32 %v3831, 2147483648
    %v3846 = vxor.u32 %v3832, 2147483648
    %v3847 = vmul.f32 %v3845, 1.442695
    %v3848 = vpow.pop %v3847
    %v3849 = vmul.f32 %v3846, 1.442695
    %v3850 = vpow.pop %v3849
    %v3851 = vadd.f32 %v3848, 1.0
    %v3852 = vadd.f32 %v3850, 1.0
    %v3853 = vrcp.pop %v3851
    %v3854 = vmul.f32 1.0, %v3853
    %v3855 = vrcp.pop %v3852
    %v3856 = vmul.f32 1.0, %v3855
    %v3859 = vcombine.low %v3854, %v3856
    %v3861 = vunpack.c.l.s4 1983009808
    %v3862 = vunpack.c.0.s8 %v3861
    %v3863 = vlaneseq
    %v3864 = vshrl.u32 %v3863, 7
    %v3865 = vsub.s32 %v3862, %v3864
    %v3866 = vrot.slane %v3859, %v3865
    %v3868 = vmul.f32 %v74, %v3866
    %3869 = vst [vmem:[#allocation9] sm:$0xf] %v3868
    %v3870 = vld [vmem:[%s76] sm:$0xf]
    %v3871 = vxor.u32 %v3835, 2147483648
    %v3872 = vxor.u32 %v3836, 2147483648
    %v3873 = vmul.f32 %v3871, 1.442695
    %v3874 = vpow.pop %v3873
    %v3875 = vmul.f32 %v3872, 1.442695
    %v3876 = vpow.pop %v3875
    %v3877 = vadd.f32 %v3874, 1.0
    %v3878 = vadd.f32 %v3876, 1.0
    %v3879 = vrcp.pop %v3877
    %v3880 = vmul.f32 1.0, %v3879
    %v3881 = vrcp.pop %v3878
    %v3882 = vmul.f32 1.0, %v3881
    %v3885 = vcombine.low %v3880, %v3882
    %v3887 = vunpack.c.l.s4 1983009808
    %v3888 = vunpack.c.0.s8 %v3887
    %v3889 = vlaneseq
    %v3890 = vshrl.u32 %v3889, 7
    %v3891 = vsub.s32 %v3888, %v3890
    %v3892 = vrot.slane %v3885, %v3891
    %v3894 = vmul.f32 %v3870, %v3892
    %s3895 = scalar_lea.vmem [#allocation9], 4
    %3896 = vst [vmem:[%s3895] sm:$0xf] %v3894
    %v3897 = vld [vmem:[%s79] sm:$0xf]
    %v3898 = vxor.u32 %v3839, 2147483648
    %v3899 = vxor.u32 %v3840, 2147483648
    %v3900 = vmul.f32 %v3898, 1.442695
    %v3901 = vpow.pop %v3900
    %v3902 = vmul.f32 %v3899, 1.442695
    %v3903 = vpow.pop %v3902
    %v3904 = vadd.f32 %v3901, 1.0
    %v3905 = vadd.f32 %v3903, 1.0
    %v3906 = vrcp.pop %v3904
    %v3907 = vmul.f32 1.0, %v3906
    %v3908 = vrcp.pop %v3905
    %v3909 = vmul.f32 1.0, %v3908
    %v3912 = vcombine.low %v3907, %v3909
    %v3914 = vunpack.c.l.s4 1983009808
    %v3915 = vunpack.c.0.s8 %v3914
    %v3916 = vlaneseq
    %v3917 = vshrl.u32 %v3916, 7
    %v3918 = vsub.s32 %v3915, %v3917
    %v3919 = vrot.slane %v3912, %v3918
    %v3921 = vmul.f32 %v3897, %v3919
    %s3922 = scalar_lea.vmem [#allocation9], 8
    %3923 = vst [vmem:[%s3922] sm:$0xf] %v3921
    %v3924 = vld [vmem:[%s82] sm:$0xf]
    %v3925 = vxor.u32 %v3843, 2147483648
    %v3926 = vxor.u32 %v3844, 2147483648
    %v3927 = vmul.f32 %v3925, 1.442695
    %v3928 = vpow.pop %v3927
    %v3929 = vmul.f32 %v3926, 1.442695
    %v3930 = vpow.pop %v3929
    %v3931 = vadd.f32 %v3928, 1.0
    %v3932 = vadd.f32 %v3930, 1.0
    %v3933 = vrcp.pop %v3931
    %v3934 = vmul.f32 1.0, %v3933
    %v3935 = vrcp.pop %v3932
    %v3936 = vmul.f32 1.0, %v3935
    %v3939 = vcombine.low %v3934, %v3936
    %v3941 = vunpack.c.l.s4 1983009808
    %v3942 = vunpack.c.0.s8 %v3941
    %v3943 = vlaneseq
    %v3944 = vshrl.u32 %v3943, 7
    %v3945 = vsub.s32 %v3942, %v3944
    %v3946 = vrot.slane %v3939, %v3945
    %v3948 = vmul.f32 %v3924, %v3946
    %s3949 = scalar_lea.vmem [#allocation9], 12
    %3950 = vst [vmem:[%s3949] sm:$0xf] %v3948
    // Predicated region
    $region30: #{tpu_custom_call.1} parent=1 // pred_check
      _
    $region31: #{tpu_custom_call.1} parent=1 // pred_check_branch
      %3952 = sbr.rel (0) target = $region33
    $region32: #{tpu_custom_call.1} parent=1 // pred_region
      %s3954 = ssub.s32 256, 256
      %3955 = vsyncadd [#allocation4], %s3954
      %s3956 = sshll.u32 [#allocation9], 4
      %s3957 = int_to_ptr.vmem [resolvable:$true] %s3956
      %3962 = dma.vmem_to_hbm [thread:$0]  %s3957, 256, %s4, [#allocation4], 64, 64, 4
    $region33: #{tpu_custom_call.1} parent=1 // pred_fallthru
      _
    // Predicated region
    $region34: #{tpu_custom_call.1} parent=1 // pred_check
      _
    $region35: #{tpu_custom_call.1} parent=1 // pred_check_branch
      %3964 = sbr.rel (0) target = $region37
    $region36: #{tpu_custom_call.1} parent=1 // pred_region
      %3965 = dma.done [#allocation4], 256
    $region37: #{tpu_custom_call.1} parent=1 // pred_fallthru
      _
    %3966 = vsyncpa [#allocation3], 1
    %3967 = vsyncpa [#allocation4], 1
    %3968 = vsyncpa [#allocation5], 1
    %3969 = vsyncpa [#allocation6], 1

</llo_original>
